<compile_context>
chip_gen: v5e
topology: v5e:2x2
jax: 0.10.0
libtpu: 0.0.40
codegen_flags: <defaults>
</compile_context>

<pallas_src>
import jax
import jax.numpy as jnp
from jax import lax
from jax.experimental import pallas as pl
from jax.experimental.pallas import tpu as pltpu

LANE = 128
BN_EPS = 1e-5
_VMEM_LIMIT = 48 * 1024 * 1024      # scoped-VMEM cap handed to Mosaic (fits v7x)
_TILE_BUDGET = 12 * 1024 * 1024     # target per-tile footprint


# ------------------------------ small helpers ------------------------------ #

def _rup(x, m):
    return (x + m - 1) // m * m


def _pad_last(x, target):
    pad = target - x.shape[-1]
    if pad == 0:
        return x
    cfg = [(0, 0)] * (x.ndim - 1) + [(0, pad)]
    return jnp.pad(x, cfg)


def _pick_row_tile(M, bytes_per_row, budget=_TILE_BUDGET):
    """Largest row tile that divides M and is a multiple of 8 (or M itself)."""
    cap = max(8, budget // max(bytes_per_row, 1))
    if M <= cap:
        return M
    t = min(cap, M) // 8 * 8
    while t >= 8:
        if M % t == 0:
            return t
        t -= 8
    return M


def _pick_row_block(H, bytes_per_row, budget=_TILE_BUDGET):
    """Largest even divisor of H whose estimated tile footprint fits budget."""
    best = 2
    for th in range(2, H + 1, 2):
        if H % th == 0 and th * bytes_per_row <= budget:
            best = th
    return best


# ----------------------------- Pallas kernels ------------------------------ #

def _upconv_matmul_kernel(x_ref, w_ref, b_ref, o_ref):
    """(TM, Cin) @ (Cin, 4*Cout) + bias  (ConvTranspose2d 2x2/s2 as a matmul)."""
    acc = jnp.dot(x_ref[...], w_ref[...], preferred_element_type=jnp.float32)
    o_ref[...] = (acc + b_ref[...]).astype(o_ref.dtype)


def _conv_taps(x_scratch, w_ref, th, w2, cout):
    """Accumulate the 9 shifted matmuls of a 3x3 conv from a halo row slab."""
    cin = x_scratch.shape[-1]
    acc = jnp.zeros((th * w2, cout), jnp.float32)
    for t in range(9):
        di, dj = divmod(t, 3)
        patch = x_scratch[pl.ds(di, th), pl.ds(dj, w2), :]      # (th, w2, cin)
        acc = acc + jnp.dot(patch.reshape(th * w2, cin), w_ref[t],
                            preferred_element_type=jnp.float32)
    return acc


def _conv3x3_relu_kernel(xa_ref, xb_ref, w_ref, b_ref, o_ref, x_scratch):
    th, w2, cout = o_ref.shape[1], o_ref.shape[2], o_ref.shape[3]
    x_scratch[pl.ds(0, th), :, :] = xa_ref[0]        # main slab (th rows)
    x_scratch[pl.ds(th, 2), :, :] = xb_ref[0]        # 2 halo rows below
    acc = _conv_taps(x_scratch, w_ref, th, w2, cout) + b_ref[...]
    o_ref[...] = jnp.maximum(acc, 0.0).reshape(1, th, w2, cout).astype(o_ref.dtype)


def _conv3x3_stats_kernel(xa_ref, xb_ref, w_ref, b_ref, y_ref, stats_ref,
                          x_scratch):
    th, w2, cout = y_ref.shape[1], y_ref.shape[2], y_ref.shape[3]
    x_scratch[pl.ds(0, th), :, :] = xa_ref[0]
    x_scratch[pl.ds(th, 2), :, :] = xb_ref[0]
    y = _conv_taps(x_scratch, w_ref, th, w2, cout) + b_ref[...]
    y_ref[...] = y.reshape(1, th, w2, cout)
    s1 = jnp.sum(y, axis=0, keepdims=True)            # per-channel partial sum
    s2 = jnp.sum(y * y, axis=0, keepdims=True)        # partial sum of squares
    stats_ref[...] = jnp.concatenate([s1, s2], axis=0)[None]


def _bn_res_relu_kernel(y_ref, x_ref, sc_ref, sh_ref, o_ref):
    v = y_ref[...] * sc_ref[...] + sh_ref[...] + x_ref[...].astype(jnp.float32)
    o_ref[...] = jnp.maximum(v, 0.0).astype(o_ref.dtype)


# --------------------------- pallas_call wrappers --------------------------- #

def _upconv2x2(x_flat, w_flat, b_flat):
    M, Cin = x_flat.shape
    Ncol = w_flat.shape[1]
    tm = _pick_row_tile(M, 2 * (Cin * 2 + Ncol * 2))
    grid = (M // tm,)
    return pl.pallas_call(
        _upconv_matmul_kernel,
        grid=grid,
        in_specs=[pl.BlockSpec((tm, Cin), lambda i: (i, 0)),
                  pl.BlockSpec((Cin, Ncol), lambda i: (0, 0)),
                  pl.BlockSpec((1, Ncol), lambda i: (0, 0))],
        out_specs=pl.BlockSpec((tm, Ncol), lambda i: (i, 0)),
        out_shape=jax.ShapeDtypeStruct((M, Ncol), jnp.bfloat16),
        compiler_params=pltpu.CompilerParams(
            dimension_semantics=("parallel",), vmem_limit_bytes=_VMEM_LIMIT),
        cost_estimate=pl.CostEstimate(
            flops=2 * M * Cin * Ncol, transcendentals=0,
            bytes_accessed=M * Cin * 2 + Cin * Ncol * 2 + M * Ncol * 2),
    )(x_flat, w_flat, b_flat)


def _conv3x3(xp, w9, bias, *, stats=False):
    """Fused 3x3 conv (padding already applied to xp).

    xp:   (N, H+2, W+2, Cin)  bf16  spatially padded NHWC activation
    w9:   (9, Cin, Cout)      bf16
    bias: (1, Cout)           f32
    """
    N, Hp, Wp, Cin = xp.shape
    H2, W2 = Hp - 2, Wp - 2
    Cout = w9.shape[-1]

    # rough per-output-row footprint (double-buffered inputs/outputs + scratch)
    row_bytes = 2 * (Wp * Cin * 2) + Wp * Cin * 2 + 2 * (W2 * Cout * 4)
    th = _pick_row_block(H2, row_bytes)
    nt = H2 // th
    grid = (N, nt)

    a_spec = pl.BlockSpec((1, th, Wp, Cin), lambda n, i: (n, i, 0, 0))
    b_spec = pl.BlockSpec((1, 2, Wp, Cin),
                          lambda n, i: (n, (i + 1) * (th // 2), 0, 0))
    w_spec = pl.BlockSpec((9, Cin, Cout), lambda n, i: (0, 0, 0))
    bias_spec = pl.BlockSpec((1, Cout), lambda n, i: (0, 0))
    y_spec = pl.BlockSpec((1, th, W2, Cout), lambda n, i: (n, i, 0, 0))

    flops = 2 * N * H2 * W2 * 9 * Cin * Cout
    bytes_accessed = (xp.size * 2 + w9.size * 2 +
                      N * H2 * W2 * Cout * (4 if stats else 2))
    cparams = pltpu.CompilerParams(
        dimension_semantics=("parallel", "parallel"),
        vmem_limit_bytes=_VMEM_LIMIT)
    scratch = [pltpu.VMEM((th + 2, Wp, Cin), jnp.bfloat16)]
    cost = pl.CostEstimate(flops=flops, transcendentals=0,
                           bytes_accessed=bytes_accessed)

    if stats:
        stats_spec = pl.BlockSpec((1, 2, Cout), lambda n, i: (n * nt + i, 0, 0))
        out_shape = (jax.ShapeDtypeStruct((N, H2, W2, Cout), jnp.float32),
                     jax.ShapeDtypeStruct((N * nt, 2, Cout), jnp.float32))
        return pl.pallas_call(
            _conv3x3_stats_kernel,
            grid=grid,
            in_specs=[a_spec, b_spec, w_spec, bias_spec],
            out_specs=(y_spec, stats_spec),
            out_shape=out_shape,
            scratch_shapes=scratch,
            compiler_params=cparams,
            cost_estimate=cost,
        )(xp, xp, w9, bias)

    return pl.pallas_call(
        _conv3x3_relu_kernel,
        grid=grid,
        in_specs=[a_spec, b_spec, w_spec, bias_spec],
        out_specs=y_spec,
        out_shape=jax.ShapeDtypeStruct((N, H2, W2, Cout), jnp.bfloat16),
        scratch_shapes=scratch,
        compiler_params=cparams,
        cost_estimate=cost,
    )(xp, xp, w9, bias)


def _bn_res_relu(y2d, x2d, scale, shift):
    M, C = y2d.shape
    tm = _pick_row_tile(M, C * (4 + 2 + 2) * 2)
    grid = (M // tm,)
    return pl.pallas_call(
        _bn_res_relu_kernel,
        grid=grid,
        in_specs=[pl.BlockSpec((tm, C), lambda i: (i, 0)),
                  pl.BlockSpec((tm, C), lambda i: (i, 0)),
                  pl.BlockSpec((1, C), lambda i: (0, 0)),
                  pl.BlockSpec((1, C), lambda i: (0, 0))],
        out_specs=pl.BlockSpec((tm, C), lambda i: (i, 0)),
        out_shape=jax.ShapeDtypeStruct((M, C), jnp.bfloat16),
        compiler_params=pltpu.CompilerParams(
            dimension_semantics=("parallel",), vmem_limit_bytes=_VMEM_LIMIT),
        cost_estimate=pl.CostEstimate(flops=4 * M * C, transcendentals=0,
                                      bytes_accessed=M * C * 8),
    )(y2d, x2d, scale, shift)


# ------------------------------- parameters -------------------------------- #

def init_params(key, in_channels, out_channels, blocks):
    ks = jax.random.split(key, 2 + blocks)
    scale = 0.1
    params = {
        # ConvTranspose2d weight, stored as (Cin, 2, 2, Cout)
        "up_w": scale * jax.random.normal(ks[0], (in_channels, 2, 2, out_channels),
                                          jnp.float32),
        "up_b": jnp.zeros((out_channels,), jnp.float32),
        # conv1: 3x3, (2*Cout -> Cout), stored as (3, 3, Cin, Cout)
        "conv1_w": scale * jax.random.normal(ks[1], (3, 3, 2 * out_channels, out_channels),
                                             jnp.float32),
        "conv1_b": jnp.zeros((out_channels,), jnp.float32),
        "conv2_w": [], "conv2_b": [], "bn_gamma": [], "bn_beta": [],
    }
    for i in range(blocks):
        params["conv2_w"].append(
            scale * jax.random.normal(ks[2 + i], (3, 3, out_channels, out_channels),
                                      jnp.float32))
        params["conv2_b"].append(jnp.zeros((out_channels,), jnp.float32))
        params["bn_gamma"].append(jnp.ones((out_channels,), jnp.float32))
        params["bn_beta"].append(jnp.zeros((out_channels,), jnp.float32))
    return params


# --------------------------------- forward --------------------------------- #

def upconvd_forward(params, from_up_nchw, from_down_nchw):
    """UpConvD forward (concat=True, residual=True, batch_norm=True, transpose=True)."""
    fu = jnp.transpose(from_up_nchw, (0, 2, 3, 1)).astype(jnp.float32)   # NHWC
    fd = jnp.transpose(from_down_nchw, (0, 2, 3, 1)).astype(jnp.float32)
    N, H, W, Cin = fu.shape
    Cout = params["up_b"].shape[0]
    H2, W2 = 2 * H, 2 * W
    M = N * H2 * W2

    Cin_p = _rup(Cin, LANE)
    Cout_p = _rup(Cout, LANE)
    C1_p = _rup(2 * Cout, LANE)

    # ---- ConvTranspose2d(k=2, s=2): gridded lane-dense matmul, scatter in XLA
    x_flat = _pad_last(fu, Cin_p).reshape(N * H * W, Cin_p).astype(jnp.bfloat16)
    w_up = jnp.zeros((Cin_p, 2, 2, Cout_p), jnp.float32)
    w_up = w_up.at[:Cin, :, :, :Cout].set(params["up_w"])
    w_up = w_up.reshape(Cin_p, 4 * Cout_p).astype(jnp.bfloat16)
    b_up = jnp.tile(_pad_last(params["up_b"], Cout_p), 4).reshape(1, 4 * Cout_p)

    y_up = _upconv2x2(x_flat, w_up, b_up)                     # (N*H*W, 4*Cout_p)
    y_up = (y_up.reshape(N, H, W, 2, 2, Cout_p)
                 .transpose(0, 1, 3, 2, 4, 5)
                 .reshape(N, H2, W2, Cout_p))

    # ---- concat(from_up, from_down) along channels; pad spatially + channels
    x1 = jnp.concatenate([y_up[..., :Cout].astype(jnp.float32), fd], axis=-1)
    x1p = jnp.pad(x1, ((0, 0), (1, 1), (1, 1),
                       (0, C1_p - 2 * Cout))).astype(jnp.bfloat16)

    # ---- conv1 3x3 + ReLU (fused halo-slab kernel, no HBM im2col) -----------
    w1 = jnp.zeros((3, 3, C1_p, Cout_p), jnp.float32)
    w1 = w1.at[:, :, :2 * Cout, :Cout].set(params["conv1_w"])
    w1 = w1.reshape(9, C1_p, Cout_p).astype(jnp.bfloat16)
    b1 = _pad_last(params["conv1_b"], Cout_p).reshape(1, Cout_p)
    x_act = _conv3x3(x1p, w1, b1)                             # (N,H2,W2,Cout_p) bf16

    # ---- residual blocks: conv -> BN(exact batch stats, 2-pass) -> +x -> ReLU
    for i in range(len(params["conv2_w"])):
        w2 = jnp.zeros((3, 3, Cout_p, Cout_p), jnp.float32)
        w2 = w2.at[:, :, :Cout, :Cout].set(params["conv2_w"][i])
        w2 = w2.reshape(9, Cout_p, Cout_p).astype(jnp.bfloat16)
        b2 = _pad_last(params["conv2_b"][i], Cout_p).reshape(1, Cout_p)

        xp = jnp.pad(x_act, ((0, 0), (1, 1), (1, 1), (0, 0)))
        y, part = _conv3x3(xp, w2, b2, stats=True)            # y: f32 pre-BN conv

        total = jnp.sum(part, axis=0)                         # (2, Cout_p)
        mean = total[0] / M
        var = jnp.maximum(total[1] / M - mean * mean, 0.0)    # biased variance
        gamma = _pad_last(params["bn_gamma"][i], Cout_p)
        beta = _pad_last(params["bn_beta"][i], Cout_p)
        denom = lax.rsqrt(var + BN_EPS)
        scale = (gamma * denom).reshape(1, Cout_p)
        shift = (beta - mean * gamma * denom).reshape(1, Cout_p)

        out2d = _bn_res_relu(y.reshape(M, Cout_p),
                             x_act.reshape(M, Cout_p), scale, shift)
        x_act = out2d.reshape(N, H2, W2, Cout_p)

    out = x_act[..., :Cout].astype(jnp.float32)
    return jnp.transpose(out, (0, 3, 1, 2))                   # back to NCHW


# ----------------------------------- main ----------------------------------- #

if __name__ == "__main__":
    in_channels, out_channels, blocks = 4, 4, 2
    N, H, W = 2, 8, 8  # from_up spatial; output / from_down spatial is 2x

    key = jax.random.PRNGKey(0)
    k_params, k_up, k_down = jax.random.split(key, 3)

    params = init_params(k_params, in_channels, out_channels, blocks)
    from_up = jax.random.normal(k_up, (N, in_channels, H, W), jnp.float32)        # NCHW
    from_down = jax.random.normal(k_down, (N, out_channels, 2 * H, 2 * W), jnp.float32)

    fwd = jax.jit(upconvd_forward)
    out = fwd(params, from_up, from_down)
    out = jax.block_until_ready(out)
    assert out.shape == (N, out_channels, 2 * H, 2 * W), out.shape
    assert bool(jnp.all(jnp.isfinite(out)))
    print("KERNEL_OK")
</pallas_src>

<mosaic_0001>
module attributes {stable_mosaic.version = 11 : i64} {
  func.func @_upconv_matmul_kernel(%arg0: i32, %arg1: memref<128x128xbf16, #tpu.memory_space<vmem>>, %arg2: memref<128x512xbf16, #tpu.memory_space<vmem>>, %arg3: memref<1x512xf32, #tpu.memory_space<vmem>>, %arg4: memref<128x512xbf16, #tpu.memory_space<vmem>>) attributes {dimension_semantics = [#tpu.dimension_semantics<parallel>], iteration_bounds = array<i64: 1>, scalar_prefetch = 0 : i64, scratch_operands = 0 : i64, tpu.core_type = #tpu.core_type<tc>, window_params = [{transform_indices = @transform_0, window_bounds = array<i64: 128, 128>}, {pipeline_mode = #tpu.pipeline_mode<synchronous>, transform_indices = @transform_1, window_bounds = array<i64: 128, 512>}, {pipeline_mode = #tpu.pipeline_mode<synchronous>, transform_indices = @transform_2, window_bounds = array<i64: 1, 512>}, {transform_indices = @transform_3, window_bounds = array<i64: 128, 512>}]} {
    %c0 = arith.constant 0 : index
    %c0_0 = arith.constant 0 : index
    %0 = vector.load %arg1[%c0, %c0_0] : memref<128x128xbf16, #tpu.memory_space<vmem>>, vector<128x128xbf16>
    %c0_1 = arith.constant 0 : index
    %c0_2 = arith.constant 0 : index
    %1 = vector.load %arg2[%c0_1, %c0_2] : memref<128x512xbf16, #tpu.memory_space<vmem>>, vector<128x512xbf16>
    %cst = arith.constant dense<0.000000e+00> : vector<128x512xf32>
    %2 = tpu.matmul %0, %1, %cst {dimension_numbers = #tpu.dot_dimension_numbers<[1], [0], [0], [1], [0, 0, 1, 1], [], []>} : vector<128x128xbf16>, vector<128x512xbf16>, vector<128x512xf32> -> vector<128x512xf32>
    %c0_3 = arith.constant 0 : index
    %c0_4 = arith.constant 0 : index
    %3 = vector.load %arg3[%c0_3, %c0_4] : memref<1x512xf32, #tpu.memory_space<vmem>>, vector<1x512xf32>
    %4 = vector.broadcast %3 : vector<1x512xf32> to vector<128x512xf32>
    %5 = arith.addf %2, %4 : vector<128x512xf32>
    %6 = arith.truncf %5 : vector<128x512xf32> to vector<128x512xbf16>
    %c0_5 = arith.constant 0 : index
    %c0_6 = arith.constant 0 : index
    %7 = vector.load %arg4[%c0_5, %c0_6] : memref<128x512xbf16, #tpu.memory_space<vmem>>, vector<128x512xbf16>
    tpu.vector_store %arg4[%c0_5, %c0_6], %6 {strides = array<i32>} : memref<128x512xbf16, #tpu.memory_space<vmem>>, vector<128x512xbf16>,
    return
  }
  func.func @transform_0(%arg0: i32) -> (i32, i32) {
    %c0_i32 = arith.constant 0 : i32
    %c0_i32_0 = arith.constant 0 : i32
    return %arg0, %c0_i32 : i32, i32
  }
  func.func @transform_1(%arg0: i32) -> (i32, i32) {
    %c0_i32 = arith.constant 0 : i32
    %c0_i32_0 = arith.constant 0 : i32
    %c0_i32_1 = arith.constant 0 : i32
    return %c0_i32, %c0_i32_0 : i32, i32
  }
  func.func @transform_2(%arg0: i32) -> (i32, i32) {
    %c0_i32 = arith.constant 0 : i32
    %c0_i32_0 = arith.constant 0 : i32
    %c0_i32_1 = arith.constant 0 : i32
    return %c0_i32, %c0_i32_0 : i32, i32
  }
  func.func @transform_3(%arg0: i32) -> (i32, i32) {
    %c0_i32 = arith.constant 0 : i32
    %c0_i32_0 = arith.constant 0 : i32
    return %arg0, %c0_i32 : i32, i32
  }
}

module attributes {stable_mosaic.version = 11 : i64} {
  func.func @_conv3x3_relu_kernel(%arg0: i32, %arg1: i32, %arg2: memref<1x16x18x128xbf16, #tpu.memory_space<vmem>>, %arg3: memref<1x2x18x128xbf16, #tpu.memory_space<vmem>>, %arg4: memref<9x128x128xbf16, #tpu.memory_space<vmem>>, %arg5: memref<1x128xf32, #tpu.memory_space<vmem>>, %arg6: memref<1x16x16x128xbf16, #tpu.memory_space<vmem>>, %arg7: memref<18x18x128xbf16, #tpu.memory_space<vmem>>) attributes {dimension_semantics = [#tpu.dimension_semantics<parallel>, #tpu.dimension_semantics<parallel>], iteration_bounds = array<i64: 2, 1>, scalar_prefetch = 0 : i64, scratch_operands = 1 : i64, tpu.core_type = #tpu.core_type<tc>, window_params = [{transform_indices = @transform_0, window_bounds = array<i64: 1, 16, 18, 128>}, {transform_indices = @transform_1, window_bounds = array<i64: 1, 2, 18, 128>}, {pipeline_mode = #tpu.pipeline_mode<synchronous>, transform_indices = @transform_2, window_bounds = array<i64: 9, 128, 128>}, {pipeline_mode = #tpu.pipeline_mode<synchronous>, transform_indices = @transform_3, window_bounds = array<i64: 1, 128>}, {transform_indices = @transform_4, window_bounds = array<i64: 1, 16, 16, 128>}]} {
    %c0 = arith.constant 0 : index
    %c0_0 = arith.constant 0 : index
    %c0_1 = arith.constant 0 : index
    %c0_2 = arith.constant 0 : index
    %0 = vector.load %arg2[%c0, %c0_0, %c0_1, %c0_2] : memref<1x16x18x128xbf16, #tpu.memory_space<vmem>>, vector<1x16x18x128xbf16>
    %1 = vector.shape_cast %0 : vector<1x16x18x128xbf16> to vector<16x18x128xbf16>
    %c0_3 = arith.constant 0 : index
    %c0_4 = arith.constant 0 : index
    %c0_5 = arith.constant 0 : index
    %2 = vector.load %arg7[%c0_3, %c0_4, %c0_5] : memref<18x18x128xbf16, #tpu.memory_space<vmem>>, vector<16x18x128xbf16>
    tpu.vector_store %arg7[%c0_3, %c0_4, %c0_5], %1 {strides = array<i32>} : memref<18x18x128xbf16, #tpu.memory_space<vmem>>, vector<16x18x128xbf16>,
    %c0_6 = arith.constant 0 : index
    %c0_7 = arith.constant 0 : index
    %c0_8 = arith.constant 0 : index
    %c0_9 = arith.constant 0 : index
    %3 = vector.load %arg3[%c0_6, %c0_7, %c0_8, %c0_9] : memref<1x2x18x128xbf16, #tpu.memory_space<vmem>>, vector<1x2x18x128xbf16>
    %4 = vector.shape_cast %3 : vector<1x2x18x128xbf16> to vector<2x18x128xbf16>
    %c16 = arith.constant 16 : index
    %c0_10 = arith.constant 0 : index
    %c0_11 = arith.constant 0 : index
    %5 = vector.load %arg7[%c16, %c0_10, %c0_11] : memref<18x18x128xbf16, #tpu.memory_space<vmem>>, vector<2x18x128xbf16>
    tpu.vector_store %arg7[%c16, %c0_10, %c0_11], %4 {strides = array<i32>} : memref<18x18x128xbf16, #tpu.memory_space<vmem>>, vector<2x18x128xbf16>,
    %cst = arith.constant 0.000000e+00 : f32
    %6 = vector.broadcast %cst : f32 to vector<256x128xf32>
    %c0_12 = arith.constant 0 : index
    %c0_13 = arith.constant 0 : index
    %c0_14 = arith.constant 0 : index
    %7 = vector.load %arg7[%c0_12, %c0_13, %c0_14] : memref<18x18x128xbf16, #tpu.memory_space<vmem>>, vector<16x16x128xbf16>
    %8 = vector.shape_cast %7 : vector<16x16x128xbf16> to vector<256x128xbf16>
    %c0_15 = arith.constant 0 : index
    %c0_16 = arith.constant 0 : index
    %c0_17 = arith.constant 0 : index
    %9 = vector.load %arg4[%c0_15, %c0_16, %c0_17] : memref<9x128x128xbf16, #tpu.memory_space<vmem>>, vector<1x128x128xbf16>
    %10 = vector.shape_cast %9 : vector<1x128x128xbf16> to vector<128x128xbf16>
    %cst_18 = arith.constant dense<0.000000e+00> : vector<256x128xf32>
    %11 = tpu.matmul %8, %10, %cst_18 {dimension_numbers = #tpu.dot_dimension_numbers<[1], [0], [0], [1], [0, 0, 1, 1], [], []>} : vector<256x128xbf16>, vector<128x128xbf16>, vector<256x128xf32> -> vector<256x128xf32>
    %12 = arith.addf %6, %11 : vector<256x128xf32>
    %c0_19 = arith.constant 0 : index
    %c1 = arith.constant 1 : index
    %c0_20 = arith.constant 0 : index
    %13 = vector.load %arg7[%c0_19, %c1, %c0_20] : memref<18x18x128xbf16, #tpu.memory_space<vmem>>, vector<16x16x128xbf16>
    %14 = vector.shape_cast %13 : vector<16x16x128xbf16> to vector<256x128xbf16>
    %c1_21 = arith.constant 1 : index
    %c0_22 = arith.constant 0 : index
    %c0_23 = arith.constant 0 : index
    %15 = vector.load %arg4[%c1_21, %c0_22, %c0_23] : memref<9x128x128xbf16, #tpu.memory_space<vmem>>, vector<1x128x128xbf16>
    %16 = vector.shape_cast %15 : vector<1x128x128xbf16> to vector<128x128xbf16>
    %cst_24 = arith.constant dense<0.000000e+00> : vector<256x128xf32>
    %17 = tpu.matmul %14, %16, %cst_24 {dimension_numbers = #tpu.dot_dimension_numbers<[1], [0], [0], [1], [0, 0, 1, 1], [], []>} : vector<256x128xbf16>, vector<128x128xbf16>, vector<256x128xf32> -> vector<256x128xf32>
    %18 = arith.addf %12, %17 : vector<256x128xf32>
    %c0_25 = arith.constant 0 : index
    %c2 = arith.constant 2 : index
    %c0_26 = arith.constant 0 : index
    %19 = vector.load %arg7[%c0_25, %c2, %c0_26] : memref<18x18x128xbf16, #tpu.memory_space<vmem>>, vector<16x16x128xbf16>
    %20 = vector.shape_cast %19 : vector<16x16x128xbf16> to vector<256x128xbf16>
    %c2_27 = arith.constant 2 : index
    %c0_28 = arith.constant 0 : index
    %c0_29 = arith.constant 0 : index
    %21 = vector.load %arg4[%c2_27, %c0_28, %c0_29] : memref<9x128x128xbf16, #tpu.memory_space<vmem>>, vector<1x128x128xbf16>
    %22 = vector.shape_cast %21 : vector<1x128x128xbf16> to vector<128x128xbf16>
    %cst_30 = arith.constant dense<0.000000e+00> : vector<256x128xf32>
    %23 = tpu.matmul %20, %22, %cst_30 {dimension_numbers = #tpu.dot_dimension_numbers<[1], [0], [0], [1], [0, 0, 1, 1], [], []>} : vector<256x128xbf16>, vector<128x128xbf16>, vector<256x128xf32> -> vector<256x128xf32>
    %24 = arith.addf %18, %23 : vector<256x128xf32>
    %c1_31 = arith.constant 1 : index
    %c0_32 = arith.constant 0 : index
    %c0_33 = arith.constant 0 : index
    %25 = vector.load %arg7[%c1_31, %c0_32, %c0_33] : memref<18x18x128xbf16, #tpu.memory_space<vmem>>, vector<16x16x128xbf16>
    %26 = vector.shape_cast %25 : vector<16x16x128xbf16> to vector<256x128xbf16>
    %c3 = arith.constant 3 : index
    %c0_34 = arith.constant 0 : index
    %c0_35 = arith.constant 0 : index
    %27 = vector.load %arg4[%c3, %c0_34, %c0_35] : memref<9x128x128xbf16, #tpu.memory_space<vmem>>, vector<1x128x128xbf16>
    %28 = vector.shape_cast %27 : vector<1x128x128xbf16> to vector<128x128xbf16>
    %cst_36 = arith.constant dense<0.000000e+00> : vector<256x128xf32>
    %29 = tpu.matmul %26, %28, %cst_36 {dimension_numbers = #tpu.dot_dimension_numbers<[1], [0], [0], [1], [0, 0, 1, 1], [], []>} : vector<256x128xbf16>, vector<128x128xbf16>, vector<256x128xf32> -> vector<256x128xf32>
    %30 = arith.addf %24, %29 : vector<256x128xf32>
    %c1_37 = arith.constant 1 : index
    %c1_38 = arith.constant 1 : index
    %c0_39 = arith.constant 0 : index
    %31 = vector.load %arg7[%c1_37, %c1_38, %c0_39] : memref<18x18x128xbf16, #tpu.memory_space<vmem>>, vector<16x16x128xbf16>
    %32 = vector.shape_cast %31 : vector<16x16x128xbf16> to vector<256x128xbf16>
    %c4 = arith.constant 4 : index
    %c0_40 = arith.constant 0 : index
    %c0_41 = arith.constant 0 : index
    %33 = vector.load %arg4[%c4, %c0_40, %c0_41] : memref<9x128x128xbf16, #tpu.memory_space<vmem>>, vector<1x128x128xbf16>
    %34 = vector.shape_cast %33 : vector<1x128x128xbf16> to vector<128x128xbf16>
    %cst_42 = arith.constant dense<0.000000e+00> : vector<256x128xf32>
    %35 = tpu.matmul %32, %34, %cst_42 {dimension_numbers = #tpu.dot_dimension_numbers<[1], [0], [0], [1], [0, 0, 1, 1], [], []>} : vector<256x128xbf16>, vector<128x128xbf16>, vector<256x128xf32> -> vector<256x128xf32>
    %36 = arith.addf %30, %35 : vector<256x128xf32>
    %c1_43 = arith.constant 1 : index
    %c2_44 = arith.constant 2 : index
    %c0_45 = arith.constant 0 : index
    %37 = vector.load %arg7[%c1_43, %c2_44, %c0_45] : memref<18x18x128xbf16, #tpu.memory_space<vmem>>, vector<16x16x128xbf16>
    %38 = vector.shape_cast %37 : vector<16x16x128xbf16> to vector<256x128xbf16>
    %c5 = arith.constant 5 : index
    %c0_46 = arith.constant 0 : index
    %c0_47 = arith.constant 0 : index
    %39 = vector.load %arg4[%c5, %c0_46, %c0_47] : memref<9x128x128xbf16, #tpu.memory_space<vmem>>, vector<1x128x128xbf16>
    %40 = vector.shape_cast %39 : vector<1x128x128xbf16> to vector<128x128xbf16>
    %cst_48 = arith.constant dense<0.000000e+00> : vector<256x128xf32>
    %41 = tpu.matmul %38, %40, %cst_48 {dimension_numbers = #tpu.dot_dimension_numbers<[1], [0], [0], [1], [0, 0, 1, 1], [], []>} : vector<256x128xbf16>, vector<128x128xbf16>, vector<256x128xf32> -> vector<256x128xf32>
    %42 = arith.addf %36, %41 : vector<256x128xf32>
    %c2_49 = arith.constant 2 : index
    %c0_50 = arith.constant 0 : index
    %c0_51 = arith.constant 0 : index
    %43 = vector.load %arg7[%c2_49, %c0_50, %c0_51] : memref<18x18x128xbf16, #tpu.memory_space<vmem>>, vector<16x16x128xbf16>
    %44 = vector.shape_cast %43 : vector<16x16x128xbf16> to vector<256x128xbf16>
    %c6 = arith.constant 6 : index
    %c0_52 = arith.constant 0 : index
    %c0_53 = arith.constant 0 : index
    %45 = vector.load %arg4[%c6, %c0_52, %c0_53] : memref<9x128x128xbf16, #tpu.memory_space<vmem>>, vector<1x128x128xbf16>
    %46 = vector.shape_cast %45 : vector<1x128x128xbf16> to vector<128x128xbf16>
    %cst_54 = arith.constant dense<0.000000e+00> : vector<256x128xf32>
    %47 = tpu.matmul %44, %46, %cst_54 {dimension_numbers = #tpu.dot_dimension_numbers<[1], [0], [0], [1], [0, 0, 1, 1], [], []>} : vector<256x128xbf16>, vector<128x128xbf16>, vector<256x128xf32> -> vector<256x128xf32>
    %48 = arith.addf %42, %47 : vector<256x128xf32>
    %c2_55 = arith.constant 2 : index
    %c1_56 = arith.constant 1 : index
    %c0_57 = arith.constant 0 : index
    %49 = vector.load %arg7[%c2_55, %c1_56, %c0_57] : memref<18x18x128xbf16, #tpu.memory_space<vmem>>, vector<16x16x128xbf16>
    %50 = vector.shape_cast %49 : vector<16x16x128xbf16> to vector<256x128xbf16>
    %c7 = arith.constant 7 : index
    %c0_58 = arith.constant 0 : index
    %c0_59 = arith.constant 0 : index
    %51 = vector.load %arg4[%c7, %c0_58, %c0_59] : memref<9x128x128xbf16, #tpu.memory_space<vmem>>, vector<1x128x128xbf16>
    %52 = vector.shape_cast %51 : vector<1x128x128xbf16> to vector<128x128xbf16>
    %cst_60 = arith.constant dense<0.000000e+00> : vector<256x128xf32>
    %53 = tpu.matmul %50, %52, %cst_60 {dimension_numbers = #tpu.dot_dimension_numbers<[1], [0], [0], [1], [0, 0, 1, 1], [], []>} : vector<256x128xbf16>, vector<128x128xbf16>, vector<256x128xf32> -> vector<256x128xf32>
    %54 = arith.addf %48, %53 : vector<256x128xf32>
    %c2_61 = arith.constant 2 : index
    %c2_62 = arith.constant 2 : index
    %c0_63 = arith.constant 0 : index
    %55 = vector.load %arg7[%c2_61, %c2_62, %c0_63] : memref<18x18x128xbf16, #tpu.memory_space<vmem>>, vector<16x16x128xbf16>
    %56 = vector.shape_cast %55 : vector<16x16x128xbf16> to vector<256x128xbf16>
    %c8 = arith.constant 8 : index
    %c0_64 = arith.constant 0 : index
    %c0_65 = arith.constant 0 : index
    %57 = vector.load %arg4[%c8, %c0_64, %c0_65] : memref<9x128x128xbf16, #tpu.memory_space<vmem>>, vector<1x128x128xbf16>
    %58 = vector.shape_cast %57 : vector<1x128x128xbf16> to vector<128x128xbf16>
    %cst_66 = arith.constant dense<0.000000e+00> : vector<256x128xf32>
    %59 = tpu.matmul %56, %58, %cst_66 {dimension_numbers = #tpu.dot_dimension_numbers<[1], [0], [0], [1], [0, 0, 1, 1], [], []>} : vector<256x128xbf16>, vector<128x128xbf16>, vector<256x128xf32> -> vector<256x128xf32>
    %60 = arith.addf %54, %59 : vector<256x128xf32>
    %c0_67 = arith.constant 0 : index
    %c0_68 = arith.constant 0 : index
    %61 = vector.load %arg5[%c0_67, %c0_68] : memref<1x128xf32, #tpu.memory_space<vmem>>, vector<1x128xf32>
    %62 = vector.broadcast %61 : vector<1x128xf32> to vector<256x128xf32>
    %63 = arith.addf %60, %62 : vector<256x128xf32>
    %cst_69 = arith.constant 0.000000e+00 : f32
    %64 = vector.broadcast %cst_69 : f32 to vector<256x128xf32>
    %65 = arith.maximumf %63, %64 : vector<256x128xf32>
    %66 = vector.shape_cast %65 : vector<256x128xf32> to vector<1x16x16x128xf32>
    %67 = arith.truncf %66 : vector<1x16x16x128xf32> to vector<1x16x16x128xbf16>
    %c0_70 = arith.constant 0 : index
    %c0_71 = arith.constant 0 : index
    %c0_72 = arith.constant 0 : index
    %c0_73 = arith.constant 0 : index
    %68 = vector.load %arg6[%c0_70, %c0_71, %c0_72, %c0_73] : memref<1x16x16x128xbf16, #tpu.memory_space<vmem>>, vector<1x16x16x128xbf16>
    tpu.vector_store %arg6[%c0_70, %c0_71, %c0_72, %c0_73], %67 {strides = array<i32>} : memref<1x16x16x128xbf16, #tpu.memory_space<vmem>>, vector<1x16x16x128xbf16>,
    return
  }
  func.func @transform_0(%arg0: i32, %arg1: i32) -> (i32, i32, i32, i32) {
    %c0_i32 = arith.constant 0 : i32
    %c0_i32_0 = arith.constant 0 : i32
    %c0_i32_1 = arith.constant 0 : i32
    return %arg0, %arg1, %c0_i32, %c0_i32_0 : i32, i32, i32, i32
  }
  func.func @transform_1(%arg0: i32, %arg1: i32) -> (i32, i32, i32, i32) {
    %c1_i32 = arith.constant 1 : i32
    %0 = arith.addi %arg1, %c1_i32 : i32
    %c8_i32 = arith.constant 8 : i32
    %1 = arith.muli %0, %c8_i32 : i32
    %c0_i32 = arith.constant 0 : i32
    %c0_i32_0 = arith.constant 0 : i32
    %c0_i32_1 = arith.constant 0 : i32
    return %arg0, %1, %c0_i32, %c0_i32_0 : i32, i32, i32, i32
  }
  func.func @transform_2(%arg0: i32, %arg1: i32) -> (i32, i32, i32) {
    %c0_i32 = arith.constant 0 : i32
    %c0_i32_0 = arith.constant 0 : i32
    %c0_i32_1 = arith.constant 0 : i32
    %c0_i32_2 = arith.constant 0 : i32
    return %c0_i32, %c0_i32_0, %c0_i32_1 : i32, i32, i32
  }
  func.func @transform_3(%arg0: i32, %arg1: i32) -> (i32, i32) {
    %c0_i32 = arith.constant 0 : i32
    %c0_i32_0 = arith.constant 0 : i32
    %c0_i32_1 = arith.constant 0 : i32
    return %c0_i32, %c0_i32_0 : i32, i32
  }
  func.func @transform_4(%arg0: i32, %arg1: i32) -> (i32, i32, i32, i32) {
    %c0_i32 = arith.constant 0 : i32
    %c0_i32_0 = arith.constant 0 : i32
    %c0_i32_1 = arith.constant 0 : i32
    return %arg0, %arg1, %c0_i32, %c0_i32_0 : i32, i32, i32, i32
  }
}

module attributes {stable_mosaic.version = 11 : i64} {
  func.func @_conv3x3_stats_kernel(%arg0: i32, %arg1: i32, %arg2: memref<1x16x18x128xbf16, #tpu.memory_space<vmem>>, %arg3: memref<1x2x18x128xbf16, #tpu.memory_space<vmem>>, %arg4: memref<9x128x128xbf16, #tpu.memory_space<vmem>>, %arg5: memref<1x128xf32, #tpu.memory_space<vmem>>, %arg6: memref<1x16x16x128xf32, #tpu.memory_space<vmem>>, %arg7: memref<1x2x128xf32, #tpu.memory_space<vmem>>, %arg8: memref<18x18x128xbf16, #tpu.memory_space<vmem>>) attributes {dimension_semantics = [#tpu.dimension_semantics<parallel>, #tpu.dimension_semantics<parallel>], iteration_bounds = array<i64: 2, 1>, scalar_prefetch = 0 : i64, scratch_operands = 1 : i64, tpu.core_type = #tpu.core_type<tc>, window_params = [{transform_indices = @transform_0, window_bounds = array<i64: 1, 16, 18, 128>}, {transform_indices = @transform_1, window_bounds = array<i64: 1, 2, 18, 128>}, {pipeline_mode = #tpu.pipeline_mode<synchronous>, transform_indices = @transform_2, window_bounds = array<i64: 9, 128, 128>}, {pipeline_mode = #tpu.pipeline_mode<synchronous>, transform_indices = @transform_3, window_bounds = array<i64: 1, 128>}, {transform_indices = @transform_4, window_bounds = array<i64: 1, 16, 16, 128>}, {transform_indices = @transform_5, window_bounds = array<i64: 1, 2, 128>}]} {
    %c0 = arith.constant 0 : index
    %c0_0 = arith.constant 0 : index
    %c0_1 = arith.constant 0 : index
    %c0_2 = arith.constant 0 : index
    %0 = vector.load %arg2[%c0, %c0_0, %c0_1, %c0_2] : memref<1x16x18x128xbf16, #tpu.memory_space<vmem>>, vector<1x16x18x128xbf16>
    %1 = vector.shape_cast %0 : vector<1x16x18x128xbf16> to vector<16x18x128xbf16>
    %c0_3 = arith.constant 0 : index
    %c0_4 = arith.constant 0 : index
    %c0_5 = arith.constant 0 : index
    %2 = vector.load %arg8[%c0_3, %c0_4, %c0_5] : memref<18x18x128xbf16, #tpu.memory_space<vmem>>, vector<16x18x128xbf16>
    tpu.vector_store %arg8[%c0_3, %c0_4, %c0_5], %1 {strides = array<i32>} : memref<18x18x128xbf16, #tpu.memory_space<vmem>>, vector<16x18x128xbf16>,
    %c0_6 = arith.constant 0 : index
    %c0_7 = arith.constant 0 : index
    %c0_8 = arith.constant 0 : index
    %c0_9 = arith.constant 0 : index
    %3 = vector.load %arg3[%c0_6, %c0_7, %c0_8, %c0_9] : memref<1x2x18x128xbf16, #tpu.memory_space<vmem>>, vector<1x2x18x128xbf16>
    %4 = vector.shape_cast %3 : vector<1x2x18x128xbf16> to vector<2x18x128xbf16>
    %c16 = arith.constant 16 : index
    %c0_10 = arith.constant 0 : index
    %c0_11 = arith.constant 0 : index
    %5 = vector.load %arg8[%c16, %c0_10, %c0_11] : memref<18x18x128xbf16, #tpu.memory_space<vmem>>, vector<2x18x128xbf16>
    tpu.vector_store %arg8[%c16, %c0_10, %c0_11], %4 {strides = array<i32>} : memref<18x18x128xbf16, #tpu.memory_space<vmem>>, vector<2x18x128xbf16>,
    %cst = arith.constant 0.000000e+00 : f32
    %6 = vector.broadcast %cst : f32 to vector<256x128xf32>
    %c0_12 = arith.constant 0 : index
    %c0_13 = arith.constant 0 : index
    %c0_14 = arith.constant 0 : index
    %7 = vector.load %arg8[%c0_12, %c0_13, %c0_14] : memref<18x18x128xbf16, #tpu.memory_space<vmem>>, vector<16x16x128xbf16>
    %8 = vector.shape_cast %7 : vector<16x16x128xbf16> to vector<256x128xbf16>
    %c0_15 = arith.constant 0 : index
    %c0_16 = arith.constant 0 : index
    %c0_17 = arith.constant 0 : index
    %9 = vector.load %arg4[%c0_15, %c0_16, %c0_17] : memref<9x128x128xbf16, #tpu.memory_space<vmem>>, vector<1x128x128xbf16>
    %10 = vector.shape_cast %9 : vector<1x128x128xbf16> to vector<128x128xbf16>
    %cst_18 = arith.constant dense<0.000000e+00> : vector<256x128xf32>
    %11 = tpu.matmul %8, %10, %cst_18 {dimension_numbers = #tpu.dot_dimension_numbers<[1], [0], [0], [1], [0, 0, 1, 1], [], []>} : vector<256x128xbf16>, vector<128x128xbf16>, vector<256x128xf32> -> vector<256x128xf32>
    %12 = arith.addf %6, %11 : vector<256x128xf32>
    %c0_19 = arith.constant 0 : index
    %c1 = arith.constant 1 : index
    %c0_20 = arith.constant 0 : index
    %13 = vector.load %arg8[%c0_19, %c1, %c0_20] : memref<18x18x128xbf16, #tpu.memory_space<vmem>>, vector<16x16x128xbf16>
    %14 = vector.shape_cast %13 : vector<16x16x128xbf16> to vector<256x128xbf16>
    %c1_21 = arith.constant 1 : index
    %c0_22 = arith.constant 0 : index
    %c0_23 = arith.constant 0 : index
    %15 = vector.load %arg4[%c1_21, %c0_22, %c0_23] : memref<9x128x128xbf16, #tpu.memory_space<vmem>>, vector<1x128x128xbf16>
    %16 = vector.shape_cast %15 : vector<1x128x128xbf16> to vector<128x128xbf16>
    %cst_24 = arith.constant dense<0.000000e+00> : vector<256x128xf32>
    %17 = tpu.matmul %14, %16, %cst_24 {dimension_numbers = #tpu.dot_dimension_numbers<[1], [0], [0], [1], [0, 0, 1, 1], [], []>} : vector<256x128xbf16>, vector<128x128xbf16>, vector<256x128xf32> -> vector<256x128xf32>
    %18 = arith.addf %12, %17 : vector<256x128xf32>
    %c0_25 = arith.constant 0 : index
    %c2 = arith.constant 2 : index
    %c0_26 = arith.constant 0 : index
    %19 = vector.load %arg8[%c0_25, %c2, %c0_26] : memref<18x18x128xbf16, #tpu.memory_space<vmem>>, vector<16x16x128xbf16>
    %20 = vector.shape_cast %19 : vector<16x16x128xbf16> to vector<256x128xbf16>
    %c2_27 = arith.constant 2 : index
    %c0_28 = arith.constant 0 : index
    %c0_29 = arith.constant 0 : index
    %21 = vector.load %arg4[%c2_27, %c0_28, %c0_29] : memref<9x128x128xbf16, #tpu.memory_space<vmem>>, vector<1x128x128xbf16>
    %22 = vector.shape_cast %21 : vector<1x128x128xbf16> to vector<128x128xbf16>
    %cst_30 = arith.constant dense<0.000000e+00> : vector<256x128xf32>
    %23 = tpu.matmul %20, %22, %cst_30 {dimension_numbers = #tpu.dot_dimension_numbers<[1], [0], [0], [1], [0, 0, 1, 1], [], []>} : vector<256x128xbf16>, vector<128x128xbf16>, vector<256x128xf32> -> vector<256x128xf32>
    %24 = arith.addf %18, %23 : vector<256x128xf32>
    %c1_31 = arith.constant 1 : index
    %c0_32 = arith.constant 0 : index
    %c0_33 = arith.constant 0 : index
    %25 = vector.load %arg8[%c1_31, %c0_32, %c0_33] : memref<18x18x128xbf16, #tpu.memory_space<vmem>>, vector<16x16x128xbf16>
    %26 = vector.shape_cast %25 : vector<16x16x128xbf16> to vector<256x128xbf16>
    %c3 = arith.constant 3 : index
    %c0_34 = arith.constant 0 : index
    %c0_35 = arith.constant 0 : index
    %27 = vector.load %arg4[%c3, %c0_34, %c0_35] : memref<9x128x128xbf16, #tpu.memory_space<vmem>>, vector<1x128x128xbf16>
    %28 = vector.shape_cast %27 : vector<1x128x128xbf16> to vector<128x128xbf16>
    %cst_36 = arith.constant dense<0.000000e+00> : vector<256x128xf32>
    %29 = tpu.matmul %26, %28, %cst_36 {dimension_numbers = #tpu.dot_dimension_numbers<[1], [0], [0], [1], [0, 0, 1, 1], [], []>} : vector<256x128xbf16>, vector<128x128xbf16>, vector<256x128xf32> -> vector<256x128xf32>
    %30 = arith.addf %24, %29 : vector<256x128xf32>
    %c1_37 = arith.constant 1 : index
    %c1_38 = arith.constant 1 : index
    %c0_39 = arith.constant 0 : index
    %31 = vector.load %arg8[%c1_37, %c1_38, %c0_39] : memref<18x18x128xbf16, #tpu.memory_space<vmem>>, vector<16x16x128xbf16>
    %32 = vector.shape_cast %31 : vector<16x16x128xbf16> to vector<256x128xbf16>
    %c4 = arith.constant 4 : index
    %c0_40 = arith.constant 0 : index
    %c0_41 = arith.constant 0 : index
    %33 = vector.load %arg4[%c4, %c0_40, %c0_41] : memref<9x128x128xbf16, #tpu.memory_space<vmem>>, vector<1x128x128xbf16>
    %34 = vector.shape_cast %33 : vector<1x128x128xbf16> to vector<128x128xbf16>
    %cst_42 = arith.constant dense<0.000000e+00> : vector<256x128xf32>
    %35 = tpu.matmul %32, %34, %cst_42 {dimension_numbers = #tpu.dot_dimension_numbers<[1], [0], [0], [1], [0, 0, 1, 1], [], []>} : vector<256x128xbf16>, vector<128x128xbf16>, vector<256x128xf32> -> vector<256x128xf32>
    %36 = arith.addf %30, %35 : vector<256x128xf32>
    %c1_43 = arith.constant 1 : index
    %c2_44 = arith.constant 2 : index
    %c0_45 = arith.constant 0 : index
    %37 = vector.load %arg8[%c1_43, %c2_44, %c0_45] : memref<18x18x128xbf16, #tpu.memory_space<vmem>>, vector<16x16x128xbf16>
    %38 = vector.shape_cast %37 : vector<16x16x128xbf16> to vector<256x128xbf16>
    %c5 = arith.constant 5 : index
    %c0_46 = arith.constant 0 : index
    %c0_47 = arith.constant 0 : index
    %39 = vector.load %arg4[%c5, %c0_46, %c0_47] : memref<9x128x128xbf16, #tpu.memory_space<vmem>>, vector<1x128x128xbf16>
    %40 = vector.shape_cast %39 : vector<1x128x128xbf16> to vector<128x128xbf16>
    %cst_48 = arith.constant dense<0.000000e+00> : vector<256x128xf32>
    %41 = tpu.matmul %38, %40, %cst_48 {dimension_numbers = #tpu.dot_dimension_numbers<[1], [0], [0], [1], [0, 0, 1, 1], [], []>} : vector<256x128xbf16>, vector<128x128xbf16>, vector<256x128xf32> -> vector<256x128xf32>
    %42 = arith.addf %36, %41 : vector<256x128xf32>
    %c2_49 = arith.constant 2 : index
    %c0_50 = arith.constant 0 : index
    %c0_51 = arith.constant 0 : index
    %43 = vector.load %arg8[%c2_49, %c0_50, %c0_51] : memref<18x18x128xbf16, #tpu.memory_space<vmem>>, vector<16x16x128xbf16>
    %44 = vector.shape_cast %43 : vector<16x16x128xbf16> to vector<256x128xbf16>
    %c6 = arith.constant 6 : index
    %c0_52 = arith.constant 0 : index
    %c0_53 = arith.constant 0 : index
    %45 = vector.load %arg4[%c6, %c0_52, %c0_53] : memref<9x128x128xbf16, #tpu.memory_space<vmem>>, vector<1x128x128xbf16>
    %46 = vector.shape_cast %45 : vector<1x128x128xbf16> to vector<128x128xbf16>
    %cst_54 = arith.constant dense<0.000000e+00> : vector<256x128xf32>
    %47 = tpu.matmul %44, %46, %cst_54 {dimension_numbers = #tpu.dot_dimension_numbers<[1], [0], [0], [1], [0, 0, 1, 1], [], []>} : vector<256x128xbf16>, vector<128x128xbf16>, vector<256x128xf32> -> vector<256x128xf32>
    %48 = arith.addf %42, %47 : vector<256x128xf32>
    %c2_55 = arith.constant 2 : index
    %c1_56 = arith.constant 1 : index
    %c0_57 = arith.constant 0 : index
    %49 = vector.load %arg8[%c2_55, %c1_56, %c0_57] : memref<18x18x128xbf16, #tpu.memory_space<vmem>>, vector<16x16x128xbf16>
    %50 = vector.shape_cast %49 : vector<16x16x128xbf16> to vector<256x128xbf16>
    %c7 = arith.constant 7 : index
    %c0_58 = arith.constant 0 : index
    %c0_59 = arith.constant 0 : index
    %51 = vector.load %arg4[%c7, %c0_58, %c0_59] : memref<9x128x128xbf16, #tpu.memory_space<vmem>>, vector<1x128x128xbf16>
    %52 = vector.shape_cast %51 : vector<1x128x128xbf16> to vector<128x128xbf16>
    %cst_60 = arith.constant dense<0.000000e+00> : vector<256x128xf32>
    %53 = tpu.matmul %50, %52, %cst_60 {dimension_numbers = #tpu.dot_dimension_numbers<[1], [0], [0], [1], [0, 0, 1, 1], [], []>} : vector<256x128xbf16>, vector<128x128xbf16>, vector<256x128xf32> -> vector<256x128xf32>
    %54 = arith.addf %48, %53 : vector<256x128xf32>
    %c2_61 = arith.constant 2 : index
    %c2_62 = arith.constant 2 : index
    %c0_63 = arith.constant 0 : index
    %55 = vector.load %arg8[%c2_61, %c2_62, %c0_63] : memref<18x18x128xbf16, #tpu.memory_space<vmem>>, vector<16x16x128xbf16>
    %56 = vector.shape_cast %55 : vector<16x16x128xbf16> to vector<256x128xbf16>
    %c8 = arith.constant 8 : index
    %c0_64 = arith.constant 0 : index
    %c0_65 = arith.constant 0 : index
    %57 = vector.load %arg4[%c8, %c0_64, %c0_65] : memref<9x128x128xbf16, #tpu.memory_space<vmem>>, vector<1x128x128xbf16>
    %58 = vector.shape_cast %57 : vector<1x128x128xbf16> to vector<128x128xbf16>
    %cst_66 = arith.constant dense<0.000000e+00> : vector<256x128xf32>
    %59 = tpu.matmul %56, %58, %cst_66 {dimension_numbers = #tpu.dot_dimension_numbers<[1], [0], [0], [1], [0, 0, 1, 1], [], []>} : vector<256x128xbf16>, vector<128x128xbf16>, vector<256x128xf32> -> vector<256x128xf32>
    %60 = arith.addf %54, %59 : vector<256x128xf32>
    %c0_67 = arith.constant 0 : index
    %c0_68 = arith.constant 0 : index
    %61 = vector.load %arg5[%c0_67, %c0_68] : memref<1x128xf32, #tpu.memory_space<vmem>>, vector<1x128xf32>
    %62 = vector.broadcast %61 : vector<1x128xf32> to vector<256x128xf32>
    %63 = arith.addf %60, %62 : vector<256x128xf32>
    %64 = vector.shape_cast %63 : vector<256x128xf32> to vector<1x16x16x128xf32>
    %c0_69 = arith.constant 0 : index
    %c0_70 = arith.constant 0 : index
    %c0_71 = arith.constant 0 : index
    %c0_72 = arith.constant 0 : index
    %65 = vector.load %arg6[%c0_69, %c0_70, %c0_71, %c0_72] : memref<1x16x16x128xf32, #tpu.memory_space<vmem>>, vector<1x16x16x128xf32>
    tpu.vector_store %arg6[%c0_69, %c0_70, %c0_71, %c0_72], %64 {strides = array<i32>} : memref<1x16x16x128xf32, #tpu.memory_space<vmem>>, vector<1x16x16x128xf32>,
    %cst_73 = arith.constant dense<0.000000e+00> : vector<128xf32>
    %66 = vector.multi_reduction <add>, %63, %cst_73 [0] : vector<256x128xf32> to vector<128xf32>
    %67 = vector.shape_cast %66 : vector<128xf32> to vector<1x128xf32>
    %68 = arith.mulf %63, %63 : vector<256x128xf32>
    %cst_74 = arith.constant dense<0.000000e+00> : vector<128xf32>
    %69 = vector.multi_reduction <add>, %68, %cst_74 [0] : vector<256x128xf32> to vector<128xf32>
    %70 = vector.shape_cast %69 : vector<128xf32> to vector<1x128xf32>
    %71 = tpu.concatenate %67, %70 in 0 : vector<1x128xf32>, vector<1x128xf32> -> vector<2x128xf32>
    %72 = vector.shape_cast %71 : vector<2x128xf32> to vector<1x2x128xf32>
    %c0_75 = arith.constant 0 : index
    %c0_76 = arith.constant 0 : index
    %c0_77 = arith.constant 0 : index
    %73 = vector.load %arg7[%c0_75, %c0_76, %c0_77] : memref<1x2x128xf32, #tpu.memory_space<vmem>>, vector<1x2x128xf32>
    tpu.vector_store %arg7[%c0_75, %c0_76, %c0_77], %72 {strides = array<i32>} : memref<1x2x128xf32, #tpu.memory_space<vmem>>, vector<1x2x128xf32>,
    return
  }
  func.func @transform_0(%arg0: i32, %arg1: i32) -> (i32, i32, i32, i32) {
    %c0_i32 = arith.constant 0 : i32
    %c0_i32_0 = arith.constant 0 : i32
    %c0_i32_1 = arith.constant 0 : i32
    return %arg0, %arg1, %c0_i32, %c0_i32_0 : i32, i32, i32, i32
  }
  func.func @transform_1(%arg0: i32, %arg1: i32) -> (i32, i32, i32, i32) {
    %c1_i32 = arith.constant 1 : i32
    %0 = arith.addi %arg1, %c1_i32 : i32
    %c8_i32 = arith.constant 8 : i32
    %1 = arith.muli %0, %c8_i32 : i32
    %c0_i32 = arith.constant 0 : i32
    %c0_i32_0 = arith.constant 0 : i32
    %c0_i32_1 = arith.constant 0 : i32
    return %arg0, %1, %c0_i32, %c0_i32_0 : i32, i32, i32, i32
  }
  func.func @transform_2(%arg0: i32, %arg1: i32) -> (i32, i32, i32) {
    %c0_i32 = arith.constant 0 : i32
    %c0_i32_0 = arith.constant 0 : i32
    %c0_i32_1 = arith.constant 0 : i32
    %c0_i32_2 = arith.constant 0 : i32
    return %c0_i32, %c0_i32_0, %c0_i32_1 : i32, i32, i32
  }
  func.func @transform_3(%arg0: i32, %arg1: i32) -> (i32, i32) {
    %c0_i32 = arith.constant 0 : i32
    %c0_i32_0 = arith.constant 0 : i32
    %c0_i32_1 = arith.constant 0 : i32
    return %c0_i32, %c0_i32_0 : i32, i32
  }
  func.func @transform_4(%arg0: i32, %arg1: i32) -> (i32, i32, i32, i32) {
    %c0_i32 = arith.constant 0 : i32
    %c0_i32_0 = arith.constant 0 : i32
    %c0_i32_1 = arith.constant 0 : i32
    return %arg0, %arg1, %c0_i32, %c0_i32_0 : i32, i32, i32, i32
  }
  func.func @transform_5(%arg0: i32, %arg1: i32) -> (i32, i32, i32) {
    %c1_i32 = arith.constant 1 : i32
    %0 = arith.muli %arg0, %c1_i32 : i32
    %1 = arith.addi %0, %arg1 : i32
    %c0_i32 = arith.constant 0 : i32
    %c0_i32_0 = arith.constant 0 : i32
    %c0_i32_1 = arith.constant 0 : i32
    return %1, %c0_i32, %c0_i32_0 : i32, i32, i32
  }
}

module attributes {stable_mosaic.version = 11 : i64} {
  func.func @_bn_res_relu_kernel(%arg0: i32, %arg1: memref<512x128xf32, #tpu.memory_space<vmem>>, %arg2: memref<512x128xbf16, #tpu.memory_space<vmem>>, %arg3: memref<1x128xf32, #tpu.memory_space<vmem>>, %arg4: memref<1x128xf32, #tpu.memory_space<vmem>>, %arg5: memref<512x128xbf16, #tpu.memory_space<vmem>>) attributes {dimension_semantics = [#tpu.dimension_semantics<parallel>], iteration_bounds = array<i64: 1>, scalar_prefetch = 0 : i64, scratch_operands = 0 : i64, tpu.core_type = #tpu.core_type<tc>, window_params = [{transform_indices = @transform_0, window_bounds = array<i64: 512, 128>}, {transform_indices = @transform_1, window_bounds = array<i64: 512, 128>}, {pipeline_mode = #tpu.pipeline_mode<synchronous>, transform_indices = @transform_2, window_bounds = array<i64: 1, 128>}, {pipeline_mode = #tpu.pipeline_mode<synchronous>, transform_indices = @transform_3, window_bounds = array<i64: 1, 128>}, {transform_indices = @transform_4, window_bounds = array<i64: 512, 128>}]} {
    %c0 = arith.constant 0 : index
    %c0_0 = arith.constant 0 : index
    %0 = vector.load %arg1[%c0, %c0_0] : memref<512x128xf32, #tpu.memory_space<vmem>>, vector<512x128xf32>
    %c0_1 = arith.constant 0 : index
    %c0_2 = arith.constant 0 : index
    %1 = vector.load %arg3[%c0_1, %c0_2] : memref<1x128xf32, #tpu.memory_space<vmem>>, vector<1x128xf32>
    %2 = vector.broadcast %1 : vector<1x128xf32> to vector<512x128xf32>
    %3 = arith.mulf %0, %2 : vector<512x128xf32>
    %c0_3 = arith.constant 0 : index
    %c0_4 = arith.constant 0 : index
    %4 = vector.load %arg4[%c0_3, %c0_4] : memref<1x128xf32, #tpu.memory_space<vmem>>, vector<1x128xf32>
    %5 = vector.broadcast %4 : vector<1x128xf32> to vector<512x128xf32>
    %6 = arith.addf %3, %5 : vector<512x128xf32>
    %c0_5 = arith.constant 0 : index
    %c0_6 = arith.constant 0 : index
    %7 = vector.load %arg2[%c0_5, %c0_6] : memref<512x128xbf16, #tpu.memory_space<vmem>>, vector<512x128xbf16>
    %8 = arith.extf %7 : vector<512x128xbf16> to vector<512x128xf32>
    %9 = arith.addf %6, %8 : vector<512x128xf32>
    %cst = arith.constant 0.000000e+00 : f32
    %10 = vector.broadcast %cst : f32 to vector<512x128xf32>
    %11 = arith.maximumf %9, %10 : vector<512x128xf32>
    %12 = arith.truncf %11 : vector<512x128xf32> to vector<512x128xbf16>
    %c0_7 = arith.constant 0 : index
    %c0_8 = arith.constant 0 : index
    %13 = vector.load %arg5[%c0_7, %c0_8] : memref<512x128xbf16, #tpu.memory_space<vmem>>, vector<512x128xbf16>
    tpu.vector_store %arg5[%c0_7, %c0_8], %12 {strides = array<i32>} : memref<512x128xbf16, #tpu.memory_space<vmem>>, vector<512x128xbf16>,
    return
  }
  func.func @transform_0(%arg0: i32) -> (i32, i32) {
    %c0_i32 = arith.constant 0 : i32
    %c0_i32_0 = arith.constant 0 : i32
    return %arg0, %c0_i32 : i32, i32
  }
  func.func @transform_1(%arg0: i32) -> (i32, i32) {
    %c0_i32 = arith.constant 0 : i32
    %c0_i32_0 = arith.constant 0 : i32
    return %arg0, %c0_i32 : i32, i32
  }
  func.func @transform_2(%arg0: i32) -> (i32, i32) {
    %c0_i32 = arith.constant 0 : i32
    %c0_i32_0 = arith.constant 0 : i32
    %c0_i32_1 = arith.constant 0 : i32
    return %c0_i32, %c0_i32_0 : i32, i32
  }
  func.func @transform_3(%arg0: i32) -> (i32, i32) {
    %c0_i32 = arith.constant 0 : i32
    %c0_i32_0 = arith.constant 0 : i32
    %c0_i32_1 = arith.constant 0 : i32
    return %c0_i32, %c0_i32_0 : i32, i32
  }
  func.func @transform_4(%arg0: i32) -> (i32, i32) {
    %c0_i32 = arith.constant 0 : i32
    %c0_i32_0 = arith.constant 0 : i32
    return %arg0, %c0_i32 : i32, i32
  }
}

</mosaic_0001>

<llo_original>
// kernel: tile.8
$region0: #{tile.8}
  #allocation0 [shape = 's32[1]{0}', space=sflag, size = 0x4, scoped, tag = 'scoped memory for tile.8']
  %s0 = inlined_call_operand.vmem [shape: f32[128], index: 0, kind: input, shape index: {}]
  %s1 = inlined_call_operand.vmem [shape: f32[4,128], index: 1, kind: output, shape index: {}]
  // Predicated region
  $region2: #{tile.8} parent=0 // pred_check
    _
  $region3: #{tile.8} parent=0 // pred_check_branch
    %3 = sbr.rel (0) target = $region5
  $region4: #{tile.8} parent=0 // pred_region
    _
  $region5: #{tile.8} parent=0 // pred_fallthru
    _
  %v4 = vld [vmem:[%s0] ss:$0 sm:$0xff]
  %5 = vst [vmem:[%s1] sm:$0xf] %v4

// kernel: upconvd_forward.6
$region0: #{upconvd_forward.6}
  #allocation0 [shape = 'u32[]', space=smem, size = 0x4, offset = 0x4, fixed_abs, tag = 'smem constant byte address 0x4 - core index']
  #allocation1 [shape = 'u32[72,128]{1,0:T(1,128)}', space=vmem, size = 0x9000, scoped, tag = 'internal scratch']
  %s0 = inlined_call_operand.vmem [shape: bf16[128,128], index: 0, kind: input, shape index: {}]
  %s1 = inlined_call_operand.vmem [shape: bf16[128,512], index: 1, kind: input, shape index: {}]
  %s2 = inlined_call_operand.vmem [shape: f32[1,512], index: 2, kind: input, shape index: {}]
  %s3 = inlined_call_operand.vmem [shape: bf16[128,512], index: 3, kind: output, shape index: {}]
  %s4 = sld [smem:[#allocation0]]
  $region22: #{upconvd_forward.6} parent=0
    _
  %s6 = ssub.s32 1, %s4
  %s7 = scalar_select 0, %s6, %s4
  // Predicated region
  $region2: #{upconvd_forward.6} parent=0 // pred_check
    _
  $region3: #{upconvd_forward.6} parent=0 // pred_check_branch
    %9 = sbr.rel (0) target = $region5
  $region4: #{upconvd_forward.6} parent=0 // pred_region
    _
  $region5: #{upconvd_forward.6} parent=0 // pred_fallthru
    _
  // Predicated region
  $region6: #{upconvd_forward.6} parent=0 // pred_check
    _
  $region7: #{upconvd_forward.6} parent=0 // pred_check_branch
    %11 = sbr.rel (0) target = $region9
  $region8: #{upconvd_forward.6} parent=0 // pred_region
    _
  $region9: #{upconvd_forward.6} parent=0 // pred_fallthru
    _
  // Predicated region
  $region10: #{upconvd_forward.6} parent=0 // pred_check
    _
  $region11: #{upconvd_forward.6} parent=0 // pred_check_branch
    %13 = sbr.rel (0) target = $region13
  $region12: #{upconvd_forward.6} parent=0 // pred_region
    _
  $region13: #{upconvd_forward.6} parent=0 // pred_fallthru
    _
  %v14 = vld [vmem:[%s0] sm:$0xf]
  %v15 = vld [vmem:[%s0 + $0x4] sm:$0xf]
  %v16 = vld [vmem:[%s0 + $0x8] sm:$0xf]
  %v17 = vld [vmem:[%s0 + $0xc] sm:$0xf]
  %v18 = vld [vmem:[%s0 + $0x10] sm:$0xf]
  %v19 = vld [vmem:[%s0 + $0x14] sm:$0xf]
  %v20 = vld [vmem:[%s0 + $0x18] sm:$0xf]
  %v21 = vld [vmem:[%s0 + $0x1c] sm:$0xf]
  %v22 = vld [vmem:[%s0 + $0x20] sm:$0xf]
  %v23 = vld [vmem:[%s0 + $0x24] sm:$0xf]
  %v24 = vld [vmem:[%s0 + $0x28] sm:$0xf]
  %v25 = vld [vmem:[%s0 + $0x2c] sm:$0xf]
  %v26 = vld [vmem:[%s0 + $0x30] sm:$0xf]
  %v27 = vld [vmem:[%s0 + $0x34] sm:$0xf]
  %v28 = vld [vmem:[%s0 + $0x38] sm:$0xf]
  %v29 = vld [vmem:[%s0 + $0x3c] sm:$0xf]
  %v30 = vld [vmem:[%s1] sm:$0xff]
  %v31 = vld [vmem:[%s1 + $0x8] sm:$0xff]
  %v32 = vld [vmem:[%s1 + $0x10] sm:$0xff]
  %v33 = vld [vmem:[%s1 + $0x18] sm:$0xff]
  %v34 = vld [vmem:[%s1 + $0x20] sm:$0xff]
  %v35 = vld [vmem:[%s1 + $0x28] sm:$0xff]
  %v36 = vld [vmem:[%s1 + $0x30] sm:$0xff]
  %v37 = vld [vmem:[%s1 + $0x38] sm:$0xff]
  %v38 = vld [vmem:[%s1 + $0x40] sm:$0xff]
  %v39 = vld [vmem:[%s1 + $0x48] sm:$0xff]
  %v40 = vld [vmem:[%s1 + $0x50] sm:$0xff]
  %v41 = vld [vmem:[%s1 + $0x58] sm:$0xff]
  %v42 = vld [vmem:[%s1 + $0x60] sm:$0xff]
  %v43 = vld [vmem:[%s1 + $0x68] sm:$0xff]
  %v44 = vld [vmem:[%s1 + $0x70] sm:$0xff]
  %v45 = vld [vmem:[%s1 + $0x78] sm:$0xff]
  %v46 = vld [vmem:[%s1 + $0x80] sm:$0xff]
  %v47 = vld [vmem:[%s1 + $0x88] sm:$0xff]
  %v48 = vld [vmem:[%s1 + $0x90] sm:$0xff]
  %v49 = vld [vmem:[%s1 + $0x98] sm:$0xff]
  %v50 = vld [vmem:[%s1 + $0xa0] sm:$0xff]
  %v51 = vld [vmem:[%s1 + $0xa8] sm:$0xff]
  %v52 = vld [vmem:[%s1 + $0xb0] sm:$0xff]
  %v53 = vld [vmem:[%s1 + $0xb8] sm:$0xff]
  %v54 = vld [vmem:[%s1 + $0xc0] sm:$0xff]
  %v55 = vld [vmem:[%s1 + $0xc8] sm:$0xff]
  %v56 = vld [vmem:[%s1 + $0xd0] sm:$0xff]
  %v57 = vld [vmem:[%s1 + $0xd8] sm:$0xff]
  %v58 = vld [vmem:[%s1 + $0xe0] sm:$0xff]
  %v59 = vld [vmem:[%s1 + $0xe8] sm:$0xff]
  %v60 = vld [vmem:[%s1 + $0xf0] sm:$0xff]
  %v61 = vld [vmem:[%s1 + $0xf8] sm:$0xff]
  %v62 = vld [vmem:[%s2] sm:$0xf]
  %v64 = vperm.slane %v62, 0
  %v65 = vperm.slane %v62, 1
  %v66 = vperm.slane %v62, 2
  %v67 = vperm.slane %v62, 3
  %v88 = vunpack.c.l.b16 %v14
  %v89 = vunpack.c.l.b16 %v15
  %v90 = vunpack.c.l.b16 %v16
  %v91 = vunpack.c.l.b16 %v17
  %v92 = vunpack.c.l.b16 %v18
  %v93 = vunpack.c.l.b16 %v19
  %v94 = vunpack.c.l.b16 %v20
  %v95 = vunpack.c.l.b16 %v21
  %v96 = vunpack.c.l.b16 %v22
  %v97 = vunpack.c.l.b16 %v23
  %v98 = vunpack.c.l.b16 %v24
  %v99 = vunpack.c.l.b16 %v25
  %v100 = vunpack.c.l.b16 %v26
  %v101 = vunpack.c.l.b16 %v27
  %v102 = vunpack.c.l.b16 %v28
  %v103 = vunpack.c.l.b16 %v29
  %v104 = vpack.c.b16 %v89, %v88
  %v105 = vpack.c.b16 %v91, %v90
  %v106 = vpack.c.b16 %v93, %v92
  %v107 = vpack.c.b16 %v95, %v94
  %v108 = vpack.c.b16 %v97, %v96
  %v109 = vpack.c.b16 %v99, %v98
  %v110 = vpack.c.b16 %v101, %v100
  %v111 = vpack.c.b16 %v103, %v102
  %v152 = vunpack.c.l.b16 %v30
  %v153 = vunpack.c.h.b16 %v30
  %v154 = vunpack.c.l.b16 %v31
  %v155 = vunpack.c.h.b16 %v31
  %v156 = vunpack.c.l.b16 %v32
  %v157 = vunpack.c.h.b16 %v32
  %v158 = vunpack.c.l.b16 %v33
  %v159 = vunpack.c.h.b16 %v33
  %v160 = vunpack.c.l.b16 %v34
  %v161 = vunpack.c.h.b16 %v34
  %v162 = vunpack.c.l.b16 %v35
  %v163 = vunpack.c.h.b16 %v35
  %v164 = vunpack.c.l.b16 %v36
  %v165 = vunpack.c.h.b16 %v36
  %v166 = vunpack.c.l.b16 %v37
  %v167 = vunpack.c.h.b16 %v37
  %v168 = vunpack.c.l.b16 %v38
  %v169 = vunpack.c.h.b16 %v38
  %v170 = vunpack.c.l.b16 %v39
  %v171 = vunpack.c.h.b16 %v39
  %v172 = vunpack.c.l.b16 %v40
  %v173 = vunpack.c.h.b16 %v40
  %v174 = vunpack.c.l.b16 %v41
  %v175 = vunpack.c.h.b16 %v41
  %v176 = vunpack.c.l.b16 %v42
  %v177 = vunpack.c.h.b16 %v42
  %v178 = vunpack.c.l.b16 %v43
  %v179 = vunpack.c.h.b16 %v43
  %v180 = vunpack.c.l.b16 %v44
  %v181 = vunpack.c.h.b16 %v44
  %v182 = vunpack.c.l.b16 %v45
  %v183 = vunpack.c.h.b16 %v45
  %v184 = vunpack.c.l.b16 %v46
  %v185 = vunpack.c.h.b16 %v46
  %v186 = vunpack.c.l.b16 %v47
  %v187 = vunpack.c.h.b16 %v47
  %v188 = vunpack.c.l.b16 %v48
  %v189 = vunpack.c.h.b16 %v48
  %v190 = vunpack.c.l.b16 %v49
  %v191 = vunpack.c.h.b16 %v49
  %v192 = vunpack.c.l.b16 %v50
  %v193 = vunpack.c.h.b16 %v50
  %v194 = vunpack.c.l.b16 %v51
  %v195 = vunpack.c.h.b16 %v51
  %v196 = vunpack.c.l.b16 %v52
  %v197 = vunpack.c.h.b16 %v52
  %v198 = vunpack.c.l.b16 %v53
  %v199 = vunpack.c.h.b16 %v53
  %v200 = vunpack.c.l.b16 %v54
  %v201 = vunpack.c.h.b16 %v54
  %v202 = vunpack.c.l.b16 %v55
  %v203 = vunpack.c.h.b16 %v55
  %v204 = vunpack.c.l.b16 %v56
  %v205 = vunpack.c.h.b16 %v56
  %v206 = vunpack.c.l.b16 %v57
  %v207 = vunpack.c.h.b16 %v57
  %v208 = vunpack.c.l.b16 %v58
  %v209 = vunpack.c.h.b16 %v58
  %v210 = vunpack.c.l.b16 %v59
  %v211 = vunpack.c.h.b16 %v59
  %v212 = vunpack.c.l.b16 %v60
  %v213 = vunpack.c.h.b16 %v60
  %v214 = vunpack.c.l.b16 %v61
  %v215 = vunpack.c.h.b16 %v61
  %v216 = vpack.c.b16 %v156, %v152
  %v217 = vpack.c.b16 %v157, %v153
  %v218 = vpack.c.b16 %v158, %v154
  %v219 = vpack.c.b16 %v159, %v155
  %v220 = vpack.c.b16 %v164, %v160
  %v221 = vpack.c.b16 %v165, %v161
  %v222 = vpack.c.b16 %v166, %v162
  %v223 = vpack.c.b16 %v167, %v163
  %v224 = vpack.c.b16 %v172, %v168
  %v225 = vpack.c.b16 %v173, %v169
  %v226 = vpack.c.b16 %v174, %v170
  %v227 = vpack.c.b16 %v175, %v171
  %v228 = vpack.c.b16 %v180, %v176
  %v229 = vpack.c.b16 %v181, %v177
  %v230 = vpack.c.b16 %v182, %v178
  %v231 = vpack.c.b16 %v183, %v179
  %v232 = vpack.c.b16 %v188, %v184
  %v233 = vpack.c.b16 %v189, %v185
  %v234 = vpack.c.b16 %v190, %v186
  %v235 = vpack.c.b16 %v191, %v187
  %v236 = vpack.c.b16 %v196, %v192
  %v237 = vpack.c.b16 %v197, %v193
  %v238 = vpack.c.b16 %v198, %v194
  %v239 = vpack.c.b16 %v199, %v195
  %v240 = vpack.c.b16 %v204, %v200
  %v241 = vpack.c.b16 %v205, %v201
  %v242 = vpack.c.b16 %v206, %v202
  %v243 = vpack.c.b16 %v207, %v203
  %v244 = vpack.c.b16 %v212, %v208
  %v245 = vpack.c.b16 %v213, %v209
  %v246 = vpack.c.b16 %v214, %v210
  %v247 = vpack.c.b16 %v215, %v211
  %280 = vmatpush.bf16.msra.mxu0 %v244
  %281 = vmatpush.bf16.msra.mxu0 %v240
  %282 = vmatpush.bf16.msra.mxu0 %v236
  %283 = vmatpush.bf16.msra.mxu0 %v232
  %284 = vmatpush.bf16.msra.mxu0 %v228
  %285 = vmatpush.bf16.msra.mxu0 %v224
  %286 = vmatpush.bf16.msra.mxu0 %v220
  %287 = vmatpush.bf16.msra.mxu0 %v216
  %288 = vmatmul.bf16.gmra.mxu0 %v104
  %v289 = vpop.f32.mrf.mxu0
  %v290 = vadd.f32 %v64, %v289
  %v291 = vpop.f32.mrf.mxu0
  %v292 = vadd.f32 %v64, %v291
  %293 = vmatmul.bf16.gmra.mxu0 %v105
  %v294 = vpop.f32.mrf.mxu0
  %v295 = vadd.f32 %v64, %v294
  %v296 = vpop.f32.mrf.mxu0
  %v297 = vadd.f32 %v64, %v296
  %298 = vmatmul.bf16.gmra.mxu0 %v106
  %v299 = vpop.f32.mrf.mxu0
  %v300 = vadd.f32 %v64, %v299
  %v301 = vpop.f32.mrf.mxu0
  %v302 = vadd.f32 %v64, %v301
  %303 = vmatmul.bf16.gmra.mxu0 %v107
  %v304 = vpop.f32.mrf.mxu0
  %v305 = vadd.f32 %v64, %v304
  %v306 = vpop.f32.mrf.mxu0
  %v307 = vadd.f32 %v64, %v306
  %308 = vmatmul.bf16.gmra.mxu0 %v108
  %v309 = vpop.f32.mrf.mxu0
  %v310 = vadd.f32 %v64, %v309
  %v311 = vpop.f32.mrf.mxu0
  %v312 = vadd.f32 %v64, %v311
  %313 = vmatmul.bf16.gmra.mxu0 %v109
  %v314 = vpop.f32.mrf.mxu0
  %v315 = vadd.f32 %v64, %v314
  %v316 = vpop.f32.mrf.mxu0
  %v317 = vadd.f32 %v64, %v316
  %318 = vmatmul.bf16.gmra.mxu0 %v110
  %v319 = vpop.f32.mrf.mxu0
  %v320 = vadd.f32 %v64, %v319
  %v321 = vpop.f32.mrf.mxu0
  %v322 = vadd.f32 %v64, %v321
  %323 = vmatmul.bf16.gmra.mxu0 %v111
  %v324 = vpop.f32.mrf.mxu0
  %v325 = vadd.f32 %v64, %v324
  %v326 = vpop.f32.mrf.mxu0
  %v327 = vadd.f32 %v64, %v326
  %328 = vdwg.mxu0
  %329 = vmatpush.bf16.msra.mxu0 %v245
  %330 = vmatpush.bf16.msra.mxu0 %v241
  %331 = vmatpush.bf16.msra.mxu0 %v237
  %332 = vmatpush.bf16.msra.mxu0 %v233
  %333 = vmatpush.bf16.msra.mxu0 %v229
  %334 = vmatpush.bf16.msra.mxu0 %v225
  %335 = vmatpush.bf16.msra.mxu0 %v221
  %336 = vmatpush.bf16.msra.mxu0 %v217
  %337 = vmatmul.bf16.gmra.mxu0 %v104
  %v338 = vpop.f32.mrf.mxu0
  %v339 = vadd.f32 %v65, %v338
  %v340 = vpop.f32.mrf.mxu0
  %v341 = vadd.f32 %v65, %v340
  %342 = vmatmul.bf16.gmra.mxu0 %v105
  %v343 = vpop.f32.mrf.mxu0
  %v344 = vadd.f32 %v65, %v343
  %v345 = vpop.f32.mrf.mxu0
  %v346 = vadd.f32 %v65, %v345
  %347 = vmatmul.bf16.gmra.mxu0 %v106
  %v348 = vpop.f32.mrf.mxu0
  %v349 = vadd.f32 %v65, %v348
  %v350 = vpop.f32.mrf.mxu0
  %v351 = vadd.f32 %v65, %v350
  %352 = vmatmul.bf16.gmra.mxu0 %v107
  %v353 = vpop.f32.mrf.mxu0
  %v354 = vadd.f32 %v65, %v353
  %v355 = vpop.f32.mrf.mxu0
  %v356 = vadd.f32 %v65, %v355
  %357 = vmatmul.bf16.gmra.mxu0 %v108
  %v358 = vpop.f32.mrf.mxu0
  %v359 = vadd.f32 %v65, %v358
  %v360 = vpop.f32.mrf.mxu0
  %v361 = vadd.f32 %v65, %v360
  %362 = vmatmul.bf16.gmra.mxu0 %v109
  %v363 = vpop.f32.mrf.mxu0
  %v364 = vadd.f32 %v65, %v363
  %v365 = vpop.f32.mrf.mxu0
  %v366 = vadd.f32 %v65, %v365
  %367 = vmatmul.bf16.gmra.mxu0 %v110
  %v368 = vpop.f32.mrf.mxu0
  %v369 = vadd.f32 %v65, %v368
  %v370 = vpop.f32.mrf.mxu0
  %v371 = vadd.f32 %v65, %v370
  %372 = vmatmul.bf16.gmra.mxu0 %v111
  %v373 = vpop.f32.mrf.mxu0
  %v374 = vadd.f32 %v65, %v373
  %v375 = vpop.f32.mrf.mxu0
  %v376 = vadd.f32 %v65, %v375
  %377 = vdwg.mxu0
  %378 = vmatpush.bf16.msra.mxu0 %v246
  %379 = vmatpush.bf16.msra.mxu0 %v242
  %380 = vmatpush.bf16.msra.mxu0 %v238
  %381 = vmatpush.bf16.msra.mxu0 %v234
  %382 = vmatpush.bf16.msra.mxu0 %v230
  %383 = vmatpush.bf16.msra.mxu0 %v226
  %384 = vmatpush.bf16.msra.mxu0 %v222
  %385 = vmatpush.bf16.msra.mxu0 %v218
  %386 = vmatmul.bf16.gmra.mxu0 %v104
  %v387 = vpop.f32.mrf.mxu0
  %v388 = vadd.f32 %v66, %v387
  %v389 = vpop.f32.mrf.mxu0
  %v390 = vadd.f32 %v66, %v389
  %391 = vmatmul.bf16.gmra.mxu0 %v105
  %v392 = vpop.f32.mrf.mxu0
  %v393 = vadd.f32 %v66, %v392
  %v394 = vpop.f32.mrf.mxu0
  %v395 = vadd.f32 %v66, %v394
  %396 = vmatmul.bf16.gmra.mxu0 %v106
  %v397 = vpop.f32.mrf.mxu0
  %v398 = vadd.f32 %v66, %v397
  %v399 = vpop.f32.mrf.mxu0
  %v400 = vadd.f32 %v66, %v399
  %401 = vmatmul.bf16.gmra.mxu0 %v107
  %v402 = vpop.f32.mrf.mxu0
  %v403 = vadd.f32 %v66, %v402
  %v404 = vpop.f32.mrf.mxu0
  %v405 = vadd.f32 %v66, %v404
  %406 = vmatmul.bf16.gmra.mxu0 %v108
  %v407 = vpop.f32.mrf.mxu0
  %v408 = vadd.f32 %v66, %v407
  %v409 = vpop.f32.mrf.mxu0
  %v410 = vadd.f32 %v66, %v409
  %411 = vmatmul.bf16.gmra.mxu0 %v109
  %v412 = vpop.f32.mrf.mxu0
  %v413 = vadd.f32 %v66, %v412
  %v414 = vpop.f32.mrf.mxu0
  %v415 = vadd.f32 %v66, %v414
  %416 = vmatmul.bf16.gmra.mxu0 %v110
  %v417 = vpop.f32.mrf.mxu0
  %v418 = vadd.f32 %v66, %v417
  %v419 = vpop.f32.mrf.mxu0
  %v420 = vadd.f32 %v66, %v419
  %421 = vmatmul.bf16.gmra.mxu0 %v111
  %v422 = vpop.f32.mrf.mxu0
  %v423 = vadd.f32 %v66, %v422
  %v424 = vpop.f32.mrf.mxu0
  %v425 = vadd.f32 %v66, %v424
  %426 = vdwg.mxu0
  %427 = vmatpush.bf16.msra.mxu0 %v247
  %428 = vmatpush.bf16.msra.mxu0 %v243
  %429 = vmatpush.bf16.msra.mxu0 %v239
  %430 = vmatpush.bf16.msra.mxu0 %v235
  %431 = vmatpush.bf16.msra.mxu0 %v231
  %432 = vmatpush.bf16.msra.mxu0 %v227
  %433 = vmatpush.bf16.msra.mxu0 %v223
  %434 = vmatpush.bf16.msra.mxu0 %v219
  %435 = vmatmul.bf16.gmra.mxu0 %v104
  %v436 = vpop.f32.mrf.mxu0
  %v437 = vadd.f32 %v67, %v436
  %v438 = vpop.f32.mrf.mxu0
  %v439 = vadd.f32 %v67, %v438
  %440 = vmatmul.bf16.gmra.mxu0 %v105
  %v441 = vpop.f32.mrf.mxu0
  %v442 = vadd.f32 %v67, %v441
  %v443 = vpop.f32.mrf.mxu0
  %v444 = vadd.f32 %v67, %v443
  %445 = vmatmul.bf16.gmra.mxu0 %v106
  %v446 = vpop.f32.mrf.mxu0
  %v447 = vadd.f32 %v67, %v446
  %v448 = vpop.f32.mrf.mxu0
  %v449 = vadd.f32 %v67, %v448
  %450 = vmatmul.bf16.gmra.mxu0 %v107
  %v451 = vpop.f32.mrf.mxu0
  %v452 = vadd.f32 %v67, %v451
  %v453 = vpop.f32.mrf.mxu0
  %v454 = vadd.f32 %v67, %v453
  %455 = vmatmul.bf16.gmra.mxu0 %v108
  %v456 = vpop.f32.mrf.mxu0
  %v457 = vadd.f32 %v67, %v456
  %v458 = vpop.f32.mrf.mxu0
  %v459 = vadd.f32 %v67, %v458
  %460 = vmatmul.bf16.gmra.mxu0 %v109
  %v461 = vpop.f32.mrf.mxu0
  %v462 = vadd.f32 %v67, %v461
  %v463 = vpop.f32.mrf.mxu0
  %v464 = vadd.f32 %v67, %v463
  %465 = vmatmul.bf16.gmra.mxu0 %v110
  %v466 = vpop.f32.mrf.mxu0
  %v467 = vadd.f32 %v67, %v466
  %v468 = vpop.f32.mrf.mxu0
  %v469 = vadd.f32 %v67, %v468
  %470 = vmatmul.bf16.gmra.mxu0 %v111
  %v471 = vpop.f32.mrf.mxu0
  %v472 = vadd.f32 %v67, %v471
  %v473 = vpop.f32.mrf.mxu0
  %v474 = vadd.f32 %v67, %v473
  %475 = vdwg.mxu0
  %v476 = vpack.c.bf16 %v339, %v290
  %v477 = vpack.c.bf16 %v437, %v388
  %v478 = vpack.c.bf16 %v341, %v292
  %v479 = vpack.c.bf16 %v439, %v390
  %v480 = vpack.c.bf16 %v344, %v295
  %v481 = vpack.c.bf16 %v442, %v393
  %v482 = vpack.c.bf16 %v346, %v297
  %v483 = vpack.c.bf16 %v444, %v395
  %v484 = vpack.c.bf16 %v349, %v300
  %v485 = vpack.c.bf16 %v447, %v398
  %v486 = vpack.c.bf16 %v351, %v302
  %v487 = vpack.c.bf16 %v449, %v400
  %v488 = vpack.c.bf16 %v354, %v305
  %v489 = vpack.c.bf16 %v452, %v403
  %v490 = vpack.c.bf16 %v356, %v307
  %v491 = vpack.c.bf16 %v454, %v405
  %v492 = vpack.c.bf16 %v359, %v310
  %v493 = vpack.c.bf16 %v457, %v408
  %v494 = vpack.c.bf16 %v361, %v312
  %v495 = vpack.c.bf16 %v459, %v410
  %v496 = vpack.c.bf16 %v364, %v315
  %v497 = vpack.c.bf16 %v462, %v413
  %v498 = vpack.c.bf16 %v366, %v317
  %v499 = vpack.c.bf16 %v464, %v415
  %v500 = vpack.c.bf16 %v369, %v320
  %v501 = vpack.c.bf16 %v467, %v418
  %v502 = vpack.c.bf16 %v371, %v322
  %v503 = vpack.c.bf16 %v469, %v420
  %v504 = vpack.c.bf16 %v374, %v325
  %v505 = vpack.c.bf16 %v472, %v423
  %v506 = vpack.c.bf16 %v376, %v327
  %v507 = vpack.c.bf16 %v474, %v425
  %508 = vst [vmem:[%s3] sm:$0xff] %v476
  %509 = vst [vmem:[%s3 + $0x8] sm:$0xff] %v477
  %510 = vst [vmem:[%s3 + $0x10] sm:$0xff] %v478
  %511 = vst [vmem:[%s3 + $0x18] sm:$0xff] %v479
  %512 = vst [vmem:[%s3 + $0x20] sm:$0xff] %v480
  %513 = vst [vmem:[%s3 + $0x28] sm:$0xff] %v481
  %514 = vst [vmem:[%s3 + $0x30] sm:$0xff] %v482
  %515 = vst [vmem:[%s3 + $0x38] sm:$0xff] %v483
  %516 = vst [vmem:[%s3 + $0x40] sm:$0xff] %v484
  %517 = vst [vmem:[%s3 + $0x48] sm:$0xff] %v485
  %518 = vst [vmem:[%s3 + $0x50] sm:$0xff] %v486
  %519 = vst [vmem:[%s3 + $0x58] sm:$0xff] %v487
  %520 = vst [vmem:[%s3 + $0x60] sm:$0xff] %v488
  %521 = vst [vmem:[%s3 + $0x68] sm:$0xff] %v489
  %522 = vst [vmem:[%s3 + $0x70] sm:$0xff] %v490
  %523 = vst [vmem:[%s3 + $0x78] sm:$0xff] %v491
  %524 = vst [vmem:[%s3 + $0x80] sm:$0xff] %v492
  %525 = vst [vmem:[%s3 + $0x88] sm:$0xff] %v493
  %526 = vst [vmem:[%s3 + $0x90] sm:$0xff] %v494
  %527 = vst [vmem:[%s3 + $0x98] sm:$0xff] %v495
  %528 = vst [vmem:[%s3 + $0xa0] sm:$0xff] %v496
  %529 = vst [vmem:[%s3 + $0xa8] sm:$0xff] %v497
  %530 = vst [vmem:[%s3 + $0xb0] sm:$0xff] %v498
  %531 = vst [vmem:[%s3 + $0xb8] sm:$0xff] %v499
  %532 = vst [vmem:[%s3 + $0xc0] sm:$0xff] %v500
  %533 = vst [vmem:[%s3 + $0xc8] sm:$0xff] %v501
  %534 = vst [vmem:[%s3 + $0xd0] sm:$0xff] %v502
  %535 = vst [vmem:[%s3 + $0xd8] sm:$0xff] %v503
  %536 = vst [vmem:[%s3 + $0xe0] sm:$0xff] %v504
  %537 = vst [vmem:[%s3 + $0xe8] sm:$0xff] %v505
  %538 = vst [vmem:[%s3 + $0xf0] sm:$0xff] %v506
  %539 = vst [vmem:[%s3 + $0xf8] sm:$0xff] %v507
  // Predicated region
  $region14: #{upconvd_forward.6} parent=0 // pred_check
    _
  $region15: #{upconvd_forward.6} parent=0 // pred_check_branch
    %541 = sbr.rel (0) target = $region17
  $region16: #{upconvd_forward.6} parent=0 // pred_region
    _
  $region17: #{upconvd_forward.6} parent=0 // pred_fallthru
    _
  // Predicated region
  $region18: #{upconvd_forward.6} parent=0 // pred_check
    _
  $region19: #{upconvd_forward.6} parent=0 // pred_check_branch
    %543 = sbr.rel (0) target = $region21
  $region20: #{upconvd_forward.6} parent=0 // pred_region
    _
  $region21: #{upconvd_forward.6} parent=0 // pred_fallthru
    _

// kernel: upconvd_forward.9
$region0: #{upconvd_forward.9}
  #allocation0 [shape = 'u32[]', space=smem, size = 0x4, offset = 0x4, fixed_abs, tag = 'smem constant byte address 0x4 - core index']
  #allocation1 [shape = 'u32[72,128]{1,0:T(1,128)}', space=vmem, size = 0x9000, scoped, tag = 'internal scratch']
  %s0 = inlined_call_operand.vmem [shape: f32[512,128], index: 0, kind: input, shape index: {}]
  %s1 = inlined_call_operand.vmem [shape: bf16[512,128], index: 1, kind: input, shape index: {}]
  %s2 = inlined_call_operand.vmem [shape: f32[1,128], index: 2, kind: input, shape index: {}]
  %s3 = inlined_call_operand.vmem [shape: f32[1,128], index: 3, kind: input, shape index: {}]
  %s4 = inlined_call_operand.vmem [shape: bf16[512,128], index: 4, kind: output, shape index: {}]
  %s5 = sld [smem:[#allocation0]]
  $region26: #{upconvd_forward.9} parent=0
    _
  %s7 = ssub.s32 1, %s5
  %s8 = scalar_select 0, %s7, %s5
  // Predicated region
  $region2: #{upconvd_forward.9} parent=0 // pred_check
    _
  $region3: #{upconvd_forward.9} parent=0 // pred_check_branch
    %10 = sbr.rel (0) target = $region5
  $region4: #{upconvd_forward.9} parent=0 // pred_region
    _
  $region5: #{upconvd_forward.9} parent=0 // pred_fallthru
    _
  // Predicated region
  $region6: #{upconvd_forward.9} parent=0 // pred_check
    _
  $region7: #{upconvd_forward.9} parent=0 // pred_check_branch
    %12 = sbr.rel (0) target = $region9
  $region8: #{upconvd_forward.9} parent=0 // pred_region
    _
  $region9: #{upconvd_forward.9} parent=0 // pred_fallthru
    _
  // Predicated region
  $region10: #{upconvd_forward.9} parent=0 // pred_check
    _
  $region11: #{upconvd_forward.9} parent=0 // pred_check_branch
    %14 = sbr.rel (0) target = $region13
  $region12: #{upconvd_forward.9} parent=0 // pred_region
    _
  $region13: #{upconvd_forward.9} parent=0 // pred_fallthru
    _
  // Predicated region
  $region14: #{upconvd_forward.9} parent=0 // pred_check
    _
  $region15: #{upconvd_forward.9} parent=0 // pred_check_branch
    %16 = sbr.rel (0) target = $region17
  $region16: #{upconvd_forward.9} parent=0 // pred_region
    _
  $region17: #{upconvd_forward.9} parent=0 // pred_fallthru
    _
  %v17 = vld [vmem:[%s0] sm:$0xff]
  %v18 = vld [vmem:[%s0 + $0x8] sm:$0xff]
  %v19 = vld [vmem:[%s0 + $0x10] sm:$0xff]
  %v20 = vld [vmem:[%s0 + $0x18] sm:$0xff]
  %v21 = vld [vmem:[%s0 + $0x20] sm:$0xff]
  %v22 = vld [vmem:[%s0 + $0x28] sm:$0xff]
  %v23 = vld [vmem:[%s0 + $0x30] sm:$0xff]
  %v24 = vld [vmem:[%s0 + $0x38] sm:$0xff]
  %v25 = vld [vmem:[%s0 + $0x40] sm:$0xff]
  %v26 = vld [vmem:[%s0 + $0x48] sm:$0xff]
  %v27 = vld [vmem:[%s0 + $0x50] sm:$0xff]
  %v28 = vld [vmem:[%s0 + $0x58] sm:$0xff]
  %v29 = vld [vmem:[%s0 + $0x60] sm:$0xff]
  %v30 = vld [vmem:[%s0 + $0x68] sm:$0xff]
  %v31 = vld [vmem:[%s0 + $0x70] sm:$0xff]
  %v32 = vld [vmem:[%s0 + $0x78] sm:$0xff]
  %v33 = vld [vmem:[%s0 + $0x80] sm:$0xff]
  %v34 = vld [vmem:[%s0 + $0x88] sm:$0xff]
  %v35 = vld [vmem:[%s0 + $0x90] sm:$0xff]
  %v36 = vld [vmem:[%s0 + $0x98] sm:$0xff]
  %v37 = vld [vmem:[%s0 + $0xa0] sm:$0xff]
  %v38 = vld [vmem:[%s0 + $0xa8] sm:$0xff]
  %v39 = vld [vmem:[%s0 + $0xb0] sm:$0xff]
  %v40 = vld [vmem:[%s0 + $0xb8] sm:$0xff]
  %v41 = vld [vmem:[%s0 + $0xc0] sm:$0xff]
  %v42 = vld [vmem:[%s0 + $0xc8] sm:$0xff]
  %v43 = vld [vmem:[%s0 + $0xd0] sm:$0xff]
  %v44 = vld [vmem:[%s0 + $0xd8] sm:$0xff]
  %v45 = vld [vmem:[%s0 + $0xe0] sm:$0xff]
  %v46 = vld [vmem:[%s0 + $0xe8] sm:$0xff]
  %v47 = vld [vmem:[%s0 + $0xf0] sm:$0xff]
  %v48 = vld [vmem:[%s0 + $0xf8] sm:$0xff]
  %v49 = vld [vmem:[%s0 + $0x100] sm:$0xff]
  %v50 = vld [vmem:[%s0 + $0x108] sm:$0xff]
  %v51 = vld [vmem:[%s0 + $0x110] sm:$0xff]
  %v52 = vld [vmem:[%s0 + $0x118] sm:$0xff]
  %v53 = vld [vmem:[%s0 + $0x120] sm:$0xff]
  %v54 = vld [vmem:[%s0 + $0x128] sm:$0xff]
  %v55 = vld [vmem:[%s0 + $0x130] sm:$0xff]
  %v56 = vld [vmem:[%s0 + $0x138] sm:$0xff]
  %v57 = vld [vmem:[%s0 + $0x140] sm:$0xff]
  %v58 = vld [vmem:[%s0 + $0x148] sm:$0xff]
  %v59 = vld [vmem:[%s0 + $0x150] sm:$0xff]
  %v60 = vld [vmem:[%s0 + $0x158] sm:$0xff]
  %v61 = vld [vmem:[%s0 + $0x160] sm:$0xff]
  %v62 = vld [vmem:[%s0 + $0x168] sm:$0xff]
  %v63 = vld [vmem:[%s0 + $0x170] sm:$0xff]
  %v64 = vld [vmem:[%s0 + $0x178] sm:$0xff]
  %v65 = vld [vmem:[%s0 + $0x180] sm:$0xff]
  %v66 = vld [vmem:[%s0 + $0x188] sm:$0xff]
  %v67 = vld [vmem:[%s0 + $0x190] sm:$0xff]
  %v68 = vld [vmem:[%s0 + $0x198] sm:$0xff]
  %v69 = vld [vmem:[%s0 + $0x1a0] sm:$0xff]
  %v70 = vld [vmem:[%s0 + $0x1a8] sm:$0xff]
  %v71 = vld [vmem:[%s0 + $0x1b0] sm:$0xff]
  %v72 = vld [vmem:[%s0 + $0x1b8] sm:$0xff]
  %v73 = vld [vmem:[%s0 + $0x1c0] sm:$0xff]
  %v74 = vld [vmem:[%s0 + $0x1c8] sm:$0xff]
  %v75 = vld [vmem:[%s0 + $0x1d0] sm:$0xff]
  %v76 = vld [vmem:[%s0 + $0x1d8] sm:$0xff]
  %v77 = vld [vmem:[%s0 + $0x1e0] sm:$0xff]
  %v78 = vld [vmem:[%s0 + $0x1e8] sm:$0xff]
  %v79 = vld [vmem:[%s0 + $0x1f0] sm:$0xff]
  %v80 = vld [vmem:[%s0 + $0x1f8] sm:$0xff]
  %v81 = vld [vmem:[%s2] sm:$0x1]
  %v83 = vperm.slane %v81, 0
  %v85 = vmul.f32 %v17, %v83
  %v86 = vmul.f32 %v18, %v83
  %v87 = vmul.f32 %v19, %v83
  %v88 = vmul.f32 %v20, %v83
  %v89 = vmul.f32 %v21, %v83
  %v90 = vmul.f32 %v22, %v83
  %v91 = vmul.f32 %v23, %v83
  %v92 = vmul.f32 %v24, %v83
  %v93 = vmul.f32 %v25, %v83
  %v94 = vmul.f32 %v26, %v83
  %v95 = vmul.f32 %v27, %v83
  %v96 = vmul.f32 %v28, %v83
  %v97 = vmul.f32 %v29, %v83
  %v98 = vmul.f32 %v30, %v83
  %v99 = vmul.f32 %v31, %v83
  %v100 = vmul.f32 %v32, %v83
  %v101 = vmul.f32 %v33, %v83
  %v102 = vmul.f32 %v34, %v83
  %v103 = vmul.f32 %v35, %v83
  %v104 = vmul.f32 %v36, %v83
  %v105 = vmul.f32 %v37, %v83
  %v106 = vmul.f32 %v38, %v83
  %v107 = vmul.f32 %v39, %v83
  %v108 = vmul.f32 %v40, %v83
  %v109 = vmul.f32 %v41, %v83
  %v110 = vmul.f32 %v42, %v83
  %v111 = vmul.f32 %v43, %v83
  %v112 = vmul.f32 %v44, %v83
  %v113 = vmul.f32 %v45, %v83
  %v114 = vmul.f32 %v46, %v83
  %v115 = vmul.f32 %v47, %v83
  %v116 = vmul.f32 %v48, %v83
  %v117 = vmul.f32 %v49, %v83
  %v118 = vmul.f32 %v50, %v83
  %v119 = vmul.f32 %v51, %v83
  %v120 = vmul.f32 %v52, %v83
  %v121 = vmul.f32 %v53, %v83
  %v122 = vmul.f32 %v54, %v83
  %v123 = vmul.f32 %v55, %v83
  %v124 = vmul.f32 %v56, %v83
  %v125 = vmul.f32 %v57, %v83
  %v126 = vmul.f32 %v58, %v83
  %v127 = vmul.f32 %v59, %v83
  %v128 = vmul.f32 %v60, %v83
  %v129 = vmul.f32 %v61, %v83
  %v130 = vmul.f32 %v62, %v83
  %v131 = vmul.f32 %v63, %v83
  %v132 = vmul.f32 %v64, %v83
  %v133 = vmul.f32 %v65, %v83
  %v134 = vmul.f32 %v66, %v83
  %v135 = vmul.f32 %v67, %v83
  %v136 = vmul.f32 %v68, %v83
  %v137 = vmul.f32 %v69, %v83
  %v138 = vmul.f32 %v70, %v83
  %v139 = vmul.f32 %v71, %v83
  %v140 = vmul.f32 %v72, %v83
  %v141 = vmul.f32 %v73, %v83
  %v142 = vmul.f32 %v74, %v83
  %v143 = vmul.f32 %v75, %v83
  %v144 = vmul.f32 %v76, %v83
  %v145 = vmul.f32 %v77, %v83
  %v146 = vmul.f32 %v78, %v83
  %v147 = vmul.f32 %v79, %v83
  %v148 = vmul.f32 %v80, %v83
  %v149 = vld [vmem:[%s3] sm:$0x1]
  %v151 = vperm.slane %v149, 0
  %v153 = vadd.f32 %v85, %v151
  %v154 = vadd.f32 %v86, %v151
  %v155 = vadd.f32 %v87, %v151
  %v156 = vadd.f32 %v88, %v151
  %v157 = vadd.f32 %v89, %v151
  %v158 = vadd.f32 %v90, %v151
  %v159 = vadd.f32 %v91, %v151
  %v160 = vadd.f32 %v92, %v151
  %v161 = vadd.f32 %v93, %v151
  %v162 = vadd.f32 %v94, %v151
  %v163 = vadd.f32 %v95, %v151
  %v164 = vadd.f32 %v96, %v151
  %v165 = vadd.f32 %v97, %v151
  %v166 = vadd.f32 %v98, %v151
  %v167 = vadd.f32 %v99, %v151
  %v168 = vadd.f32 %v100, %v151
  %v169 = vadd.f32 %v101, %v151
  %v170 = vadd.f32 %v102, %v151
  %v171 = vadd.f32 %v103, %v151
  %v172 = vadd.f32 %v104, %v151
  %v173 = vadd.f32 %v105, %v151
  %v174 = vadd.f32 %v106, %v151
  %v175 = vadd.f32 %v107, %v151
  %v176 = vadd.f32 %v108, %v151
  %v177 = vadd.f32 %v109, %v151
  %v178 = vadd.f32 %v110, %v151
  %v179 = vadd.f32 %v111, %v151
  %v180 = vadd.f32 %v112, %v151
  %v181 = vadd.f32 %v113, %v151
  %v182 = vadd.f32 %v114, %v151
  %v183 = vadd.f32 %v115, %v151
  %v184 = vadd.f32 %v116, %v151
  %v185 = vadd.f32 %v117, %v151
  %v186 = vadd.f32 %v118, %v151
  %v187 = vadd.f32 %v119, %v151
  %v188 = vadd.f32 %v120, %v151
  %v189 = vadd.f32 %v121, %v151
  %v190 = vadd.f32 %v122, %v151
  %v191 = vadd.f32 %v123, %v151
  %v192 = vadd.f32 %v124, %v151
  %v193 = vadd.f32 %v125, %v151
  %v194 = vadd.f32 %v126, %v151
  %v195 = vadd.f32 %v127, %v151
  %v196 = vadd.f32 %v128, %v151
  %v197 = vadd.f32 %v129, %v151
  %v198 = vadd.f32 %v130, %v151
  %v199 = vadd.f32 %v131, %v151
  %v200 = vadd.f32 %v132, %v151
  %v201 = vadd.f32 %v133, %v151
  %v202 = vadd.f32 %v134, %v151
  %v203 = vadd.f32 %v135, %v151
  %v204 = vadd.f32 %v136, %v151
  %v205 = vadd.f32 %v137, %v151
  %v206 = vadd.f32 %v138, %v151
  %v207 = vadd.f32 %v139, %v151
  %v208 = vadd.f32 %v140, %v151
  %v209 = vadd.f32 %v141, %v151
  %v210 = vadd.f32 %v142, %v151
  %v211 = vadd.f32 %v143, %v151
  %v212 = vadd.f32 %v144, %v151
  %v213 = vadd.f32 %v145, %v151
  %v214 = vadd.f32 %v146, %v151
  %v215 = vadd.f32 %v147, %v151
  %v216 = vadd.f32 %v148, %v151
  %v217 = vld [vmem:[%s1] sm:$0xf]
  %v218 = vld [vmem:[%s1 + $0x4] sm:$0xf]
  %v219 = vld [vmem:[%s1 + $0x8] sm:$0xf]
  %v220 = vld [vmem:[%s1 + $0xc] sm:$0xf]
  %v221 = vld [vmem:[%s1 + $0x10] sm:$0xf]
  %v222 = vld [vmem:[%s1 + $0x14] sm:$0xf]
  %v223 = vld [vmem:[%s1 + $0x18] sm:$0xf]
  %v224 = vld [vmem:[%s1 + $0x1c] sm:$0xf]
  %v225 = vld [vmem:[%s1 + $0x20] sm:$0xf]
  %v226 = vld [vmem:[%s1 + $0x24] sm:$0xf]
  %v227 = vld [vmem:[%s1 + $0x28] sm:$0xf]
  %v228 = vld [vmem:[%s1 + $0x2c] sm:$0xf]
  %v229 = vld [vmem:[%s1 + $0x30] sm:$0xf]
  %v230 = vld [vmem:[%s1 + $0x34] sm:$0xf]
  %v231 = vld [vmem:[%s1 + $0x38] sm:$0xf]
  %v232 = vld [vmem:[%s1 + $0x3c] sm:$0xf]
  %v233 = vld [vmem:[%s1 + $0x40] sm:$0xf]
  %v234 = vld [vmem:[%s1 + $0x44] sm:$0xf]
  %v235 = vld [vmem:[%s1 + $0x48] sm:$0xf]
  %v236 = vld [vmem:[%s1 + $0x4c] sm:$0xf]
  %v237 = vld [vmem:[%s1 + $0x50] sm:$0xf]
  %v238 = vld [vmem:[%s1 + $0x54] sm:$0xf]
  %v239 = vld [vmem:[%s1 + $0x58] sm:$0xf]
  %v240 = vld [vmem:[%s1 + $0x5c] sm:$0xf]
  %v241 = vld [vmem:[%s1 + $0x60] sm:$0xf]
  %v242 = vld [vmem:[%s1 + $0x64] sm:$0xf]
  %v243 = vld [vmem:[%s1 + $0x68] sm:$0xf]
  %v244 = vld [vmem:[%s1 + $0x6c] sm:$0xf]
  %v245 = vld [vmem:[%s1 + $0x70] sm:$0xf]
  %v246 = vld [vmem:[%s1 + $0x74] sm:$0xf]
  %v247 = vld [vmem:[%s1 + $0x78] sm:$0xf]
  %v248 = vld [vmem:[%s1 + $0x7c] sm:$0xf]
  %v249 = vld [vmem:[%s1 + $0x80] sm:$0xf]
  %v250 = vld [vmem:[%s1 + $0x84] sm:$0xf]
  %v251 = vld [vmem:[%s1 + $0x88] sm:$0xf]
  %v252 = vld [vmem:[%s1 + $0x8c] sm:$0xf]
  %v253 = vld [vmem:[%s1 + $0x90] sm:$0xf]
  %v254 = vld [vmem:[%s1 + $0x94] sm:$0xf]
  %v255 = vld [vmem:[%s1 + $0x98] sm:$0xf]
  %v256 = vld [vmem:[%s1 + $0x9c] sm:$0xf]
  %v257 = vld [vmem:[%s1 + $0xa0] sm:$0xf]
  %v258 = vld [vmem:[%s1 + $0xa4] sm:$0xf]
  %v259 = vld [vmem:[%s1 + $0xa8] sm:$0xf]
  %v260 = vld [vmem:[%s1 + $0xac] sm:$0xf]
  %v261 = vld [vmem:[%s1 + $0xb0] sm:$0xf]
  %v262 = vld [vmem:[%s1 + $0xb4] sm:$0xf]
  %v263 = vld [vmem:[%s1 + $0xb8] sm:$0xf]
  %v264 = vld [vmem:[%s1 + $0xbc] sm:$0xf]
  %v265 = vld [vmem:[%s1 + $0xc0] sm:$0xf]
  %v266 = vld [vmem:[%s1 + $0xc4] sm:$0xf]
  %v267 = vld [vmem:[%s1 + $0xc8] sm:$0xf]
  %v268 = vld [vmem:[%s1 + $0xcc] sm:$0xf]
  %v269 = vld [vmem:[%s1 + $0xd0] sm:$0xf]
  %v270 = vld [vmem:[%s1 + $0xd4] sm:$0xf]
  %v271 = vld [vmem:[%s1 + $0xd8] sm:$0xf]
  %v272 = vld [vmem:[%s1 + $0xdc] sm:$0xf]
  %v273 = vld [vmem:[%s1 + $0xe0] sm:$0xf]
  %v274 = vld [vmem:[%s1 + $0xe4] sm:$0xf]
  %v275 = vld [vmem:[%s1 + $0xe8] sm:$0xf]
  %v276 = vld [vmem:[%s1 + $0xec] sm:$0xf]
  %v277 = vld [vmem:[%s1 + $0xf0] sm:$0xf]
  %v278 = vld [vmem:[%s1 + $0xf4] sm:$0xf]
  %v279 = vld [vmem:[%s1 + $0xf8] sm:$0xf]
  %v280 = vld [vmem:[%s1 + $0xfc] sm:$0xf]
  %v281 = vunpack.c.l.bf16 %v217
  %v282 = vunpack.c.l.bf16 %v218
  %v283 = vunpack.c.l.bf16 %v219
  %v284 = vunpack.c.l.bf16 %v220
  %v285 = vunpack.c.l.bf16 %v221
  %v286 = vunpack.c.l.bf16 %v222
  %v287 = vunpack.c.l.bf16 %v223
  %v288 = vunpack.c.l.bf16 %v224
  %v289 = vunpack.c.l.bf16 %v225
  %v290 = vunpack.c.l.bf16 %v226
  %v291 = vunpack.c.l.bf16 %v227
  %v292 = vunpack.c.l.bf16 %v228
  %v293 = vunpack.c.l.bf16 %v229
  %v294 = vunpack.c.l.bf16 %v230
  %v295 = vunpack.c.l.bf16 %v231
  %v296 = vunpack.c.l.bf16 %v232
  %v297 = vunpack.c.l.bf16 %v233
  %v298 = vunpack.c.l.bf16 %v234
  %v299 = vunpack.c.l.bf16 %v235
  %v300 = vunpack.c.l.bf16 %v236
  %v301 = vunpack.c.l.bf16 %v237
  %v302 = vunpack.c.l.bf16 %v238
  %v303 = vunpack.c.l.bf16 %v239
  %v304 = vunpack.c.l.bf16 %v240
  %v305 = vunpack.c.l.bf16 %v241
  %v306 = vunpack.c.l.bf16 %v242
  %v307 = vunpack.c.l.bf16 %v243
  %v308 = vunpack.c.l.bf16 %v244
  %v309 = vunpack.c.l.bf16 %v245
  %v310 = vunpack.c.l.bf16 %v246
  %v311 = vunpack.c.l.bf16 %v247
  %v312 = vunpack.c.l.bf16 %v248
  %v313 = vunpack.c.l.bf16 %v249
  %v314 = vunpack.c.l.bf16 %v250
  %v315 = vunpack.c.l.bf16 %v251
  %v316 = vunpack.c.l.bf16 %v252
  %v317 = vunpack.c.l.bf16 %v253
  %v318 = vunpack.c.l.bf16 %v254
  %v319 = vunpack.c.l.bf16 %v255
  %v320 = vunpack.c.l.bf16 %v256
  %v321 = vunpack.c.l.bf16 %v257
  %v322 = vunpack.c.l.bf16 %v258
  %v323 = vunpack.c.l.bf16 %v259
  %v324 = vunpack.c.l.bf16 %v260
  %v325 = vunpack.c.l.bf16 %v261
  %v326 = vunpack.c.l.bf16 %v262
  %v327 = vunpack.c.l.bf16 %v263
  %v328 = vunpack.c.l.bf16 %v264
  %v329 = vunpack.c.l.bf16 %v265
  %v330 = vunpack.c.l.bf16 %v266
  %v331 = vunpack.c.l.bf16 %v267
  %v332 = vunpack.c.l.bf16 %v268
  %v333 = vunpack.c.l.bf16 %v269
  %v334 = vunpack.c.l.bf16 %v270
  %v335 = vunpack.c.l.bf16 %v271
  %v336 = vunpack.c.l.bf16 %v272
  %v337 = vunpack.c.l.bf16 %v273
  %v338 = vunpack.c.l.bf16 %v274
  %v339 = vunpack.c.l.bf16 %v275
  %v340 = vunpack.c.l.bf16 %v276
  %v341 = vunpack.c.l.bf16 %v277
  %v342 = vunpack.c.l.bf16 %v278
  %v343 = vunpack.c.l.bf16 %v279
  %v344 = vunpack.c.l.bf16 %v280
  %v345 = vadd.f32 %v153, %v281
  %v346 = vadd.f32 %v154, %v282
  %v347 = vadd.f32 %v155, %v283
  %v348 = vadd.f32 %v156, %v284
  %v349 = vadd.f32 %v157, %v285
  %v350 = vadd.f32 %v158, %v286
  %v351 = vadd.f32 %v159, %v287
  %v352 = vadd.f32 %v160, %v288
  %v353 = vadd.f32 %v161, %v289
  %v354 = vadd.f32 %v162, %v290
  %v355 = vadd.f32 %v163, %v291
  %v356 = vadd.f32 %v164, %v292
  %v357 = vadd.f32 %v165, %v293
  %v358 = vadd.f32 %v166, %v294
  %v359 = vadd.f32 %v167, %v295
  %v360 = vadd.f32 %v168, %v296
  %v361 = vadd.f32 %v169, %v297
  %v362 = vadd.f32 %v170, %v298
  %v363 = vadd.f32 %v171, %v299
  %v364 = vadd.f32 %v172, %v300
  %v365 = vadd.f32 %v173, %v301
  %v366 = vadd.f32 %v174, %v302
  %v367 = vadd.f32 %v175, %v303
  %v368 = vadd.f32 %v176, %v304
  %v369 = vadd.f32 %v177, %v305
  %v370 = vadd.f32 %v178, %v306
  %v371 = vadd.f32 %v179, %v307
  %v372 = vadd.f32 %v180, %v308
  %v373 = vadd.f32 %v181, %v309
  %v374 = vadd.f32 %v182, %v310
  %v375 = vadd.f32 %v183, %v311
  %v376 = vadd.f32 %v184, %v312
  %v377 = vadd.f32 %v185, %v313
  %v378 = vadd.f32 %v186, %v314
  %v379 = vadd.f32 %v187, %v315
  %v380 = vadd.f32 %v188, %v316
  %v381 = vadd.f32 %v189, %v317
  %v382 = vadd.f32 %v190, %v318
  %v383 = vadd.f32 %v191, %v319
  %v384 = vadd.f32 %v192, %v320
  %v385 = vadd.f32 %v193, %v321
  %v386 = vadd.f32 %v194, %v322
  %v387 = vadd.f32 %v195, %v323
  %v388 = vadd.f32 %v196, %v324
  %v389 = vadd.f32 %v197, %v325
  %v390 = vadd.f32 %v198, %v326
  %v391 = vadd.f32 %v199, %v327
  %v392 = vadd.f32 %v200, %v328
  %v393 = vadd.f32 %v201, %v329
  %v394 = vadd.f32 %v202, %v330
  %v395 = vadd.f32 %v203, %v331
  %v396 = vadd.f32 %v204, %v332
  %v397 = vadd.f32 %v205, %v333
  %v398 = vadd.f32 %v206, %v334
  %v399 = vadd.f32 %v207, %v335
  %v400 = vadd.f32 %v208, %v336
  %v401 = vadd.f32 %v209, %v337
  %v402 = vadd.f32 %v210, %v338
  %v403 = vadd.f32 %v211, %v339
  %v404 = vadd.f32 %v212, %v340
  %v405 = vadd.f32 %v213, %v341
  %v406 = vadd.f32 %v214, %v342
  %v407 = vadd.f32 %v215, %v343
  %v408 = vadd.f32 %v216, %v344
  %v409 = vmax.f32 %v345, 0.0
  %v410 = vmax.f32 %v346, 0.0
  %v411 = vmax.f32 %v347, 0.0
  %v412 = vmax.f32 %v348, 0.0
  %v413 = vmax.f32 %v349, 0.0
  %v414 = vmax.f32 %v350, 0.0
  %v415 = vmax.f32 %v351, 0.0
  %v416 = vmax.f32 %v352, 0.0
  %v417 = vmax.f32 %v353, 0.0
  %v418 = vmax.f32 %v354, 0.0
  %v419 = vmax.f32 %v355, 0.0
  %v420 = vmax.f32 %v356, 0.0
  %v421 = vmax.f32 %v357, 0.0
  %v422 = vmax.f32 %v358, 0.0
  %v423 = vmax.f32 %v359, 0.0
  %v424 = vmax.f32 %v360, 0.0
  %v425 = vmax.f32 %v361, 0.0
  %v426 = vmax.f32 %v362, 0.0
  %v427 = vmax.f32 %v363, 0.0
  %v428 = vmax.f32 %v364, 0.0
  %v429 = vmax.f32 %v365, 0.0
  %v430 = vmax.f32 %v366, 0.0
  %v431 = vmax.f32 %v367, 0.0
  %v432 = vmax.f32 %v368, 0.0
  %v433 = vmax.f32 %v369, 0.0
  %v434 = vmax.f32 %v370, 0.0
  %v435 = vmax.f32 %v371, 0.0
  %v436 = vmax.f32 %v372, 0.0
  %v437 = vmax.f32 %v373, 0.0
  %v438 = vmax.f32 %v374, 0.0
  %v439 = vmax.f32 %v375, 0.0
  %v440 = vmax.f32 %v376, 0.0
  %v441 = vmax.f32 %v377, 0.0
  %v442 = vmax.f32 %v378, 0.0
  %v443 = vmax.f32 %v379, 0.0
  %v444 = vmax.f32 %v380, 0.0
  %v445 = vmax.f32 %v381, 0.0
  %v446 = vmax.f32 %v382, 0.0
  %v447 = vmax.f32 %v383, 0.0
  %v448 = vmax.f32 %v384, 0.0
  %v449 = vmax.f32 %v385, 0.0
  %v450 = vmax.f32 %v386, 0.0
  %v451 = vmax.f32 %v387, 0.0
  %v452 = vmax.f32 %v388, 0.0
  %v453 = vmax.f32 %v389, 0.0
  %v454 = vmax.f32 %v390, 0.0
  %v455 = vmax.f32 %v391, 0.0
  %v456 = vmax.f32 %v392, 0.0
  %v457 = vmax.f32 %v393, 0.0
  %v458 = vmax.f32 %v394, 0.0
  %v459 = vmax.f32 %v395, 0.0
  %v460 = vmax.f32 %v396, 0.0
  %v461 = vmax.f32 %v397, 0.0
  %v462 = vmax.f32 %v398, 0.0
  %v463 = vmax.f32 %v399, 0.0
  %v464 = vmax.f32 %v400, 0.0
  %v465 = vmax.f32 %v401, 0.0
  %v466 = vmax.f32 %v402, 0.0
  %v467 = vmax.f32 %v403, 0.0
  %v468 = vmax.f32 %v404, 0.0
  %v469 = vmax.f32 %v405, 0.0
  %v470 = vmax.f32 %v406, 0.0
  %v471 = vmax.f32 %v407, 0.0
  %v472 = vmax.f32 %v408, 0.0
  %v473 = vpack.c.bf16 %v409, %v409
  %v474 = vpack.c.bf16 %v410, %v410
  %v475 = vpack.c.bf16 %v411, %v411
  %v476 = vpack.c.bf16 %v412, %v412
  %v477 = vpack.c.bf16 %v413, %v413
  %v478 = vpack.c.bf16 %v414, %v414
  %v479 = vpack.c.bf16 %v415, %v415
  %v480 = vpack.c.bf16 %v416, %v416
  %v481 = vpack.c.bf16 %v417, %v417
  %v482 = vpack.c.bf16 %v418, %v418
  %v483 = vpack.c.bf16 %v419, %v419
  %v484 = vpack.c.bf16 %v420, %v420
  %v485 = vpack.c.bf16 %v421, %v421
  %v486 = vpack.c.bf16 %v422, %v422
  %v487 = vpack.c.bf16 %v423, %v423
  %v488 = vpack.c.bf16 %v424, %v424
  %v489 = vpack.c.bf16 %v425, %v425
  %v490 = vpack.c.bf16 %v426, %v426
  %v491 = vpack.c.bf16 %v427, %v427
  %v492 = vpack.c.bf16 %v428, %v428
  %v493 = vpack.c.bf16 %v429, %v429
  %v494 = vpack.c.bf16 %v430, %v430
  %v495 = vpack.c.bf16 %v431, %v431
  %v496 = vpack.c.bf16 %v432, %v432
  %v497 = vpack.c.bf16 %v433, %v433
  %v498 = vpack.c.bf16 %v434, %v434
  %v499 = vpack.c.bf16 %v435, %v435
  %v500 = vpack.c.bf16 %v436, %v436
  %v501 = vpack.c.bf16 %v437, %v437
  %v502 = vpack.c.bf16 %v438, %v438
  %v503 = vpack.c.bf16 %v439, %v439
  %v504 = vpack.c.bf16 %v440, %v440
  %v505 = vpack.c.bf16 %v441, %v441
  %v506 = vpack.c.bf16 %v442, %v442
  %v507 = vpack.c.bf16 %v443, %v443
  %v508 = vpack.c.bf16 %v444, %v444
  %v509 = vpack.c.bf16 %v445, %v445
  %v510 = vpack.c.bf16 %v446, %v446
  %v511 = vpack.c.bf16 %v447, %v447
  %v512 = vpack.c.bf16 %v448, %v448
  %v513 = vpack.c.bf16 %v449, %v449
  %v514 = vpack.c.bf16 %v450, %v450
  %v515 = vpack.c.bf16 %v451, %v451
  %v516 = vpack.c.bf16 %v452, %v452
  %v517 = vpack.c.bf16 %v453, %v453
  %v518 = vpack.c.bf16 %v454, %v454
  %v519 = vpack.c.bf16 %v455, %v455
  %v520 = vpack.c.bf16 %v456, %v456
  %v521 = vpack.c.bf16 %v457, %v457
  %v522 = vpack.c.bf16 %v458, %v458
  %v523 = vpack.c.bf16 %v459, %v459
  %v524 = vpack.c.bf16 %v460, %v460
  %v525 = vpack.c.bf16 %v461, %v461
  %v526 = vpack.c.bf16 %v462, %v462
  %v527 = vpack.c.bf16 %v463, %v463
  %v528 = vpack.c.bf16 %v464, %v464
  %v529 = vpack.c.bf16 %v465, %v465
  %v530 = vpack.c.bf16 %v466, %v466
  %v531 = vpack.c.bf16 %v467, %v467
  %v532 = vpack.c.bf16 %v468, %v468
  %v533 = vpack.c.bf16 %v469, %v469
  %v534 = vpack.c.bf16 %v470, %v470
  %v535 = vpack.c.bf16 %v471, %v471
  %v536 = vpack.c.bf16 %v472, %v472
  %537 = vst [vmem:[%s4] sm:$0xf] %v473
  %538 = vst [vmem:[%s4 + $0x4] sm:$0xf] %v474
  %539 = vst [vmem:[%s4 + $0x8] sm:$0xf] %v475
  %540 = vst [vmem:[%s4 + $0xc] sm:$0xf] %v476
  %541 = vst [vmem:[%s4 + $0x10] sm:$0xf] %v477
  %542 = vst [vmem:[%s4 + $0x14] sm:$0xf] %v478
  %543 = vst [vmem:[%s4 + $0x18] sm:$0xf] %v479
  %544 = vst [vmem:[%s4 + $0x1c] sm:$0xf] %v480
  %545 = vst [vmem:[%s4 + $0x20] sm:$0xf] %v481
  %546 = vst [vmem:[%s4 + $0x24] sm:$0xf] %v482
  %547 = vst [vmem:[%s4 + $0x28] sm:$0xf] %v483
  %548 = vst [vmem:[%s4 + $0x2c] sm:$0xf] %v484
  %549 = vst [vmem:[%s4 + $0x30] sm:$0xf] %v485
  %550 = vst [vmem:[%s4 + $0x34] sm:$0xf] %v486
  %551 = vst [vmem:[%s4 + $0x38] sm:$0xf] %v487
  %552 = vst [vmem:[%s4 + $0x3c] sm:$0xf] %v488
  %553 = vst [vmem:[%s4 + $0x40] sm:$0xf] %v489
  %554 = vst [vmem:[%s4 + $0x44] sm:$0xf] %v490
  %555 = vst [vmem:[%s4 + $0x48] sm:$0xf] %v491
  %556 = vst [vmem:[%s4 + $0x4c] sm:$0xf] %v492
  %557 = vst [vmem:[%s4 + $0x50] sm:$0xf] %v493
  %558 = vst [vmem:[%s4 + $0x54] sm:$0xf] %v494
  %559 = vst [vmem:[%s4 + $0x58] sm:$0xf] %v495
  %560 = vst [vmem:[%s4 + $0x5c] sm:$0xf] %v496
  %561 = vst [vmem:[%s4 + $0x60] sm:$0xf] %v497
  %562 = vst [vmem:[%s4 + $0x64] sm:$0xf] %v498
  %563 = vst [vmem:[%s4 + $0x68] sm:$0xf] %v499
  %564 = vst [vmem:[%s4 + $0x6c] sm:$0xf] %v500
  %565 = vst [vmem:[%s4 + $0x70] sm:$0xf] %v501
  %566 = vst [vmem:[%s4 + $0x74] sm:$0xf] %v502
  %567 = vst [vmem:[%s4 + $0x78] sm:$0xf] %v503
  %568 = vst [vmem:[%s4 + $0x7c] sm:$0xf] %v504
  %569 = vst [vmem:[%s4 + $0x80] sm:$0xf] %v505
  %570 = vst [vmem:[%s4 + $0x84] sm:$0xf] %v506
  %571 = vst [vmem:[%s4 + $0x88] sm:$0xf] %v507
  %572 = vst [vmem:[%s4 + $0x8c] sm:$0xf] %v508
  %573 = vst [vmem:[%s4 + $0x90] sm:$0xf] %v509
  %574 = vst [vmem:[%s4 + $0x94] sm:$0xf] %v510
  %575 = vst [vmem:[%s4 + $0x98] sm:$0xf] %v511
  %576 = vst [vmem:[%s4 + $0x9c] sm:$0xf] %v512
  %577 = vst [vmem:[%s4 + $0xa0] sm:$0xf] %v513
  %578 = vst [vmem:[%s4 + $0xa4] sm:$0xf] %v514
  %579 = vst [vmem:[%s4 + $0xa8] sm:$0xf] %v515
  %580 = vst [vmem:[%s4 + $0xac] sm:$0xf] %v516
  %581 = vst [vmem:[%s4 + $0xb0] sm:$0xf] %v517
  %582 = vst [vmem:[%s4 + $0xb4] sm:$0xf] %v518
  %583 = vst [vmem:[%s4 + $0xb8] sm:$0xf] %v519
  %584 = vst [vmem:[%s4 + $0xbc] sm:$0xf] %v520
  %585 = vst [vmem:[%s4 + $0xc0] sm:$0xf] %v521
  %586 = vst [vmem:[%s4 + $0xc4] sm:$0xf] %v522
  %587 = vst [vmem:[%s4 + $0xc8] sm:$0xf] %v523
  %588 = vst [vmem:[%s4 + $0xcc] sm:$0xf] %v524
  %589 = vst [vmem:[%s4 + $0xd0] sm:$0xf] %v525
  %590 = vst [vmem:[%s4 + $0xd4] sm:$0xf] %v526
  %591 = vst [vmem:[%s4 + $0xd8] sm:$0xf] %v527
  %592 = vst [vmem:[%s4 + $0xdc] sm:$0xf] %v528
  %593 = vst [vmem:[%s4 + $0xe0] sm:$0xf] %v529
  %594 = vst [vmem:[%s4 + $0xe4] sm:$0xf] %v530
  %595 = vst [vmem:[%s4 + $0xe8] sm:$0xf] %v531
  %596 = vst [vmem:[%s4 + $0xec] sm:$0xf] %v532
  %597 = vst [vmem:[%s4 + $0xf0] sm:$0xf] %v533
  %598 = vst [vmem:[%s4 + $0xf4] sm:$0xf] %v534
  %599 = vst [vmem:[%s4 + $0xf8] sm:$0xf] %v535
  %600 = vst [vmem:[%s4 + $0xfc] sm:$0xf] %v536
  // Predicated region
  $region18: #{upconvd_forward.9} parent=0 // pred_check
    _
  $region19: #{upconvd_forward.9} parent=0 // pred_check_branch
    %602 = sbr.rel (0) target = $region21
  $region20: #{upconvd_forward.9} parent=0 // pred_region
    _
  $region21: #{upconvd_forward.9} parent=0 // pred_fallthru
    _
  // Predicated region
  $region22: #{upconvd_forward.9} parent=0 // pred_check
    _
  $region23: #{upconvd_forward.9} parent=0 // pred_check_branch
    %604 = sbr.rel (0) target = $region25
  $region24: #{upconvd_forward.9} parent=0 // pred_region
    _
  $region25: #{upconvd_forward.9} parent=0 // pred_fallthru
    _

// kernel: upconvd_forward.7
$region0: #{upconvd_forward.7}
  #allocation0 [shape = 'u32[]', space=smem, size = 0x4, offset = 0x4, fixed_abs, tag = 'smem constant byte address 0x4 - core index']
  #allocation1 [shape = 'u32[72,128]{1,0:T(1,128)}', space=vmem, size = 0x9000, scoped, tag = 'internal scratch']
  #allocation2 [shape = 'bf16[18,18,128]{2,1,0:T(8,128)(2,1)}', space=vmem, size = 0x1b000, scoped, tag = 'scratch operand']
  %s0 = inlined_call_operand.vmem [shape: bf16[2,18,18,128], index: 0, kind: input, shape index: {}, may-alias: {0,1}]
  %s1 = inlined_call_operand.vmem [shape: bf16[2,18,18,128], index: 1, kind: input, shape index: {}, may-alias: {0,1}]
  %s2 = inlined_call_operand.vmem [shape: bf16[9,128,128], index: 2, kind: input, shape index: {}]
  %s3 = inlined_call_operand.vmem [shape: f32[1,128], index: 3, kind: input, shape index: {}]
  %s4 = inlined_call_operand.vmem [shape: bf16[2,16,16,128], index: 4, kind: output, shape index: {}]
  %s5 = sld [smem:[#allocation0]]
  $region49: #{upconvd_forward.7} parent=0
    _
  %s7 = ssub.s32 1, %s5
  %s8 = scalar_select 0, %s7, %s5
  loop: start=0, step=1, limit=4
  $region2: #{upconvd_forward.7} parent=0 // loop_pre_header
    _
  $region3: #{upconvd_forward.7} parent=0 // loop_header
    %s10 = sphi 0, %s14
    %p11 = scmp.ge.s32.totalorder %s10, 4
    %s17 = sphi 0, %s29
    %s18 = sphi 0, %s25
    %s19 = sphi 0, %s17
    %s20 = sphi 0, %s18
    %s21 = sphi 0, %s19
    %s22 = sphi 0, %s20
    %s34 = sphi 0, %s36
    %s37 = sphi 0, %s34
    %s38 = sphi 0, %s37
    %s54 = sphi 0, %s38
    %s66 = sphi 0, %s68
    %s69 = sphi 0, %s66
    %s70 = sphi 0, %s69
    %s86 = sphi 0, %s70
    %s90 = sphi 0, %s90
    %s92 = sphi 0, %s90
    %s93 = sphi 0, %s92
    %s107 = sphi 0, %s93
    %s111 = sphi 0, %s111
    %s113 = sphi 0, %s111
    %s114 = sphi 0, %s113
    %s128 = sphi 0, %s114
    %s136 = sphi 0, %s138
    %s139 = sphi 0, %s136
    %s140 = sphi 0, %s139
    %s156 = sphi 0, %s140
  $region4: #{upconvd_forward.7} parent=0 // loop_header_branch
    %13 = sbr.rel (%p11) target = $region8
  $region5: #{upconvd_forward.7} parent=0 // loop_body
    %s15 = ssub.s32 %s10, 1
    %s16 = ssub.s32 %s10, 2
    %s23 = sadd.s32 1, %s18
    %p24 = scmp.ge.s32.totalorder %s23, 1
    %s25 = scalar_select %p24, 0, %s23
    %s26 = sadd.s32 1, %s17
    %s27 = scalar_select %p24, %s26, %s17
    %p28 = scmp.ge.s32.totalorder %s27, 2
    %s29 = scalar_select %p28, 0, %s27
    %s30 = ssub.s32 %s17, %s29
    %s31 = ssub.s32 %s18, %s25
    %s32 = sor.u32 %s30, %s31
    %p33 = scmp.eq.s32.totalorder %s32, 0
    %s35 = sadd.s32 %s34, 1
    %s36 = scalar_select %p33, %s34, %s35
    %p39 = pneg %p33
    %p40 = scmp.eq.s32.totalorder %s10, 1
    %p41 = por %p39, %p40
    %p42 = scmp.ne.s32.totalorder %s34, %s37
    %p43 = scmp.eq.s32.totalorder %s10, 0
    %p44 = por %p42, %p43
    %p45 = scmp.ne.s32.totalorder %s34, %s37
    %p46 = scmp.eq.s32.totalorder %s15, 1
    %p47 = por %p45, %p46
    %p48 = scmp.ne.s32.totalorder %s37, %s38
    %p49 = scmp.eq.s32.totalorder %s15, 0
    %p50 = por %p48, %p49
    %p51 = scmp.ne.s32.totalorder %s37, %s38
    %p52 = scmp.eq.s32.totalorder %s16, 1
    %p53 = por %p51, %p52
    %p55 = scmp.ne.s32.totalorder %s38, %s54
    %p56 = scmp.eq.s32.totalorder %s16, 0
    %p57 = por %p55, %p56
    %s58 = sadd.s32 %s18, 1
    %s59 = smul.u32 %s58, 8
    %s60 = sadd.s32 %s25, 1
    %s61 = smul.u32 %s60, 8
    %s62 = ssub.s32 %s17, %s29
    %s63 = ssub.s32 %s59, %s61
    %s64 = sor.u32 %s62, %s63
    %p65 = scmp.eq.s32.totalorder %s64, 0
    %s67 = sadd.s32 %s66, 1
    %s68 = scalar_select %p65, %s66, %s67
    %p71 = pneg %p65
    %p72 = scmp.eq.s32.totalorder %s10, 1
    %p73 = por %p71, %p72
    %p74 = scmp.ne.s32.totalorder %s66, %s69
    %p75 = scmp.eq.s32.totalorder %s10, 0
    %p76 = por %p74, %p75
    %p77 = scmp.ne.s32.totalorder %s66, %s69
    %p78 = scmp.eq.s32.totalorder %s15, 1
    %p79 = por %p77, %p78
    %p80 = scmp.ne.s32.totalorder %s69, %s70
    %p81 = scmp.eq.s32.totalorder %s15, 0
    %p82 = por %p80, %p81
    %p83 = scmp.ne.s32.totalorder %s69, %s70
    %p84 = scmp.eq.s32.totalorder %s16, 1
    %p85 = por %p83, %p84
    %p87 = scmp.ne.s32.totalorder %s70, %s86
    %p88 = scmp.eq.s32.totalorder %s16, 0
    %p89 = por %p87, %p88
    %s91 = sadd.s32 %s90, 1
    %p94 = scmp.eq.s32.totalorder %s10, 1
    %p95 = scmp.ne.s32.totalorder %s90, %s92
    %p96 = scmp.eq.s32.totalorder %s10, 0
    %p97 = por %p95, %p96
    %p98 = scmp.ne.s32.totalorder %s90, %s92
    %p99 = scmp.eq.s32.totalorder %s15, 1
    %p100 = por %p98, %p99
    %p101 = scmp.ne.s32.totalorder %s92, %s93
    %p102 = scmp.eq.s32.totalorder %s15, 0
    %p103 = por %p101, %p102
    %p104 = scmp.ne.s32.totalorder %s92, %s93
    %p105 = scmp.eq.s32.totalorder %s16, 1
    %p106 = por %p104, %p105
    %p108 = scmp.ne.s32.totalorder %s93, %s107
    %p109 = scmp.eq.s32.totalorder %s16, 0
    %p110 = por %p108, %p109
    %s112 = sadd.s32 %s111, 1
    %p115 = scmp.eq.s32.totalorder %s10, 1
    %p116 = scmp.ne.s32.totalorder %s111, %s113
    %p117 = scmp.eq.s32.totalorder %s10, 0
    %p118 = por %p116, %p117
    %p119 = scmp.ne.s32.totalorder %s111, %s113
    %p120 = scmp.eq.s32.totalorder %s15, 1
    %p121 = por %p119, %p120
    %p122 = scmp.ne.s32.totalorder %s113, %s114
    %p123 = scmp.eq.s32.totalorder %s15, 0
    %p124 = por %p122, %p123
    %p125 = scmp.ne.s32.totalorder %s113, %s114
    %p126 = scmp.eq.s32.totalorder %s16, 1
    %p127 = por %p125, %p126
    %p129 = scmp.ne.s32.totalorder %s114, %s128
    %p130 = scmp.eq.s32.totalorder %s16, 0
    %p131 = por %p129, %p130
    %s132 = ssub.s32 %s17, %s29
    %s133 = ssub.s32 %s18, %s25
    %s134 = sor.u32 %s132, %s133
    %p135 = scmp.eq.s32.totalorder %s134, 0
    %s137 = sadd.s32 %s136, 1
    %s138 = scalar_select %p135, %s136, %s137
    %p141 = pneg %p135
    %p142 = scmp.eq.s32.totalorder %s10, 1
    %p143 = por %p141, %p142
    %p144 = scmp.ne.s32.totalorder %s136, %s139
    %p145 = scmp.eq.s32.totalorder %s10, 0
    %p146 = por %p144, %p145
    %p147 = scmp.ne.s32.totalorder %s136, %s139
    %p148 = scmp.eq.s32.totalorder %s15, 1
    %p149 = por %p147, %p148
    %p150 = scmp.ne.s32.totalorder %s139, %s140
    %p151 = scmp.eq.s32.totalorder %s15, 0
    %p152 = por %p150, %p151
    %p153 = scmp.ne.s32.totalorder %s139, %s140
    %p154 = scmp.eq.s32.totalorder %s16, 1
    %p155 = por %p153, %p154
    %p157 = scmp.ne.s32.totalorder %s140, %s156
    %p158 = scmp.eq.s32.totalorder %s16, 0
    %p159 = por %p157, %p158
    %p160 = scmp.le.s32.totalorder 1, %s10
    %p161 = scmp.lt.s32.totalorder %s10, 3
    %p162 = pnand %p160, %p161
    %p163 = pneg %p162
    // Predicated region
    $region9: #{upconvd_forward.7} parent=5 // pred_check
      _
    $region10: #{upconvd_forward.7} parent=5 // pred_check_branch
      %165 = sbr.rel (%p162) target = $region12
    $region11: #{upconvd_forward.7} parent=5 // pred_region
      %s166 = ssub.s32 %s10, 1
      // Predicated region
      $region13: #{upconvd_forward.7} parent=11 // pred_check
        %p167 = pneg %p103
      $region14: #{upconvd_forward.7} parent=11 // pred_check_branch
        %169 = sbr.rel (%p167) target = $region16
      $region15: #{upconvd_forward.7} parent=11 // pred_region
        _
      $region16: #{upconvd_forward.7} parent=11 // pred_fallthru
        _
      // Predicated region
      $region17: #{upconvd_forward.7} parent=11 // pred_check
        %p170 = pneg %p124
      $region18: #{upconvd_forward.7} parent=11 // pred_check_branch
        %172 = sbr.rel (%p170) target = $region20
      $region19: #{upconvd_forward.7} parent=11 // pred_region
        _
      $region20: #{upconvd_forward.7} parent=11 // pred_fallthru
        _
    $region12: #{upconvd_forward.7} parent=5 // pred_fallthru
      _
    %p173 = scmp.lt.s32.totalorder %s10, 2
    // Predicated region
    $region21: #{upconvd_forward.7} parent=5 // pred_check
      %p174 = pneg %p173
    $region22: #{upconvd_forward.7} parent=5 // pred_check_branch
      %176 = sbr.rel (%p174) target = $region24
    $region23: #{upconvd_forward.7} parent=5 // pred_region
      // Predicated region
      $region25: #{upconvd_forward.7} parent=23 // pred_check
        %p177 = pneg %p44
      $region26: #{upconvd_forward.7} parent=23 // pred_check_branch
        %179 = sbr.rel (%p177) target = $region28
      $region27: #{upconvd_forward.7} parent=23 // pred_region
        %s180 = smul.u32 16, %s18
        %s181 = ssub.s32 18, %s180
        %p182 = scmp.lt.s32.totalorder %s181, 16
        %s183 = scalar_select %p182, %s181, 16
        %s184 = smul.u32 4, %s183
        %s185 = smul.u32 %s184, 3
        %p186 = scmp.lt.s32.totalorder %s17, 1
        %s187 = scalar_select %p186, %s17, 1
        %p188 = scmp.lt.s32.totalorder %s180, 17
        %s189 = scalar_select %p188, %s180, 17
        %s190 = smul.addr %s189, 3
        %s191 = smul.addr %s187, 54
        %s192 = sadd.s32 %s190, %s191
        %s193 = smul.addr %s192, 4
        %s194 = scalar_lea.vmem %s0, %s193
        %s195 = smul.u32 16, %s18
        %s196 = ssub.s32 18, %s195
        %p197 = scmp.lt.s32.totalorder %s196, 16
        %s198 = scalar_select %p197, %s196, 16
        %s199 = smul.u32 4, %s198
        %s200 = smul.u32 %s199, 3
      $region28: #{upconvd_forward.7} parent=23 // pred_fallthru
        _
      // Predicated region
      $region29: #{upconvd_forward.7} parent=23 // pred_check
        %p201 = pneg %p76
      $region30: #{upconvd_forward.7} parent=23 // pred_check_branch
        %203 = sbr.rel (%p201) target = $region32
      $region31: #{upconvd_forward.7} parent=23 // pred_region
        %s204 = sadd.s32 %s18, 1
        %s205 = smul.u32 %s204, 8
        %s206 = smul.u32 2, %s205
        %p207 = scmp.lt.s32.totalorder %s17, 1
        %s208 = scalar_select %p207, %s17, 1
        %p209 = scmp.lt.s32.totalorder %s206, 17
        %s210 = scalar_select %p209, %s206, 17
        %s211 = smul.addr %s210, 3
        %s212 = smul.addr %s208, 54
        %s213 = sadd.s32 %s211, %s212
        %s214 = smul.addr %s213, 4
        %s215 = scalar_lea.vmem %s1, %s214
        %s216 = sadd.s32 %s18, 1
        %s217 = smul.u32 %s216, 8
        %s218 = smul.u32 2, %s217
      $region32: #{upconvd_forward.7} parent=23 // pred_fallthru
        _
    $region24: #{upconvd_forward.7} parent=5 // pred_fallthru
      _
    %p219 = scmp.le.s32.totalorder 1, %s10
    %p220 = scmp.lt.s32.totalorder %s10, 3
    %p221 = pnand %p219, %p220
    %p222 = pneg %p221
    // Predicated region
    $region33: #{upconvd_forward.7} parent=5 // pred_check
      _
    $region34: #{upconvd_forward.7} parent=5 // pred_check_branch
      %224 = sbr.rel (%p221) target = $region36
    $region35: #{upconvd_forward.7} parent=5 // pred_region
      %s225 = ssub.s32 %s10, 1
      %s226 = smul.u32 16, %s20
      %s227 = ssub.s32 18, %s226
      %p228 = scmp.lt.s32.totalorder %s227, 16
      %s229 = scalar_select %p228, %s227, 16
      %s230 = smul.u32 4, %s229
      %s231 = smul.u32 %s230, 3
      %p232 = scmp.lt.s32.totalorder %s19, 1
      %s233 = scalar_select %p232, %s19, 1
      %p234 = scmp.lt.s32.totalorder %s226, 17
      %s235 = scalar_select %p234, %s226, 17
      %s236 = smul.addr %s235, 3
      %s237 = smul.addr %s233, 54
      %s238 = sadd.s32 %s236, %s237
      %s239 = smul.addr %s238, 4
      %s240 = scalar_lea.vmem %s0, %s239
      %p241 = pneg %p50
      %p242 = pneg %p47
      %s243 = sadd.s32 %s20, 1
      %s244 = smul.u32 %s243, 8
      %s245 = smul.u32 2, %s244
      %p246 = scmp.lt.s32.totalorder %s19, 1
      %s247 = scalar_select %p246, %s19, 1
      %p248 = scmp.lt.s32.totalorder %s245, 17
      %s249 = scalar_select %p248, %s245, 17
      %s250 = smul.addr %s249, 3
      %s251 = smul.addr %s247, 54
      %s252 = sadd.s32 %s250, %s251
      %s253 = smul.addr %s252, 4
      %s254 = scalar_lea.vmem %s1, %s253
      %p255 = pneg %p82
      %p256 = pneg %p79
      %p257 = pneg %p103
      %p258 = pneg %p100
      %p259 = pneg %p124
      %p260 = pneg %p121
      %p261 = pneg %p152
      %p262 = pneg %p149
      %s263 = smul.u32 16, %s20
      %p264 = scmp.lt.s32.totalorder %s19, 1
      %s265 = scalar_select %p264, %s19, 1
      %p266 = scmp.lt.s32.totalorder %s263, 15
      %s267 = scalar_select %p266, %s263, 15
      %s268 = smul.addr %s267, 2
      %s269 = smul.addr %s265, 32
      %s270 = sadd.s32 %s268, %s269
      %s271 = smul.addr %s270, 4
      %s272 = scalar_lea.vmem %s4, %s271
      %s273 = smul.u32 16, %s20
      %s274 = ssub.s32 18, %s273
      %p275 = scmp.lt.s32.totalorder %s274, 16
      %s276 = scalar_select %p275, %s274, 16
      %s277 = smul.u32 4, %s276
      %s278 = smul.u32 %s277, 3
      %p279 = scmp.lt.s32.totalorder %s19, 1
      %s280 = scalar_select %p279, %s19, 1
      %p281 = scmp.lt.s32.totalorder %s273, 17
      %s282 = scalar_select %p281, %s273, 17
      %s283 = smul.addr %s282, 3
      %s284 = smul.addr %s280, 54
      %s285 = sadd.s32 %s283, %s284
      %s286 = smul.addr %s285, 4
      %s287 = scalar_lea.vmem %s0, %s286
      %s288 = smul.u32 16, %s20
      %s289 = ssub.s32 18, %s288
      %p290 = scmp.lt.s32.totalorder %s289, 16
      %s291 = scalar_select %p290, %s289, 16
      %s292 = smul.u32 4, %s291
      %s293 = smul.u32 %s292, 3
      %s294 = sadd.s32 %s20, 1
      %s295 = smul.u32 %s294, 8
      %s296 = smul.u32 2, %s295
      %p297 = scmp.lt.s32.totalorder %s19, 1
      %s298 = scalar_select %p297, %s19, 1
      %p299 = scmp.lt.s32.totalorder %s296, 17
      %s300 = scalar_select %p299, %s296, 17
      %s301 = smul.addr %s300, 3
      %s302 = smul.addr %s298, 54
      %s303 = sadd.s32 %s301, %s302
      %s304 = smul.addr %s303, 4
      %s305 = scalar_lea.vmem %s1, %s304
      %s306 = sadd.s32 %s20, 1
      %s307 = smul.u32 %s306, 8
      %s308 = smul.u32 2, %s307
      %s309 = smul.u32 16, %s20
      %p310 = scmp.lt.s32.totalorder %s19, 1
      %s311 = scalar_select %p310, %s19, 1
      %p312 = scmp.lt.s32.totalorder %s309, 15
      %s313 = scalar_select %p312, %s309, 15
      %s314 = smul.addr %s313, 2
      %s315 = smul.addr %s311, 32
      %s316 = sadd.s32 %s314, %s315
      %s317 = smul.addr %s316, 4
      %s318 = scalar_lea.vmem %s4, %s317
      %s319 = smul.u32 16, %s20
      %v320 = vld [vmem:[%s287] sm:$0xf]
      %v321 = vld [vmem:[%s287 + $0x4] sm:$0xf]
      %v322 = vld [vmem:[%s287 + $0x8] sm:$0x1]
      %v323 = vld [vmem:[%s287 + $0xc] sm:$0xf]
      %v324 = vld [vmem:[%s287 + $0x10] sm:$0xf]
      %v325 = vld [vmem:[%s287 + $0x14] sm:$0x1]
      %v326 = vld [vmem:[%s287 + $0x18] sm:$0xf]
      %v327 = vld [vmem:[%s287 + $0x1c] sm:$0xf]
      %v328 = vld [vmem:[%s287 + $0x20] sm:$0x1]
      %v329 = vld [vmem:[%s287 + $0x24] sm:$0xf]
      %v330 = vld [vmem:[%s287 + $0x28] sm:$0xf]
      %v331 = vld [vmem:[%s287 + $0x2c] sm:$0x1]
      %v332 = vld [vmem:[%s287 + $0x30] sm:$0xf]
      %v333 = vld [vmem:[%s287 + $0x34] sm:$0xf]
      %v334 = vld [vmem:[%s287 + $0x38] sm:$0x1]
      %v335 = vld [vmem:[%s287 + $0x3c] sm:$0xf]
      %v336 = vld [vmem:[%s287 + $0x40] sm:$0xf]
      %v337 = vld [vmem:[%s287 + $0x44] sm:$0x1]
      %v338 = vld [vmem:[%s287 + $0x48] sm:$0xf]
      %v339 = vld [vmem:[%s287 + $0x4c] sm:$0xf]
      %v340 = vld [vmem:[%s287 + $0x50] sm:$0x1]
      %v341 = vld [vmem:[%s287 + $0x54] sm:$0xf]
      %v342 = vld [vmem:[%s287 + $0x58] sm:$0xf]
      %v343 = vld [vmem:[%s287 + $0x5c] sm:$0x1]
      %v344 = vld [vmem:[%s287 + $0x60] sm:$0xf]
      %v345 = vld [vmem:[%s287 + $0x64] sm:$0xf]
      %v346 = vld [vmem:[%s287 + $0x68] sm:$0x1]
      %v347 = vld [vmem:[%s287 + $0x6c] sm:$0xf]
      %v348 = vld [vmem:[%s287 + $0x70] sm:$0xf]
      %v349 = vld [vmem:[%s287 + $0x74] sm:$0x1]
      %v350 = vld [vmem:[%s287 + $0x78] sm:$0xf]
      %v351 = vld [vmem:[%s287 + $0x7c] sm:$0xf]
      %v352 = vld [vmem:[%s287 + $0x80] sm:$0x1]
      %v353 = vld [vmem:[%s287 + $0x84] sm:$0xf]
      %v354 = vld [vmem:[%s287 + $0x88] sm:$0xf]
      %v355 = vld [vmem:[%s287 + $0x8c] sm:$0x1]
      %v356 = vld [vmem:[%s287 + $0x90] sm:$0xf]
      %v357 = vld [vmem:[%s287 + $0x94] sm:$0xf]
      %v358 = vld [vmem:[%s287 + $0x98] sm:$0x1]
      %v359 = vld [vmem:[%s287 + $0x9c] sm:$0xf]
      %v360 = vld [vmem:[%s287 + $0xa0] sm:$0xf]
      %v361 = vld [vmem:[%s287 + $0xa4] sm:$0x1]
      %v362 = vld [vmem:[%s287 + $0xa8] sm:$0xf]
      %v363 = vld [vmem:[%s287 + $0xac] sm:$0xf]
      %v364 = vld [vmem:[%s287 + $0xb0] sm:$0x1]
      %v365 = vld [vmem:[%s287 + $0xb4] sm:$0xf]
      %v366 = vld [vmem:[%s287 + $0xb8] sm:$0xf]
      %v367 = vld [vmem:[%s287 + $0xbc] sm:$0x1]
      %368 = vst [vmem:[#allocation2] sm:$0xf] %v320
      %369 = vst [vmem:[#allocation2 + $0x4] sm:$0xf] %v321
      %370 = vst [vmem:[#allocation2 + $0x8] sm:$0x1] %v322
      %371 = vst [vmem:[#allocation2 + $0xc] sm:$0xf] %v323
      %372 = vst [vmem:[#allocation2 + $0x10] sm:$0xf] %v324
      %373 = vst [vmem:[#allocation2 + $0x14] sm:$0x1] %v325
      %374 = vst [vmem:[#allocation2 + $0x18] sm:$0xf] %v326
      %375 = vst [vmem:[#allocation2 + $0x1c] sm:$0xf] %v327
      %376 = vst [vmem:[#allocation2 + $0x20] sm:$0x1] %v328
      %377 = vst [vmem:[#allocation2 + $0x24] sm:$0xf] %v329
      %378 = vst [vmem:[#allocation2 + $0x28] sm:$0xf] %v330
      %379 = vst [vmem:[#allocation2 + $0x2c] sm:$0x1] %v331
      %380 = vst [vmem:[#allocation2 + $0x30] sm:$0xf] %v332
      %381 = vst [vmem:[#allocation2 + $0x34] sm:$0xf] %v333
      %382 = vst [vmem:[#allocation2 + $0x38] sm:$0x1] %v334
      %383 = vst [vmem:[#allocation2 + $0x3c] sm:$0xf] %v335
      %384 = vst [vmem:[#allocation2 + $0x40] sm:$0xf] %v336
      %385 = vst [vmem:[#allocation2 + $0x44] sm:$0x1] %v337
      %386 = vst [vmem:[#allocation2 + $0x48] sm:$0xf] %v338
      %387 = vst [vmem:[#allocation2 + $0x4c] sm:$0xf] %v339
      %388 = vst [vmem:[#allocation2 + $0x50] sm:$0x1] %v340
      %389 = vst [vmem:[#allocation2 + $0x54] sm:$0xf] %v341
      %390 = vst [vmem:[#allocation2 + $0x58] sm:$0xf] %v342
      %391 = vst [vmem:[#allocation2 + $0x5c] sm:$0x1] %v343
      %392 = vst [vmem:[#allocation2 + $0x60] sm:$0xf] %v344
      %393 = vst [vmem:[#allocation2 + $0x64] sm:$0xf] %v345
      %394 = vst [vmem:[#allocation2 + $0x68] sm:$0x1] %v346
      %395 = vst [vmem:[#allocation2 + $0x6c] sm:$0xf] %v347
      %396 = vst [vmem:[#allocation2 + $0x70] sm:$0xf] %v348
      %397 = vst [vmem:[#allocation2 + $0x74] sm:$0x1] %v349
      %398 = vst [vmem:[#allocation2 + $0x78] sm:$0xf] %v350
      %399 = vst [vmem:[#allocation2 + $0x7c] sm:$0xf] %v351
      %400 = vst [vmem:[#allocation2 + $0x80] sm:$0x1] %v352
      %401 = vst [vmem:[#allocation2 + $0x84] sm:$0xf] %v353
      %402 = vst [vmem:[#allocation2 + $0x88] sm:$0xf] %v354
      %403 = vst [vmem:[#allocation2 + $0x8c] sm:$0x1] %v355
      %404 = vst [vmem:[#allocation2 + $0x90] sm:$0xf] %v356
      %405 = vst [vmem:[#allocation2 + $0x94] sm:$0xf] %v357
      %406 = vst [vmem:[#allocation2 + $0x98] sm:$0x1] %v358
      %407 = vst [vmem:[#allocation2 + $0x9c] sm:$0xf] %v359
      %408 = vst [vmem:[#allocation2 + $0xa0] sm:$0xf] %v360
      %409 = vst [vmem:[#allocation2 + $0xa4] sm:$0x1] %v361
      %410 = vst [vmem:[#allocation2 + $0xa8] sm:$0xf] %v362
      %411 = vst [vmem:[#allocation2 + $0xac] sm:$0xf] %v363
      %412 = vst [vmem:[#allocation2 + $0xb0] sm:$0x1] %v364
      %413 = vst [vmem:[#allocation2 + $0xb4] sm:$0xf] %v365
      %414 = vst [vmem:[#allocation2 + $0xb8] sm:$0xf] %v366
      %415 = vst [vmem:[#allocation2 + $0xbc] sm:$0x1] %v367
      %v416 = vld [vmem:[%s305] sm:$0xf]
      %v417 = vld [vmem:[%s305 + $0x4] sm:$0xf]
      %v418 = vld [vmem:[%s305 + $0x8] sm:$0x1]
      %v419 = vld [vmem:[%s305 + $0xc] sm:$0xf]
      %v420 = vld [vmem:[%s305 + $0x10] sm:$0xf]
      %v421 = vld [vmem:[%s305 + $0x14] sm:$0x1]
      %s422 = scalar_lea.vmem [#allocation2], 192
      %423 = vst [vmem:[%s422] sm:$0xf] %v416
      %424 = vst [vmem:[%s422 + $0x4] sm:$0xf] %v417
      %425 = vst [vmem:[%s422 + $0x8] sm:$0x1] %v418
      %426 = vst [vmem:[%s422 + $0xc] sm:$0xf] %v419
      %427 = vst [vmem:[%s422 + $0x10] sm:$0xf] %v420
      %428 = vst [vmem:[%s422 + $0x14] sm:$0x1] %v421
      %v429 = vld [vmem:[#allocation2] sm:$0xf]
      %v430 = vld [vmem:[#allocation2 + $0x4] sm:$0xf]
      %v431 = vld [vmem:[#allocation2 + $0xc] sm:$0xf]
      %v432 = vld [vmem:[#allocation2 + $0x10] sm:$0xf]
      %v433 = vld [vmem:[#allocation2 + $0x18] sm:$0xf]
      %v434 = vld [vmem:[#allocation2 + $0x1c] sm:$0xf]
      %v435 = vld [vmem:[#allocation2 + $0x24] sm:$0xf]
      %v436 = vld [vmem:[#allocation2 + $0x28] sm:$0xf]
      %v437 = vld [vmem:[#allocation2 + $0x30] sm:$0xf]
      %v438 = vld [vmem:[#allocation2 + $0x34] sm:$0xf]
      %v439 = vld [vmem:[#allocation2 + $0x3c] sm:$0xf]
      %v440 = vld [vmem:[#allocation2 + $0x40] sm:$0xf]
      %v441 = vld [vmem:[#allocation2 + $0x48] sm:$0xf]
      %v442 = vld [vmem:[#allocation2 + $0x4c] sm:$0xf]
      %v443 = vld [vmem:[#allocation2 + $0x54] sm:$0xf]
      %v444 = vld [vmem:[#allocation2 + $0x58] sm:$0xf]
      %v445 = vld [vmem:[#allocation2 + $0x60] sm:$0xf]
      %v446 = vld [vmem:[#allocation2 + $0x64] sm:$0xf]
      %v447 = vld [vmem:[#allocation2 + $0x6c] sm:$0xf]
      %v448 = vld [vmem:[#allocation2 + $0x70] sm:$0xf]
      %v449 = vld [vmem:[#allocation2 + $0x78] sm:$0xf]
      %v450 = vld [vmem:[#allocation2 + $0x7c] sm:$0xf]
      %v451 = vld [vmem:[#allocation2 + $0x84] sm:$0xf]
      %v452 = vld [vmem:[#allocation2 + $0x88] sm:$0xf]
      %v453 = vld [vmem:[#allocation2 + $0x90] sm:$0xf]
      %v454 = vld [vmem:[#allocation2 + $0x94] sm:$0xf]
      %v455 = vld [vmem:[#allocation2 + $0x9c] sm:$0xf]
      %v456 = vld [vmem:[#allocation2 + $0xa0] sm:$0xf]
      %v457 = vld [vmem:[#allocation2 + $0xa8] sm:$0xf]
      %v458 = vld [vmem:[#allocation2 + $0xac] sm:$0xf]
      %v459 = vld [vmem:[#allocation2 + $0xb4] sm:$0xf]
      %v460 = vld [vmem:[#allocation2 + $0xb8] sm:$0xf]
      %v461 = vld [vmem:[%s2] sm:$0xf]
      %v462 = vld [vmem:[%s2 + $0x4] sm:$0xf]
      %v463 = vld [vmem:[%s2 + $0x8] sm:$0xf]
      %v464 = vld [vmem:[%s2 + $0xc] sm:$0xf]
      %v465 = vld [vmem:[%s2 + $0x10] sm:$0xf]
      %v466 = vld [vmem:[%s2 + $0x14] sm:$0xf]
      %v467 = vld [vmem:[%s2 + $0x18] sm:$0xf]
      %v468 = vld [vmem:[%s2 + $0x1c] sm:$0xf]
      %v469 = vld [vmem:[%s2 + $0x20] sm:$0xf]
      %v470 = vld [vmem:[%s2 + $0x24] sm:$0xf]
      %v471 = vld [vmem:[%s2 + $0x28] sm:$0xf]
      %v472 = vld [vmem:[%s2 + $0x2c] sm:$0xf]
      %v473 = vld [vmem:[%s2 + $0x30] sm:$0xf]
      %v474 = vld [vmem:[%s2 + $0x34] sm:$0xf]
      %v475 = vld [vmem:[%s2 + $0x38] sm:$0xf]
      %v476 = vld [vmem:[%s2 + $0x3c] sm:$0xf]
      %v477 = vld [vmem:[#allocation2 + $0x8] sm:$0x1]
      %v478 = vld [vmem:[#allocation2 + $0x14] sm:$0x1]
      %v479 = vld [vmem:[#allocation2 + $0x20] sm:$0x1]
      %v480 = vld [vmem:[#allocation2 + $0x2c] sm:$0x1]
      %v481 = vld [vmem:[#allocation2 + $0x38] sm:$0x1]
      %v482 = vld [vmem:[#allocation2 + $0x44] sm:$0x1]
      %v483 = vld [vmem:[#allocation2 + $0x50] sm:$0x1]
      %v484 = vld [vmem:[#allocation2 + $0x5c] sm:$0x1]
      %v485 = vld [vmem:[#allocation2 + $0x68] sm:$0x1]
      %v486 = vld [vmem:[#allocation2 + $0x74] sm:$0x1]
      %v487 = vld [vmem:[#allocation2 + $0x80] sm:$0x1]
      %v488 = vld [vmem:[#allocation2 + $0x8c] sm:$0x1]
      %v489 = vld [vmem:[#allocation2 + $0x98] sm:$0x1]
      %v490 = vld [vmem:[#allocation2 + $0xa4] sm:$0x1]
      %v491 = vld [vmem:[#allocation2 + $0xb0] sm:$0x1]
      %v492 = vld [vmem:[#allocation2 + $0xbc] sm:$0x1]
      %vm493 = vsmask.f32 3328
      %vm494 = vsmask.f32 7440
      %vm495 = vmor %vm493, %vm494
      %v497 = vshrl.u32 %v429, 16
      %v499 = vrot.slane %v497, 4
      %v500 = vshll.u32 %v429, 16
      %v502 = vrot.slane %v500, 5
      %v503 = vor.u32 %v499, %v502
      %v504 = vrot.slane %v503, 4
      %v506 = vshll.u32 %v430, 16
      %v508 = vrot.slane %v506, 5
      %v509 = vsel %vm495, %v504, %v508
      %v510 = vshrl.u32 %v430, 16
      %v512 = vrot.slane %v510, 4
      %v513 = vor.u32 %v512, %v508
      %v514 = vrot.slane %v513, 4
      %v516 = vshll.u32 %v477, 16
      %v518 = vrot.slane %v516, 5
      %v519 = vsel %vm495, %v514, %v518
      %v521 = vshrl.u32 %v431, 16
      %v523 = vrot.slane %v521, 4
      %v524 = vshll.u32 %v431, 16
      %v526 = vrot.slane %v524, 5
      %v527 = vor.u32 %v523, %v526
      %v528 = vrot.slane %v527, 4
      %v530 = vshll.u32 %v432, 16
      %v532 = vrot.slane %v530, 5
      %v533 = vsel %vm495, %v528, %v532
      %v534 = vshrl.u32 %v432, 16
      %v536 = vrot.slane %v534, 4
      %v537 = vor.u32 %v536, %v532
      %v538 = vrot.slane %v537, 4
      %v540 = vshll.u32 %v478, 16
      %v542 = vrot.slane %v540, 5
      %v543 = vsel %vm495, %v538, %v542
      %v545 = vshrl.u32 %v433, 16
      %v547 = vrot.slane %v545, 4
      %v548 = vshll.u32 %v433, 16
      %v550 = vrot.slane %v548, 5
      %v551 = vor.u32 %v547, %v550
      %v552 = vrot.slane %v551, 4
      %v554 = vshll.u32 %v434, 16
      %v556 = vrot.slane %v554, 5
      %v557 = vsel %vm495, %v552, %v556
      %v558 = vshrl.u32 %v434, 16
      %v560 = vrot.slane %v558, 4
      %v561 = vor.u32 %v560, %v556
      %v562 = vrot.slane %v561, 4
      %v564 = vshll.u32 %v479, 16
      %v566 = vrot.slane %v564, 5
      %v567 = vsel %vm495, %v562, %v566
      %v569 = vshrl.u32 %v435, 16
      %v571 = vrot.slane %v569, 4
      %v572 = vshll.u32 %v435, 16
      %v574 = vrot.slane %v572, 5
      %v575 = vor.u32 %v571, %v574
      %v576 = vrot.slane %v575, 4
      %v578 = vshll.u32 %v436, 16
      %v580 = vrot.slane %v578, 5
      %v581 = vsel %vm495, %v576, %v580
      %v582 = vshrl.u32 %v436, 16
      %v584 = vrot.slane %v582, 4
      %v585 = vor.u32 %v584, %v580
      %v586 = vrot.slane %v585, 4
      %v588 = vshll.u32 %v480, 16
      %v590 = vrot.slane %v588, 5
      %v591 = vsel %vm495, %v586, %v590
      %v593 = vshrl.u32 %v437, 16
      %v595 = vrot.slane %v593, 4
      %v596 = vshll.u32 %v437, 16
      %v598 = vrot.slane %v596, 5
      %v599 = vor.u32 %v595, %v598
      %v600 = vrot.slane %v599, 4
      %v602 = vshll.u32 %v438, 16
      %v604 = vrot.slane %v602, 5
      %v605 = vsel %vm495, %v600, %v604
      %v606 = vshrl.u32 %v438, 16
      %v608 = vrot.slane %v606, 4
      %v609 = vor.u32 %v608, %v604
      %v610 = vrot.slane %v609, 4
      %v612 = vshll.u32 %v481, 16
      %v614 = vrot.slane %v612, 5
      %v615 = vsel %vm495, %v610, %v614
      %v617 = vshrl.u32 %v439, 16
      %v619 = vrot.slane %v617, 4
      %v620 = vshll.u32 %v439, 16
      %v622 = vrot.slane %v620, 5
      %v623 = vor.u32 %v619, %v622
      %v624 = vrot.slane %v623, 4
      %v626 = vshll.u32 %v440, 16
      %v628 = vrot.slane %v626, 5
      %v629 = vsel %vm495, %v624, %v628
      %v630 = vshrl.u32 %v440, 16
      %v632 = vrot.slane %v630, 4
      %v633 = vor.u32 %v632, %v628
      %v634 = vrot.slane %v633, 4
      %v636 = vshll.u32 %v482, 16
      %v638 = vrot.slane %v636, 5
      %v639 = vsel %vm495, %v634, %v638
      %v641 = vshrl.u32 %v441, 16
      %v643 = vrot.slane %v641, 4
      %v644 = vshll.u32 %v441, 16
      %v646 = vrot.slane %v644, 5
      %v647 = vor.u32 %v643, %v646
      %v648 = vrot.slane %v647, 4
      %v650 = vshll.u32 %v442, 16
      %v652 = vrot.slane %v650, 5
      %v653 = vsel %vm495, %v648, %v652
      %v654 = vshrl.u32 %v442, 16
      %v656 = vrot.slane %v654, 4
      %v657 = vor.u32 %v656, %v652
      %v658 = vrot.slane %v657, 4
      %v660 = vshll.u32 %v483, 16
      %v662 = vrot.slane %v660, 5
      %v663 = vsel %vm495, %v658, %v662
      %v665 = vshrl.u32 %v443, 16
      %v667 = vrot.slane %v665, 4
      %v668 = vshll.u32 %v443, 16
      %v670 = vrot.slane %v668, 5
      %v671 = vor.u32 %v667, %v670
      %v672 = vrot.slane %v671, 4
      %v674 = vshll.u32 %v444, 16
      %v676 = vrot.slane %v674, 5
      %v677 = vsel %vm495, %v672, %v676
      %v678 = vshrl.u32 %v444, 16
      %v680 = vrot.slane %v678, 4
      %v681 = vor.u32 %v680, %v676
      %v682 = vrot.slane %v681, 4
      %v684 = vshll.u32 %v484, 16
      %v686 = vrot.slane %v684, 5
      %v687 = vsel %vm495, %v682, %v686
      %v689 = vshrl.u32 %v445, 16
      %v691 = vrot.slane %v689, 4
      %v692 = vshll.u32 %v445, 16
      %v694 = vrot.slane %v692, 5
      %v695 = vor.u32 %v691, %v694
      %v696 = vrot.slane %v695, 4
      %v698 = vshll.u32 %v446, 16
      %v700 = vrot.slane %v698, 5
      %v701 = vsel %vm495, %v696, %v700
      %v702 = vshrl.u32 %v446, 16
      %v704 = vrot.slane %v702, 4
      %v705 = vor.u32 %v704, %v700
      %v706 = vrot.slane %v705, 4
      %v708 = vshll.u32 %v485, 16
      %v710 = vrot.slane %v708, 5
      %v711 = vsel %vm495, %v706, %v710
      %v713 = vshrl.u32 %v447, 16
      %v715 = vrot.slane %v713, 4
      %v716 = vshll.u32 %v447, 16
      %v718 = vrot.slane %v716, 5
      %v719 = vor.u32 %v715, %v718
      %v720 = vrot.slane %v719, 4
      %v722 = vshll.u32 %v448, 16
      %v724 = vrot.slane %v722, 5
      %v725 = vsel %vm495, %v720, %v724
      %v726 = vshrl.u32 %v448, 16
      %v728 = vrot.slane %v726, 4
      %v729 = vor.u32 %v728, %v724
      %v730 = vrot.slane %v729, 4
      %v732 = vshll.u32 %v486, 16
      %v734 = vrot.slane %v732, 5
      %v735 = vsel %vm495, %v730, %v734
      %v737 = vshrl.u32 %v449, 16
      %v739 = vrot.slane %v737, 4
      %v740 = vshll.u32 %v449, 16
      %v742 = vrot.slane %v740, 5
      %v743 = vor.u32 %v739, %v742
      %v744 = vrot.slane %v743, 4
      %v746 = vshll.u32 %v450, 16
      %v748 = vrot.slane %v746, 5
      %v749 = vsel %vm495, %v744, %v748
      %v750 = vshrl.u32 %v450, 16
      %v752 = vrot.slane %v750, 4
      %v753 = vor.u32 %v752, %v748
      %v754 = vrot.slane %v753, 4
      %v756 = vshll.u32 %v487, 16
      %v758 = vrot.slane %v756, 5
      %v759 = vsel %vm495, %v754, %v758
      %v761 = vshrl.u32 %v451, 16
      %v763 = vrot.slane %v761, 4
      %v764 = vshll.u32 %v451, 16
      %v766 = vrot.slane %v764, 5
      %v767 = vor.u32 %v763, %v766
      %v768 = vrot.slane %v767, 4
      %v770 = vshll.u32 %v452, 16
      %v772 = vrot.slane %v770, 5
      %v773 = vsel %vm495, %v768, %v772
      %v774 = vshrl.u32 %v452, 16
      %v776 = vrot.slane %v774, 4
      %v777 = vor.u32 %v776, %v772
      %v778 = vrot.slane %v777, 4
      %v780 = vshll.u32 %v488, 16
      %v782 = vrot.slane %v780, 5
      %v783 = vsel %vm495, %v778, %v782
      %v785 = vshrl.u32 %v453, 16
      %v787 = vrot.slane %v785, 4
      %v788 = vshll.u32 %v453, 16
      %v790 = vrot.slane %v788, 5
      %v791 = vor.u32 %v787, %v790
      %v792 = vrot.slane %v791, 4
      %v794 = vshll.u32 %v454, 16
      %v796 = vrot.slane %v794, 5
      %v797 = vsel %vm495, %v792, %v796
      %v798 = vshrl.u32 %v454, 16
      %v800 = vrot.slane %v798, 4
      %v801 = vor.u32 %v800, %v796
      %v802 = vrot.slane %v801, 4
      %v804 = vshll.u32 %v489, 16
      %v806 = vrot.slane %v804, 5
      %v807 = vsel %vm495, %v802, %v806
      %v809 = vshrl.u32 %v455, 16
      %v811 = vrot.slane %v809, 4
      %v812 = vshll.u32 %v455, 16
      %v814 = vrot.slane %v812, 5
      %v815 = vor.u32 %v811, %v814
      %v816 = vrot.slane %v815, 4
      %v818 = vshll.u32 %v456, 16
      %v820 = vrot.slane %v818, 5
      %v821 = vsel %vm495, %v816, %v820
      %v822 = vshrl.u32 %v456, 16
      %v824 = vrot.slane %v822, 4
      %v825 = vor.u32 %v824, %v820
      %v826 = vrot.slane %v825, 4
      %v828 = vshll.u32 %v490, 16
      %v830 = vrot.slane %v828, 5
      %v831 = vsel %vm495, %v826, %v830
      %v833 = vshrl.u32 %v457, 16
      %v835 = vrot.slane %v833, 4
      %v836 = vshll.u32 %v457, 16
      %v838 = vrot.slane %v836, 5
      %v839 = vor.u32 %v835, %v838
      %v840 = vrot.slane %v839, 4
      %v842 = vshll.u32 %v458, 16
      %v844 = vrot.slane %v842, 5
      %v845 = vsel %vm495, %v840, %v844
      %v846 = vshrl.u32 %v458, 16
      %v848 = vrot.slane %v846, 4
      %v849 = vor.u32 %v848, %v844
      %v850 = vrot.slane %v849, 4
      %v852 = vshll.u32 %v491, 16
      %v854 = vrot.slane %v852, 5
      %v855 = vsel %vm495, %v850, %v854
      %v857 = vshrl.u32 %v459, 16
      %v859 = vrot.slane %v857, 4
      %v860 = vshll.u32 %v459, 16
      %v862 = vrot.slane %v860, 5
      %v863 = vor.u32 %v859, %v862
      %v864 = vrot.slane %v863, 4
      %v866 = vshll.u32 %v460, 16
      %v868 = vrot.slane %v866, 5
      %v869 = vsel %vm495, %v864, %v868
      %v870 = vshrl.u32 %v460, 16
      %v872 = vrot.slane %v870, 4
      %v873 = vor.u32 %v872, %v868
      %v874 = vrot.slane %v873, 4
      %v876 = vshll.u32 %v492, 16
      %v878 = vrot.slane %v876, 5
      %v879 = vsel %vm495, %v874, %v878
      %s880 = scalar_lea.vmem %s2, 64
      %v881 = vld [vmem:[%s880] sm:$0xf]
      %v882 = vld [vmem:[%s880 + $0x4] sm:$0xf]
      %v883 = vld [vmem:[%s880 + $0x8] sm:$0xf]
      %v884 = vld [vmem:[%s880 + $0xc] sm:$0xf]
      %v885 = vld [vmem:[%s880 + $0x10] sm:$0xf]
      %v886 = vld [vmem:[%s880 + $0x14] sm:$0xf]
      %v887 = vld [vmem:[%s880 + $0x18] sm:$0xf]
      %v888 = vld [vmem:[%s880 + $0x1c] sm:$0xf]
      %v889 = vld [vmem:[%s880 + $0x20] sm:$0xf]
      %v890 = vld [vmem:[%s880 + $0x24] sm:$0xf]
      %v891 = vld [vmem:[%s880 + $0x28] sm:$0xf]
      %v892 = vld [vmem:[%s880 + $0x2c] sm:$0xf]
      %v893 = vld [vmem:[%s880 + $0x30] sm:$0xf]
      %v894 = vld [vmem:[%s880 + $0x34] sm:$0xf]
      %v895 = vld [vmem:[%s880 + $0x38] sm:$0xf]
      %v896 = vld [vmem:[%s880 + $0x3c] sm:$0xf]
      %v897 = vunpack.c.l.b16 %v509
      %v898 = vunpack.c.l.b16 %v519
      %v899 = vunpack.c.l.b16 %v533
      %v900 = vunpack.c.l.b16 %v543
      %v901 = vunpack.c.l.b16 %v557
      %v902 = vunpack.c.l.b16 %v567
      %v903 = vunpack.c.l.b16 %v581
      %v904 = vunpack.c.l.b16 %v591
      %v905 = vunpack.c.l.b16 %v605
      %v906 = vunpack.c.l.b16 %v615
      %v907 = vunpack.c.l.b16 %v629
      %v908 = vunpack.c.l.b16 %v639
      %v909 = vunpack.c.l.b16 %v653
      %v910 = vunpack.c.l.b16 %v663
      %v911 = vunpack.c.l.b16 %v677
      %v912 = vunpack.c.l.b16 %v687
      %v913 = vunpack.c.l.b16 %v701
      %v914 = vunpack.c.l.b16 %v711
      %v915 = vunpack.c.l.b16 %v725
      %v916 = vunpack.c.l.b16 %v735
      %v917 = vunpack.c.l.b16 %v749
      %v918 = vunpack.c.l.b16 %v759
      %v919 = vunpack.c.l.b16 %v773
      %v920 = vunpack.c.l.b16 %v783
      %v921 = vunpack.c.l.b16 %v797
      %v922 = vunpack.c.l.b16 %v807
      %v923 = vunpack.c.l.b16 %v821
      %v924 = vunpack.c.l.b16 %v831
      %v925 = vunpack.c.l.b16 %v845
      %v926 = vunpack.c.l.b16 %v855
      %v927 = vunpack.c.l.b16 %v869
      %v928 = vunpack.c.l.b16 %v879
      %v929 = vpack.c.b16 %v898, %v897
      %v930 = vpack.c.b16 %v900, %v899
      %v931 = vpack.c.b16 %v902, %v901
      %v932 = vpack.c.b16 %v904, %v903
      %v933 = vpack.c.b16 %v906, %v905
      %v934 = vpack.c.b16 %v908, %v907
      %v935 = vpack.c.b16 %v910, %v909
      %v936 = vpack.c.b16 %v912, %v911
      %v937 = vpack.c.b16 %v914, %v913
      %v938 = vpack.c.b16 %v916, %v915
      %v939 = vpack.c.b16 %v918, %v917
      %v940 = vpack.c.b16 %v920, %v919
      %v941 = vpack.c.b16 %v922, %v921
      %v942 = vpack.c.b16 %v924, %v923
      %v943 = vpack.c.b16 %v926, %v925
      %v944 = vpack.c.b16 %v928, %v927
      %v977 = vunpack.c.l.b16 %v881
      %v978 = vunpack.c.l.b16 %v882
      %v979 = vunpack.c.l.b16 %v883
      %v980 = vunpack.c.l.b16 %v884
      %v981 = vunpack.c.l.b16 %v885
      %v982 = vunpack.c.l.b16 %v886
      %v983 = vunpack.c.l.b16 %v887
      %v984 = vunpack.c.l.b16 %v888
      %v985 = vunpack.c.l.b16 %v889
      %v986 = vunpack.c.l.b16 %v890
      %v987 = vunpack.c.l.b16 %v891
      %v988 = vunpack.c.l.b16 %v892
      %v989 = vunpack.c.l.b16 %v893
      %v990 = vunpack.c.l.b16 %v894
      %v991 = vunpack.c.l.b16 %v895
      %v992 = vunpack.c.l.b16 %v896
      %v993 = vpack.c.b16 %v978, %v977
      %v994 = vpack.c.b16 %v980, %v979
      %v995 = vpack.c.b16 %v982, %v981
      %v996 = vpack.c.b16 %v984, %v983
      %v997 = vpack.c.b16 %v986, %v985
      %v998 = vpack.c.b16 %v988, %v987
      %v999 = vpack.c.b16 %v990, %v989
      %v1000 = vpack.c.b16 %v992, %v991
      %1009 = vmatpush.bf16.msra.mxu0 %v1000
      %1010 = vmatpush.bf16.msra.mxu0 %v999
      %1011 = vmatpush.bf16.msra.mxu0 %v998
      %1012 = vmatpush.bf16.msra.mxu0 %v997
      %1013 = vmatpush.bf16.msra.mxu0 %v996
      %1014 = vmatpush.bf16.msra.mxu0 %v995
      %1015 = vmatpush.bf16.msra.mxu0 %v994
      %1016 = vmatpush.bf16.msra.mxu0 %v993
      %1017 = vmatmul.bf16.gmra.mxu0 %v929
      %v1018 = vpop.f32.mrf.mxu0
      %v1019 = vadd.f32 0.0, %v1018
      %v1020 = vpop.f32.mrf.mxu0
      %v1021 = vadd.f32 0.0, %v1020
      %1022 = vmatmul.bf16.gmra.mxu0 %v930
      %v1023 = vpop.f32.mrf.mxu0
      %v1024 = vadd.f32 0.0, %v1023
      %v1025 = vpop.f32.mrf.mxu0
      %v1026 = vadd.f32 0.0, %v1025
      %1027 = vmatmul.bf16.gmra.mxu0 %v931
      %v1028 = vpop.f32.mrf.mxu0
      %v1029 = vadd.f32 0.0, %v1028
      %v1030 = vpop.f32.mrf.mxu0
      %v1031 = vadd.f32 0.0, %v1030
      %1032 = vmatmul.bf16.gmra.mxu0 %v932
      %v1033 = vpop.f32.mrf.mxu0
      %v1034 = vadd.f32 0.0, %v1033
      %v1035 = vpop.f32.mrf.mxu0
      %v1036 = vadd.f32 0.0, %v1035
      %1037 = vmatmul.bf16.gmra.mxu0 %v933
      %v1038 = vpop.f32.mrf.mxu0
      %v1039 = vadd.f32 0.0, %v1038
      %v1040 = vpop.f32.mrf.mxu0
      %v1041 = vadd.f32 0.0, %v1040
      %1042 = vmatmul.bf16.gmra.mxu0 %v934
      %v1043 = vpop.f32.mrf.mxu0
      %v1044 = vadd.f32 0.0, %v1043
      %v1045 = vpop.f32.mrf.mxu0
      %v1046 = vadd.f32 0.0, %v1045
      %1047 = vmatmul.bf16.gmra.mxu0 %v935
      %v1048 = vpop.f32.mrf.mxu0
      %v1049 = vadd.f32 0.0, %v1048
      %v1050 = vpop.f32.mrf.mxu0
      %v1051 = vadd.f32 0.0, %v1050
      %1052 = vmatmul.bf16.gmra.mxu0 %v936
      %v1053 = vpop.f32.mrf.mxu0
      %v1054 = vadd.f32 0.0, %v1053
      %v1055 = vpop.f32.mrf.mxu0
      %v1056 = vadd.f32 0.0, %v1055
      %1057 = vmatmul.bf16.gmra.mxu0 %v937
      %v1058 = vpop.f32.mrf.mxu0
      %v1059 = vadd.f32 0.0, %v1058
      %v1060 = vpop.f32.mrf.mxu0
      %v1061 = vadd.f32 0.0, %v1060
      %1062 = vmatmul.bf16.gmra.mxu0 %v938
      %v1063 = vpop.f32.mrf.mxu0
      %v1064 = vadd.f32 0.0, %v1063
      %v1065 = vpop.f32.mrf.mxu0
      %v1066 = vadd.f32 0.0, %v1065
      %1067 = vmatmul.bf16.gmra.mxu0 %v939
      %v1068 = vpop.f32.mrf.mxu0
      %v1069 = vadd.f32 0.0, %v1068
      %v1070 = vpop.f32.mrf.mxu0
      %v1071 = vadd.f32 0.0, %v1070
      %1072 = vmatmul.bf16.gmra.mxu0 %v940
      %v1073 = vpop.f32.mrf.mxu0
      %v1074 = vadd.f32 0.0, %v1073
      %v1075 = vpop.f32.mrf.mxu0
      %v1076 = vadd.f32 0.0, %v1075
      %1077 = vmatmul.bf16.gmra.mxu0 %v941
      %v1078 = vpop.f32.mrf.mxu0
      %v1079 = vadd.f32 0.0, %v1078
      %v1080 = vpop.f32.mrf.mxu0
      %v1081 = vadd.f32 0.0, %v1080
      %1082 = vmatmul.bf16.gmra.mxu0 %v942
      %v1083 = vpop.f32.mrf.mxu0
      %v1084 = vadd.f32 0.0, %v1083
      %v1085 = vpop.f32.mrf.mxu0
      %v1086 = vadd.f32 0.0, %v1085
      %1087 = vmatmul.bf16.gmra.mxu0 %v943
      %v1088 = vpop.f32.mrf.mxu0
      %v1089 = vadd.f32 0.0, %v1088
      %v1090 = vpop.f32.mrf.mxu0
      %v1091 = vadd.f32 0.0, %v1090
      %1092 = vmatmul.bf16.gmra.mxu0 %v944
      %v1093 = vpop.f32.mrf.mxu0
      %v1094 = vadd.f32 0.0, %v1093
      %v1095 = vpop.f32.mrf.mxu0
      %v1096 = vadd.f32 0.0, %v1095
      %1097 = vdwg.mxu0
      %v1130 = vunpack.c.l.b16 %v429
      %v1131 = vunpack.c.l.b16 %v430
      %v1132 = vunpack.c.l.b16 %v431
      %v1133 = vunpack.c.l.b16 %v432
      %v1134 = vunpack.c.l.b16 %v433
      %v1135 = vunpack.c.l.b16 %v434
      %v1136 = vunpack.c.l.b16 %v435
      %v1137 = vunpack.c.l.b16 %v436
      %v1138 = vunpack.c.l.b16 %v437
      %v1139 = vunpack.c.l.b16 %v438
      %v1140 = vunpack.c.l.b16 %v439
      %v1141 = vunpack.c.l.b16 %v440
      %v1142 = vunpack.c.l.b16 %v441
      %v1143 = vunpack.c.l.b16 %v442
      %v1144 = vunpack.c.l.b16 %v443
      %v1145 = vunpack.c.l.b16 %v444
      %v1146 = vunpack.c.l.b16 %v445
      %v1147 = vunpack.c.l.b16 %v446
      %v1148 = vunpack.c.l.b16 %v447
      %v1149 = vunpack.c.l.b16 %v448
      %v1150 = vunpack.c.l.b16 %v449
      %v1151 = vunpack.c.l.b16 %v450
      %v1152 = vunpack.c.l.b16 %v451
      %v1153 = vunpack.c.l.b16 %v452
      %v1154 = vunpack.c.l.b16 %v453
      %v1155 = vunpack.c.l.b16 %v454
      %v1156 = vunpack.c.l.b16 %v455
      %v1157 = vunpack.c.l.b16 %v456
      %v1158 = vunpack.c.l.b16 %v457
      %v1159 = vunpack.c.l.b16 %v458
      %v1160 = vunpack.c.l.b16 %v459
      %v1161 = vunpack.c.l.b16 %v460
      %v1162 = vpack.c.b16 %v1131, %v1130
      %v1163 = vpack.c.b16 %v1133, %v1132
      %v1164 = vpack.c.b16 %v1135, %v1134
      %v1165 = vpack.c.b16 %v1137, %v1136
      %v1166 = vpack.c.b16 %v1139, %v1138
      %v1167 = vpack.c.b16 %v1141, %v1140
      %v1168 = vpack.c.b16 %v1143, %v1142
      %v1169 = vpack.c.b16 %v1145, %v1144
      %v1170 = vpack.c.b16 %v1147, %v1146
      %v1171 = vpack.c.b16 %v1149, %v1148
      %v1172 = vpack.c.b16 %v1151, %v1150
      %v1173 = vpack.c.b16 %v1153, %v1152
      %v1174 = vpack.c.b16 %v1155, %v1154
      %v1175 = vpack.c.b16 %v1157, %v1156
      %v1176 = vpack.c.b16 %v1159, %v1158
      %v1177 = vpack.c.b16 %v1161, %v1160
      %v1210 = vunpack.c.l.b16 %v461
      %v1211 = vunpack.c.l.b16 %v462
      %v1212 = vunpack.c.l.b16 %v463
      %v1213 = vunpack.c.l.b16 %v464
      %v1214 = vunpack.c.l.b16 %v465
      %v1215 = vunpack.c.l.b16 %v466
      %v1216 = vunpack.c.l.b16 %v467
      %v1217 = vunpack.c.l.b16 %v468
      %v1218 = vunpack.c.l.b16 %v469
      %v1219 = vunpack.c.l.b16 %v470
      %v1220 = vunpack.c.l.b16 %v471
      %v1221 = vunpack.c.l.b16 %v472
      %v1222 = vunpack.c.l.b16 %v473
      %v1223 = vunpack.c.l.b16 %v474
      %v1224 = vunpack.c.l.b16 %v475
      %v1225 = vunpack.c.l.b16 %v476
      %v1226 = vpack.c.b16 %v1211, %v1210
      %v1227 = vpack.c.b16 %v1213, %v1212
      %v1228 = vpack.c.b16 %v1215, %v1214
      %v1229 = vpack.c.b16 %v1217, %v1216
      %v1230 = vpack.c.b16 %v1219, %v1218
      %v1231 = vpack.c.b16 %v1221, %v1220
      %v1232 = vpack.c.b16 %v1223, %v1222
      %v1233 = vpack.c.b16 %v1225, %v1224
      %1242 = vmatpush.bf16.msra.mxu0 %v1233
      %1243 = vmatpush.bf16.msra.mxu0 %v1232
      %1244 = vmatpush.bf16.msra.mxu0 %v1231
      %1245 = vmatpush.bf16.msra.mxu0 %v1230
      %1246 = vmatpush.bf16.msra.mxu0 %v1229
      %1247 = vmatpush.bf16.msra.mxu0 %v1228
      %1248 = vmatpush.bf16.msra.mxu0 %v1227
      %1249 = vmatpush.bf16.msra.mxu0 %v1226
      %1250 = vmatmul.bf16.gmra.mxu0 %v1162
      %v1251 = vpop.f32.mrf.mxu0
      %v1252 = vadd.f32 %v1019, %v1251
      %v1253 = vpop.f32.mrf.mxu0
      %v1254 = vadd.f32 %v1021, %v1253
      %1255 = vmatmul.bf16.gmra.mxu0 %v1163
      %v1256 = vpop.f32.mrf.mxu0
      %v1257 = vadd.f32 %v1024, %v1256
      %v1258 = vpop.f32.mrf.mxu0
      %v1259 = vadd.f32 %v1026, %v1258
      %1260 = vmatmul.bf16.gmra.mxu0 %v1164
      %v1261 = vpop.f32.mrf.mxu0
      %v1262 = vadd.f32 %v1029, %v1261
      %v1263 = vpop.f32.mrf.mxu0
      %v1264 = vadd.f32 %v1031, %v1263
      %1265 = vmatmul.bf16.gmra.mxu0 %v1165
      %v1266 = vpop.f32.mrf.mxu0
      %v1267 = vadd.f32 %v1034, %v1266
      %v1268 = vpop.f32.mrf.mxu0
      %v1269 = vadd.f32 %v1036, %v1268
      %1270 = vmatmul.bf16.gmra.mxu0 %v1166
      %v1271 = vpop.f32.mrf.mxu0
      %v1272 = vadd.f32 %v1039, %v1271
      %v1273 = vpop.f32.mrf.mxu0
      %v1274 = vadd.f32 %v1041, %v1273
      %1275 = vmatmul.bf16.gmra.mxu0 %v1167
      %v1276 = vpop.f32.mrf.mxu0
      %v1277 = vadd.f32 %v1044, %v1276
      %v1278 = vpop.f32.mrf.mxu0
      %v1279 = vadd.f32 %v1046, %v1278
      %1280 = vmatmul.bf16.gmra.mxu0 %v1168
      %v1281 = vpop.f32.mrf.mxu0
      %v1282 = vadd.f32 %v1049, %v1281
      %v1283 = vpop.f32.mrf.mxu0
      %v1284 = vadd.f32 %v1051, %v1283
      %1285 = vmatmul.bf16.gmra.mxu0 %v1169
      %v1286 = vpop.f32.mrf.mxu0
      %v1287 = vadd.f32 %v1054, %v1286
      %v1288 = vpop.f32.mrf.mxu0
      %v1289 = vadd.f32 %v1056, %v1288
      %1290 = vmatmul.bf16.gmra.mxu0 %v1170
      %v1291 = vpop.f32.mrf.mxu0
      %v1292 = vadd.f32 %v1059, %v1291
      %v1293 = vpop.f32.mrf.mxu0
      %v1294 = vadd.f32 %v1061, %v1293
      %1295 = vmatmul.bf16.gmra.mxu0 %v1171
      %v1296 = vpop.f32.mrf.mxu0
      %v1297 = vadd.f32 %v1064, %v1296
      %v1298 = vpop.f32.mrf.mxu0
      %v1299 = vadd.f32 %v1066, %v1298
      %1300 = vmatmul.bf16.gmra.mxu0 %v1172
      %v1301 = vpop.f32.mrf.mxu0
      %v1302 = vadd.f32 %v1069, %v1301
      %v1303 = vpop.f32.mrf.mxu0
      %v1304 = vadd.f32 %v1071, %v1303
      %1305 = vmatmul.bf16.gmra.mxu0 %v1173
      %v1306 = vpop.f32.mrf.mxu0
      %v1307 = vadd.f32 %v1074, %v1306
      %v1308 = vpop.f32.mrf.mxu0
      %v1309 = vadd.f32 %v1076, %v1308
      %1310 = vmatmul.bf16.gmra.mxu0 %v1174
      %v1311 = vpop.f32.mrf.mxu0
      %v1312 = vadd.f32 %v1079, %v1311
      %v1313 = vpop.f32.mrf.mxu0
      %v1314 = vadd.f32 %v1081, %v1313
      %1315 = vmatmul.bf16.gmra.mxu0 %v1175
      %v1316 = vpop.f32.mrf.mxu0
      %v1317 = vadd.f32 %v1084, %v1316
      %v1318 = vpop.f32.mrf.mxu0
      %v1319 = vadd.f32 %v1086, %v1318
      %1320 = vmatmul.bf16.gmra.mxu0 %v1176
      %v1321 = vpop.f32.mrf.mxu0
      %v1322 = vadd.f32 %v1089, %v1321
      %v1323 = vpop.f32.mrf.mxu0
      %v1324 = vadd.f32 %v1091, %v1323
      %1325 = vmatmul.bf16.gmra.mxu0 %v1177
      %v1326 = vpop.f32.mrf.mxu0
      %v1327 = vadd.f32 %v1094, %v1326
      %v1328 = vpop.f32.mrf.mxu0
      %v1329 = vadd.f32 %v1096, %v1328
      %1330 = vdwg.mxu0
      %v1331 = vld [vmem:[#allocation2] sm:$0xe]
      %v1332 = vld [vmem:[#allocation2 + $0xc] sm:$0xe]
      %v1333 = vld [vmem:[#allocation2 + $0x18] sm:$0xe]
      %v1334 = vld [vmem:[#allocation2 + $0x24] sm:$0xe]
      %v1335 = vld [vmem:[#allocation2 + $0x30] sm:$0xe]
      %v1336 = vld [vmem:[#allocation2 + $0x3c] sm:$0xe]
      %v1337 = vld [vmem:[#allocation2 + $0x48] sm:$0xe]
      %v1338 = vld [vmem:[#allocation2 + $0x54] sm:$0xe]
      %v1339 = vld [vmem:[#allocation2 + $0x60] sm:$0xe]
      %v1340 = vld [vmem:[#allocation2 + $0x6c] sm:$0xe]
      %v1341 = vld [vmem:[#allocation2 + $0x78] sm:$0xe]
      %v1342 = vld [vmem:[#allocation2 + $0x84] sm:$0xe]
      %v1343 = vld [vmem:[#allocation2 + $0x90] sm:$0xe]
      %v1344 = vld [vmem:[#allocation2 + $0x9c] sm:$0xe]
      %v1345 = vld [vmem:[#allocation2 + $0xa8] sm:$0xe]
      %v1346 = vld [vmem:[#allocation2 + $0xb4] sm:$0xe]
      %vm1379 = vcmask 1042432
      %vm1380 = vcmask 1046532
      %vm1381 = vmor %vm1379, %vm1380
      %v1382 = vrot.slane %v1331, 5
      %v1383 = vrot.slane %v1382, 4
      %v1384 = vrot.slane %v430, 5
      %v1385 = vsel %vm1381, %v1383, %v1384
      %v1386 = vrot.slane %v1384, 4
      %v1387 = vrot.slane %v477, 5
      %v1388 = vsel %vm1381, %v1386, %v1387
      %v1389 = vrot.slane %v1332, 5
      %v1390 = vrot.slane %v1389, 4
      %v1391 = vrot.slane %v432, 5
      %v1392 = vsel %vm1381, %v1390, %v1391
      %v1393 = vrot.slane %v1391, 4
      %v1394 = vrot.slane %v478, 5
      %v1395 = vsel %vm1381, %v1393, %v1394
      %v1396 = vrot.slane %v1333, 5
      %v1397 = vrot.slane %v1396, 4
      %v1398 = vrot.slane %v434, 5
      %v1399 = vsel %vm1381, %v1397, %v1398
      %v1400 = vrot.slane %v1398, 4
      %v1401 = vrot.slane %v479, 5
      %v1402 = vsel %vm1381, %v1400, %v1401
      %v1403 = vrot.slane %v1334, 5
      %v1404 = vrot.slane %v1403, 4
      %v1405 = vrot.slane %v436, 5
      %v1406 = vsel %vm1381, %v1404, %v1405
      %v1407 = vrot.slane %v1405, 4
      %v1408 = vrot.slane %v480, 5
      %v1409 = vsel %vm1381, %v1407, %v1408
      %v1410 = vrot.slane %v1335, 5
      %v1411 = vrot.slane %v1410, 4
      %v1412 = vrot.slane %v438, 5
      %v1413 = vsel %vm1381, %v1411, %v1412
      %v1414 = vrot.slane %v1412, 4
      %v1415 = vrot.slane %v481, 5
      %v1416 = vsel %vm1381, %v1414, %v1415
      %v1417 = vrot.slane %v1336, 5
      %v1418 = vrot.slane %v1417, 4
      %v1419 = vrot.slane %v440, 5
      %v1420 = vsel %vm1381, %v1418, %v1419
      %v1421 = vrot.slane %v1419, 4
      %v1422 = vrot.slane %v482, 5
      %v1423 = vsel %vm1381, %v1421, %v1422
      %v1424 = vrot.slane %v1337, 5
      %v1425 = vrot.slane %v1424, 4
      %v1426 = vrot.slane %v442, 5
      %v1427 = vsel %vm1381, %v1425, %v1426
      %v1428 = vrot.slane %v1426, 4
      %v1429 = vrot.slane %v483, 5
      %v1430 = vsel %vm1381, %v1428, %v1429
      %v1431 = vrot.slane %v1338, 5
      %v1432 = vrot.slane %v1431, 4
      %v1433 = vrot.slane %v444, 5
      %v1434 = vsel %vm1381, %v1432, %v1433
      %v1435 = vrot.slane %v1433, 4
      %v1436 = vrot.slane %v484, 5
      %v1437 = vsel %vm1381, %v1435, %v1436
      %v1438 = vrot.slane %v1339, 5
      %v1439 = vrot.slane %v1438, 4
      %v1440 = vrot.slane %v446, 5
      %v1441 = vsel %vm1381, %v1439, %v1440
      %v1442 = vrot.slane %v1440, 4
      %v1443 = vrot.slane %v485, 5
      %v1444 = vsel %vm1381, %v1442, %v1443
      %v1445 = vrot.slane %v1340, 5
      %v1446 = vrot.slane %v1445, 4
      %v1447 = vrot.slane %v448, 5
      %v1448 = vsel %vm1381, %v1446, %v1447
      %v1449 = vrot.slane %v1447, 4
      %v1450 = vrot.slane %v486, 5
      %v1451 = vsel %vm1381, %v1449, %v1450
      %v1452 = vrot.slane %v1341, 5
      %v1453 = vrot.slane %v1452, 4
      %v1454 = vrot.slane %v450, 5
      %v1455 = vsel %vm1381, %v1453, %v1454
      %v1456 = vrot.slane %v1454, 4
      %v1457 = vrot.slane %v487, 5
      %v1458 = vsel %vm1381, %v1456, %v1457
      %v1459 = vrot.slane %v1342, 5
      %v1460 = vrot.slane %v1459, 4
      %v1461 = vrot.slane %v452, 5
      %v1462 = vsel %vm1381, %v1460, %v1461
      %v1463 = vrot.slane %v1461, 4
      %v1464 = vrot.slane %v488, 5
      %v1465 = vsel %vm1381, %v1463, %v1464
      %v1466 = vrot.slane %v1343, 5
      %v1467 = vrot.slane %v1466, 4
      %v1468 = vrot.slane %v454, 5
      %v1469 = vsel %vm1381, %v1467, %v1468
      %v1470 = vrot.slane %v1468, 4
      %v1471 = vrot.slane %v489, 5
      %v1472 = vsel %vm1381, %v1470, %v1471
      %v1473 = vrot.slane %v1344, 5
      %v1474 = vrot.slane %v1473, 4
      %v1475 = vrot.slane %v456, 5
      %v1476 = vsel %vm1381, %v1474, %v1475
      %v1477 = vrot.slane %v1475, 4
      %v1478 = vrot.slane %v490, 5
      %v1479 = vsel %vm1381, %v1477, %v1478
      %v1480 = vrot.slane %v1345, 5
      %v1481 = vrot.slane %v1480, 4
      %v1482 = vrot.slane %v458, 5
      %v1483 = vsel %vm1381, %v1481, %v1482
      %v1484 = vrot.slane %v1482, 4
      %v1485 = vrot.slane %v491, 5
      %v1486 = vsel %vm1381, %v1484, %v1485
      %v1487 = vrot.slane %v1346, 5
      %v1488 = vrot.slane %v1487, 4
      %v1489 = vrot.slane %v460, 5
      %v1490 = vsel %vm1381, %v1488, %v1489
      %v1491 = vrot.slane %v1489, 4
      %v1492 = vrot.slane %v492, 5
      %v1493 = vsel %vm1381, %v1491, %v1492
      %s1494 = scalar_lea.vmem %s2, 128
      %v1495 = vld [vmem:[%s1494] sm:$0xf]
      %v1496 = vld [vmem:[%s1494 + $0x4] sm:$0xf]
      %v1497 = vld [vmem:[%s1494 + $0x8] sm:$0xf]
      %v1498 = vld [vmem:[%s1494 + $0xc] sm:$0xf]
      %v1499 = vld [vmem:[%s1494 + $0x10] sm:$0xf]
      %v1500 = vld [vmem:[%s1494 + $0x14] sm:$0xf]
      %v1501 = vld [vmem:[%s1494 + $0x18] sm:$0xf]
      %v1502 = vld [vmem:[%s1494 + $0x1c] sm:$0xf]
      %v1503 = vld [vmem:[%s1494 + $0x20] sm:$0xf]
      %v1504 = vld [vmem:[%s1494 + $0x24] sm:$0xf]
      %v1505 = vld [vmem:[%s1494 + $0x28] sm:$0xf]
      %v1506 = vld [vmem:[%s1494 + $0x2c] sm:$0xf]
      %v1507 = vld [vmem:[%s1494 + $0x30] sm:$0xf]
      %v1508 = vld [vmem:[%s1494 + $0x34] sm:$0xf]
      %v1509 = vld [vmem:[%s1494 + $0x38] sm:$0xf]
      %v1510 = vld [vmem:[%s1494 + $0x3c] sm:$0xf]
      %v1511 = vunpack.c.l.b16 %v1385
      %v1512 = vunpack.c.l.b16 %v1388
      %v1513 = vunpack.c.l.b16 %v1392
      %v1514 = vunpack.c.l.b16 %v1395
      %v1515 = vunpack.c.l.b16 %v1399
      %v1516 = vunpack.c.l.b16 %v1402
      %v1517 = vunpack.c.l.b16 %v1406
      %v1518 = vunpack.c.l.b16 %v1409
      %v1519 = vunpack.c.l.b16 %v1413
      %v1520 = vunpack.c.l.b16 %v1416
      %v1521 = vunpack.c.l.b16 %v1420
      %v1522 = vunpack.c.l.b16 %v1423
      %v1523 = vunpack.c.l.b16 %v1427
      %v1524 = vunpack.c.l.b16 %v1430
      %v1525 = vunpack.c.l.b16 %v1434
      %v1526 = vunpack.c.l.b16 %v1437
      %v1527 = vunpack.c.l.b16 %v1441
      %v1528 = vunpack.c.l.b16 %v1444
      %v1529 = vunpack.c.l.b16 %v1448
      %v1530 = vunpack.c.l.b16 %v1451
      %v1531 = vunpack.c.l.b16 %v1455
      %v1532 = vunpack.c.l.b16 %v1458
      %v1533 = vunpack.c.l.b16 %v1462
      %v1534 = vunpack.c.l.b16 %v1465
      %v1535 = vunpack.c.l.b16 %v1469
      %v1536 = vunpack.c.l.b16 %v1472
      %v1537 = vunpack.c.l.b16 %v1476
      %v1538 = vunpack.c.l.b16 %v1479
      %v1539 = vunpack.c.l.b16 %v1483
      %v1540 = vunpack.c.l.b16 %v1486
      %v1541 = vunpack.c.l.b16 %v1490
      %v1542 = vunpack.c.l.b16 %v1493
      %v1543 = vpack.c.b16 %v1512, %v1511
      %v1544 = vpack.c.b16 %v1514, %v1513
      %v1545 = vpack.c.b16 %v1516, %v1515
      %v1546 = vpack.c.b16 %v1518, %v1517
      %v1547 = vpack.c.b16 %v1520, %v1519
      %v1548 = vpack.c.b16 %v1522, %v1521
      %v1549 = vpack.c.b16 %v1524, %v1523
      %v1550 = vpack.c.b16 %v1526, %v1525
      %v1551 = vpack.c.b16 %v1528, %v1527
      %v1552 = vpack.c.b16 %v1530, %v1529
      %v1553 = vpack.c.b16 %v1532, %v1531
      %v1554 = vpack.c.b16 %v1534, %v1533
      %v1555 = vpack.c.b16 %v1536, %v1535
      %v1556 = vpack.c.b16 %v1538, %v1537
      %v1557 = vpack.c.b16 %v1540, %v1539
      %v1558 = vpack.c.b16 %v1542, %v1541
      %v1591 = vunpack.c.l.b16 %v1495
      %v1592 = vunpack.c.l.b16 %v1496
      %v1593 = vunpack.c.l.b16 %v1497
      %v1594 = vunpack.c.l.b16 %v1498
      %v1595 = vunpack.c.l.b16 %v1499
      %v1596 = vunpack.c.l.b16 %v1500
      %v1597 = vunpack.c.l.b16 %v1501
      %v1598 = vunpack.c.l.b16 %v1502
      %v1599 = vunpack.c.l.b16 %v1503
      %v1600 = vunpack.c.l.b16 %v1504
      %v1601 = vunpack.c.l.b16 %v1505
      %v1602 = vunpack.c.l.b16 %v1506
      %v1603 = vunpack.c.l.b16 %v1507
      %v1604 = vunpack.c.l.b16 %v1508
      %v1605 = vunpack.c.l.b16 %v1509
      %v1606 = vunpack.c.l.b16 %v1510
      %v1607 = vpack.c.b16 %v1592, %v1591
      %v1608 = vpack.c.b16 %v1594, %v1593
      %v1609 = vpack.c.b16 %v1596, %v1595
      %v1610 = vpack.c.b16 %v1598, %v1597
      %v1611 = vpack.c.b16 %v1600, %v1599
      %v1612 = vpack.c.b16 %v1602, %v1601
      %v1613 = vpack.c.b16 %v1604, %v1603
      %v1614 = vpack.c.b16 %v1606, %v1605
      %1623 = vmatpush.bf16.msra.mxu0 %v1614
      %1624 = vmatpush.bf16.msra.mxu0 %v1613
      %1625 = vmatpush.bf16.msra.mxu0 %v1612
      %1626 = vmatpush.bf16.msra.mxu0 %v1611
      %1627 = vmatpush.bf16.msra.mxu0 %v1610
      %1628 = vmatpush.bf16.msra.mxu0 %v1609
      %1629 = vmatpush.bf16.msra.mxu0 %v1608
      %1630 = vmatpush.bf16.msra.mxu0 %v1607
      %1631 = vmatmul.bf16.gmra.mxu0 %v1543
      %v1632 = vpop.f32.mrf.mxu0
      %v1633 = vadd.f32 0.0, %v1632
      %v1634 = vpop.f32.mrf.mxu0
      %v1635 = vadd.f32 0.0, %v1634
      %1636 = vmatmul.bf16.gmra.mxu0 %v1544
      %v1637 = vpop.f32.mrf.mxu0
      %v1638 = vadd.f32 0.0, %v1637
      %v1639 = vpop.f32.mrf.mxu0
      %v1640 = vadd.f32 0.0, %v1639
      %1641 = vmatmul.bf16.gmra.mxu0 %v1545
      %v1642 = vpop.f32.mrf.mxu0
      %v1643 = vadd.f32 0.0, %v1642
      %v1644 = vpop.f32.mrf.mxu0
      %v1645 = vadd.f32 0.0, %v1644
      %1646 = vmatmul.bf16.gmra.mxu0 %v1546
      %v1647 = vpop.f32.mrf.mxu0
      %v1648 = vadd.f32 0.0, %v1647
      %v1649 = vpop.f32.mrf.mxu0
      %v1650 = vadd.f32 0.0, %v1649
      %1651 = vmatmul.bf16.gmra.mxu0 %v1547
      %v1652 = vpop.f32.mrf.mxu0
      %v1653 = vadd.f32 0.0, %v1652
      %v1654 = vpop.f32.mrf.mxu0
      %v1655 = vadd.f32 0.0, %v1654
      %1656 = vmatmul.bf16.gmra.mxu0 %v1548
      %v1657 = vpop.f32.mrf.mxu0
      %v1658 = vadd.f32 0.0, %v1657
      %v1659 = vpop.f32.mrf.mxu0
      %v1660 = vadd.f32 0.0, %v1659
      %1661 = vmatmul.bf16.gmra.mxu0 %v1549
      %v1662 = vpop.f32.mrf.mxu0
      %v1663 = vadd.f32 0.0, %v1662
      %v1664 = vpop.f32.mrf.mxu0
      %v1665 = vadd.f32 0.0, %v1664
      %1666 = vmatmul.bf16.gmra.mxu0 %v1550
      %v1667 = vpop.f32.mrf.mxu0
      %v1668 = vadd.f32 0.0, %v1667
      %v1669 = vpop.f32.mrf.mxu0
      %v1670 = vadd.f32 0.0, %v1669
      %1671 = vmatmul.bf16.gmra.mxu0 %v1551
      %v1672 = vpop.f32.mrf.mxu0
      %v1673 = vadd.f32 0.0, %v1672
      %v1674 = vpop.f32.mrf.mxu0
      %v1675 = vadd.f32 0.0, %v1674
      %1676 = vmatmul.bf16.gmra.mxu0 %v1552
      %v1677 = vpop.f32.mrf.mxu0
      %v1678 = vadd.f32 0.0, %v1677
      %v1679 = vpop.f32.mrf.mxu0
      %v1680 = vadd.f32 0.0, %v1679
      %1681 = vmatmul.bf16.gmra.mxu0 %v1553
      %v1682 = vpop.f32.mrf.mxu0
      %v1683 = vadd.f32 0.0, %v1682
      %v1684 = vpop.f32.mrf.mxu0
      %v1685 = vadd.f32 0.0, %v1684
      %1686 = vmatmul.bf16.gmra.mxu0 %v1554
      %v1687 = vpop.f32.mrf.mxu0
      %v1688 = vadd.f32 0.0, %v1687
      %v1689 = vpop.f32.mrf.mxu0
      %v1690 = vadd.f32 0.0, %v1689
      %1691 = vmatmul.bf16.gmra.mxu0 %v1555
      %v1692 = vpop.f32.mrf.mxu0
      %v1693 = vadd.f32 0.0, %v1692
      %v1694 = vpop.f32.mrf.mxu0
      %v1695 = vadd.f32 0.0, %v1694
      %1696 = vmatmul.bf16.gmra.mxu0 %v1556
      %v1697 = vpop.f32.mrf.mxu0
      %v1698 = vadd.f32 0.0, %v1697
      %v1699 = vpop.f32.mrf.mxu0
      %v1700 = vadd.f32 0.0, %v1699
      %1701 = vmatmul.bf16.gmra.mxu0 %v1557
      %v1702 = vpop.f32.mrf.mxu0
      %v1703 = vadd.f32 0.0, %v1702
      %v1704 = vpop.f32.mrf.mxu0
      %v1705 = vadd.f32 0.0, %v1704
      %1706 = vmatmul.bf16.gmra.mxu0 %v1558
      %v1707 = vpop.f32.mrf.mxu0
      %v1708 = vadd.f32 0.0, %v1707
      %v1709 = vpop.f32.mrf.mxu0
      %v1710 = vadd.f32 0.0, %v1709
      %1711 = vdwg.mxu0
      %v1712 = vadd.f32 %v1252, %v1633
      %v1713 = vadd.f32 %v1254, %v1635
      %v1714 = vadd.f32 %v1257, %v1638
      %v1715 = vadd.f32 %v1259, %v1640
      %v1716 = vadd.f32 %v1262, %v1643
      %v1717 = vadd.f32 %v1264, %v1645
      %v1718 = vadd.f32 %v1267, %v1648
      %v1719 = vadd.f32 %v1269, %v1650
      %v1720 = vadd.f32 %v1272, %v1653
      %v1721 = vadd.f32 %v1274, %v1655
      %v1722 = vadd.f32 %v1277, %v1658
      %v1723 = vadd.f32 %v1279, %v1660
      %v1724 = vadd.f32 %v1282, %v1663
      %v1725 = vadd.f32 %v1284, %v1665
      %v1726 = vadd.f32 %v1287, %v1668
      %v1727 = vadd.f32 %v1289, %v1670
      %v1728 = vadd.f32 %v1292, %v1673
      %v1729 = vadd.f32 %v1294, %v1675
      %v1730 = vadd.f32 %v1297, %v1678
      %v1731 = vadd.f32 %v1299, %v1680
      %v1732 = vadd.f32 %v1302, %v1683
      %v1733 = vadd.f32 %v1304, %v1685
      %v1734 = vadd.f32 %v1307, %v1688
      %v1735 = vadd.f32 %v1309, %v1690
      %v1736 = vadd.f32 %v1312, %v1693
      %v1737 = vadd.f32 %v1314, %v1695
      %v1738 = vadd.f32 %v1317, %v1698
      %v1739 = vadd.f32 %v1319, %v1700
      %v1740 = vadd.f32 %v1322, %v1703
      %v1741 = vadd.f32 %v1324, %v1705
      %v1742 = vadd.f32 %v1327, %v1708
      %v1743 = vadd.f32 %v1329, %v1710
      %s1744 = scalar_lea.vmem [#allocation2], 12
      %v1745 = vld [vmem:[%s1744] sm:$0xf]
      %v1746 = vld [vmem:[%s1744 + $0x4] sm:$0xf]
      %v1747 = vld [vmem:[%s1744 + $0xc] sm:$0xf]
      %v1748 = vld [vmem:[%s1744 + $0x10] sm:$0xf]
      %v1749 = vld [vmem:[%s1744 + $0x18] sm:$0xf]
      %v1750 = vld [vmem:[%s1744 + $0x1c] sm:$0xf]
      %v1751 = vld [vmem:[%s1744 + $0x24] sm:$0xf]
      %v1752 = vld [vmem:[%s1744 + $0x28] sm:$0xf]
      %v1753 = vld [vmem:[%s1744 + $0x30] sm:$0xf]
      %v1754 = vld [vmem:[%s1744 + $0x34] sm:$0xf]
      %v1755 = vld [vmem:[%s1744 + $0x3c] sm:$0xf]
      %v1756 = vld [vmem:[%s1744 + $0x40] sm:$0xf]
      %v1757 = vld [vmem:[%s1744 + $0x48] sm:$0xf]
      %v1758 = vld [vmem:[%s1744 + $0x4c] sm:$0xf]
      %v1759 = vld [vmem:[%s1744 + $0x54] sm:$0xf]
      %v1760 = vld [vmem:[%s1744 + $0x58] sm:$0xf]
      %v1761 = vld [vmem:[%s1744 + $0x60] sm:$0xf]
      %v1762 = vld [vmem:[%s1744 + $0x64] sm:$0xf]
      %v1763 = vld [vmem:[%s1744 + $0x6c] sm:$0xf]
      %v1764 = vld [vmem:[%s1744 + $0x70] sm:$0xf]
      %v1765 = vld [vmem:[%s1744 + $0x78] sm:$0xf]
      %v1766 = vld [vmem:[%s1744 + $0x7c] sm:$0xf]
      %v1767 = vld [vmem:[%s1744 + $0x84] sm:$0xf]
      %v1768 = vld [vmem:[%s1744 + $0x88] sm:$0xf]
      %v1769 = vld [vmem:[%s1744 + $0x90] sm:$0xf]
      %v1770 = vld [vmem:[%s1744 + $0x94] sm:$0xf]
      %v1771 = vld [vmem:[%s1744 + $0x9c] sm:$0xf]
      %v1772 = vld [vmem:[%s1744 + $0xa0] sm:$0xf]
      %v1773 = vld [vmem:[%s1744 + $0xa8] sm:$0xf]
      %v1774 = vld [vmem:[%s1744 + $0xac] sm:$0xf]
      %v1775 = vld [vmem:[%s1744 + $0xb4] sm:$0xf]
      %v1776 = vld [vmem:[%s1744 + $0xb8] sm:$0xf]
      %s1777 = scalar_lea.vmem %s2, 192
      %v1778 = vld [vmem:[%s1777] sm:$0xf]
      %v1779 = vld [vmem:[%s1777 + $0x4] sm:$0xf]
      %v1780 = vld [vmem:[%s1777 + $0x8] sm:$0xf]
      %v1781 = vld [vmem:[%s1777 + $0xc] sm:$0xf]
      %v1782 = vld [vmem:[%s1777 + $0x10] sm:$0xf]
      %v1783 = vld [vmem:[%s1777 + $0x14] sm:$0xf]
      %v1784 = vld [vmem:[%s1777 + $0x18] sm:$0xf]
      %v1785 = vld [vmem:[%s1777 + $0x1c] sm:$0xf]
      %v1786 = vld [vmem:[%s1777 + $0x20] sm:$0xf]
      %v1787 = vld [vmem:[%s1777 + $0x24] sm:$0xf]
      %v1788 = vld [vmem:[%s1777 + $0x28] sm:$0xf]
      %v1789 = vld [vmem:[%s1777 + $0x2c] sm:$0xf]
      %v1790 = vld [vmem:[%s1777 + $0x30] sm:$0xf]
      %v1791 = vld [vmem:[%s1777 + $0x34] sm:$0xf]
      %v1792 = vld [vmem:[%s1777 + $0x38] sm:$0xf]
      %v1793 = vld [vmem:[%s1777 + $0x3c] sm:$0xf]
      %v1826 = vunpack.c.l.b16 %v1745
      %v1827 = vunpack.c.l.b16 %v1746
      %v1828 = vunpack.c.l.b16 %v1747
      %v1829 = vunpack.c.l.b16 %v1748
      %v1830 = vunpack.c.l.b16 %v1749
      %v1831 = vunpack.c.l.b16 %v1750
      %v1832 = vunpack.c.l.b16 %v1751
      %v1833 = vunpack.c.l.b16 %v1752
      %v1834 = vunpack.c.l.b16 %v1753
      %v1835 = vunpack.c.l.b16 %v1754
      %v1836 = vunpack.c.l.b16 %v1755
      %v1837 = vunpack.c.l.b16 %v1756
      %v1838 = vunpack.c.l.b16 %v1757
      %v1839 = vunpack.c.l.b16 %v1758
      %v1840 = vunpack.c.l.b16 %v1759
      %v1841 = vunpack.c.l.b16 %v1760
      %v1842 = vunpack.c.l.b16 %v1761
      %v1843 = vunpack.c.l.b16 %v1762
      %v1844 = vunpack.c.l.b16 %v1763
      %v1845 = vunpack.c.l.b16 %v1764
      %v1846 = vunpack.c.l.b16 %v1765
      %v1847 = vunpack.c.l.b16 %v1766
      %v1848 = vunpack.c.l.b16 %v1767
      %v1849 = vunpack.c.l.b16 %v1768
      %v1850 = vunpack.c.l.b16 %v1769
      %v1851 = vunpack.c.l.b16 %v1770
      %v1852 = vunpack.c.l.b16 %v1771
      %v1853 = vunpack.c.l.b16 %v1772
      %v1854 = vunpack.c.l.b16 %v1773
      %v1855 = vunpack.c.l.b16 %v1774
      %v1856 = vunpack.c.l.b16 %v1775
      %v1857 = vunpack.c.l.b16 %v1776
      %v1858 = vpack.c.b16 %v1827, %v1826
      %v1859 = vpack.c.b16 %v1829, %v1828
      %v1860 = vpack.c.b16 %v1831, %v1830
      %v1861 = vpack.c.b16 %v1833, %v1832
      %v1862 = vpack.c.b16 %v1835, %v1834
      %v1863 = vpack.c.b16 %v1837, %v1836
      %v1864 = vpack.c.b16 %v1839, %v1838
      %v1865 = vpack.c.b16 %v1841, %v1840
      %v1866 = vpack.c.b16 %v1843, %v1842
      %v1867 = vpack.c.b16 %v1845, %v1844
      %v1868 = vpack.c.b16 %v1847, %v1846
      %v1869 = vpack.c.b16 %v1849, %v1848
      %v1870 = vpack.c.b16 %v1851, %v1850
      %v1871 = vpack.c.b16 %v1853, %v1852
      %v1872 = vpack.c.b16 %v1855, %v1854
      %v1873 = vpack.c.b16 %v1857, %v1856
      %v1906 = vunpack.c.l.b16 %v1778
      %v1907 = vunpack.c.l.b16 %v1779
      %v1908 = vunpack.c.l.b16 %v1780
      %v1909 = vunpack.c.l.b16 %v1781
      %v1910 = vunpack.c.l.b16 %v1782
      %v1911 = vunpack.c.l.b16 %v1783
      %v1912 = vunpack.c.l.b16 %v1784
      %v1913 = vunpack.c.l.b16 %v1785
      %v1914 = vunpack.c.l.b16 %v1786
      %v1915 = vunpack.c.l.b16 %v1787
      %v1916 = vunpack.c.l.b16 %v1788
      %v1917 = vunpack.c.l.b16 %v1789
      %v1918 = vunpack.c.l.b16 %v1790
      %v1919 = vunpack.c.l.b16 %v1791
      %v1920 = vunpack.c.l.b16 %v1792
      %v1921 = vunpack.c.l.b16 %v1793
      %v1922 = vpack.c.b16 %v1907, %v1906
      %v1923 = vpack.c.b16 %v1909, %v1908
      %v1924 = vpack.c.b16 %v1911, %v1910
      %v1925 = vpack.c.b16 %v1913, %v1912
      %v1926 = vpack.c.b16 %v1915, %v1914
      %v1927 = vpack.c.b16 %v1917, %v1916
      %v1928 = vpack.c.b16 %v1919, %v1918
      %v1929 = vpack.c.b16 %v1921, %v1920
      %1938 = vmatpush.bf16.msra.mxu0 %v1929
      %1939 = vmatpush.bf16.msra.mxu0 %v1928
      %1940 = vmatpush.bf16.msra.mxu0 %v1927
      %1941 = vmatpush.bf16.msra.mxu0 %v1926
      %1942 = vmatpush.bf16.msra.mxu0 %v1925
      %1943 = vmatpush.bf16.msra.mxu0 %v1924
      %1944 = vmatpush.bf16.msra.mxu0 %v1923
      %1945 = vmatpush.bf16.msra.mxu0 %v1922
      %1946 = vmatmul.bf16.gmra.mxu0 %v1858
      %v1947 = vpop.f32.mrf.mxu0
      %v1948 = vadd.f32 0.0, %v1947
      %v1949 = vpop.f32.mrf.mxu0
      %v1950 = vadd.f32 0.0, %v1949
      %1951 = vmatmul.bf16.gmra.mxu0 %v1859
      %v1952 = vpop.f32.mrf.mxu0
      %v1953 = vadd.f32 0.0, %v1952
      %v1954 = vpop.f32.mrf.mxu0
      %v1955 = vadd.f32 0.0, %v1954
      %1956 = vmatmul.bf16.gmra.mxu0 %v1860
      %v1957 = vpop.f32.mrf.mxu0
      %v1958 = vadd.f32 0.0, %v1957
      %v1959 = vpop.f32.mrf.mxu0
      %v1960 = vadd.f32 0.0, %v1959
      %1961 = vmatmul.bf16.gmra.mxu0 %v1861
      %v1962 = vpop.f32.mrf.mxu0
      %v1963 = vadd.f32 0.0, %v1962
      %v1964 = vpop.f32.mrf.mxu0
      %v1965 = vadd.f32 0.0, %v1964
      %1966 = vmatmul.bf16.gmra.mxu0 %v1862
      %v1967 = vpop.f32.mrf.mxu0
      %v1968 = vadd.f32 0.0, %v1967
      %v1969 = vpop.f32.mrf.mxu0
      %v1970 = vadd.f32 0.0, %v1969
      %1971 = vmatmul.bf16.gmra.mxu0 %v1863
      %v1972 = vpop.f32.mrf.mxu0
      %v1973 = vadd.f32 0.0, %v1972
      %v1974 = vpop.f32.mrf.mxu0
      %v1975 = vadd.f32 0.0, %v1974
      %1976 = vmatmul.bf16.gmra.mxu0 %v1864
      %v1977 = vpop.f32.mrf.mxu0
      %v1978 = vadd.f32 0.0, %v1977
      %v1979 = vpop.f32.mrf.mxu0
      %v1980 = vadd.f32 0.0, %v1979
      %1981 = vmatmul.bf16.gmra.mxu0 %v1865
      %v1982 = vpop.f32.mrf.mxu0
      %v1983 = vadd.f32 0.0, %v1982
      %v1984 = vpop.f32.mrf.mxu0
      %v1985 = vadd.f32 0.0, %v1984
      %1986 = vmatmul.bf16.gmra.mxu0 %v1866
      %v1987 = vpop.f32.mrf.mxu0
      %v1988 = vadd.f32 0.0, %v1987
      %v1989 = vpop.f32.mrf.mxu0
      %v1990 = vadd.f32 0.0, %v1989
      %1991 = vmatmul.bf16.gmra.mxu0 %v1867
      %v1992 = vpop.f32.mrf.mxu0
      %v1993 = vadd.f32 0.0, %v1992
      %v1994 = vpop.f32.mrf.mxu0
      %v1995 = vadd.f32 0.0, %v1994
      %1996 = vmatmul.bf16.gmra.mxu0 %v1868
      %v1997 = vpop.f32.mrf.mxu0
      %v1998 = vadd.f32 0.0, %v1997
      %v1999 = vpop.f32.mrf.mxu0
      %v2000 = vadd.f32 0.0, %v1999
      %2001 = vmatmul.bf16.gmra.mxu0 %v1869
      %v2002 = vpop.f32.mrf.mxu0
      %v2003 = vadd.f32 0.0, %v2002
      %v2004 = vpop.f32.mrf.mxu0
      %v2005 = vadd.f32 0.0, %v2004
      %2006 = vmatmul.bf16.gmra.mxu0 %v1870
      %v2007 = vpop.f32.mrf.mxu0
      %v2008 = vadd.f32 0.0, %v2007
      %v2009 = vpop.f32.mrf.mxu0
      %v2010 = vadd.f32 0.0, %v2009
      %2011 = vmatmul.bf16.gmra.mxu0 %v1871
      %v2012 = vpop.f32.mrf.mxu0
      %v2013 = vadd.f32 0.0, %v2012
      %v2014 = vpop.f32.mrf.mxu0
      %v2015 = vadd.f32 0.0, %v2014
      %2016 = vmatmul.bf16.gmra.mxu0 %v1872
      %v2017 = vpop.f32.mrf.mxu0
      %v2018 = vadd.f32 0.0, %v2017
      %v2019 = vpop.f32.mrf.mxu0
      %v2020 = vadd.f32 0.0, %v2019
      %2021 = vmatmul.bf16.gmra.mxu0 %v1873
      %v2022 = vpop.f32.mrf.mxu0
      %v2023 = vadd.f32 0.0, %v2022
      %v2024 = vpop.f32.mrf.mxu0
      %v2025 = vadd.f32 0.0, %v2024
      %2026 = vdwg.mxu0
      %v2027 = vadd.f32 %v1712, %v1948
      %v2028 = vadd.f32 %v1713, %v1950
      %v2029 = vadd.f32 %v1714, %v1953
      %v2030 = vadd.f32 %v1715, %v1955
      %v2031 = vadd.f32 %v1716, %v1958
      %v2032 = vadd.f32 %v1717, %v1960
      %v2033 = vadd.f32 %v1718, %v1963
      %v2034 = vadd.f32 %v1719, %v1965
      %v2035 = vadd.f32 %v1720, %v1968
      %v2036 = vadd.f32 %v1721, %v1970
      %v2037 = vadd.f32 %v1722, %v1973
      %v2038 = vadd.f32 %v1723, %v1975
      %v2039 = vadd.f32 %v1724, %v1978
      %v2040 = vadd.f32 %v1725, %v1980
      %v2041 = vadd.f32 %v1726, %v1983
      %v2042 = vadd.f32 %v1727, %v1985
      %v2043 = vadd.f32 %v1728, %v1988
      %v2044 = vadd.f32 %v1729, %v1990
      %v2045 = vadd.f32 %v1730, %v1993
      %v2046 = vadd.f32 %v1731, %v1995
      %v2047 = vadd.f32 %v1732, %v1998
      %v2048 = vadd.f32 %v1733, %v2000
      %v2049 = vadd.f32 %v1734, %v2003
      %v2050 = vadd.f32 %v1735, %v2005
      %v2051 = vadd.f32 %v1736, %v2008
      %v2052 = vadd.f32 %v1737, %v2010
      %v2053 = vadd.f32 %v1738, %v2013
      %v2054 = vadd.f32 %v1739, %v2015
      %v2055 = vadd.f32 %v1740, %v2018
      %v2056 = vadd.f32 %v1741, %v2020
      %v2057 = vadd.f32 %v1742, %v2023
      %v2058 = vadd.f32 %v1743, %v2025
      %v2059 = vld [vmem:[%s1744] sm:$0xf]
      %v2060 = vld [vmem:[%s1744 + $0x4] sm:$0xf]
      %v2061 = vld [vmem:[%s1744 + $0x8] sm:$0x1]
      %v2062 = vld [vmem:[%s1744 + $0xc] sm:$0xf]
      %v2063 = vld [vmem:[%s1744 + $0x10] sm:$0xf]
      %v2064 = vld [vmem:[%s1744 + $0x14] sm:$0x1]
      %v2065 = vld [vmem:[%s1744 + $0x18] sm:$0xf]
      %v2066 = vld [vmem:[%s1744 + $0x1c] sm:$0xf]
      %v2067 = vld [vmem:[%s1744 + $0x20] sm:$0x1]
      %v2068 = vld [vmem:[%s1744 + $0x24] sm:$0xf]
      %v2069 = vld [vmem:[%s1744 + $0x28] sm:$0xf]
      %v2070 = vld [vmem:[%s1744 + $0x2c] sm:$0x1]
      %v2071 = vld [vmem:[%s1744 + $0x30] sm:$0xf]
      %v2072 = vld [vmem:[%s1744 + $0x34] sm:$0xf]
      %v2073 = vld [vmem:[%s1744 + $0x38] sm:$0x1]
      %v2074 = vld [vmem:[%s1744 + $0x3c] sm:$0xf]
      %v2075 = vld [vmem:[%s1744 + $0x40] sm:$0xf]
      %v2076 = vld [vmem:[%s1744 + $0x44] sm:$0x1]
      %v2077 = vld [vmem:[%s1744 + $0x48] sm:$0xf]
      %v2078 = vld [vmem:[%s1744 + $0x4c] sm:$0xf]
      %v2079 = vld [vmem:[%s1744 + $0x50] sm:$0x1]
      %v2080 = vld [vmem:[%s1744 + $0x54] sm:$0xf]
      %v2081 = vld [vmem:[%s1744 + $0x58] sm:$0xf]
      %v2082 = vld [vmem:[%s1744 + $0x5c] sm:$0x1]
      %v2083 = vld [vmem:[%s1744 + $0x60] sm:$0xf]
      %v2084 = vld [vmem:[%s1744 + $0x64] sm:$0xf]
      %v2085 = vld [vmem:[%s1744 + $0x68] sm:$0x1]
      %v2086 = vld [vmem:[%s1744 + $0x6c] sm:$0xf]
      %v2087 = vld [vmem:[%s1744 + $0x70] sm:$0xf]
      %v2088 = vld [vmem:[%s1744 + $0x74] sm:$0x1]
      %v2089 = vld [vmem:[%s1744 + $0x78] sm:$0xf]
      %v2090 = vld [vmem:[%s1744 + $0x7c] sm:$0xf]
      %v2091 = vld [vmem:[%s1744 + $0x80] sm:$0x1]
      %v2092 = vld [vmem:[%s1744 + $0x84] sm:$0xf]
      %v2093 = vld [vmem:[%s1744 + $0x88] sm:$0xf]
      %v2094 = vld [vmem:[%s1744 + $0x8c] sm:$0x1]
      %v2095 = vld [vmem:[%s1744 + $0x90] sm:$0xf]
      %v2096 = vld [vmem:[%s1744 + $0x94] sm:$0xf]
      %v2097 = vld [vmem:[%s1744 + $0x98] sm:$0x1]
      %v2098 = vld [vmem:[%s1744 + $0x9c] sm:$0xf]
      %v2099 = vld [vmem:[%s1744 + $0xa0] sm:$0xf]
      %v2100 = vld [vmem:[%s1744 + $0xa4] sm:$0x1]
      %v2101 = vld [vmem:[%s1744 + $0xa8] sm:$0xf]
      %v2102 = vld [vmem:[%s1744 + $0xac] sm:$0xf]
      %v2103 = vld [vmem:[%s1744 + $0xb0] sm:$0x1]
      %v2104 = vld [vmem:[%s1744 + $0xb4] sm:$0xf]
      %v2105 = vld [vmem:[%s1744 + $0xb8] sm:$0xf]
      %v2106 = vld [vmem:[%s1744 + $0xbc] sm:$0x1]
      %v2108 = vshrl.u32 %v2059, 16
      %v2110 = vrot.slane %v2108, 4
      %v2111 = vshll.u32 %v2059, 16
      %v2113 = vrot.slane %v2111, 5
      %v2114 = vor.u32 %v2110, %v2113
      %v2115 = vrot.slane %v2114, 4
      %v2117 = vshll.u32 %v2060, 16
      %v2119 = vrot.slane %v2117, 5
      %v2120 = vsel %vm495, %v2115, %v2119
      %v2121 = vshrl.u32 %v2060, 16
      %v2123 = vrot.slane %v2121, 4
      %v2124 = vor.u32 %v2123, %v2119
      %v2125 = vrot.slane %v2124, 4
      %v2127 = vshll.u32 %v2061, 16
      %v2129 = vrot.slane %v2127, 5
      %v2130 = vsel %vm495, %v2125, %v2129
      %v2132 = vshrl.u32 %v2062, 16
      %v2134 = vrot.slane %v2132, 4
      %v2135 = vshll.u32 %v2062, 16
      %v2137 = vrot.slane %v2135, 5
      %v2138 = vor.u32 %v2134, %v2137
      %v2139 = vrot.slane %v2138, 4
      %v2141 = vshll.u32 %v2063, 16
      %v2143 = vrot.slane %v2141, 5
      %v2144 = vsel %vm495, %v2139, %v2143
      %v2145 = vshrl.u32 %v2063, 16
      %v2147 = vrot.slane %v2145, 4
      %v2148 = vor.u32 %v2147, %v2143
      %v2149 = vrot.slane %v2148, 4
      %v2151 = vshll.u32 %v2064, 16
      %v2153 = vrot.slane %v2151, 5
      %v2154 = vsel %vm495, %v2149, %v2153
      %v2156 = vshrl.u32 %v2065, 16
      %v2158 = vrot.slane %v2156, 4
      %v2159 = vshll.u32 %v2065, 16
      %v2161 = vrot.slane %v2159, 5
      %v2162 = vor.u32 %v2158, %v2161
      %v2163 = vrot.slane %v2162, 4
      %v2165 = vshll.u32 %v2066, 16
      %v2167 = vrot.slane %v2165, 5
      %v2168 = vsel %vm495, %v2163, %v2167
      %v2169 = vshrl.u32 %v2066, 16
      %v2171 = vrot.slane %v2169, 4
      %v2172 = vor.u32 %v2171, %v2167
      %v2173 = vrot.slane %v2172, 4
      %v2175 = vshll.u32 %v2067, 16
      %v2177 = vrot.slane %v2175, 5
      %v2178 = vsel %vm495, %v2173, %v2177
      %v2180 = vshrl.u32 %v2068, 16
      %v2182 = vrot.slane %v2180, 4
      %v2183 = vshll.u32 %v2068, 16
      %v2185 = vrot.slane %v2183, 5
      %v2186 = vor.u32 %v2182, %v2185
      %v2187 = vrot.slane %v2186, 4
      %v2189 = vshll.u32 %v2069, 16
      %v2191 = vrot.slane %v2189, 5
      %v2192 = vsel %vm495, %v2187, %v2191
      %v2193 = vshrl.u32 %v2069, 16
      %v2195 = vrot.slane %v2193, 4
      %v2196 = vor.u32 %v2195, %v2191
      %v2197 = vrot.slane %v2196, 4
      %v2199 = vshll.u32 %v2070, 16
      %v2201 = vrot.slane %v2199, 5
      %v2202 = vsel %vm495, %v2197, %v2201
      %v2204 = vshrl.u32 %v2071, 16
      %v2206 = vrot.slane %v2204, 4
      %v2207 = vshll.u32 %v2071, 16
      %v2209 = vrot.slane %v2207, 5
      %v2210 = vor.u32 %v2206, %v2209
      %v2211 = vrot.slane %v2210, 4
      %v2213 = vshll.u32 %v2072, 16
      %v2215 = vrot.slane %v2213, 5
      %v2216 = vsel %vm495, %v2211, %v2215
      %v2217 = vshrl.u32 %v2072, 16
      %v2219 = vrot.slane %v2217, 4
      %v2220 = vor.u32 %v2219, %v2215
      %v2221 = vrot.slane %v2220, 4
      %v2223 = vshll.u32 %v2073, 16
      %v2225 = vrot.slane %v2223, 5
      %v2226 = vsel %vm495, %v2221, %v2225
      %v2228 = vshrl.u32 %v2074, 16
      %v2230 = vrot.slane %v2228, 4
      %v2231 = vshll.u32 %v2074, 16
      %v2233 = vrot.slane %v2231, 5
      %v2234 = vor.u32 %v2230, %v2233
      %v2235 = vrot.slane %v2234, 4
      %v2237 = vshll.u32 %v2075, 16
      %v2239 = vrot.slane %v2237, 5
      %v2240 = vsel %vm495, %v2235, %v2239
      %v2241 = vshrl.u32 %v2075, 16
      %v2243 = vrot.slane %v2241, 4
      %v2244 = vor.u32 %v2243, %v2239
      %v2245 = vrot.slane %v2244, 4
      %v2247 = vshll.u32 %v2076, 16
      %v2249 = vrot.slane %v2247, 5
      %v2250 = vsel %vm495, %v2245, %v2249
      %v2252 = vshrl.u32 %v2077, 16
      %v2254 = vrot.slane %v2252, 4
      %v2255 = vshll.u32 %v2077, 16
      %v2257 = vrot.slane %v2255, 5
      %v2258 = vor.u32 %v2254, %v2257
      %v2259 = vrot.slane %v2258, 4
      %v2261 = vshll.u32 %v2078, 16
      %v2263 = vrot.slane %v2261, 5
      %v2264 = vsel %vm495, %v2259, %v2263
      %v2265 = vshrl.u32 %v2078, 16
      %v2267 = vrot.slane %v2265, 4
      %v2268 = vor.u32 %v2267, %v2263
      %v2269 = vrot.slane %v2268, 4
      %v2271 = vshll.u32 %v2079, 16
      %v2273 = vrot.slane %v2271, 5
      %v2274 = vsel %vm495, %v2269, %v2273
      %v2276 = vshrl.u32 %v2080, 16
      %v2278 = vrot.slane %v2276, 4
      %v2279 = vshll.u32 %v2080, 16
      %v2281 = vrot.slane %v2279, 5
      %v2282 = vor.u32 %v2278, %v2281
      %v2283 = vrot.slane %v2282, 4
      %v2285 = vshll.u32 %v2081, 16
      %v2287 = vrot.slane %v2285, 5
      %v2288 = vsel %vm495, %v2283, %v2287
      %v2289 = vshrl.u32 %v2081, 16
      %v2291 = vrot.slane %v2289, 4
      %v2292 = vor.u32 %v2291, %v2287
      %v2293 = vrot.slane %v2292, 4
      %v2295 = vshll.u32 %v2082, 16
      %v2297 = vrot.slane %v2295, 5
      %v2298 = vsel %vm495, %v2293, %v2297
      %v2300 = vshrl.u32 %v2083, 16
      %v2302 = vrot.slane %v2300, 4
      %v2303 = vshll.u32 %v2083, 16
      %v2305 = vrot.slane %v2303, 5
      %v2306 = vor.u32 %v2302, %v2305
      %v2307 = vrot.slane %v2306, 4
      %v2309 = vshll.u32 %v2084, 16
      %v2311 = vrot.slane %v2309, 5
      %v2312 = vsel %vm495, %v2307, %v2311
      %v2313 = vshrl.u32 %v2084, 16
      %v2315 = vrot.slane %v2313, 4
      %v2316 = vor.u32 %v2315, %v2311
      %v2317 = vrot.slane %v2316, 4
      %v2319 = vshll.u32 %v2085, 16
      %v2321 = vrot.slane %v2319, 5
      %v2322 = vsel %vm495, %v2317, %v2321
      %v2324 = vshrl.u32 %v2086, 16
      %v2326 = vrot.slane %v2324, 4
      %v2327 = vshll.u32 %v2086, 16
      %v2329 = vrot.slane %v2327, 5
      %v2330 = vor.u32 %v2326, %v2329
      %v2331 = vrot.slane %v2330, 4
      %v2333 = vshll.u32 %v2087, 16
      %v2335 = vrot.slane %v2333, 5
      %v2336 = vsel %vm495, %v2331, %v2335
      %v2337 = vshrl.u32 %v2087, 16
      %v2339 = vrot.slane %v2337, 4
      %v2340 = vor.u32 %v2339, %v2335
      %v2341 = vrot.slane %v2340, 4
      %v2343 = vshll.u32 %v2088, 16
      %v2345 = vrot.slane %v2343, 5
      %v2346 = vsel %vm495, %v2341, %v2345
      %v2348 = vshrl.u32 %v2089, 16
      %v2350 = vrot.slane %v2348, 4
      %v2351 = vshll.u32 %v2089, 16
      %v2353 = vrot.slane %v2351, 5
      %v2354 = vor.u32 %v2350, %v2353
      %v2355 = vrot.slane %v2354, 4
      %v2357 = vshll.u32 %v2090, 16
      %v2359 = vrot.slane %v2357, 5
      %v2360 = vsel %vm495, %v2355, %v2359
      %v2361 = vshrl.u32 %v2090, 16
      %v2363 = vrot.slane %v2361, 4
      %v2364 = vor.u32 %v2363, %v2359
      %v2365 = vrot.slane %v2364, 4
      %v2367 = vshll.u32 %v2091, 16
      %v2369 = vrot.slane %v2367, 5
      %v2370 = vsel %vm495, %v2365, %v2369
      %v2372 = vshrl.u32 %v2092, 16
      %v2374 = vrot.slane %v2372, 4
      %v2375 = vshll.u32 %v2092, 16
      %v2377 = vrot.slane %v2375, 5
      %v2378 = vor.u32 %v2374, %v2377
      %v2379 = vrot.slane %v2378, 4
      %v2381 = vshll.u32 %v2093, 16
      %v2383 = vrot.slane %v2381, 5
      %v2384 = vsel %vm495, %v2379, %v2383
      %v2385 = vshrl.u32 %v2093, 16
      %v2387 = vrot.slane %v2385, 4
      %v2388 = vor.u32 %v2387, %v2383
      %v2389 = vrot.slane %v2388, 4
      %v2391 = vshll.u32 %v2094, 16
      %v2393 = vrot.slane %v2391, 5
      %v2394 = vsel %vm495, %v2389, %v2393
      %v2396 = vshrl.u32 %v2095, 16
      %v2398 = vrot.slane %v2396, 4
      %v2399 = vshll.u32 %v2095, 16
      %v2401 = vrot.slane %v2399, 5
      %v2402 = vor.u32 %v2398, %v2401
      %v2403 = vrot.slane %v2402, 4
      %v2405 = vshll.u32 %v2096, 16
      %v2407 = vrot.slane %v2405, 5
      %v2408 = vsel %vm495, %v2403, %v2407
      %v2409 = vshrl.u32 %v2096, 16
      %v2411 = vrot.slane %v2409, 4
      %v2412 = vor.u32 %v2411, %v2407
      %v2413 = vrot.slane %v2412, 4
      %v2415 = vshll.u32 %v2097, 16
      %v2417 = vrot.slane %v2415, 5
      %v2418 = vsel %vm495, %v2413, %v2417
      %v2420 = vshrl.u32 %v2098, 16
      %v2422 = vrot.slane %v2420, 4
      %v2423 = vshll.u32 %v2098, 16
      %v2425 = vrot.slane %v2423, 5
      %v2426 = vor.u32 %v2422, %v2425
      %v2427 = vrot.slane %v2426, 4
      %v2429 = vshll.u32 %v2099, 16
      %v2431 = vrot.slane %v2429, 5
      %v2432 = vsel %vm495, %v2427, %v2431
      %v2433 = vshrl.u32 %v2099, 16
      %v2435 = vrot.slane %v2433, 4
      %v2436 = vor.u32 %v2435, %v2431
      %v2437 = vrot.slane %v2436, 4
      %v2439 = vshll.u32 %v2100, 16
      %v2441 = vrot.slane %v2439, 5
      %v2442 = vsel %vm495, %v2437, %v2441
      %v2444 = vshrl.u32 %v2101, 16
      %v2446 = vrot.slane %v2444, 4
      %v2447 = vshll.u32 %v2101, 16
      %v2449 = vrot.slane %v2447, 5
      %v2450 = vor.u32 %v2446, %v2449
      %v2451 = vrot.slane %v2450, 4
      %v2453 = vshll.u32 %v2102, 16
      %v2455 = vrot.slane %v2453, 5
      %v2456 = vsel %vm495, %v2451, %v2455
      %v2457 = vshrl.u32 %v2102, 16
      %v2459 = vrot.slane %v2457, 4
      %v2460 = vor.u32 %v2459, %v2455
      %v2461 = vrot.slane %v2460, 4
      %v2463 = vshll.u32 %v2103, 16
      %v2465 = vrot.slane %v2463, 5
      %v2466 = vsel %vm495, %v2461, %v2465
      %v2468 = vshrl.u32 %v2104, 16
      %v2470 = vrot.slane %v2468, 4
      %v2471 = vshll.u32 %v2104, 16
      %v2473 = vrot.slane %v2471, 5
      %v2474 = vor.u32 %v2470, %v2473
      %v2475 = vrot.slane %v2474, 4
      %v2477 = vshll.u32 %v2105, 16
      %v2479 = vrot.slane %v2477, 5
      %v2480 = vsel %vm495, %v2475, %v2479
      %v2481 = vshrl.u32 %v2105, 16
      %v2483 = vrot.slane %v2481, 4
      %v2484 = vor.u32 %v2483, %v2479
      %v2485 = vrot.slane %v2484, 4
      %v2487 = vshll.u32 %v2106, 16
      %v2489 = vrot.slane %v2487, 5
      %v2490 = vsel %vm495, %v2485, %v2489
      %s2491 = scalar_lea.vmem %s2, 256
      %v2492 = vld [vmem:[%s2491] sm:$0xf]
      %v2493 = vld [vmem:[%s2491 + $0x4] sm:$0xf]
      %v2494 = vld [vmem:[%s2491 + $0x8] sm:$0xf]
      %v2495 = vld [vmem:[%s2491 + $0xc] sm:$0xf]
      %v2496 = vld [vmem:[%s2491 + $0x10] sm:$0xf]
      %v2497 = vld [vmem:[%s2491 + $0x14] sm:$0xf]
      %v2498 = vld [vmem:[%s2491 + $0x18] sm:$0xf]
      %v2499 = vld [vmem:[%s2491 + $0x1c] sm:$0xf]
      %v2500 = vld [vmem:[%s2491 + $0x20] sm:$0xf]
      %v2501 = vld [vmem:[%s2491 + $0x24] sm:$0xf]
      %v2502 = vld [vmem:[%s2491 + $0x28] sm:$0xf]
      %v2503 = vld [vmem:[%s2491 + $0x2c] sm:$0xf]
      %v2504 = vld [vmem:[%s2491 + $0x30] sm:$0xf]
      %v2505 = vld [vmem:[%s2491 + $0x34] sm:$0xf]
      %v2506 = vld [vmem:[%s2491 + $0x38] sm:$0xf]
      %v2507 = vld [vmem:[%s2491 + $0x3c] sm:$0xf]
      %v2508 = vunpack.c.l.b16 %v2120
      %v2509 = vunpack.c.l.b16 %v2130
      %v2510 = vunpack.c.l.b16 %v2144
      %v2511 = vunpack.c.l.b16 %v2154
      %v2512 = vunpack.c.l.b16 %v2168
      %v2513 = vunpack.c.l.b16 %v2178
      %v2514 = vunpack.c.l.b16 %v2192
      %v2515 = vunpack.c.l.b16 %v2202
      %v2516 = vunpack.c.l.b16 %v2216
      %v2517 = vunpack.c.l.b16 %v2226
      %v2518 = vunpack.c.l.b16 %v2240
      %v2519 = vunpack.c.l.b16 %v2250
      %v2520 = vunpack.c.l.b16 %v2264
      %v2521 = vunpack.c.l.b16 %v2274
      %v2522 = vunpack.c.l.b16 %v2288
      %v2523 = vunpack.c.l.b16 %v2298
      %v2524 = vunpack.c.l.b16 %v2312
      %v2525 = vunpack.c.l.b16 %v2322
      %v2526 = vunpack.c.l.b16 %v2336
      %v2527 = vunpack.c.l.b16 %v2346
      %v2528 = vunpack.c.l.b16 %v2360
      %v2529 = vunpack.c.l.b16 %v2370
      %v2530 = vunpack.c.l.b16 %v2384
      %v2531 = vunpack.c.l.b16 %v2394
      %v2532 = vunpack.c.l.b16 %v2408
      %v2533 = vunpack.c.l.b16 %v2418
      %v2534 = vunpack.c.l.b16 %v2432
      %v2535 = vunpack.c.l.b16 %v2442
      %v2536 = vunpack.c.l.b16 %v2456
      %v2537 = vunpack.c.l.b16 %v2466
      %v2538 = vunpack.c.l.b16 %v2480
      %v2539 = vunpack.c.l.b16 %v2490
      %v2540 = vpack.c.b16 %v2509, %v2508
      %v2541 = vpack.c.b16 %v2511, %v2510
      %v2542 = vpack.c.b16 %v2513, %v2512
      %v2543 = vpack.c.b16 %v2515, %v2514
      %v2544 = vpack.c.b16 %v2517, %v2516
      %v2545 = vpack.c.b16 %v2519, %v2518
      %v2546 = vpack.c.b16 %v2521, %v2520
      %v2547 = vpack.c.b16 %v2523, %v2522
      %v2548 = vpack.c.b16 %v2525, %v2524
      %v2549 = vpack.c.b16 %v2527, %v2526
      %v2550 = vpack.c.b16 %v2529, %v2528
      %v2551 = vpack.c.b16 %v2531, %v2530
      %v2552 = vpack.c.b16 %v2533, %v2532
      %v2553 = vpack.c.b16 %v2535, %v2534
      %v2554 = vpack.c.b16 %v2537, %v2536
      %v2555 = vpack.c.b16 %v2539, %v2538
      %v2588 = vunpack.c.l.b16 %v2492
      %v2589 = vunpack.c.l.b16 %v2493
      %v2590 = vunpack.c.l.b16 %v2494
      %v2591 = vunpack.c.l.b16 %v2495
      %v2592 = vunpack.c.l.b16 %v2496
      %v2593 = vunpack.c.l.b16 %v2497
      %v2594 = vunpack.c.l.b16 %v2498
      %v2595 = vunpack.c.l.b16 %v2499
      %v2596 = vunpack.c.l.b16 %v2500
      %v2597 = vunpack.c.l.b16 %v2501
      %v2598 = vunpack.c.l.b16 %v2502
      %v2599 = vunpack.c.l.b16 %v2503
      %v2600 = vunpack.c.l.b16 %v2504
      %v2601 = vunpack.c.l.b16 %v2505
      %v2602 = vunpack.c.l.b16 %v2506
      %v2603 = vunpack.c.l.b16 %v2507
      %v2604 = vpack.c.b16 %v2589, %v2588
      %v2605 = vpack.c.b16 %v2591, %v2590
      %v2606 = vpack.c.b16 %v2593, %v2592
      %v2607 = vpack.c.b16 %v2595, %v2594
      %v2608 = vpack.c.b16 %v2597, %v2596
      %v2609 = vpack.c.b16 %v2599, %v2598
      %v2610 = vpack.c.b16 %v2601, %v2600
      %v2611 = vpack.c.b16 %v2603, %v2602
      %2620 = vmatpush.bf16.msra.mxu0 %v2611
      %2621 = vmatpush.bf16.msra.mxu0 %v2610
      %2622 = vmatpush.bf16.msra.mxu0 %v2609
      %2623 = vmatpush.bf16.msra.mxu0 %v2608
      %2624 = vmatpush.bf16.msra.mxu0 %v2607
      %2625 = vmatpush.bf16.msra.mxu0 %v2606
      %2626 = vmatpush.bf16.msra.mxu0 %v2605
      %2627 = vmatpush.bf16.msra.mxu0 %v2604
      %2628 = vmatmul.bf16.gmra.mxu0 %v2540
      %v2629 = vpop.f32.mrf.mxu0
      %v2630 = vadd.f32 0.0, %v2629
      %v2631 = vpop.f32.mrf.mxu0
      %v2632 = vadd.f32 0.0, %v2631
      %2633 = vmatmul.bf16.gmra.mxu0 %v2541
      %v2634 = vpop.f32.mrf.mxu0
      %v2635 = vadd.f32 0.0, %v2634
      %v2636 = vpop.f32.mrf.mxu0
      %v2637 = vadd.f32 0.0, %v2636
      %2638 = vmatmul.bf16.gmra.mxu0 %v2542
      %v2639 = vpop.f32.mrf.mxu0
      %v2640 = vadd.f32 0.0, %v2639
      %v2641 = vpop.f32.mrf.mxu0
      %v2642 = vadd.f32 0.0, %v2641
      %2643 = vmatmul.bf16.gmra.mxu0 %v2543
      %v2644 = vpop.f32.mrf.mxu0
      %v2645 = vadd.f32 0.0, %v2644
      %v2646 = vpop.f32.mrf.mxu0
      %v2647 = vadd.f32 0.0, %v2646
      %2648 = vmatmul.bf16.gmra.mxu0 %v2544
      %v2649 = vpop.f32.mrf.mxu0
      %v2650 = vadd.f32 0.0, %v2649
      %v2651 = vpop.f32.mrf.mxu0
      %v2652 = vadd.f32 0.0, %v2651
      %2653 = vmatmul.bf16.gmra.mxu0 %v2545
      %v2654 = vpop.f32.mrf.mxu0
      %v2655 = vadd.f32 0.0, %v2654
      %v2656 = vpop.f32.mrf.mxu0
      %v2657 = vadd.f32 0.0, %v2656
      %2658 = vmatmul.bf16.gmra.mxu0 %v2546
      %v2659 = vpop.f32.mrf.mxu0
      %v2660 = vadd.f32 0.0, %v2659
      %v2661 = vpop.f32.mrf.mxu0
      %v2662 = vadd.f32 0.0, %v2661
      %2663 = vmatmul.bf16.gmra.mxu0 %v2547
      %v2664 = vpop.f32.mrf.mxu0
      %v2665 = vadd.f32 0.0, %v2664
      %v2666 = vpop.f32.mrf.mxu0
      %v2667 = vadd.f32 0.0, %v2666
      %2668 = vmatmul.bf16.gmra.mxu0 %v2548
      %v2669 = vpop.f32.mrf.mxu0
      %v2670 = vadd.f32 0.0, %v2669
      %v2671 = vpop.f32.mrf.mxu0
      %v2672 = vadd.f32 0.0, %v2671
      %2673 = vmatmul.bf16.gmra.mxu0 %v2549
      %v2674 = vpop.f32.mrf.mxu0
      %v2675 = vadd.f32 0.0, %v2674
      %v2676 = vpop.f32.mrf.mxu0
      %v2677 = vadd.f32 0.0, %v2676
      %2678 = vmatmul.bf16.gmra.mxu0 %v2550
      %v2679 = vpop.f32.mrf.mxu0
      %v2680 = vadd.f32 0.0, %v2679
      %v2681 = vpop.f32.mrf.mxu0
      %v2682 = vadd.f32 0.0, %v2681
      %2683 = vmatmul.bf16.gmra.mxu0 %v2551
      %v2684 = vpop.f32.mrf.mxu0
      %v2685 = vadd.f32 0.0, %v2684
      %v2686 = vpop.f32.mrf.mxu0
      %v2687 = vadd.f32 0.0, %v2686
      %2688 = vmatmul.bf16.gmra.mxu0 %v2552
      %v2689 = vpop.f32.mrf.mxu0
      %v2690 = vadd.f32 0.0, %v2689
      %v2691 = vpop.f32.mrf.mxu0
      %v2692 = vadd.f32 0.0, %v2691
      %2693 = vmatmul.bf16.gmra.mxu0 %v2553
      %v2694 = vpop.f32.mrf.mxu0
      %v2695 = vadd.f32 0.0, %v2694
      %v2696 = vpop.f32.mrf.mxu0
      %v2697 = vadd.f32 0.0, %v2696
      %2698 = vmatmul.bf16.gmra.mxu0 %v2554
      %v2699 = vpop.f32.mrf.mxu0
      %v2700 = vadd.f32 0.0, %v2699
      %v2701 = vpop.f32.mrf.mxu0
      %v2702 = vadd.f32 0.0, %v2701
      %2703 = vmatmul.bf16.gmra.mxu0 %v2555
      %v2704 = vpop.f32.mrf.mxu0
      %v2705 = vadd.f32 0.0, %v2704
      %v2706 = vpop.f32.mrf.mxu0
      %v2707 = vadd.f32 0.0, %v2706
      %2708 = vdwg.mxu0
      %v2709 = vadd.f32 %v2027, %v2630
      %v2710 = vadd.f32 %v2028, %v2632
      %v2711 = vadd.f32 %v2029, %v2635
      %v2712 = vadd.f32 %v2030, %v2637
      %v2713 = vadd.f32 %v2031, %v2640
      %v2714 = vadd.f32 %v2032, %v2642
      %v2715 = vadd.f32 %v2033, %v2645
      %v2716 = vadd.f32 %v2034, %v2647
      %v2717 = vadd.f32 %v2035, %v2650
      %v2718 = vadd.f32 %v2036, %v2652
      %v2719 = vadd.f32 %v2037, %v2655
      %v2720 = vadd.f32 %v2038, %v2657
      %v2721 = vadd.f32 %v2039, %v2660
      %v2722 = vadd.f32 %v2040, %v2662
      %v2723 = vadd.f32 %v2041, %v2665
      %v2724 = vadd.f32 %v2042, %v2667
      %v2725 = vadd.f32 %v2043, %v2670
      %v2726 = vadd.f32 %v2044, %v2672
      %v2727 = vadd.f32 %v2045, %v2675
      %v2728 = vadd.f32 %v2046, %v2677
      %v2729 = vadd.f32 %v2047, %v2680
      %v2730 = vadd.f32 %v2048, %v2682
      %v2731 = vadd.f32 %v2049, %v2685
      %v2732 = vadd.f32 %v2050, %v2687
      %v2733 = vadd.f32 %v2051, %v2690
      %v2734 = vadd.f32 %v2052, %v2692
      %v2735 = vadd.f32 %v2053, %v2695
      %v2736 = vadd.f32 %v2054, %v2697
      %v2737 = vadd.f32 %v2055, %v2700
      %v2738 = vadd.f32 %v2056, %v2702
      %v2739 = vadd.f32 %v2057, %v2705
      %v2740 = vadd.f32 %v2058, %v2707
      %v2741 = vld [vmem:[%s1744] sm:$0xe]
      %v2742 = vld [vmem:[%s1744 + $0xc] sm:$0xe]
      %v2743 = vld [vmem:[%s1744 + $0x18] sm:$0xe]
      %v2744 = vld [vmem:[%s1744 + $0x24] sm:$0xe]
      %v2745 = vld [vmem:[%s1744 + $0x30] sm:$0xe]
      %v2746 = vld [vmem:[%s1744 + $0x3c] sm:$0xe]
      %v2747 = vld [vmem:[%s1744 + $0x48] sm:$0xe]
      %v2748 = vld [vmem:[%s1744 + $0x54] sm:$0xe]
      %v2749 = vld [vmem:[%s1744 + $0x60] sm:$0xe]
      %v2750 = vld [vmem:[%s1744 + $0x6c] sm:$0xe]
      %v2751 = vld [vmem:[%s1744 + $0x78] sm:$0xe]
      %v2752 = vld [vmem:[%s1744 + $0x84] sm:$0xe]
      %v2753 = vld [vmem:[%s1744 + $0x90] sm:$0xe]
      %v2754 = vld [vmem:[%s1744 + $0x9c] sm:$0xe]
      %v2755 = vld [vmem:[%s1744 + $0xa8] sm:$0xe]
      %v2756 = vld [vmem:[%s1744 + $0xb4] sm:$0xe]
      %v2805 = vrot.slane %v2741, 5
      %v2806 = vrot.slane %v2805, 4
      %v2807 = vrot.slane %v2060, 5
      %v2808 = vsel %vm1381, %v2806, %v2807
      %v2809 = vrot.slane %v2807, 4
      %v2810 = vrot.slane %v2061, 5
      %v2811 = vsel %vm1381, %v2809, %v2810
      %v2812 = vrot.slane %v2742, 5
      %v2813 = vrot.slane %v2812, 4
      %v2814 = vrot.slane %v2063, 5
      %v2815 = vsel %vm1381, %v2813, %v2814
      %v2816 = vrot.slane %v2814, 4
      %v2817 = vrot.slane %v2064, 5
      %v2818 = vsel %vm1381, %v2816, %v2817
      %v2819 = vrot.slane %v2743, 5
      %v2820 = vrot.slane %v2819, 4
      %v2821 = vrot.slane %v2066, 5
      %v2822 = vsel %vm1381, %v2820, %v2821
      %v2823 = vrot.slane %v2821, 4
      %v2824 = vrot.slane %v2067, 5
      %v2825 = vsel %vm1381, %v2823, %v2824
      %v2826 = vrot.slane %v2744, 5
      %v2827 = vrot.slane %v2826, 4
      %v2828 = vrot.slane %v2069, 5
      %v2829 = vsel %vm1381, %v2827, %v2828
      %v2830 = vrot.slane %v2828, 4
      %v2831 = vrot.slane %v2070, 5
      %v2832 = vsel %vm1381, %v2830, %v2831
      %v2833 = vrot.slane %v2745, 5
      %v2834 = vrot.slane %v2833, 4
      %v2835 = vrot.slane %v2072, 5
      %v2836 = vsel %vm1381, %v2834, %v2835
      %v2837 = vrot.slane %v2835, 4
      %v2838 = vrot.slane %v2073, 5
      %v2839 = vsel %vm1381, %v2837, %v2838
      %v2840 = vrot.slane %v2746, 5
      %v2841 = vrot.slane %v2840, 4
      %v2842 = vrot.slane %v2075, 5
      %v2843 = vsel %vm1381, %v2841, %v2842
      %v2844 = vrot.slane %v2842, 4
      %v2845 = vrot.slane %v2076, 5
      %v2846 = vsel %vm1381, %v2844, %v2845
      %v2847 = vrot.slane %v2747, 5
      %v2848 = vrot.slane %v2847, 4
      %v2849 = vrot.slane %v2078, 5
      %v2850 = vsel %vm1381, %v2848, %v2849
      %v2851 = vrot.slane %v2849, 4
      %v2852 = vrot.slane %v2079, 5
      %v2853 = vsel %vm1381, %v2851, %v2852
      %v2854 = vrot.slane %v2748, 5
      %v2855 = vrot.slane %v2854, 4
      %v2856 = vrot.slane %v2081, 5
      %v2857 = vsel %vm1381, %v2855, %v2856
      %v2858 = vrot.slane %v2856, 4
      %v2859 = vrot.slane %v2082, 5
      %v2860 = vsel %vm1381, %v2858, %v2859
      %v2861 = vrot.slane %v2749, 5
      %v2862 = vrot.slane %v2861, 4
      %v2863 = vrot.slane %v2084, 5
      %v2864 = vsel %vm1381, %v2862, %v2863
      %v2865 = vrot.slane %v2863, 4
      %v2866 = vrot.slane %v2085, 5
      %v2867 = vsel %vm1381, %v2865, %v2866
      %v2868 = vrot.slane %v2750, 5
      %v2869 = vrot.slane %v2868, 4
      %v2870 = vrot.slane %v2087, 5
      %v2871 = vsel %vm1381, %v2869, %v2870
      %v2872 = vrot.slane %v2870, 4
      %v2873 = vrot.slane %v2088, 5
      %v2874 = vsel %vm1381, %v2872, %v2873
      %v2875 = vrot.slane %v2751, 5
      %v2876 = vrot.slane %v2875, 4
      %v2877 = vrot.slane %v2090, 5
      %v2878 = vsel %vm1381, %v2876, %v2877
      %v2879 = vrot.slane %v2877, 4
      %v2880 = vrot.slane %v2091, 5
      %v2881 = vsel %vm1381, %v2879, %v2880
      %v2882 = vrot.slane %v2752, 5
      %v2883 = vrot.slane %v2882, 4
      %v2884 = vrot.slane %v2093, 5
      %v2885 = vsel %vm1381, %v2883, %v2884
      %v2886 = vrot.slane %v2884, 4
      %v2887 = vrot.slane %v2094, 5
      %v2888 = vsel %vm1381, %v2886, %v2887
      %v2889 = vrot.slane %v2753, 5
      %v2890 = vrot.slane %v2889, 4
      %v2891 = vrot.slane %v2096, 5
      %v2892 = vsel %vm1381, %v2890, %v2891
      %v2893 = vrot.slane %v2891, 4
      %v2894 = vrot.slane %v2097, 5
      %v2895 = vsel %vm1381, %v2893, %v2894
      %v2896 = vrot.slane %v2754, 5
      %v2897 = vrot.slane %v2896, 4
      %v2898 = vrot.slane %v2099, 5
      %v2899 = vsel %vm1381, %v2897, %v2898
      %v2900 = vrot.slane %v2898, 4
      %v2901 = vrot.slane %v2100, 5
      %v2902 = vsel %vm1381, %v2900, %v2901
      %v2903 = vrot.slane %v2755, 5
      %v2904 = vrot.slane %v2903, 4
      %v2905 = vrot.slane %v2102, 5
      %v2906 = vsel %vm1381, %v2904, %v2905
      %v2907 = vrot.slane %v2905, 4
      %v2908 = vrot.slane %v2103, 5
      %v2909 = vsel %vm1381, %v2907, %v2908
      %v2910 = vrot.slane %v2756, 5
      %v2911 = vrot.slane %v2910, 4
      %v2912 = vrot.slane %v2105, 5
      %v2913 = vsel %vm1381, %v2911, %v2912
      %v2914 = vrot.slane %v2912, 4
      %v2915 = vrot.slane %v2106, 5
      %v2916 = vsel %vm1381, %v2914, %v2915
      %s2917 = scalar_lea.vmem %s2, 320
      %v2918 = vld [vmem:[%s2917] sm:$0xf]
      %v2919 = vld [vmem:[%s2917 + $0x4] sm:$0xf]
      %v2920 = vld [vmem:[%s2917 + $0x8] sm:$0xf]
      %v2921 = vld [vmem:[%s2917 + $0xc] sm:$0xf]
      %v2922 = vld [vmem:[%s2917 + $0x10] sm:$0xf]
      %v2923 = vld [vmem:[%s2917 + $0x14] sm:$0xf]
      %v2924 = vld [vmem:[%s2917 + $0x18] sm:$0xf]
      %v2925 = vld [vmem:[%s2917 + $0x1c] sm:$0xf]
      %v2926 = vld [vmem:[%s2917 + $0x20] sm:$0xf]
      %v2927 = vld [vmem:[%s2917 + $0x24] sm:$0xf]
      %v2928 = vld [vmem:[%s2917 + $0x28] sm:$0xf]
      %v2929 = vld [vmem:[%s2917 + $0x2c] sm:$0xf]
      %v2930 = vld [vmem:[%s2917 + $0x30] sm:$0xf]
      %v2931 = vld [vmem:[%s2917 + $0x34] sm:$0xf]
      %v2932 = vld [vmem:[%s2917 + $0x38] sm:$0xf]
      %v2933 = vld [vmem:[%s2917 + $0x3c] sm:$0xf]
      %v2934 = vunpack.c.l.b16 %v2808
      %v2935 = vunpack.c.l.b16 %v2811
      %v2936 = vunpack.c.l.b16 %v2815
      %v2937 = vunpack.c.l.b16 %v2818
      %v2938 = vunpack.c.l.b16 %v2822
      %v2939 = vunpack.c.l.b16 %v2825
      %v2940 = vunpack.c.l.b16 %v2829
      %v2941 = vunpack.c.l.b16 %v2832
      %v2942 = vunpack.c.l.b16 %v2836
      %v2943 = vunpack.c.l.b16 %v2839
      %v2944 = vunpack.c.l.b16 %v2843
      %v2945 = vunpack.c.l.b16 %v2846
      %v2946 = vunpack.c.l.b16 %v2850
      %v2947 = vunpack.c.l.b16 %v2853
      %v2948 = vunpack.c.l.b16 %v2857
      %v2949 = vunpack.c.l.b16 %v2860
      %v2950 = vunpack.c.l.b16 %v2864
      %v2951 = vunpack.c.l.b16 %v2867
      %v2952 = vunpack.c.l.b16 %v2871
      %v2953 = vunpack.c.l.b16 %v2874
      %v2954 = vunpack.c.l.b16 %v2878
      %v2955 = vunpack.c.l.b16 %v2881
      %v2956 = vunpack.c.l.b16 %v2885
      %v2957 = vunpack.c.l.b16 %v2888
      %v2958 = vunpack.c.l.b16 %v2892
      %v2959 = vunpack.c.l.b16 %v2895
      %v2960 = vunpack.c.l.b16 %v2899
      %v2961 = vunpack.c.l.b16 %v2902
      %v2962 = vunpack.c.l.b16 %v2906
      %v2963 = vunpack.c.l.b16 %v2909
      %v2964 = vunpack.c.l.b16 %v2913
      %v2965 = vunpack.c.l.b16 %v2916
      %v2966 = vpack.c.b16 %v2935, %v2934
      %v2967 = vpack.c.b16 %v2937, %v2936
      %v2968 = vpack.c.b16 %v2939, %v2938
      %v2969 = vpack.c.b16 %v2941, %v2940
      %v2970 = vpack.c.b16 %v2943, %v2942
      %v2971 = vpack.c.b16 %v2945, %v2944
      %v2972 = vpack.c.b16 %v2947, %v2946
      %v2973 = vpack.c.b16 %v2949, %v2948
      %v2974 = vpack.c.b16 %v2951, %v2950
      %v2975 = vpack.c.b16 %v2953, %v2952
      %v2976 = vpack.c.b16 %v2955, %v2954
      %v2977 = vpack.c.b16 %v2957, %v2956
      %v2978 = vpack.c.b16 %v2959, %v2958
      %v2979 = vpack.c.b16 %v2961, %v2960
      %v2980 = vpack.c.b16 %v2963, %v2962
      %v2981 = vpack.c.b16 %v2965, %v2964
      %v3014 = vunpack.c.l.b16 %v2918
      %v3015 = vunpack.c.l.b16 %v2919
      %v3016 = vunpack.c.l.b16 %v2920
      %v3017 = vunpack.c.l.b16 %v2921
      %v3018 = vunpack.c.l.b16 %v2922
      %v3019 = vunpack.c.l.b16 %v2923
      %v3020 = vunpack.c.l.b16 %v2924
      %v3021 = vunpack.c.l.b16 %v2925
      %v3022 = vunpack.c.l.b16 %v2926
      %v3023 = vunpack.c.l.b16 %v2927
      %v3024 = vunpack.c.l.b16 %v2928
      %v3025 = vunpack.c.l.b16 %v2929
      %v3026 = vunpack.c.l.b16 %v2930
      %v3027 = vunpack.c.l.b16 %v2931
      %v3028 = vunpack.c.l.b16 %v2932
      %v3029 = vunpack.c.l.b16 %v2933
      %v3030 = vpack.c.b16 %v3015, %v3014
      %v3031 = vpack.c.b16 %v3017, %v3016
      %v3032 = vpack.c.b16 %v3019, %v3018
      %v3033 = vpack.c.b16 %v3021, %v3020
      %v3034 = vpack.c.b16 %v3023, %v3022
      %v3035 = vpack.c.b16 %v3025, %v3024
      %v3036 = vpack.c.b16 %v3027, %v3026
      %v3037 = vpack.c.b16 %v3029, %v3028
      %3046 = vmatpush.bf16.msra.mxu0 %v3037
      %3047 = vmatpush.bf16.msra.mxu0 %v3036
      %3048 = vmatpush.bf16.msra.mxu0 %v3035
      %3049 = vmatpush.bf16.msra.mxu0 %v3034
      %3050 = vmatpush.bf16.msra.mxu0 %v3033
      %3051 = vmatpush.bf16.msra.mxu0 %v3032
      %3052 = vmatpush.bf16.msra.mxu0 %v3031
      %3053 = vmatpush.bf16.msra.mxu0 %v3030
      %3054 = vmatmul.bf16.gmra.mxu0 %v2966
      %v3055 = vpop.f32.mrf.mxu0
      %v3056 = vadd.f32 0.0, %v3055
      %v3057 = vpop.f32.mrf.mxu0
      %v3058 = vadd.f32 0.0, %v3057
      %3059 = vmatmul.bf16.gmra.mxu0 %v2967
      %v3060 = vpop.f32.mrf.mxu0
      %v3061 = vadd.f32 0.0, %v3060
      %v3062 = vpop.f32.mrf.mxu0
      %v3063 = vadd.f32 0.0, %v3062
      %3064 = vmatmul.bf16.gmra.mxu0 %v2968
      %v3065 = vpop.f32.mrf.mxu0
      %v3066 = vadd.f32 0.0, %v3065
      %v3067 = vpop.f32.mrf.mxu0
      %v3068 = vadd.f32 0.0, %v3067
      %3069 = vmatmul.bf16.gmra.mxu0 %v2969
      %v3070 = vpop.f32.mrf.mxu0
      %v3071 = vadd.f32 0.0, %v3070
      %v3072 = vpop.f32.mrf.mxu0
      %v3073 = vadd.f32 0.0, %v3072
      %3074 = vmatmul.bf16.gmra.mxu0 %v2970
      %v3075 = vpop.f32.mrf.mxu0
      %v3076 = vadd.f32 0.0, %v3075
      %v3077 = vpop.f32.mrf.mxu0
      %v3078 = vadd.f32 0.0, %v3077
      %3079 = vmatmul.bf16.gmra.mxu0 %v2971
      %v3080 = vpop.f32.mrf.mxu0
      %v3081 = vadd.f32 0.0, %v3080
      %v3082 = vpop.f32.mrf.mxu0
      %v3083 = vadd.f32 0.0, %v3082
      %3084 = vmatmul.bf16.gmra.mxu0 %v2972
      %v3085 = vpop.f32.mrf.mxu0
      %v3086 = vadd.f32 0.0, %v3085
      %v3087 = vpop.f32.mrf.mxu0
      %v3088 = vadd.f32 0.0, %v3087
      %3089 = vmatmul.bf16.gmra.mxu0 %v2973
      %v3090 = vpop.f32.mrf.mxu0
      %v3091 = vadd.f32 0.0, %v3090
      %v3092 = vpop.f32.mrf.mxu0
      %v3093 = vadd.f32 0.0, %v3092
      %3094 = vmatmul.bf16.gmra.mxu0 %v2974
      %v3095 = vpop.f32.mrf.mxu0
      %v3096 = vadd.f32 0.0, %v3095
      %v3097 = vpop.f32.mrf.mxu0
      %v3098 = vadd.f32 0.0, %v3097
      %3099 = vmatmul.bf16.gmra.mxu0 %v2975
      %v3100 = vpop.f32.mrf.mxu0
      %v3101 = vadd.f32 0.0, %v3100
      %v3102 = vpop.f32.mrf.mxu0
      %v3103 = vadd.f32 0.0, %v3102
      %3104 = vmatmul.bf16.gmra.mxu0 %v2976
      %v3105 = vpop.f32.mrf.mxu0
      %v3106 = vadd.f32 0.0, %v3105
      %v3107 = vpop.f32.mrf.mxu0
      %v3108 = vadd.f32 0.0, %v3107
      %3109 = vmatmul.bf16.gmra.mxu0 %v2977
      %v3110 = vpop.f32.mrf.mxu0
      %v3111 = vadd.f32 0.0, %v3110
      %v3112 = vpop.f32.mrf.mxu0
      %v3113 = vadd.f32 0.0, %v3112
      %3114 = vmatmul.bf16.gmra.mxu0 %v2978
      %v3115 = vpop.f32.mrf.mxu0
      %v3116 = vadd.f32 0.0, %v3115
      %v3117 = vpop.f32.mrf.mxu0
      %v3118 = vadd.f32 0.0, %v3117
      %3119 = vmatmul.bf16.gmra.mxu0 %v2979
      %v3120 = vpop.f32.mrf.mxu0
      %v3121 = vadd.f32 0.0, %v3120
      %v3122 = vpop.f32.mrf.mxu0
      %v3123 = vadd.f32 0.0, %v3122
      %3124 = vmatmul.bf16.gmra.mxu0 %v2980
      %v3125 = vpop.f32.mrf.mxu0
      %v3126 = vadd.f32 0.0, %v3125
      %v3127 = vpop.f32.mrf.mxu0
      %v3128 = vadd.f32 0.0, %v3127
      %3129 = vmatmul.bf16.gmra.mxu0 %v2981
      %v3130 = vpop.f32.mrf.mxu0
      %v3131 = vadd.f32 0.0, %v3130
      %v3132 = vpop.f32.mrf.mxu0
      %v3133 = vadd.f32 0.0, %v3132
      %3134 = vdwg.mxu0
      %v3135 = vadd.f32 %v2709, %v3056
      %v3136 = vadd.f32 %v2710, %v3058
      %v3137 = vadd.f32 %v2711, %v3061
      %v3138 = vadd.f32 %v2712, %v3063
      %v3139 = vadd.f32 %v2713, %v3066
      %v3140 = vadd.f32 %v2714, %v3068
      %v3141 = vadd.f32 %v2715, %v3071
      %v3142 = vadd.f32 %v2716, %v3073
      %v3143 = vadd.f32 %v2717, %v3076
      %v3144 = vadd.f32 %v2718, %v3078
      %v3145 = vadd.f32 %v2719, %v3081
      %v3146 = vadd.f32 %v2720, %v3083
      %v3147 = vadd.f32 %v2721, %v3086
      %v3148 = vadd.f32 %v2722, %v3088
      %v3149 = vadd.f32 %v2723, %v3091
      %v3150 = vadd.f32 %v2724, %v3093
      %v3151 = vadd.f32 %v2725, %v3096
      %v3152 = vadd.f32 %v2726, %v3098
      %v3153 = vadd.f32 %v2727, %v3101
      %v3154 = vadd.f32 %v2728, %v3103
      %v3155 = vadd.f32 %v2729, %v3106
      %v3156 = vadd.f32 %v2730, %v3108
      %v3157 = vadd.f32 %v2731, %v3111
      %v3158 = vadd.f32 %v2732, %v3113
      %v3159 = vadd.f32 %v2733, %v3116
      %v3160 = vadd.f32 %v2734, %v3118
      %v3161 = vadd.f32 %v2735, %v3121
      %v3162 = vadd.f32 %v2736, %v3123
      %v3163 = vadd.f32 %v2737, %v3126
      %v3164 = vadd.f32 %v2738, %v3128
      %v3165 = vadd.f32 %v2739, %v3131
      %v3166 = vadd.f32 %v2740, %v3133
      %s3167 = scalar_lea.vmem [#allocation2], 24
      %v3168 = vld [vmem:[%s3167] sm:$0xf]
      %v3169 = vld [vmem:[%s3167 + $0x4] sm:$0xf]
      %v3170 = vld [vmem:[%s3167 + $0xc] sm:$0xf]
      %v3171 = vld [vmem:[%s3167 + $0x10] sm:$0xf]
      %v3172 = vld [vmem:[%s3167 + $0x18] sm:$0xf]
      %v3173 = vld [vmem:[%s3167 + $0x1c] sm:$0xf]
      %v3174 = vld [vmem:[%s3167 + $0x24] sm:$0xf]
      %v3175 = vld [vmem:[%s3167 + $0x28] sm:$0xf]
      %v3176 = vld [vmem:[%s3167 + $0x30] sm:$0xf]
      %v3177 = vld [vmem:[%s3167 + $0x34] sm:$0xf]
      %v3178 = vld [vmem:[%s3167 + $0x3c] sm:$0xf]
      %v3179 = vld [vmem:[%s3167 + $0x40] sm:$0xf]
      %v3180 = vld [vmem:[%s3167 + $0x48] sm:$0xf]
      %v3181 = vld [vmem:[%s3167 + $0x4c] sm:$0xf]
      %v3182 = vld [vmem:[%s3167 + $0x54] sm:$0xf]
      %v3183 = vld [vmem:[%s3167 + $0x58] sm:$0xf]
      %v3184 = vld [vmem:[%s3167 + $0x60] sm:$0xf]
      %v3185 = vld [vmem:[%s3167 + $0x64] sm:$0xf]
      %v3186 = vld [vmem:[%s3167 + $0x6c] sm:$0xf]
      %v3187 = vld [vmem:[%s3167 + $0x70] sm:$0xf]
      %v3188 = vld [vmem:[%s3167 + $0x78] sm:$0xf]
      %v3189 = vld [vmem:[%s3167 + $0x7c] sm:$0xf]
      %v3190 = vld [vmem:[%s3167 + $0x84] sm:$0xf]
      %v3191 = vld [vmem:[%s3167 + $0x88] sm:$0xf]
      %v3192 = vld [vmem:[%s3167 + $0x90] sm:$0xf]
      %v3193 = vld [vmem:[%s3167 + $0x94] sm:$0xf]
      %v3194 = vld [vmem:[%s3167 + $0x9c] sm:$0xf]
      %v3195 = vld [vmem:[%s3167 + $0xa0] sm:$0xf]
      %v3196 = vld [vmem:[%s3167 + $0xa8] sm:$0xf]
      %v3197 = vld [vmem:[%s3167 + $0xac] sm:$0xf]
      %v3198 = vld [vmem:[%s3167 + $0xb4] sm:$0xf]
      %v3199 = vld [vmem:[%s3167 + $0xb8] sm:$0xf]
      %s3200 = scalar_lea.vmem %s2, 384
      %v3201 = vld [vmem:[%s3200] sm:$0xf]
      %v3202 = vld [vmem:[%s3200 + $0x4] sm:$0xf]
      %v3203 = vld [vmem:[%s3200 + $0x8] sm:$0xf]
      %v3204 = vld [vmem:[%s3200 + $0xc] sm:$0xf]
      %v3205 = vld [vmem:[%s3200 + $0x10] sm:$0xf]
      %v3206 = vld [vmem:[%s3200 + $0x14] sm:$0xf]
      %v3207 = vld [vmem:[%s3200 + $0x18] sm:$0xf]
      %v3208 = vld [vmem:[%s3200 + $0x1c] sm:$0xf]
      %v3209 = vld [vmem:[%s3200 + $0x20] sm:$0xf]
      %v3210 = vld [vmem:[%s3200 + $0x24] sm:$0xf]
      %v3211 = vld [vmem:[%s3200 + $0x28] sm:$0xf]
      %v3212 = vld [vmem:[%s3200 + $0x2c] sm:$0xf]
      %v3213 = vld [vmem:[%s3200 + $0x30] sm:$0xf]
      %v3214 = vld [vmem:[%s3200 + $0x34] sm:$0xf]
      %v3215 = vld [vmem:[%s3200 + $0x38] sm:$0xf]
      %v3216 = vld [vmem:[%s3200 + $0x3c] sm:$0xf]
      %v3249 = vunpack.c.l.b16 %v3168
      %v3250 = vunpack.c.l.b16 %v3169
      %v3251 = vunpack.c.l.b16 %v3170
      %v3252 = vunpack.c.l.b16 %v3171
      %v3253 = vunpack.c.l.b16 %v3172
      %v3254 = vunpack.c.l.b16 %v3173
      %v3255 = vunpack.c.l.b16 %v3174
      %v3256 = vunpack.c.l.b16 %v3175
      %v3257 = vunpack.c.l.b16 %v3176
      %v3258 = vunpack.c.l.b16 %v3177
      %v3259 = vunpack.c.l.b16 %v3178
      %v3260 = vunpack.c.l.b16 %v3179
      %v3261 = vunpack.c.l.b16 %v3180
      %v3262 = vunpack.c.l.b16 %v3181
      %v3263 = vunpack.c.l.b16 %v3182
      %v3264 = vunpack.c.l.b16 %v3183
      %v3265 = vunpack.c.l.b16 %v3184
      %v3266 = vunpack.c.l.b16 %v3185
      %v3267 = vunpack.c.l.b16 %v3186
      %v3268 = vunpack.c.l.b16 %v3187
      %v3269 = vunpack.c.l.b16 %v3188
      %v3270 = vunpack.c.l.b16 %v3189
      %v3271 = vunpack.c.l.b16 %v3190
      %v3272 = vunpack.c.l.b16 %v3191
      %v3273 = vunpack.c.l.b16 %v3192
      %v3274 = vunpack.c.l.b16 %v3193
      %v3275 = vunpack.c.l.b16 %v3194
      %v3276 = vunpack.c.l.b16 %v3195
      %v3277 = vunpack.c.l.b16 %v3196
      %v3278 = vunpack.c.l.b16 %v3197
      %v3279 = vunpack.c.l.b16 %v3198
      %v3280 = vunpack.c.l.b16 %v3199
      %v3281 = vpack.c.b16 %v3250, %v3249
      %v3282 = vpack.c.b16 %v3252, %v3251
      %v3283 = vpack.c.b16 %v3254, %v3253
      %v3284 = vpack.c.b16 %v3256, %v3255
      %v3285 = vpack.c.b16 %v3258, %v3257
      %v3286 = vpack.c.b16 %v3260, %v3259
      %v3287 = vpack.c.b16 %v3262, %v3261
      %v3288 = vpack.c.b16 %v3264, %v3263
      %v3289 = vpack.c.b16 %v3266, %v3265
      %v3290 = vpack.c.b16 %v3268, %v3267
      %v3291 = vpack.c.b16 %v3270, %v3269
      %v3292 = vpack.c.b16 %v3272, %v3271
      %v3293 = vpack.c.b16 %v3274, %v3273
      %v3294 = vpack.c.b16 %v3276, %v3275
      %v3295 = vpack.c.b16 %v3278, %v3277
      %v3296 = vpack.c.b16 %v3280, %v3279
      %v3329 = vunpack.c.l.b16 %v3201
      %v3330 = vunpack.c.l.b16 %v3202
      %v3331 = vunpack.c.l.b16 %v3203
      %v3332 = vunpack.c.l.b16 %v3204
      %v3333 = vunpack.c.l.b16 %v3205
      %v3334 = vunpack.c.l.b16 %v3206
      %v3335 = vunpack.c.l.b16 %v3207
      %v3336 = vunpack.c.l.b16 %v3208
      %v3337 = vunpack.c.l.b16 %v3209
      %v3338 = vunpack.c.l.b16 %v3210
      %v3339 = vunpack.c.l.b16 %v3211
      %v3340 = vunpack.c.l.b16 %v3212
      %v3341 = vunpack.c.l.b16 %v3213
      %v3342 = vunpack.c.l.b16 %v3214
      %v3343 = vunpack.c.l.b16 %v3215
      %v3344 = vunpack.c.l.b16 %v3216
      %v3345 = vpack.c.b16 %v3330, %v3329
      %v3346 = vpack.c.b16 %v3332, %v3331
      %v3347 = vpack.c.b16 %v3334, %v3333
      %v3348 = vpack.c.b16 %v3336, %v3335
      %v3349 = vpack.c.b16 %v3338, %v3337
      %v3350 = vpack.c.b16 %v3340, %v3339
      %v3351 = vpack.c.b16 %v3342, %v3341
      %v3352 = vpack.c.b16 %v3344, %v3343
      %3361 = vmatpush.bf16.msra.mxu0 %v3352
      %3362 = vmatpush.bf16.msra.mxu0 %v3351
      %3363 = vmatpush.bf16.msra.mxu0 %v3350
      %3364 = vmatpush.bf16.msra.mxu0 %v3349
      %3365 = vmatpush.bf16.msra.mxu0 %v3348
      %3366 = vmatpush.bf16.msra.mxu0 %v3347
      %3367 = vmatpush.bf16.msra.mxu0 %v3346
      %3368 = vmatpush.bf16.msra.mxu0 %v3345
      %3369 = vmatmul.bf16.gmra.mxu0 %v3281
      %v3370 = vpop.f32.mrf.mxu0
      %v3371 = vadd.f32 0.0, %v3370
      %v3372 = vpop.f32.mrf.mxu0
      %v3373 = vadd.f32 0.0, %v3372
      %3374 = vmatmul.bf16.gmra.mxu0 %v3282
      %v3375 = vpop.f32.mrf.mxu0
      %v3376 = vadd.f32 0.0, %v3375
      %v3377 = vpop.f32.mrf.mxu0
      %v3378 = vadd.f32 0.0, %v3377
      %3379 = vmatmul.bf16.gmra.mxu0 %v3283
      %v3380 = vpop.f32.mrf.mxu0
      %v3381 = vadd.f32 0.0, %v3380
      %v3382 = vpop.f32.mrf.mxu0
      %v3383 = vadd.f32 0.0, %v3382
      %3384 = vmatmul.bf16.gmra.mxu0 %v3284
      %v3385 = vpop.f32.mrf.mxu0
      %v3386 = vadd.f32 0.0, %v3385
      %v3387 = vpop.f32.mrf.mxu0
      %v3388 = vadd.f32 0.0, %v3387
      %3389 = vmatmul.bf16.gmra.mxu0 %v3285
      %v3390 = vpop.f32.mrf.mxu0
      %v3391 = vadd.f32 0.0, %v3390
      %v3392 = vpop.f32.mrf.mxu0
      %v3393 = vadd.f32 0.0, %v3392
      %3394 = vmatmul.bf16.gmra.mxu0 %v3286
      %v3395 = vpop.f32.mrf.mxu0
      %v3396 = vadd.f32 0.0, %v3395
      %v3397 = vpop.f32.mrf.mxu0
      %v3398 = vadd.f32 0.0, %v3397
      %3399 = vmatmul.bf16.gmra.mxu0 %v3287
      %v3400 = vpop.f32.mrf.mxu0
      %v3401 = vadd.f32 0.0, %v3400
      %v3402 = vpop.f32.mrf.mxu0
      %v3403 = vadd.f32 0.0, %v3402
      %3404 = vmatmul.bf16.gmra.mxu0 %v3288
      %v3405 = vpop.f32.mrf.mxu0
      %v3406 = vadd.f32 0.0, %v3405
      %v3407 = vpop.f32.mrf.mxu0
      %v3408 = vadd.f32 0.0, %v3407
      %3409 = vmatmul.bf16.gmra.mxu0 %v3289
      %v3410 = vpop.f32.mrf.mxu0
      %v3411 = vadd.f32 0.0, %v3410
      %v3412 = vpop.f32.mrf.mxu0
      %v3413 = vadd.f32 0.0, %v3412
      %3414 = vmatmul.bf16.gmra.mxu0 %v3290
      %v3415 = vpop.f32.mrf.mxu0
      %v3416 = vadd.f32 0.0, %v3415
      %v3417 = vpop.f32.mrf.mxu0
      %v3418 = vadd.f32 0.0, %v3417
      %3419 = vmatmul.bf16.gmra.mxu0 %v3291
      %v3420 = vpop.f32.mrf.mxu0
      %v3421 = vadd.f32 0.0, %v3420
      %v3422 = vpop.f32.mrf.mxu0
      %v3423 = vadd.f32 0.0, %v3422
      %3424 = vmatmul.bf16.gmra.mxu0 %v3292
      %v3425 = vpop.f32.mrf.mxu0
      %v3426 = vadd.f32 0.0, %v3425
      %v3427 = vpop.f32.mrf.mxu0
      %v3428 = vadd.f32 0.0, %v3427
      %3429 = vmatmul.bf16.gmra.mxu0 %v3293
      %v3430 = vpop.f32.mrf.mxu0
      %v3431 = vadd.f32 0.0, %v3430
      %v3432 = vpop.f32.mrf.mxu0
      %v3433 = vadd.f32 0.0, %v3432
      %3434 = vmatmul.bf16.gmra.mxu0 %v3294
      %v3435 = vpop.f32.mrf.mxu0
      %v3436 = vadd.f32 0.0, %v3435
      %v3437 = vpop.f32.mrf.mxu0
      %v3438 = vadd.f32 0.0, %v3437
      %3439 = vmatmul.bf16.gmra.mxu0 %v3295
      %v3440 = vpop.f32.mrf.mxu0
      %v3441 = vadd.f32 0.0, %v3440
      %v3442 = vpop.f32.mrf.mxu0
      %v3443 = vadd.f32 0.0, %v3442
      %3444 = vmatmul.bf16.gmra.mxu0 %v3296
      %v3445 = vpop.f32.mrf.mxu0
      %v3446 = vadd.f32 0.0, %v3445
      %v3447 = vpop.f32.mrf.mxu0
      %v3448 = vadd.f32 0.0, %v3447
      %3449 = vdwg.mxu0
      %v3450 = vadd.f32 %v3135, %v3371
      %v3451 = vadd.f32 %v3136, %v3373
      %v3452 = vadd.f32 %v3137, %v3376
      %v3453 = vadd.f32 %v3138, %v3378
      %v3454 = vadd.f32 %v3139, %v3381
      %v3455 = vadd.f32 %v3140, %v3383
      %v3456 = vadd.f32 %v3141, %v3386
      %v3457 = vadd.f32 %v3142, %v3388
      %v3458 = vadd.f32 %v3143, %v3391
      %v3459 = vadd.f32 %v3144, %v3393
      %v3460 = vadd.f32 %v3145, %v3396
      %v3461 = vadd.f32 %v3146, %v3398
      %v3462 = vadd.f32 %v3147, %v3401
      %v3463 = vadd.f32 %v3148, %v3403
      %v3464 = vadd.f32 %v3149, %v3406
      %v3465 = vadd.f32 %v3150, %v3408
      %v3466 = vadd.f32 %v3151, %v3411
      %v3467 = vadd.f32 %v3152, %v3413
      %v3468 = vadd.f32 %v3153, %v3416
      %v3469 = vadd.f32 %v3154, %v3418
      %v3470 = vadd.f32 %v3155, %v3421
      %v3471 = vadd.f32 %v3156, %v3423
      %v3472 = vadd.f32 %v3157, %v3426
      %v3473 = vadd.f32 %v3158, %v3428
      %v3474 = vadd.f32 %v3159, %v3431
      %v3475 = vadd.f32 %v3160, %v3433
      %v3476 = vadd.f32 %v3161, %v3436
      %v3477 = vadd.f32 %v3162, %v3438
      %v3478 = vadd.f32 %v3163, %v3441
      %v3479 = vadd.f32 %v3164, %v3443
      %v3480 = vadd.f32 %v3165, %v3446
      %v3481 = vadd.f32 %v3166, %v3448
      %v3482 = vld [vmem:[%s3167] sm:$0xf]
      %v3483 = vld [vmem:[%s3167 + $0x4] sm:$0xf]
      %v3484 = vld [vmem:[%s3167 + $0x8] sm:$0x1]
      %v3485 = vld [vmem:[%s3167 + $0xc] sm:$0xf]
      %v3486 = vld [vmem:[%s3167 + $0x10] sm:$0xf]
      %v3487 = vld [vmem:[%s3167 + $0x14] sm:$0x1]
      %v3488 = vld [vmem:[%s3167 + $0x18] sm:$0xf]
      %v3489 = vld [vmem:[%s3167 + $0x1c] sm:$0xf]
      %v3490 = vld [vmem:[%s3167 + $0x20] sm:$0x1]
      %v3491 = vld [vmem:[%s3167 + $0x24] sm:$0xf]
      %v3492 = vld [vmem:[%s3167 + $0x28] sm:$0xf]
      %v3493 = vld [vmem:[%s3167 + $0x2c] sm:$0x1]
      %v3494 = vld [vmem:[%s3167 + $0x30] sm:$0xf]
      %v3495 = vld [vmem:[%s3167 + $0x34] sm:$0xf]
      %v3496 = vld [vmem:[%s3167 + $0x38] sm:$0x1]
      %v3497 = vld [vmem:[%s3167 + $0x3c] sm:$0xf]
      %v3498 = vld [vmem:[%s3167 + $0x40] sm:$0xf]
      %v3499 = vld [vmem:[%s3167 + $0x44] sm:$0x1]
      %v3500 = vld [vmem:[%s3167 + $0x48] sm:$0xf]
      %v3501 = vld [vmem:[%s3167 + $0x4c] sm:$0xf]
      %v3502 = vld [vmem:[%s3167 + $0x50] sm:$0x1]
      %v3503 = vld [vmem:[%s3167 + $0x54] sm:$0xf]
      %v3504 = vld [vmem:[%s3167 + $0x58] sm:$0xf]
      %v3505 = vld [vmem:[%s3167 + $0x5c] sm:$0x1]
      %v3506 = vld [vmem:[%s3167 + $0x60] sm:$0xf]
      %v3507 = vld [vmem:[%s3167 + $0x64] sm:$0xf]
      %v3508 = vld [vmem:[%s3167 + $0x68] sm:$0x1]
      %v3509 = vld [vmem:[%s3167 + $0x6c] sm:$0xf]
      %v3510 = vld [vmem:[%s3167 + $0x70] sm:$0xf]
      %v3511 = vld [vmem:[%s3167 + $0x74] sm:$0x1]
      %v3512 = vld [vmem:[%s3167 + $0x78] sm:$0xf]
      %v3513 = vld [vmem:[%s3167 + $0x7c] sm:$0xf]
      %v3514 = vld [vmem:[%s3167 + $0x80] sm:$0x1]
      %v3515 = vld [vmem:[%s3167 + $0x84] sm:$0xf]
      %v3516 = vld [vmem:[%s3167 + $0x88] sm:$0xf]
      %v3517 = vld [vmem:[%s3167 + $0x8c] sm:$0x1]
      %v3518 = vld [vmem:[%s3167 + $0x90] sm:$0xf]
      %v3519 = vld [vmem:[%s3167 + $0x94] sm:$0xf]
      %v3520 = vld [vmem:[%s3167 + $0x98] sm:$0x1]
      %v3521 = vld [vmem:[%s3167 + $0x9c] sm:$0xf]
      %v3522 = vld [vmem:[%s3167 + $0xa0] sm:$0xf]
      %v3523 = vld [vmem:[%s3167 + $0xa4] sm:$0x1]
      %v3524 = vld [vmem:[%s3167 + $0xa8] sm:$0xf]
      %v3525 = vld [vmem:[%s3167 + $0xac] sm:$0xf]
      %v3526 = vld [vmem:[%s3167 + $0xb0] sm:$0x1]
      %v3527 = vld [vmem:[%s3167 + $0xb4] sm:$0xf]
      %v3528 = vld [vmem:[%s3167 + $0xb8] sm:$0xf]
      %v3529 = vld [vmem:[%s3167 + $0xbc] sm:$0x1]
      %v3531 = vshrl.u32 %v3482, 16
      %v3533 = vrot.slane %v3531, 4
      %v3534 = vshll.u32 %v3482, 16
      %v3536 = vrot.slane %v3534, 5
      %v3537 = vor.u32 %v3533, %v3536
      %v3538 = vrot.slane %v3537, 4
      %v3540 = vshll.u32 %v3483, 16
      %v3542 = vrot.slane %v3540, 5
      %v3543 = vsel %vm495, %v3538, %v3542
      %v3544 = vshrl.u32 %v3483, 16
      %v3546 = vrot.slane %v3544, 4
      %v3547 = vor.u32 %v3546, %v3542
      %v3548 = vrot.slane %v3547, 4
      %v3550 = vshll.u32 %v3484, 16
      %v3552 = vrot.slane %v3550, 5
      %v3553 = vsel %vm495, %v3548, %v3552
      %v3555 = vshrl.u32 %v3485, 16
      %v3557 = vrot.slane %v3555, 4
      %v3558 = vshll.u32 %v3485, 16
      %v3560 = vrot.slane %v3558, 5
      %v3561 = vor.u32 %v3557, %v3560
      %v3562 = vrot.slane %v3561, 4
      %v3564 = vshll.u32 %v3486, 16
      %v3566 = vrot.slane %v3564, 5
      %v3567 = vsel %vm495, %v3562, %v3566
      %v3568 = vshrl.u32 %v3486, 16
      %v3570 = vrot.slane %v3568, 4
      %v3571 = vor.u32 %v3570, %v3566
      %v3572 = vrot.slane %v3571, 4
      %v3574 = vshll.u32 %v3487, 16
      %v3576 = vrot.slane %v3574, 5
      %v3577 = vsel %vm495, %v3572, %v3576
      %v3579 = vshrl.u32 %v3488, 16
      %v3581 = vrot.slane %v3579, 4
      %v3582 = vshll.u32 %v3488, 16
      %v3584 = vrot.slane %v3582, 5
      %v3585 = vor.u32 %v3581, %v3584
      %v3586 = vrot.slane %v3585, 4
      %v3588 = vshll.u32 %v3489, 16
      %v3590 = vrot.slane %v3588, 5
      %v3591 = vsel %vm495, %v3586, %v3590
      %v3592 = vshrl.u32 %v3489, 16
      %v3594 = vrot.slane %v3592, 4
      %v3595 = vor.u32 %v3594, %v3590
      %v3596 = vrot.slane %v3595, 4
      %v3598 = vshll.u32 %v3490, 16
      %v3600 = vrot.slane %v3598, 5
      %v3601 = vsel %vm495, %v3596, %v3600
      %v3603 = vshrl.u32 %v3491, 16
      %v3605 = vrot.slane %v3603, 4
      %v3606 = vshll.u32 %v3491, 16
      %v3608 = vrot.slane %v3606, 5
      %v3609 = vor.u32 %v3605, %v3608
      %v3610 = vrot.slane %v3609, 4
      %v3612 = vshll.u32 %v3492, 16
      %v3614 = vrot.slane %v3612, 5
      %v3615 = vsel %vm495, %v3610, %v3614
      %v3616 = vshrl.u32 %v3492, 16
      %v3618 = vrot.slane %v3616, 4
      %v3619 = vor.u32 %v3618, %v3614
      %v3620 = vrot.slane %v3619, 4
      %v3622 = vshll.u32 %v3493, 16
      %v3624 = vrot.slane %v3622, 5
      %v3625 = vsel %vm495, %v3620, %v3624
      %v3627 = vshrl.u32 %v3494, 16
      %v3629 = vrot.slane %v3627, 4
      %v3630 = vshll.u32 %v3494, 16
      %v3632 = vrot.slane %v3630, 5
      %v3633 = vor.u32 %v3629, %v3632
      %v3634 = vrot.slane %v3633, 4
      %v3636 = vshll.u32 %v3495, 16
      %v3638 = vrot.slane %v3636, 5
      %v3639 = vsel %vm495, %v3634, %v3638
      %v3640 = vshrl.u32 %v3495, 16
      %v3642 = vrot.slane %v3640, 4
      %v3643 = vor.u32 %v3642, %v3638
      %v3644 = vrot.slane %v3643, 4
      %v3646 = vshll.u32 %v3496, 16
      %v3648 = vrot.slane %v3646, 5
      %v3649 = vsel %vm495, %v3644, %v3648
      %v3651 = vshrl.u32 %v3497, 16
      %v3653 = vrot.slane %v3651, 4
      %v3654 = vshll.u32 %v3497, 16
      %v3656 = vrot.slane %v3654, 5
      %v3657 = vor.u32 %v3653, %v3656
      %v3658 = vrot.slane %v3657, 4
      %v3660 = vshll.u32 %v3498, 16
      %v3662 = vrot.slane %v3660, 5
      %v3663 = vsel %vm495, %v3658, %v3662
      %v3664 = vshrl.u32 %v3498, 16
      %v3666 = vrot.slane %v3664, 4
      %v3667 = vor.u32 %v3666, %v3662
      %v3668 = vrot.slane %v3667, 4
      %v3670 = vshll.u32 %v3499, 16
      %v3672 = vrot.slane %v3670, 5
      %v3673 = vsel %vm495, %v3668, %v3672
      %v3675 = vshrl.u32 %v3500, 16
      %v3677 = vrot.slane %v3675, 4
      %v3678 = vshll.u32 %v3500, 16
      %v3680 = vrot.slane %v3678, 5
      %v3681 = vor.u32 %v3677, %v3680
      %v3682 = vrot.slane %v3681, 4
      %v3684 = vshll.u32 %v3501, 16
      %v3686 = vrot.slane %v3684, 5
      %v3687 = vsel %vm495, %v3682, %v3686
      %v3688 = vshrl.u32 %v3501, 16
      %v3690 = vrot.slane %v3688, 4
      %v3691 = vor.u32 %v3690, %v3686
      %v3692 = vrot.slane %v3691, 4
      %v3694 = vshll.u32 %v3502, 16
      %v3696 = vrot.slane %v3694, 5
      %v3697 = vsel %vm495, %v3692, %v3696
      %v3699 = vshrl.u32 %v3503, 16
      %v3701 = vrot.slane %v3699, 4
      %v3702 = vshll.u32 %v3503, 16
      %v3704 = vrot.slane %v3702, 5
      %v3705 = vor.u32 %v3701, %v3704
      %v3706 = vrot.slane %v3705, 4
      %v3708 = vshll.u32 %v3504, 16
      %v3710 = vrot.slane %v3708, 5
      %v3711 = vsel %vm495, %v3706, %v3710
      %v3712 = vshrl.u32 %v3504, 16
      %v3714 = vrot.slane %v3712, 4
      %v3715 = vor.u32 %v3714, %v3710
      %v3716 = vrot.slane %v3715, 4
      %v3718 = vshll.u32 %v3505, 16
      %v3720 = vrot.slane %v3718, 5
      %v3721 = vsel %vm495, %v3716, %v3720
      %v3723 = vshrl.u32 %v3506, 16
      %v3725 = vrot.slane %v3723, 4
      %v3726 = vshll.u32 %v3506, 16
      %v3728 = vrot.slane %v3726, 5
      %v3729 = vor.u32 %v3725, %v3728
      %v3730 = vrot.slane %v3729, 4
      %v3732 = vshll.u32 %v3507, 16
      %v3734 = vrot.slane %v3732, 5
      %v3735 = vsel %vm495, %v3730, %v3734
      %v3736 = vshrl.u32 %v3507, 16
      %v3738 = vrot.slane %v3736, 4
      %v3739 = vor.u32 %v3738, %v3734
      %v3740 = vrot.slane %v3739, 4
      %v3742 = vshll.u32 %v3508, 16
      %v3744 = vrot.slane %v3742, 5
      %v3745 = vsel %vm495, %v3740, %v3744
      %v3747 = vshrl.u32 %v3509, 16
      %v3749 = vrot.slane %v3747, 4
      %v3750 = vshll.u32 %v3509, 16
      %v3752 = vrot.slane %v3750, 5
      %v3753 = vor.u32 %v3749, %v3752
      %v3754 = vrot.slane %v3753, 4
      %v3756 = vshll.u32 %v3510, 16
      %v3758 = vrot.slane %v3756, 5
      %v3759 = vsel %vm495, %v3754, %v3758
      %v3760 = vshrl.u32 %v3510, 16
      %v3762 = vrot.slane %v3760, 4
      %v3763 = vor.u32 %v3762, %v3758
      %v3764 = vrot.slane %v3763, 4
      %v3766 = vshll.u32 %v3511, 16
      %v3768 = vrot.slane %v3766, 5
      %v3769 = vsel %vm495, %v3764, %v3768
      %v3771 = vshrl.u32 %v3512, 16
      %v3773 = vrot.slane %v3771, 4
      %v3774 = vshll.u32 %v3512, 16
      %v3776 = vrot.slane %v3774, 5
      %v3777 = vor.u32 %v3773, %v3776
      %v3778 = vrot.slane %v3777, 4
      %v3780 = vshll.u32 %v3513, 16
      %v3782 = vrot.slane %v3780, 5
      %v3783 = vsel %vm495, %v3778, %v3782
      %v3784 = vshrl.u32 %v3513, 16
      %v3786 = vrot.slane %v3784, 4
      %v3787 = vor.u32 %v3786, %v3782
      %v3788 = vrot.slane %v3787, 4
      %v3790 = vshll.u32 %v3514, 16
      %v3792 = vrot.slane %v3790, 5
      %v3793 = vsel %vm495, %v3788, %v3792
      %v3795 = vshrl.u32 %v3515, 16
      %v3797 = vrot.slane %v3795, 4
      %v3798 = vshll.u32 %v3515, 16
      %v3800 = vrot.slane %v3798, 5
      %v3801 = vor.u32 %v3797, %v3800
      %v3802 = vrot.slane %v3801, 4
      %v3804 = vshll.u32 %v3516, 16
      %v3806 = vrot.slane %v3804, 5
      %v3807 = vsel %vm495, %v3802, %v3806
      %v3808 = vshrl.u32 %v3516, 16
      %v3810 = vrot.slane %v3808, 4
      %v3811 = vor.u32 %v3810, %v3806
      %v3812 = vrot.slane %v3811, 4
      %v3814 = vshll.u32 %v3517, 16
      %v3816 = vrot.slane %v3814, 5
      %v3817 = vsel %vm495, %v3812, %v3816
      %v3819 = vshrl.u32 %v3518, 16
      %v3821 = vrot.slane %v3819, 4
      %v3822 = vshll.u32 %v3518, 16
      %v3824 = vrot.slane %v3822, 5
      %v3825 = vor.u32 %v3821, %v3824
      %v3826 = vrot.slane %v3825, 4
      %v3828 = vshll.u32 %v3519, 16
      %v3830 = vrot.slane %v3828, 5
      %v3831 = vsel %vm495, %v3826, %v3830
      %v3832 = vshrl.u32 %v3519, 16
      %v3834 = vrot.slane %v3832, 4
      %v3835 = vor.u32 %v3834, %v3830
      %v3836 = vrot.slane %v3835, 4
      %v3838 = vshll.u32 %v3520, 16
      %v3840 = vrot.slane %v3838, 5
      %v3841 = vsel %vm495, %v3836, %v3840
      %v3843 = vshrl.u32 %v3521, 16
      %v3845 = vrot.slane %v3843, 4
      %v3846 = vshll.u32 %v3521, 16
      %v3848 = vrot.slane %v3846, 5
      %v3849 = vor.u32 %v3845, %v3848
      %v3850 = vrot.slane %v3849, 4
      %v3852 = vshll.u32 %v3522, 16
      %v3854 = vrot.slane %v3852, 5
      %v3855 = vsel %vm495, %v3850, %v3854
      %v3856 = vshrl.u32 %v3522, 16
      %v3858 = vrot.slane %v3856, 4
      %v3859 = vor.u32 %v3858, %v3854
      %v3860 = vrot.slane %v3859, 4
      %v3862 = vshll.u32 %v3523, 16
      %v3864 = vrot.slane %v3862, 5
      %v3865 = vsel %vm495, %v3860, %v3864
      %v3867 = vshrl.u32 %v3524, 16
      %v3869 = vrot.slane %v3867, 4
      %v3870 = vshll.u32 %v3524, 16
      %v3872 = vrot.slane %v3870, 5
      %v3873 = vor.u32 %v3869, %v3872
      %v3874 = vrot.slane %v3873, 4
      %v3876 = vshll.u32 %v3525, 16
      %v3878 = vrot.slane %v3876, 5
      %v3879 = vsel %vm495, %v3874, %v3878
      %v3880 = vshrl.u32 %v3525, 16
      %v3882 = vrot.slane %v3880, 4
      %v3883 = vor.u32 %v3882, %v3878
      %v3884 = vrot.slane %v3883, 4
      %v3886 = vshll.u32 %v3526, 16
      %v3888 = vrot.slane %v3886, 5
      %v3889 = vsel %vm495, %v3884, %v3888
      %v3891 = vshrl.u32 %v3527, 16
      %v3893 = vrot.slane %v3891, 4
      %v3894 = vshll.u32 %v3527, 16
      %v3896 = vrot.slane %v3894, 5
      %v3897 = vor.u32 %v3893, %v3896
      %v3898 = vrot.slane %v3897, 4
      %v3900 = vshll.u32 %v3528, 16
      %v3902 = vrot.slane %v3900, 5
      %v3903 = vsel %vm495, %v3898, %v3902
      %v3904 = vshrl.u32 %v3528, 16
      %v3906 = vrot.slane %v3904, 4
      %v3907 = vor.u32 %v3906, %v3902
      %v3908 = vrot.slane %v3907, 4
      %v3910 = vshll.u32 %v3529, 16
      %v3912 = vrot.slane %v3910, 5
      %v3913 = vsel %vm495, %v3908, %v3912
      %s3914 = scalar_lea.vmem %s2, 448
      %v3915 = vld [vmem:[%s3914] sm:$0xf]
      %v3916 = vld [vmem:[%s3914 + $0x4] sm:$0xf]
      %v3917 = vld [vmem:[%s3914 + $0x8] sm:$0xf]
      %v3918 = vld [vmem:[%s3914 + $0xc] sm:$0xf]
      %v3919 = vld [vmem:[%s3914 + $0x10] sm:$0xf]
      %v3920 = vld [vmem:[%s3914 + $0x14] sm:$0xf]
      %v3921 = vld [vmem:[%s3914 + $0x18] sm:$0xf]
      %v3922 = vld [vmem:[%s3914 + $0x1c] sm:$0xf]
      %v3923 = vld [vmem:[%s3914 + $0x20] sm:$0xf]
      %v3924 = vld [vmem:[%s3914 + $0x24] sm:$0xf]
      %v3925 = vld [vmem:[%s3914 + $0x28] sm:$0xf]
      %v3926 = vld [vmem:[%s3914 + $0x2c] sm:$0xf]
      %v3927 = vld [vmem:[%s3914 + $0x30] sm:$0xf]
      %v3928 = vld [vmem:[%s3914 + $0x34] sm:$0xf]
      %v3929 = vld [vmem:[%s3914 + $0x38] sm:$0xf]
      %v3930 = vld [vmem:[%s3914 + $0x3c] sm:$0xf]
      %v3931 = vunpack.c.l.b16 %v3543
      %v3932 = vunpack.c.l.b16 %v3553
      %v3933 = vunpack.c.l.b16 %v3567
      %v3934 = vunpack.c.l.b16 %v3577
      %v3935 = vunpack.c.l.b16 %v3591
      %v3936 = vunpack.c.l.b16 %v3601
      %v3937 = vunpack.c.l.b16 %v3615
      %v3938 = vunpack.c.l.b16 %v3625
      %v3939 = vunpack.c.l.b16 %v3639
      %v3940 = vunpack.c.l.b16 %v3649
      %v3941 = vunpack.c.l.b16 %v3663
      %v3942 = vunpack.c.l.b16 %v3673
      %v3943 = vunpack.c.l.b16 %v3687
      %v3944 = vunpack.c.l.b16 %v3697
      %v3945 = vunpack.c.l.b16 %v3711
      %v3946 = vunpack.c.l.b16 %v3721
      %v3947 = vunpack.c.l.b16 %v3735
      %v3948 = vunpack.c.l.b16 %v3745
      %v3949 = vunpack.c.l.b16 %v3759
      %v3950 = vunpack.c.l.b16 %v3769
      %v3951 = vunpack.c.l.b16 %v3783
      %v3952 = vunpack.c.l.b16 %v3793
      %v3953 = vunpack.c.l.b16 %v3807
      %v3954 = vunpack.c.l.b16 %v3817
      %v3955 = vunpack.c.l.b16 %v3831
      %v3956 = vunpack.c.l.b16 %v3841
      %v3957 = vunpack.c.l.b16 %v3855
      %v3958 = vunpack.c.l.b16 %v3865
      %v3959 = vunpack.c.l.b16 %v3879
      %v3960 = vunpack.c.l.b16 %v3889
      %v3961 = vunpack.c.l.b16 %v3903
      %v3962 = vunpack.c.l.b16 %v3913
      %v3963 = vpack.c.b16 %v3932, %v3931
      %v3964 = vpack.c.b16 %v3934, %v3933
      %v3965 = vpack.c.b16 %v3936, %v3935
      %v3966 = vpack.c.b16 %v3938, %v3937
      %v3967 = vpack.c.b16 %v3940, %v3939
      %v3968 = vpack.c.b16 %v3942, %v3941
      %v3969 = vpack.c.b16 %v3944, %v3943
      %v3970 = vpack.c.b16 %v3946, %v3945
      %v3971 = vpack.c.b16 %v3948, %v3947
      %v3972 = vpack.c.b16 %v3950, %v3949
      %v3973 = vpack.c.b16 %v3952, %v3951
      %v3974 = vpack.c.b16 %v3954, %v3953
      %v3975 = vpack.c.b16 %v3956, %v3955
      %v3976 = vpack.c.b16 %v3958, %v3957
      %v3977 = vpack.c.b16 %v3960, %v3959
      %v3978 = vpack.c.b16 %v3962, %v3961
      %v4011 = vunpack.c.l.b16 %v3915
      %v4012 = vunpack.c.l.b16 %v3916
      %v4013 = vunpack.c.l.b16 %v3917
      %v4014 = vunpack.c.l.b16 %v3918
      %v4015 = vunpack.c.l.b16 %v3919
      %v4016 = vunpack.c.l.b16 %v3920
      %v4017 = vunpack.c.l.b16 %v3921
      %v4018 = vunpack.c.l.b16 %v3922
      %v4019 = vunpack.c.l.b16 %v3923
      %v4020 = vunpack.c.l.b16 %v3924
      %v4021 = vunpack.c.l.b16 %v3925
      %v4022 = vunpack.c.l.b16 %v3926
      %v4023 = vunpack.c.l.b16 %v3927
      %v4024 = vunpack.c.l.b16 %v3928
      %v4025 = vunpack.c.l.b16 %v3929
      %v4026 = vunpack.c.l.b16 %v3930
      %v4027 = vpack.c.b16 %v4012, %v4011
      %v4028 = vpack.c.b16 %v4014, %v4013
      %v4029 = vpack.c.b16 %v4016, %v4015
      %v4030 = vpack.c.b16 %v4018, %v4017
      %v4031 = vpack.c.b16 %v4020, %v4019
      %v4032 = vpack.c.b16 %v4022, %v4021
      %v4033 = vpack.c.b16 %v4024, %v4023
      %v4034 = vpack.c.b16 %v4026, %v4025
      %4043 = vmatpush.bf16.msra.mxu0 %v4034
      %4044 = vmatpush.bf16.msra.mxu0 %v4033
      %4045 = vmatpush.bf16.msra.mxu0 %v4032
      %4046 = vmatpush.bf16.msra.mxu0 %v4031
      %4047 = vmatpush.bf16.msra.mxu0 %v4030
      %4048 = vmatpush.bf16.msra.mxu0 %v4029
      %4049 = vmatpush.bf16.msra.mxu0 %v4028
      %4050 = vmatpush.bf16.msra.mxu0 %v4027
      %4051 = vmatmul.bf16.gmra.mxu0 %v3963
      %v4052 = vpop.f32.mrf.mxu0
      %v4053 = vadd.f32 0.0, %v4052
      %v4054 = vpop.f32.mrf.mxu0
      %v4055 = vadd.f32 0.0, %v4054
      %4056 = vmatmul.bf16.gmra.mxu0 %v3964
      %v4057 = vpop.f32.mrf.mxu0
      %v4058 = vadd.f32 0.0, %v4057
      %v4059 = vpop.f32.mrf.mxu0
      %v4060 = vadd.f32 0.0, %v4059
      %4061 = vmatmul.bf16.gmra.mxu0 %v3965
      %v4062 = vpop.f32.mrf.mxu0
      %v4063 = vadd.f32 0.0, %v4062
      %v4064 = vpop.f32.mrf.mxu0
      %v4065 = vadd.f32 0.0, %v4064
      %4066 = vmatmul.bf16.gmra.mxu0 %v3966
      %v4067 = vpop.f32.mrf.mxu0
      %v4068 = vadd.f32 0.0, %v4067
      %v4069 = vpop.f32.mrf.mxu0
      %v4070 = vadd.f32 0.0, %v4069
      %4071 = vmatmul.bf16.gmra.mxu0 %v3967
      %v4072 = vpop.f32.mrf.mxu0
      %v4073 = vadd.f32 0.0, %v4072
      %v4074 = vpop.f32.mrf.mxu0
      %v4075 = vadd.f32 0.0, %v4074
      %4076 = vmatmul.bf16.gmra.mxu0 %v3968
      %v4077 = vpop.f32.mrf.mxu0
      %v4078 = vadd.f32 0.0, %v4077
      %v4079 = vpop.f32.mrf.mxu0
      %v4080 = vadd.f32 0.0, %v4079
      %4081 = vmatmul.bf16.gmra.mxu0 %v3969
      %v4082 = vpop.f32.mrf.mxu0
      %v4083 = vadd.f32 0.0, %v4082
      %v4084 = vpop.f32.mrf.mxu0
      %v4085 = vadd.f32 0.0, %v4084
      %4086 = vmatmul.bf16.gmra.mxu0 %v3970
      %v4087 = vpop.f32.mrf.mxu0
      %v4088 = vadd.f32 0.0, %v4087
      %v4089 = vpop.f32.mrf.mxu0
      %v4090 = vadd.f32 0.0, %v4089
      %4091 = vmatmul.bf16.gmra.mxu0 %v3971
      %v4092 = vpop.f32.mrf.mxu0
      %v4093 = vadd.f32 0.0, %v4092
      %v4094 = vpop.f32.mrf.mxu0
      %v4095 = vadd.f32 0.0, %v4094
      %4096 = vmatmul.bf16.gmra.mxu0 %v3972
      %v4097 = vpop.f32.mrf.mxu0
      %v4098 = vadd.f32 0.0, %v4097
      %v4099 = vpop.f32.mrf.mxu0
      %v4100 = vadd.f32 0.0, %v4099
      %4101 = vmatmul.bf16.gmra.mxu0 %v3973
      %v4102 = vpop.f32.mrf.mxu0
      %v4103 = vadd.f32 0.0, %v4102
      %v4104 = vpop.f32.mrf.mxu0
      %v4105 = vadd.f32 0.0, %v4104
      %4106 = vmatmul.bf16.gmra.mxu0 %v3974
      %v4107 = vpop.f32.mrf.mxu0
      %v4108 = vadd.f32 0.0, %v4107
      %v4109 = vpop.f32.mrf.mxu0
      %v4110 = vadd.f32 0.0, %v4109
      %4111 = vmatmul.bf16.gmra.mxu0 %v3975
      %v4112 = vpop.f32.mrf.mxu0
      %v4113 = vadd.f32 0.0, %v4112
      %v4114 = vpop.f32.mrf.mxu0
      %v4115 = vadd.f32 0.0, %v4114
      %4116 = vmatmul.bf16.gmra.mxu0 %v3976
      %v4117 = vpop.f32.mrf.mxu0
      %v4118 = vadd.f32 0.0, %v4117
      %v4119 = vpop.f32.mrf.mxu0
      %v4120 = vadd.f32 0.0, %v4119
      %4121 = vmatmul.bf16.gmra.mxu0 %v3977
      %v4122 = vpop.f32.mrf.mxu0
      %v4123 = vadd.f32 0.0, %v4122
      %v4124 = vpop.f32.mrf.mxu0
      %v4125 = vadd.f32 0.0, %v4124
      %4126 = vmatmul.bf16.gmra.mxu0 %v3978
      %v4127 = vpop.f32.mrf.mxu0
      %v4128 = vadd.f32 0.0, %v4127
      %v4129 = vpop.f32.mrf.mxu0
      %v4130 = vadd.f32 0.0, %v4129
      %4131 = vdwg.mxu0
      %v4132 = vadd.f32 %v3450, %v4053
      %v4133 = vadd.f32 %v3451, %v4055
      %v4134 = vadd.f32 %v3452, %v4058
      %v4135 = vadd.f32 %v3453, %v4060
      %v4136 = vadd.f32 %v3454, %v4063
      %v4137 = vadd.f32 %v3455, %v4065
      %v4138 = vadd.f32 %v3456, %v4068
      %v4139 = vadd.f32 %v3457, %v4070
      %v4140 = vadd.f32 %v3458, %v4073
      %v4141 = vadd.f32 %v3459, %v4075
      %v4142 = vadd.f32 %v3460, %v4078
      %v4143 = vadd.f32 %v3461, %v4080
      %v4144 = vadd.f32 %v3462, %v4083
      %v4145 = vadd.f32 %v3463, %v4085
      %v4146 = vadd.f32 %v3464, %v4088
      %v4147 = vadd.f32 %v3465, %v4090
      %v4148 = vadd.f32 %v3466, %v4093
      %v4149 = vadd.f32 %v3467, %v4095
      %v4150 = vadd.f32 %v3468, %v4098
      %v4151 = vadd.f32 %v3469, %v4100
      %v4152 = vadd.f32 %v3470, %v4103
      %v4153 = vadd.f32 %v3471, %v4105
      %v4154 = vadd.f32 %v3472, %v4108
      %v4155 = vadd.f32 %v3473, %v4110
      %v4156 = vadd.f32 %v3474, %v4113
      %v4157 = vadd.f32 %v3475, %v4115
      %v4158 = vadd.f32 %v3476, %v4118
      %v4159 = vadd.f32 %v3477, %v4120
      %v4160 = vadd.f32 %v3478, %v4123
      %v4161 = vadd.f32 %v3479, %v4125
      %v4162 = vadd.f32 %v3480, %v4128
      %v4163 = vadd.f32 %v3481, %v4130
      %v4164 = vld [vmem:[%s3167] sm:$0xe]
      %v4165 = vld [vmem:[%s3167 + $0xc] sm:$0xe]
      %v4166 = vld [vmem:[%s3167 + $0x18] sm:$0xe]
      %v4167 = vld [vmem:[%s3167 + $0x24] sm:$0xe]
      %v4168 = vld [vmem:[%s3167 + $0x30] sm:$0xe]
      %v4169 = vld [vmem:[%s3167 + $0x3c] sm:$0xe]
      %v4170 = vld [vmem:[%s3167 + $0x48] sm:$0xe]
      %v4171 = vld [vmem:[%s3167 + $0x54] sm:$0xe]
      %v4172 = vld [vmem:[%s3167 + $0x60] sm:$0xe]
      %v4173 = vld [vmem:[%s3167 + $0x6c] sm:$0xe]
      %v4174 = vld [vmem:[%s3167 + $0x78] sm:$0xe]
      %v4175 = vld [vmem:[%s3167 + $0x84] sm:$0xe]
      %v4176 = vld [vmem:[%s3167 + $0x90] sm:$0xe]
      %v4177 = vld [vmem:[%s3167 + $0x9c] sm:$0xe]
      %v4178 = vld [vmem:[%s3167 + $0xa8] sm:$0xe]
      %v4179 = vld [vmem:[%s3167 + $0xb4] sm:$0xe]
      %v4228 = vrot.slane %v4164, 5
      %v4229 = vrot.slane %v4228, 4
      %v4230 = vrot.slane %v3483, 5
      %v4231 = vsel %vm1381, %v4229, %v4230
      %v4232 = vrot.slane %v4230, 4
      %v4233 = vrot.slane %v3484, 5
      %v4234 = vsel %vm1381, %v4232, %v4233
      %v4235 = vrot.slane %v4165, 5
      %v4236 = vrot.slane %v4235, 4
      %v4237 = vrot.slane %v3486, 5
      %v4238 = vsel %vm1381, %v4236, %v4237
      %v4239 = vrot.slane %v4237, 4
      %v4240 = vrot.slane %v3487, 5
      %v4241 = vsel %vm1381, %v4239, %v4240
      %v4242 = vrot.slane %v4166, 5
      %v4243 = vrot.slane %v4242, 4
      %v4244 = vrot.slane %v3489, 5
      %v4245 = vsel %vm1381, %v4243, %v4244
      %v4246 = vrot.slane %v4244, 4
      %v4247 = vrot.slane %v3490, 5
      %v4248 = vsel %vm1381, %v4246, %v4247
      %v4249 = vrot.slane %v4167, 5
      %v4250 = vrot.slane %v4249, 4
      %v4251 = vrot.slane %v3492, 5
      %v4252 = vsel %vm1381, %v4250, %v4251
      %v4253 = vrot.slane %v4251, 4
      %v4254 = vrot.slane %v3493, 5
      %v4255 = vsel %vm1381, %v4253, %v4254
      %v4256 = vrot.slane %v4168, 5
      %v4257 = vrot.slane %v4256, 4
      %v4258 = vrot.slane %v3495, 5
      %v4259 = vsel %vm1381, %v4257, %v4258
      %v4260 = vrot.slane %v4258, 4
      %v4261 = vrot.slane %v3496, 5
      %v4262 = vsel %vm1381, %v4260, %v4261
      %v4263 = vrot.slane %v4169, 5
      %v4264 = vrot.slane %v4263, 4
      %v4265 = vrot.slane %v3498, 5
      %v4266 = vsel %vm1381, %v4264, %v4265
      %v4267 = vrot.slane %v4265, 4
      %v4268 = vrot.slane %v3499, 5
      %v4269 = vsel %vm1381, %v4267, %v4268
      %v4270 = vrot.slane %v4170, 5
      %v4271 = vrot.slane %v4270, 4
      %v4272 = vrot.slane %v3501, 5
      %v4273 = vsel %vm1381, %v4271, %v4272
      %v4274 = vrot.slane %v4272, 4
      %v4275 = vrot.slane %v3502, 5
      %v4276 = vsel %vm1381, %v4274, %v4275
      %v4277 = vrot.slane %v4171, 5
      %v4278 = vrot.slane %v4277, 4
      %v4279 = vrot.slane %v3504, 5
      %v4280 = vsel %vm1381, %v4278, %v4279
      %v4281 = vrot.slane %v4279, 4
      %v4282 = vrot.slane %v3505, 5
      %v4283 = vsel %vm1381, %v4281, %v4282
      %v4284 = vrot.slane %v4172, 5
      %v4285 = vrot.slane %v4284, 4
      %v4286 = vrot.slane %v3507, 5
      %v4287 = vsel %vm1381, %v4285, %v4286
      %v4288 = vrot.slane %v4286, 4
      %v4289 = vrot.slane %v3508, 5
      %v4290 = vsel %vm1381, %v4288, %v4289
      %v4291 = vrot.slane %v4173, 5
      %v4292 = vrot.slane %v4291, 4
      %v4293 = vrot.slane %v3510, 5
      %v4294 = vsel %vm1381, %v4292, %v4293
      %v4295 = vrot.slane %v4293, 4
      %v4296 = vrot.slane %v3511, 5
      %v4297 = vsel %vm1381, %v4295, %v4296
      %v4298 = vrot.slane %v4174, 5
      %v4299 = vrot.slane %v4298, 4
      %v4300 = vrot.slane %v3513, 5
      %v4301 = vsel %vm1381, %v4299, %v4300
      %v4302 = vrot.slane %v4300, 4
      %v4303 = vrot.slane %v3514, 5
      %v4304 = vsel %vm1381, %v4302, %v4303
      %v4305 = vrot.slane %v4175, 5
      %v4306 = vrot.slane %v4305, 4
      %v4307 = vrot.slane %v3516, 5
      %v4308 = vsel %vm1381, %v4306, %v4307
      %v4309 = vrot.slane %v4307, 4
      %v4310 = vrot.slane %v3517, 5
      %v4311 = vsel %vm1381, %v4309, %v4310
      %v4312 = vrot.slane %v4176, 5
      %v4313 = vrot.slane %v4312, 4
      %v4314 = vrot.slane %v3519, 5
      %v4315 = vsel %vm1381, %v4313, %v4314
      %v4316 = vrot.slane %v4314, 4
      %v4317 = vrot.slane %v3520, 5
      %v4318 = vsel %vm1381, %v4316, %v4317
      %v4319 = vrot.slane %v4177, 5
      %v4320 = vrot.slane %v4319, 4
      %v4321 = vrot.slane %v3522, 5
      %v4322 = vsel %vm1381, %v4320, %v4321
      %v4323 = vrot.slane %v4321, 4
      %v4324 = vrot.slane %v3523, 5
      %v4325 = vsel %vm1381, %v4323, %v4324
      %v4326 = vrot.slane %v4178, 5
      %v4327 = vrot.slane %v4326, 4
      %v4328 = vrot.slane %v3525, 5
      %v4329 = vsel %vm1381, %v4327, %v4328
      %v4330 = vrot.slane %v4328, 4
      %v4331 = vrot.slane %v3526, 5
      %v4332 = vsel %vm1381, %v4330, %v4331
      %v4333 = vrot.slane %v4179, 5
      %v4334 = vrot.slane %v4333, 4
      %v4335 = vrot.slane %v3528, 5
      %v4336 = vsel %vm1381, %v4334, %v4335
      %v4337 = vrot.slane %v4335, 4
      %v4338 = vrot.slane %v3529, 5
      %v4339 = vsel %vm1381, %v4337, %v4338
      %s4340 = scalar_lea.vmem %s2, 512
      %v4341 = vld [vmem:[%s4340] sm:$0xf]
      %v4342 = vld [vmem:[%s4340 + $0x4] sm:$0xf]
      %v4343 = vld [vmem:[%s4340 + $0x8] sm:$0xf]
      %v4344 = vld [vmem:[%s4340 + $0xc] sm:$0xf]
      %v4345 = vld [vmem:[%s4340 + $0x10] sm:$0xf]
      %v4346 = vld [vmem:[%s4340 + $0x14] sm:$0xf]
      %v4347 = vld [vmem:[%s4340 + $0x18] sm:$0xf]
      %v4348 = vld [vmem:[%s4340 + $0x1c] sm:$0xf]
      %v4349 = vld [vmem:[%s4340 + $0x20] sm:$0xf]
      %v4350 = vld [vmem:[%s4340 + $0x24] sm:$0xf]
      %v4351 = vld [vmem:[%s4340 + $0x28] sm:$0xf]
      %v4352 = vld [vmem:[%s4340 + $0x2c] sm:$0xf]
      %v4353 = vld [vmem:[%s4340 + $0x30] sm:$0xf]
      %v4354 = vld [vmem:[%s4340 + $0x34] sm:$0xf]
      %v4355 = vld [vmem:[%s4340 + $0x38] sm:$0xf]
      %v4356 = vld [vmem:[%s4340 + $0x3c] sm:$0xf]
      %v4357 = vunpack.c.l.b16 %v4231
      %v4358 = vunpack.c.l.b16 %v4234
      %v4359 = vunpack.c.l.b16 %v4238
      %v4360 = vunpack.c.l.b16 %v4241
      %v4361 = vunpack.c.l.b16 %v4245
      %v4362 = vunpack.c.l.b16 %v4248
      %v4363 = vunpack.c.l.b16 %v4252
      %v4364 = vunpack.c.l.b16 %v4255
      %v4365 = vunpack.c.l.b16 %v4259
      %v4366 = vunpack.c.l.b16 %v4262
      %v4367 = vunpack.c.l.b16 %v4266
      %v4368 = vunpack.c.l.b16 %v4269
      %v4369 = vunpack.c.l.b16 %v4273
      %v4370 = vunpack.c.l.b16 %v4276
      %v4371 = vunpack.c.l.b16 %v4280
      %v4372 = vunpack.c.l.b16 %v4283
      %v4373 = vunpack.c.l.b16 %v4287
      %v4374 = vunpack.c.l.b16 %v4290
      %v4375 = vunpack.c.l.b16 %v4294
      %v4376 = vunpack.c.l.b16 %v4297
      %v4377 = vunpack.c.l.b16 %v4301
      %v4378 = vunpack.c.l.b16 %v4304
      %v4379 = vunpack.c.l.b16 %v4308
      %v4380 = vunpack.c.l.b16 %v4311
      %v4381 = vunpack.c.l.b16 %v4315
      %v4382 = vunpack.c.l.b16 %v4318
      %v4383 = vunpack.c.l.b16 %v4322
      %v4384 = vunpack.c.l.b16 %v4325
      %v4385 = vunpack.c.l.b16 %v4329
      %v4386 = vunpack.c.l.b16 %v4332
      %v4387 = vunpack.c.l.b16 %v4336
      %v4388 = vunpack.c.l.b16 %v4339
      %v4389 = vpack.c.b16 %v4358, %v4357
      %v4390 = vpack.c.b16 %v4360, %v4359
      %v4391 = vpack.c.b16 %v4362, %v4361
      %v4392 = vpack.c.b16 %v4364, %v4363
      %v4393 = vpack.c.b16 %v4366, %v4365
      %v4394 = vpack.c.b16 %v4368, %v4367
      %v4395 = vpack.c.b16 %v4370, %v4369
      %v4396 = vpack.c.b16 %v4372, %v4371
      %v4397 = vpack.c.b16 %v4374, %v4373
      %v4398 = vpack.c.b16 %v4376, %v4375
      %v4399 = vpack.c.b16 %v4378, %v4377
      %v4400 = vpack.c.b16 %v4380, %v4379
      %v4401 = vpack.c.b16 %v4382, %v4381
      %v4402 = vpack.c.b16 %v4384, %v4383
      %v4403 = vpack.c.b16 %v4386, %v4385
      %v4404 = vpack.c.b16 %v4388, %v4387
      %v4437 = vunpack.c.l.b16 %v4341
      %v4438 = vunpack.c.l.b16 %v4342
      %v4439 = vunpack.c.l.b16 %v4343
      %v4440 = vunpack.c.l.b16 %v4344
      %v4441 = vunpack.c.l.b16 %v4345
      %v4442 = vunpack.c.l.b16 %v4346
      %v4443 = vunpack.c.l.b16 %v4347
      %v4444 = vunpack.c.l.b16 %v4348
      %v4445 = vunpack.c.l.b16 %v4349
      %v4446 = vunpack.c.l.b16 %v4350
      %v4447 = vunpack.c.l.b16 %v4351
      %v4448 = vunpack.c.l.b16 %v4352
      %v4449 = vunpack.c.l.b16 %v4353
      %v4450 = vunpack.c.l.b16 %v4354
      %v4451 = vunpack.c.l.b16 %v4355
      %v4452 = vunpack.c.l.b16 %v4356
      %v4453 = vpack.c.b16 %v4438, %v4437
      %v4454 = vpack.c.b16 %v4440, %v4439
      %v4455 = vpack.c.b16 %v4442, %v4441
      %v4456 = vpack.c.b16 %v4444, %v4443
      %v4457 = vpack.c.b16 %v4446, %v4445
      %v4458 = vpack.c.b16 %v4448, %v4447
      %v4459 = vpack.c.b16 %v4450, %v4449
      %v4460 = vpack.c.b16 %v4452, %v4451
      %4469 = vmatpush.bf16.msra.mxu0 %v4460
      %4470 = vmatpush.bf16.msra.mxu0 %v4459
      %4471 = vmatpush.bf16.msra.mxu0 %v4458
      %4472 = vmatpush.bf16.msra.mxu0 %v4457
      %4473 = vmatpush.bf16.msra.mxu0 %v4456
      %4474 = vmatpush.bf16.msra.mxu0 %v4455
      %4475 = vmatpush.bf16.msra.mxu0 %v4454
      %4476 = vmatpush.bf16.msra.mxu0 %v4453
      %4477 = vmatmul.bf16.gmra.mxu0 %v4389
      %v4478 = vpop.f32.mrf.mxu0
      %v4479 = vadd.f32 0.0, %v4478
      %v4480 = vpop.f32.mrf.mxu0
      %v4481 = vadd.f32 0.0, %v4480
      %4482 = vmatmul.bf16.gmra.mxu0 %v4390
      %v4483 = vpop.f32.mrf.mxu0
      %v4484 = vadd.f32 0.0, %v4483
      %v4485 = vpop.f32.mrf.mxu0
      %v4486 = vadd.f32 0.0, %v4485
      %4487 = vmatmul.bf16.gmra.mxu0 %v4391
      %v4488 = vpop.f32.mrf.mxu0
      %v4489 = vadd.f32 0.0, %v4488
      %v4490 = vpop.f32.mrf.mxu0
      %v4491 = vadd.f32 0.0, %v4490
      %4492 = vmatmul.bf16.gmra.mxu0 %v4392
      %v4493 = vpop.f32.mrf.mxu0
      %v4494 = vadd.f32 0.0, %v4493
      %v4495 = vpop.f32.mrf.mxu0
      %v4496 = vadd.f32 0.0, %v4495
      %4497 = vmatmul.bf16.gmra.mxu0 %v4393
      %v4498 = vpop.f32.mrf.mxu0
      %v4499 = vadd.f32 0.0, %v4498
      %v4500 = vpop.f32.mrf.mxu0
      %v4501 = vadd.f32 0.0, %v4500
      %4502 = vmatmul.bf16.gmra.mxu0 %v4394
      %v4503 = vpop.f32.mrf.mxu0
      %v4504 = vadd.f32 0.0, %v4503
      %v4505 = vpop.f32.mrf.mxu0
      %v4506 = vadd.f32 0.0, %v4505
      %4507 = vmatmul.bf16.gmra.mxu0 %v4395
      %v4508 = vpop.f32.mrf.mxu0
      %v4509 = vadd.f32 0.0, %v4508
      %v4510 = vpop.f32.mrf.mxu0
      %v4511 = vadd.f32 0.0, %v4510
      %4512 = vmatmul.bf16.gmra.mxu0 %v4396
      %v4513 = vpop.f32.mrf.mxu0
      %v4514 = vadd.f32 0.0, %v4513
      %v4515 = vpop.f32.mrf.mxu0
      %v4516 = vadd.f32 0.0, %v4515
      %4517 = vmatmul.bf16.gmra.mxu0 %v4397
      %v4518 = vpop.f32.mrf.mxu0
      %v4519 = vadd.f32 0.0, %v4518
      %v4520 = vpop.f32.mrf.mxu0
      %v4521 = vadd.f32 0.0, %v4520
      %4522 = vmatmul.bf16.gmra.mxu0 %v4398
      %v4523 = vpop.f32.mrf.mxu0
      %v4524 = vadd.f32 0.0, %v4523
      %v4525 = vpop.f32.mrf.mxu0
      %v4526 = vadd.f32 0.0, %v4525
      %4527 = vmatmul.bf16.gmra.mxu0 %v4399
      %v4528 = vpop.f32.mrf.mxu0
      %v4529 = vadd.f32 0.0, %v4528
      %v4530 = vpop.f32.mrf.mxu0
      %v4531 = vadd.f32 0.0, %v4530
      %4532 = vmatmul.bf16.gmra.mxu0 %v4400
      %v4533 = vpop.f32.mrf.mxu0
      %v4534 = vadd.f32 0.0, %v4533
      %v4535 = vpop.f32.mrf.mxu0
      %v4536 = vadd.f32 0.0, %v4535
      %4537 = vmatmul.bf16.gmra.mxu0 %v4401
      %v4538 = vpop.f32.mrf.mxu0
      %v4539 = vadd.f32 0.0, %v4538
      %v4540 = vpop.f32.mrf.mxu0
      %v4541 = vadd.f32 0.0, %v4540
      %4542 = vmatmul.bf16.gmra.mxu0 %v4402
      %v4543 = vpop.f32.mrf.mxu0
      %v4544 = vadd.f32 0.0, %v4543
      %v4545 = vpop.f32.mrf.mxu0
      %v4546 = vadd.f32 0.0, %v4545
      %4547 = vmatmul.bf16.gmra.mxu0 %v4403
      %v4548 = vpop.f32.mrf.mxu0
      %v4549 = vadd.f32 0.0, %v4548
      %v4550 = vpop.f32.mrf.mxu0
      %v4551 = vadd.f32 0.0, %v4550
      %4552 = vmatmul.bf16.gmra.mxu0 %v4404
      %v4553 = vpop.f32.mrf.mxu0
      %v4554 = vadd.f32 0.0, %v4553
      %v4555 = vpop.f32.mrf.mxu0
      %v4556 = vadd.f32 0.0, %v4555
      %4557 = vdwg.mxu0
      %v4558 = vadd.f32 %v4132, %v4479
      %v4559 = vadd.f32 %v4133, %v4481
      %v4560 = vadd.f32 %v4134, %v4484
      %v4561 = vadd.f32 %v4135, %v4486
      %v4562 = vadd.f32 %v4136, %v4489
      %v4563 = vadd.f32 %v4137, %v4491
      %v4564 = vadd.f32 %v4138, %v4494
      %v4565 = vadd.f32 %v4139, %v4496
      %v4566 = vadd.f32 %v4140, %v4499
      %v4567 = vadd.f32 %v4141, %v4501
      %v4568 = vadd.f32 %v4142, %v4504
      %v4569 = vadd.f32 %v4143, %v4506
      %v4570 = vadd.f32 %v4144, %v4509
      %v4571 = vadd.f32 %v4145, %v4511
      %v4572 = vadd.f32 %v4146, %v4514
      %v4573 = vadd.f32 %v4147, %v4516
      %v4574 = vadd.f32 %v4148, %v4519
      %v4575 = vadd.f32 %v4149, %v4521
      %v4576 = vadd.f32 %v4150, %v4524
      %v4577 = vadd.f32 %v4151, %v4526
      %v4578 = vadd.f32 %v4152, %v4529
      %v4579 = vadd.f32 %v4153, %v4531
      %v4580 = vadd.f32 %v4154, %v4534
      %v4581 = vadd.f32 %v4155, %v4536
      %v4582 = vadd.f32 %v4156, %v4539
      %v4583 = vadd.f32 %v4157, %v4541
      %v4584 = vadd.f32 %v4158, %v4544
      %v4585 = vadd.f32 %v4159, %v4546
      %v4586 = vadd.f32 %v4160, %v4549
      %v4587 = vadd.f32 %v4161, %v4551
      %v4588 = vadd.f32 %v4162, %v4554
      %v4589 = vadd.f32 %v4163, %v4556
      %v4590 = vld [vmem:[%s3] sm:$0x1]
      %v4592 = vperm.slane %v4590, 0
      %v4594 = vadd.f32 %v4558, %v4592
      %v4595 = vadd.f32 %v4559, %v4592
      %v4596 = vadd.f32 %v4560, %v4592
      %v4597 = vadd.f32 %v4561, %v4592
      %v4598 = vadd.f32 %v4562, %v4592
      %v4599 = vadd.f32 %v4563, %v4592
      %v4600 = vadd.f32 %v4564, %v4592
      %v4601 = vadd.f32 %v4565, %v4592
      %v4602 = vadd.f32 %v4566, %v4592
      %v4603 = vadd.f32 %v4567, %v4592
      %v4604 = vadd.f32 %v4568, %v4592
      %v4605 = vadd.f32 %v4569, %v4592
      %v4606 = vadd.f32 %v4570, %v4592
      %v4607 = vadd.f32 %v4571, %v4592
      %v4608 = vadd.f32 %v4572, %v4592
      %v4609 = vadd.f32 %v4573, %v4592
      %v4610 = vadd.f32 %v4574, %v4592
      %v4611 = vadd.f32 %v4575, %v4592
      %v4612 = vadd.f32 %v4576, %v4592
      %v4613 = vadd.f32 %v4577, %v4592
      %v4614 = vadd.f32 %v4578, %v4592
      %v4615 = vadd.f32 %v4579, %v4592
      %v4616 = vadd.f32 %v4580, %v4592
      %v4617 = vadd.f32 %v4581, %v4592
      %v4618 = vadd.f32 %v4582, %v4592
      %v4619 = vadd.f32 %v4583, %v4592
      %v4620 = vadd.f32 %v4584, %v4592
      %v4621 = vadd.f32 %v4585, %v4592
      %v4622 = vadd.f32 %v4586, %v4592
      %v4623 = vadd.f32 %v4587, %v4592
      %v4624 = vadd.f32 %v4588, %v4592
      %v4625 = vadd.f32 %v4589, %v4592
      %v4626 = vmax.f32 %v4594, 0.0
      %v4627 = vmax.f32 %v4595, 0.0
      %v4628 = vmax.f32 %v4596, 0.0
      %v4629 = vmax.f32 %v4597, 0.0
      %v4630 = vmax.f32 %v4598, 0.0
      %v4631 = vmax.f32 %v4599, 0.0
      %v4632 = vmax.f32 %v4600, 0.0
      %v4633 = vmax.f32 %v4601, 0.0
      %v4634 = vmax.f32 %v4602, 0.0
      %v4635 = vmax.f32 %v4603, 0.0
      %v4636 = vmax.f32 %v4604, 0.0
      %v4637 = vmax.f32 %v4605, 0.0
      %v4638 = vmax.f32 %v4606, 0.0
      %v4639 = vmax.f32 %v4607, 0.0
      %v4640 = vmax.f32 %v4608, 0.0
      %v4641 = vmax.f32 %v4609, 0.0
      %v4642 = vmax.f32 %v4610, 0.0
      %v4643 = vmax.f32 %v4611, 0.0
      %v4644 = vmax.f32 %v4612, 0.0
      %v4645 = vmax.f32 %v4613, 0.0
      %v4646 = vmax.f32 %v4614, 0.0
      %v4647 = vmax.f32 %v4615, 0.0
      %v4648 = vmax.f32 %v4616, 0.0
      %v4649 = vmax.f32 %v4617, 0.0
      %v4650 = vmax.f32 %v4618, 0.0
      %v4651 = vmax.f32 %v4619, 0.0
      %v4652 = vmax.f32 %v4620, 0.0
      %v4653 = vmax.f32 %v4621, 0.0
      %v4654 = vmax.f32 %v4622, 0.0
      %v4655 = vmax.f32 %v4623, 0.0
      %v4656 = vmax.f32 %v4624, 0.0
      %v4657 = vmax.f32 %v4625, 0.0
      %v4658 = vpack.c.bf16 %v4626, %v4626
      %v4659 = vpack.c.bf16 %v4627, %v4627
      %v4660 = vpack.c.bf16 %v4628, %v4628
      %v4661 = vpack.c.bf16 %v4629, %v4629
      %v4662 = vpack.c.bf16 %v4630, %v4630
      %v4663 = vpack.c.bf16 %v4631, %v4631
      %v4664 = vpack.c.bf16 %v4632, %v4632
      %v4665 = vpack.c.bf16 %v4633, %v4633
      %v4666 = vpack.c.bf16 %v4634, %v4634
      %v4667 = vpack.c.bf16 %v4635, %v4635
      %v4668 = vpack.c.bf16 %v4636, %v4636
      %v4669 = vpack.c.bf16 %v4637, %v4637
      %v4670 = vpack.c.bf16 %v4638, %v4638
      %v4671 = vpack.c.bf16 %v4639, %v4639
      %v4672 = vpack.c.bf16 %v4640, %v4640
      %v4673 = vpack.c.bf16 %v4641, %v4641
      %v4674 = vpack.c.bf16 %v4642, %v4642
      %v4675 = vpack.c.bf16 %v4643, %v4643
      %v4676 = vpack.c.bf16 %v4644, %v4644
      %v4677 = vpack.c.bf16 %v4645, %v4645
      %v4678 = vpack.c.bf16 %v4646, %v4646
      %v4679 = vpack.c.bf16 %v4647, %v4647
      %v4680 = vpack.c.bf16 %v4648, %v4648
      %v4681 = vpack.c.bf16 %v4649, %v4649
      %v4682 = vpack.c.bf16 %v4650, %v4650
      %v4683 = vpack.c.bf16 %v4651, %v4651
      %v4684 = vpack.c.bf16 %v4652, %v4652
      %v4685 = vpack.c.bf16 %v4653, %v4653
      %v4686 = vpack.c.bf16 %v4654, %v4654
      %v4687 = vpack.c.bf16 %v4655, %v4655
      %v4688 = vpack.c.bf16 %v4656, %v4656
      %v4689 = vpack.c.bf16 %v4657, %v4657
      %4690 = vst [vmem:[%s318] sm:$0xf] %v4658
      %4691 = vst [vmem:[%s318 + $0x4] sm:$0xf] %v4659
      %4692 = vst [vmem:[%s318 + $0x8] sm:$0xf] %v4660
      %4693 = vst [vmem:[%s318 + $0xc] sm:$0xf] %v4661
      %4694 = vst [vmem:[%s318 + $0x10] sm:$0xf] %v4662
      %4695 = vst [vmem:[%s318 + $0x14] sm:$0xf] %v4663
      %4696 = vst [vmem:[%s318 + $0x18] sm:$0xf] %v4664
      %4697 = vst [vmem:[%s318 + $0x1c] sm:$0xf] %v4665
      %4698 = vst [vmem:[%s318 + $0x20] sm:$0xf] %v4666
      %4699 = vst [vmem:[%s318 + $0x24] sm:$0xf] %v4667
      %4700 = vst [vmem:[%s318 + $0x28] sm:$0xf] %v4668
      %4701 = vst [vmem:[%s318 + $0x2c] sm:$0xf] %v4669
      %4702 = vst [vmem:[%s318 + $0x30] sm:$0xf] %v4670
      %4703 = vst [vmem:[%s318 + $0x34] sm:$0xf] %v4671
      %4704 = vst [vmem:[%s318 + $0x38] sm:$0xf] %v4672
      %4705 = vst [vmem:[%s318 + $0x3c] sm:$0xf] %v4673
      %4706 = vst [vmem:[%s318 + $0x40] sm:$0xf] %v4674
      %4707 = vst [vmem:[%s318 + $0x44] sm:$0xf] %v4675
      %4708 = vst [vmem:[%s318 + $0x48] sm:$0xf] %v4676
      %4709 = vst [vmem:[%s318 + $0x4c] sm:$0xf] %v4677
      %4710 = vst [vmem:[%s318 + $0x50] sm:$0xf] %v4678
      %4711 = vst [vmem:[%s318 + $0x54] sm:$0xf] %v4679
      %4712 = vst [vmem:[%s318 + $0x58] sm:$0xf] %v4680
      %4713 = vst [vmem:[%s318 + $0x5c] sm:$0xf] %v4681
      %4714 = vst [vmem:[%s318 + $0x60] sm:$0xf] %v4682
      %4715 = vst [vmem:[%s318 + $0x64] sm:$0xf] %v4683
      %4716 = vst [vmem:[%s318 + $0x68] sm:$0xf] %v4684
      %4717 = vst [vmem:[%s318 + $0x6c] sm:$0xf] %v4685
      %4718 = vst [vmem:[%s318 + $0x70] sm:$0xf] %v4686
      %4719 = vst [vmem:[%s318 + $0x74] sm:$0xf] %v4687
      %4720 = vst [vmem:[%s318 + $0x78] sm:$0xf] %v4688
      %4721 = vst [vmem:[%s318 + $0x7c] sm:$0xf] %v4689
      %s4722 = smul.u32 16, %s20
      %p4723 = scmp.lt.s32.totalorder %s19, 1
      %s4724 = scalar_select %p4723, %s19, 1
      %p4725 = scmp.lt.s32.totalorder %s4722, 15
      %s4726 = scalar_select %p4725, %s4722, 15
      %s4727 = smul.addr %s4726, 2
      %s4728 = smul.addr %s4724, 32
      %s4729 = sadd.s32 %s4727, %s4728
      %s4730 = smul.addr %s4729, 4
      %s4731 = scalar_lea.vmem %s4, %s4730
      // Predicated region
      $region37: #{upconvd_forward.7} parent=35 // pred_check
        %p4732 = pneg %p149
      $region38: #{upconvd_forward.7} parent=35 // pred_check_branch
        %4734 = sbr.rel (%p4732) target = $region40
      $region39: #{upconvd_forward.7} parent=35 // pred_region
        %s4735 = smul.u32 16, %s20
      $region40: #{upconvd_forward.7} parent=35 // pred_fallthru
        _
    $region36: #{upconvd_forward.7} parent=5 // pred_fallthru
      _
    %p4736 = scmp.le.s32.totalorder 2, %s10
    // Predicated region
    $region41: #{upconvd_forward.7} parent=5 // pred_check
      %p4737 = pneg %p4736
    $region42: #{upconvd_forward.7} parent=5 // pred_check_branch
      %4739 = sbr.rel (%p4737) target = $region44
    $region43: #{upconvd_forward.7} parent=5 // pred_region
      %s4740 = ssub.s32 %s10, 2
      // Predicated region
      $region45: #{upconvd_forward.7} parent=43 // pred_check
        %p4741 = pneg %p155
      $region46: #{upconvd_forward.7} parent=43 // pred_check_branch
        %4743 = sbr.rel (%p4741) target = $region48
      $region47: #{upconvd_forward.7} parent=43 // pred_region
        %s4744 = smul.u32 16, %s22
        %p4745 = scmp.lt.s32.totalorder %s21, 1
        %s4746 = scalar_select %p4745, %s21, 1
        %p4747 = scmp.lt.s32.totalorder %s4744, 15
        %s4748 = scalar_select %p4747, %s4744, 15
        %s4749 = smul.addr %s4748, 2
        %s4750 = smul.addr %s4746, 32
        %s4751 = sadd.s32 %s4749, %s4750
        %s4752 = smul.addr %s4751, 4
        %s4753 = scalar_lea.vmem %s4, %s4752
      $region48: #{upconvd_forward.7} parent=43 // pred_fallthru
        _
    $region44: #{upconvd_forward.7} parent=5 // pred_fallthru
      _
  $region6: #{upconvd_forward.7} parent=0 // loop_footer
    %s14 = sadd.s32 1, %s10
  $region7: #{upconvd_forward.7} parent=0 // loop_footer_branch
    %9 = sbr.rel target = $region3
  $region8: #{upconvd_forward.7} parent=0 // loop_exit
    _

// kernel: upconvd_forward.8
$region0: #{upconvd_forward.8}
  #allocation0 [shape = 'u32[]', space=smem, size = 0x4, offset = 0x4, fixed_abs, tag = 'smem constant byte address 0x4 - core index']
  #allocation1 [shape = 'u32[72,128]{1,0:T(1,128)}', space=vmem, size = 0x9000, scoped, tag = 'internal scratch']
  #allocation2 [shape = 'bf16[18,18,128]{2,1,0:T(8,128)(2,1)}', space=vmem, size = 0x1b000, scoped, tag = 'scratch operand']
  %s0 = inlined_call_operand.vmem [shape: bf16[2,18,18,128], index: 0, kind: input, shape index: {}, may-alias: {0,1}]
  %s1 = inlined_call_operand.vmem [shape: bf16[2,18,18,128], index: 1, kind: input, shape index: {}, may-alias: {0,1}]
  %s2 = inlined_call_operand.vmem [shape: bf16[9,128,128], index: 2, kind: input, shape index: {}]
  %s3 = inlined_call_operand.vmem [shape: f32[1,128], index: 3, kind: input, shape index: {}]
  %s4 = inlined_call_operand.vmem [shape: f32[2,16,16,128], index: 4, kind: output, shape index: {0}]
  %s5 = inlined_call_operand.vmem [shape: f32[2,2,128], index: 5, kind: output, shape index: {1}]
  %6 = xla_tuple %s4, %s5
  %s7 = sld [smem:[#allocation0]]
  $region57: #{upconvd_forward.8} parent=0
    _
  %s9 = ssub.s32 1, %s7
  %s10 = scalar_select 0, %s9, %s7
  loop: start=0, step=1, limit=4
  $region2: #{upconvd_forward.8} parent=0 // loop_pre_header
    _
  $region3: #{upconvd_forward.8} parent=0 // loop_header
    %s12 = sphi 0, %s16
    %p13 = scmp.ge.s32.totalorder %s12, 4
    %s19 = sphi 0, %s31
    %s20 = sphi 0, %s27
    %s21 = sphi 0, %s19
    %s22 = sphi 0, %s20
    %s23 = sphi 0, %s21
    %s24 = sphi 0, %s22
    %s36 = sphi 0, %s38
    %s39 = sphi 0, %s36
    %s40 = sphi 0, %s39
    %s56 = sphi 0, %s40
    %s68 = sphi 0, %s70
    %s71 = sphi 0, %s68
    %s72 = sphi 0, %s71
    %s88 = sphi 0, %s72
    %s92 = sphi 0, %s92
    %s94 = sphi 0, %s92
    %s95 = sphi 0, %s94
    %s109 = sphi 0, %s95
    %s113 = sphi 0, %s113
    %s115 = sphi 0, %s113
    %s116 = sphi 0, %s115
    %s130 = sphi 0, %s116
    %s138 = sphi 0, %s140
    %s141 = sphi 0, %s138
    %s142 = sphi 0, %s141
    %s158 = sphi 0, %s142
    %s166 = sphi 0, %s168
    %s169 = sphi 0, %s166
    %s170 = sphi 0, %s169
    %s186 = sphi 0, %s170
  $region4: #{upconvd_forward.8} parent=0 // loop_header_branch
    %15 = sbr.rel (%p13) target = $region8
  $region5: #{upconvd_forward.8} parent=0 // loop_body
    %s17 = ssub.s32 %s12, 1
    %s18 = ssub.s32 %s12, 2
    %s25 = sadd.s32 1, %s20
    %p26 = scmp.ge.s32.totalorder %s25, 1
    %s27 = scalar_select %p26, 0, %s25
    %s28 = sadd.s32 1, %s19
    %s29 = scalar_select %p26, %s28, %s19
    %p30 = scmp.ge.s32.totalorder %s29, 2
    %s31 = scalar_select %p30, 0, %s29
    %s32 = ssub.s32 %s19, %s31
    %s33 = ssub.s32 %s20, %s27
    %s34 = sor.u32 %s32, %s33
    %p35 = scmp.eq.s32.totalorder %s34, 0
    %s37 = sadd.s32 %s36, 1
    %s38 = scalar_select %p35, %s36, %s37
    %p41 = pneg %p35
    %p42 = scmp.eq.s32.totalorder %s12, 1
    %p43 = por %p41, %p42
    %p44 = scmp.ne.s32.totalorder %s36, %s39
    %p45 = scmp.eq.s32.totalorder %s12, 0
    %p46 = por %p44, %p45
    %p47 = scmp.ne.s32.totalorder %s36, %s39
    %p48 = scmp.eq.s32.totalorder %s17, 1
    %p49 = por %p47, %p48
    %p50 = scmp.ne.s32.totalorder %s39, %s40
    %p51 = scmp.eq.s32.totalorder %s17, 0
    %p52 = por %p50, %p51
    %p53 = scmp.ne.s32.totalorder %s39, %s40
    %p54 = scmp.eq.s32.totalorder %s18, 1
    %p55 = por %p53, %p54
    %p57 = scmp.ne.s32.totalorder %s40, %s56
    %p58 = scmp.eq.s32.totalorder %s18, 0
    %p59 = por %p57, %p58
    %s60 = sadd.s32 %s20, 1
    %s61 = smul.u32 %s60, 8
    %s62 = sadd.s32 %s27, 1
    %s63 = smul.u32 %s62, 8
    %s64 = ssub.s32 %s19, %s31
    %s65 = ssub.s32 %s61, %s63
    %s66 = sor.u32 %s64, %s65
    %p67 = scmp.eq.s32.totalorder %s66, 0
    %s69 = sadd.s32 %s68, 1
    %s70 = scalar_select %p67, %s68, %s69
    %p73 = pneg %p67
    %p74 = scmp.eq.s32.totalorder %s12, 1
    %p75 = por %p73, %p74
    %p76 = scmp.ne.s32.totalorder %s68, %s71
    %p77 = scmp.eq.s32.totalorder %s12, 0
    %p78 = por %p76, %p77
    %p79 = scmp.ne.s32.totalorder %s68, %s71
    %p80 = scmp.eq.s32.totalorder %s17, 1
    %p81 = por %p79, %p80
    %p82 = scmp.ne.s32.totalorder %s71, %s72
    %p83 = scmp.eq.s32.totalorder %s17, 0
    %p84 = por %p82, %p83
    %p85 = scmp.ne.s32.totalorder %s71, %s72
    %p86 = scmp.eq.s32.totalorder %s18, 1
    %p87 = por %p85, %p86
    %p89 = scmp.ne.s32.totalorder %s72, %s88
    %p90 = scmp.eq.s32.totalorder %s18, 0
    %p91 = por %p89, %p90
    %s93 = sadd.s32 %s92, 1
    %p96 = scmp.eq.s32.totalorder %s12, 1
    %p97 = scmp.ne.s32.totalorder %s92, %s94
    %p98 = scmp.eq.s32.totalorder %s12, 0
    %p99 = por %p97, %p98
    %p100 = scmp.ne.s32.totalorder %s92, %s94
    %p101 = scmp.eq.s32.totalorder %s17, 1
    %p102 = por %p100, %p101
    %p103 = scmp.ne.s32.totalorder %s94, %s95
    %p104 = scmp.eq.s32.totalorder %s17, 0
    %p105 = por %p103, %p104
    %p106 = scmp.ne.s32.totalorder %s94, %s95
    %p107 = scmp.eq.s32.totalorder %s18, 1
    %p108 = por %p106, %p107
    %p110 = scmp.ne.s32.totalorder %s95, %s109
    %p111 = scmp.eq.s32.totalorder %s18, 0
    %p112 = por %p110, %p111
    %s114 = sadd.s32 %s113, 1
    %p117 = scmp.eq.s32.totalorder %s12, 1
    %p118 = scmp.ne.s32.totalorder %s113, %s115
    %p119 = scmp.eq.s32.totalorder %s12, 0
    %p120 = por %p118, %p119
    %p121 = scmp.ne.s32.totalorder %s113, %s115
    %p122 = scmp.eq.s32.totalorder %s17, 1
    %p123 = por %p121, %p122
    %p124 = scmp.ne.s32.totalorder %s115, %s116
    %p125 = scmp.eq.s32.totalorder %s17, 0
    %p126 = por %p124, %p125
    %p127 = scmp.ne.s32.totalorder %s115, %s116
    %p128 = scmp.eq.s32.totalorder %s18, 1
    %p129 = por %p127, %p128
    %p131 = scmp.ne.s32.totalorder %s116, %s130
    %p132 = scmp.eq.s32.totalorder %s18, 0
    %p133 = por %p131, %p132
    %s134 = ssub.s32 %s19, %s31
    %s135 = ssub.s32 %s20, %s27
    %s136 = sor.u32 %s134, %s135
    %p137 = scmp.eq.s32.totalorder %s136, 0
    %s139 = sadd.s32 %s138, 1
    %s140 = scalar_select %p137, %s138, %s139
    %p143 = pneg %p137
    %p144 = scmp.eq.s32.totalorder %s12, 1
    %p145 = por %p143, %p144
    %p146 = scmp.ne.s32.totalorder %s138, %s141
    %p147 = scmp.eq.s32.totalorder %s12, 0
    %p148 = por %p146, %p147
    %p149 = scmp.ne.s32.totalorder %s138, %s141
    %p150 = scmp.eq.s32.totalorder %s17, 1
    %p151 = por %p149, %p150
    %p152 = scmp.ne.s32.totalorder %s141, %s142
    %p153 = scmp.eq.s32.totalorder %s17, 0
    %p154 = por %p152, %p153
    %p155 = scmp.ne.s32.totalorder %s141, %s142
    %p156 = scmp.eq.s32.totalorder %s18, 1
    %p157 = por %p155, %p156
    %p159 = scmp.ne.s32.totalorder %s142, %s158
    %p160 = scmp.eq.s32.totalorder %s18, 0
    %p161 = por %p159, %p160
    %s162 = sadd.s32 %s19, %s20
    %s163 = sadd.s32 %s31, %s27
    %s164 = ssub.s32 %s162, %s163
    %p165 = scmp.eq.s32.totalorder %s164, 0
    %s167 = sadd.s32 %s166, 1
    %s168 = scalar_select %p165, %s166, %s167
    %p171 = pneg %p165
    %p172 = scmp.eq.s32.totalorder %s12, 1
    %p173 = por %p171, %p172
    %p174 = scmp.ne.s32.totalorder %s166, %s169
    %p175 = scmp.eq.s32.totalorder %s12, 0
    %p176 = por %p174, %p175
    %p177 = scmp.ne.s32.totalorder %s166, %s169
    %p178 = scmp.eq.s32.totalorder %s17, 1
    %p179 = por %p177, %p178
    %p180 = scmp.ne.s32.totalorder %s169, %s170
    %p181 = scmp.eq.s32.totalorder %s17, 0
    %p182 = por %p180, %p181
    %p183 = scmp.ne.s32.totalorder %s169, %s170
    %p184 = scmp.eq.s32.totalorder %s18, 1
    %p185 = por %p183, %p184
    %p187 = scmp.ne.s32.totalorder %s170, %s186
    %p188 = scmp.eq.s32.totalorder %s18, 0
    %p189 = por %p187, %p188
    %p190 = scmp.le.s32.totalorder 1, %s12
    %p191 = scmp.lt.s32.totalorder %s12, 3
    %p192 = pnand %p190, %p191
    %p193 = pneg %p192
    // Predicated region
    $region9: #{upconvd_forward.8} parent=5 // pred_check
      _
    $region10: #{upconvd_forward.8} parent=5 // pred_check_branch
      %195 = sbr.rel (%p192) target = $region12
    $region11: #{upconvd_forward.8} parent=5 // pred_region
      %s196 = ssub.s32 %s12, 1
      // Predicated region
      $region13: #{upconvd_forward.8} parent=11 // pred_check
        %p197 = pneg %p105
      $region14: #{upconvd_forward.8} parent=11 // pred_check_branch
        %199 = sbr.rel (%p197) target = $region16
      $region15: #{upconvd_forward.8} parent=11 // pred_region
        _
      $region16: #{upconvd_forward.8} parent=11 // pred_fallthru
        _
      // Predicated region
      $region17: #{upconvd_forward.8} parent=11 // pred_check
        %p200 = pneg %p126
      $region18: #{upconvd_forward.8} parent=11 // pred_check_branch
        %202 = sbr.rel (%p200) target = $region20
      $region19: #{upconvd_forward.8} parent=11 // pred_region
        _
      $region20: #{upconvd_forward.8} parent=11 // pred_fallthru
        _
    $region12: #{upconvd_forward.8} parent=5 // pred_fallthru
      _
    %p203 = scmp.lt.s32.totalorder %s12, 2
    // Predicated region
    $region21: #{upconvd_forward.8} parent=5 // pred_check
      %p204 = pneg %p203
    $region22: #{upconvd_forward.8} parent=5 // pred_check_branch
      %206 = sbr.rel (%p204) target = $region24
    $region23: #{upconvd_forward.8} parent=5 // pred_region
      // Predicated region
      $region25: #{upconvd_forward.8} parent=23 // pred_check
        %p207 = pneg %p46
      $region26: #{upconvd_forward.8} parent=23 // pred_check_branch
        %209 = sbr.rel (%p207) target = $region28
      $region27: #{upconvd_forward.8} parent=23 // pred_region
        %s210 = smul.u32 16, %s20
        %s211 = ssub.s32 18, %s210
        %p212 = scmp.lt.s32.totalorder %s211, 16
        %s213 = scalar_select %p212, %s211, 16
        %s214 = smul.u32 4, %s213
        %s215 = smul.u32 %s214, 3
        %p216 = scmp.lt.s32.totalorder %s19, 1
        %s217 = scalar_select %p216, %s19, 1
        %p218 = scmp.lt.s32.totalorder %s210, 17
        %s219 = scalar_select %p218, %s210, 17
        %s220 = smul.addr %s219, 3
        %s221 = smul.addr %s217, 54
        %s222 = sadd.s32 %s220, %s221
        %s223 = smul.addr %s222, 4
        %s224 = scalar_lea.vmem %s0, %s223
        %s225 = smul.u32 16, %s20
        %s226 = ssub.s32 18, %s225
        %p227 = scmp.lt.s32.totalorder %s226, 16
        %s228 = scalar_select %p227, %s226, 16
        %s229 = smul.u32 4, %s228
        %s230 = smul.u32 %s229, 3
      $region28: #{upconvd_forward.8} parent=23 // pred_fallthru
        _
      // Predicated region
      $region29: #{upconvd_forward.8} parent=23 // pred_check
        %p231 = pneg %p78
      $region30: #{upconvd_forward.8} parent=23 // pred_check_branch
        %233 = sbr.rel (%p231) target = $region32
      $region31: #{upconvd_forward.8} parent=23 // pred_region
        %s234 = sadd.s32 %s20, 1
        %s235 = smul.u32 %s234, 8
        %s236 = smul.u32 2, %s235
        %p237 = scmp.lt.s32.totalorder %s19, 1
        %s238 = scalar_select %p237, %s19, 1
        %p239 = scmp.lt.s32.totalorder %s236, 17
        %s240 = scalar_select %p239, %s236, 17
        %s241 = smul.addr %s240, 3
        %s242 = smul.addr %s238, 54
        %s243 = sadd.s32 %s241, %s242
        %s244 = smul.addr %s243, 4
        %s245 = scalar_lea.vmem %s1, %s244
        %s246 = sadd.s32 %s20, 1
        %s247 = smul.u32 %s246, 8
        %s248 = smul.u32 2, %s247
      $region32: #{upconvd_forward.8} parent=23 // pred_fallthru
        _
    $region24: #{upconvd_forward.8} parent=5 // pred_fallthru
      _
    %p249 = scmp.le.s32.totalorder 1, %s12
    %p250 = scmp.lt.s32.totalorder %s12, 3
    %p251 = pnand %p249, %p250
    %p252 = pneg %p251
    // Predicated region
    $region33: #{upconvd_forward.8} parent=5 // pred_check
      _
    $region34: #{upconvd_forward.8} parent=5 // pred_check_branch
      %254 = sbr.rel (%p251) target = $region36
    $region35: #{upconvd_forward.8} parent=5 // pred_region
      %s255 = ssub.s32 %s12, 1
      %s256 = smul.u32 16, %s22
      %s257 = ssub.s32 18, %s256
      %p258 = scmp.lt.s32.totalorder %s257, 16
      %s259 = scalar_select %p258, %s257, 16
      %s260 = smul.u32 4, %s259
      %s261 = smul.u32 %s260, 3
      %p262 = scmp.lt.s32.totalorder %s21, 1
      %s263 = scalar_select %p262, %s21, 1
      %p264 = scmp.lt.s32.totalorder %s256, 17
      %s265 = scalar_select %p264, %s256, 17
      %s266 = smul.addr %s265, 3
      %s267 = smul.addr %s263, 54
      %s268 = sadd.s32 %s266, %s267
      %s269 = smul.addr %s268, 4
      %s270 = scalar_lea.vmem %s0, %s269
      %p271 = pneg %p52
      %p272 = pneg %p49
      %s273 = sadd.s32 %s22, 1
      %s274 = smul.u32 %s273, 8
      %s275 = smul.u32 2, %s274
      %p276 = scmp.lt.s32.totalorder %s21, 1
      %s277 = scalar_select %p276, %s21, 1
      %p278 = scmp.lt.s32.totalorder %s275, 17
      %s279 = scalar_select %p278, %s275, 17
      %s280 = smul.addr %s279, 3
      %s281 = smul.addr %s277, 54
      %s282 = sadd.s32 %s280, %s281
      %s283 = smul.addr %s282, 4
      %s284 = scalar_lea.vmem %s1, %s283
      %p285 = pneg %p84
      %p286 = pneg %p81
      %p287 = pneg %p105
      %p288 = pneg %p102
      %p289 = pneg %p126
      %p290 = pneg %p123
      %p291 = pneg %p154
      %p292 = pneg %p151
      %s293 = smul.u32 16, %s22
      %p294 = scmp.lt.s32.totalorder %s21, 1
      %s295 = scalar_select %p294, %s21, 1
      %p296 = scmp.lt.s32.totalorder %s293, 15
      %s297 = scalar_select %p296, %s293, 15
      %s298 = smul.addr %s297, 2
      %s299 = smul.addr %s295, 32
      %s300 = sadd.s32 %s298, %s299
      %s301 = smul.addr %s300, 8
      %s302 = scalar_lea.vmem %s4, %s301
      %p303 = pneg %p182
      %p304 = pneg %p179
      %s305 = sadd.s32 %s21, %s22
      %p306 = scmp.lt.s32.totalorder %s305, 1
      %s307 = scalar_select %p306, %s305, 1
      %s308 = smul.addr %s307, 2
      %s309 = scalar_lea.vmem %s5, %s308
      %s310 = smul.u32 16, %s22
      %s311 = ssub.s32 18, %s310
      %p312 = scmp.lt.s32.totalorder %s311, 16
      %s313 = scalar_select %p312, %s311, 16
      %s314 = smul.u32 4, %s313
      %s315 = smul.u32 %s314, 3
      %p316 = scmp.lt.s32.totalorder %s21, 1
      %s317 = scalar_select %p316, %s21, 1
      %p318 = scmp.lt.s32.totalorder %s310, 17
      %s319 = scalar_select %p318, %s310, 17
      %s320 = smul.addr %s319, 3
      %s321 = smul.addr %s317, 54
      %s322 = sadd.s32 %s320, %s321
      %s323 = smul.addr %s322, 4
      %s324 = scalar_lea.vmem %s0, %s323
      %s325 = smul.u32 16, %s22
      %s326 = ssub.s32 18, %s325
      %p327 = scmp.lt.s32.totalorder %s326, 16
      %s328 = scalar_select %p327, %s326, 16
      %s329 = smul.u32 4, %s328
      %s330 = smul.u32 %s329, 3
      %s331 = sadd.s32 %s22, 1
      %s332 = smul.u32 %s331, 8
      %s333 = smul.u32 2, %s332
      %p334 = scmp.lt.s32.totalorder %s21, 1
      %s335 = scalar_select %p334, %s21, 1
      %p336 = scmp.lt.s32.totalorder %s333, 17
      %s337 = scalar_select %p336, %s333, 17
      %s338 = smul.addr %s337, 3
      %s339 = smul.addr %s335, 54
      %s340 = sadd.s32 %s338, %s339
      %s341 = smul.addr %s340, 4
      %s342 = scalar_lea.vmem %s1, %s341
      %s343 = sadd.s32 %s22, 1
      %s344 = smul.u32 %s343, 8
      %s345 = smul.u32 2, %s344
      %s346 = smul.u32 16, %s22
      %p347 = scmp.lt.s32.totalorder %s21, 1
      %s348 = scalar_select %p347, %s21, 1
      %p349 = scmp.lt.s32.totalorder %s346, 15
      %s350 = scalar_select %p349, %s346, 15
      %s351 = smul.addr %s350, 2
      %s352 = smul.addr %s348, 32
      %s353 = sadd.s32 %s351, %s352
      %s354 = smul.addr %s353, 8
      %s355 = scalar_lea.vmem %s4, %s354
      %s356 = smul.u32 16, %s22
      %s357 = sadd.s32 %s21, %s22
      %p358 = scmp.lt.s32.totalorder %s357, 1
      %s359 = scalar_select %p358, %s357, 1
      %s360 = smul.addr %s359, 2
      %s361 = scalar_lea.vmem %s5, %s360
      %s362 = sadd.s32 %s21, %s22
      %v363 = vld [vmem:[%s324] sm:$0xf]
      %v364 = vld [vmem:[%s324 + $0x4] sm:$0xf]
      %v365 = vld [vmem:[%s324 + $0x8] sm:$0x1]
      %v366 = vld [vmem:[%s324 + $0xc] sm:$0xf]
      %v367 = vld [vmem:[%s324 + $0x10] sm:$0xf]
      %v368 = vld [vmem:[%s324 + $0x14] sm:$0x1]
      %v369 = vld [vmem:[%s324 + $0x18] sm:$0xf]
      %v370 = vld [vmem:[%s324 + $0x1c] sm:$0xf]
      %v371 = vld [vmem:[%s324 + $0x20] sm:$0x1]
      %v372 = vld [vmem:[%s324 + $0x24] sm:$0xf]
      %v373 = vld [vmem:[%s324 + $0x28] sm:$0xf]
      %v374 = vld [vmem:[%s324 + $0x2c] sm:$0x1]
      %v375 = vld [vmem:[%s324 + $0x30] sm:$0xf]
      %v376 = vld [vmem:[%s324 + $0x34] sm:$0xf]
      %v377 = vld [vmem:[%s324 + $0x38] sm:$0x1]
      %v378 = vld [vmem:[%s324 + $0x3c] sm:$0xf]
      %v379 = vld [vmem:[%s324 + $0x40] sm:$0xf]
      %v380 = vld [vmem:[%s324 + $0x44] sm:$0x1]
      %v381 = vld [vmem:[%s324 + $0x48] sm:$0xf]
      %v382 = vld [vmem:[%s324 + $0x4c] sm:$0xf]
      %v383 = vld [vmem:[%s324 + $0x50] sm:$0x1]
      %v384 = vld [vmem:[%s324 + $0x54] sm:$0xf]
      %v385 = vld [vmem:[%s324 + $0x58] sm:$0xf]
      %v386 = vld [vmem:[%s324 + $0x5c] sm:$0x1]
      %v387 = vld [vmem:[%s324 + $0x60] sm:$0xf]
      %v388 = vld [vmem:[%s324 + $0x64] sm:$0xf]
      %v389 = vld [vmem:[%s324 + $0x68] sm:$0x1]
      %v390 = vld [vmem:[%s324 + $0x6c] sm:$0xf]
      %v391 = vld [vmem:[%s324 + $0x70] sm:$0xf]
      %v392 = vld [vmem:[%s324 + $0x74] sm:$0x1]
      %v393 = vld [vmem:[%s324 + $0x78] sm:$0xf]
      %v394 = vld [vmem:[%s324 + $0x7c] sm:$0xf]
      %v395 = vld [vmem:[%s324 + $0x80] sm:$0x1]
      %v396 = vld [vmem:[%s324 + $0x84] sm:$0xf]
      %v397 = vld [vmem:[%s324 + $0x88] sm:$0xf]
      %v398 = vld [vmem:[%s324 + $0x8c] sm:$0x1]
      %v399 = vld [vmem:[%s324 + $0x90] sm:$0xf]
      %v400 = vld [vmem:[%s324 + $0x94] sm:$0xf]
      %v401 = vld [vmem:[%s324 + $0x98] sm:$0x1]
      %v402 = vld [vmem:[%s324 + $0x9c] sm:$0xf]
      %v403 = vld [vmem:[%s324 + $0xa0] sm:$0xf]
      %v404 = vld [vmem:[%s324 + $0xa4] sm:$0x1]
      %v405 = vld [vmem:[%s324 + $0xa8] sm:$0xf]
      %v406 = vld [vmem:[%s324 + $0xac] sm:$0xf]
      %v407 = vld [vmem:[%s324 + $0xb0] sm:$0x1]
      %v408 = vld [vmem:[%s324 + $0xb4] sm:$0xf]
      %v409 = vld [vmem:[%s324 + $0xb8] sm:$0xf]
      %v410 = vld [vmem:[%s324 + $0xbc] sm:$0x1]
      %411 = vst [vmem:[#allocation2] sm:$0xf] %v363
      %412 = vst [vmem:[#allocation2 + $0x4] sm:$0xf] %v364
      %413 = vst [vmem:[#allocation2 + $0x8] sm:$0x1] %v365
      %414 = vst [vmem:[#allocation2 + $0xc] sm:$0xf] %v366
      %415 = vst [vmem:[#allocation2 + $0x10] sm:$0xf] %v367
      %416 = vst [vmem:[#allocation2 + $0x14] sm:$0x1] %v368
      %417 = vst [vmem:[#allocation2 + $0x18] sm:$0xf] %v369
      %418 = vst [vmem:[#allocation2 + $0x1c] sm:$0xf] %v370
      %419 = vst [vmem:[#allocation2 + $0x20] sm:$0x1] %v371
      %420 = vst [vmem:[#allocation2 + $0x24] sm:$0xf] %v372
      %421 = vst [vmem:[#allocation2 + $0x28] sm:$0xf] %v373
      %422 = vst [vmem:[#allocation2 + $0x2c] sm:$0x1] %v374
      %423 = vst [vmem:[#allocation2 + $0x30] sm:$0xf] %v375
      %424 = vst [vmem:[#allocation2 + $0x34] sm:$0xf] %v376
      %425 = vst [vmem:[#allocation2 + $0x38] sm:$0x1] %v377
      %426 = vst [vmem:[#allocation2 + $0x3c] sm:$0xf] %v378
      %427 = vst [vmem:[#allocation2 + $0x40] sm:$0xf] %v379
      %428 = vst [vmem:[#allocation2 + $0x44] sm:$0x1] %v380
      %429 = vst [vmem:[#allocation2 + $0x48] sm:$0xf] %v381
      %430 = vst [vmem:[#allocation2 + $0x4c] sm:$0xf] %v382
      %431 = vst [vmem:[#allocation2 + $0x50] sm:$0x1] %v383
      %432 = vst [vmem:[#allocation2 + $0x54] sm:$0xf] %v384
      %433 = vst [vmem:[#allocation2 + $0x58] sm:$0xf] %v385
      %434 = vst [vmem:[#allocation2 + $0x5c] sm:$0x1] %v386
      %435 = vst [vmem:[#allocation2 + $0x60] sm:$0xf] %v387
      %436 = vst [vmem:[#allocation2 + $0x64] sm:$0xf] %v388
      %437 = vst [vmem:[#allocation2 + $0x68] sm:$0x1] %v389
      %438 = vst [vmem:[#allocation2 + $0x6c] sm:$0xf] %v390
      %439 = vst [vmem:[#allocation2 + $0x70] sm:$0xf] %v391
      %440 = vst [vmem:[#allocation2 + $0x74] sm:$0x1] %v392
      %441 = vst [vmem:[#allocation2 + $0x78] sm:$0xf] %v393
      %442 = vst [vmem:[#allocation2 + $0x7c] sm:$0xf] %v394
      %443 = vst [vmem:[#allocation2 + $0x80] sm:$0x1] %v395
      %444 = vst [vmem:[#allocation2 + $0x84] sm:$0xf] %v396
      %445 = vst [vmem:[#allocation2 + $0x88] sm:$0xf] %v397
      %446 = vst [vmem:[#allocation2 + $0x8c] sm:$0x1] %v398
      %447 = vst [vmem:[#allocation2 + $0x90] sm:$0xf] %v399
      %448 = vst [vmem:[#allocation2 + $0x94] sm:$0xf] %v400
      %449 = vst [vmem:[#allocation2 + $0x98] sm:$0x1] %v401
      %450 = vst [vmem:[#allocation2 + $0x9c] sm:$0xf] %v402
      %451 = vst [vmem:[#allocation2 + $0xa0] sm:$0xf] %v403
      %452 = vst [vmem:[#allocation2 + $0xa4] sm:$0x1] %v404
      %453 = vst [vmem:[#allocation2 + $0xa8] sm:$0xf] %v405
      %454 = vst [vmem:[#allocation2 + $0xac] sm:$0xf] %v406
      %455 = vst [vmem:[#allocation2 + $0xb0] sm:$0x1] %v407
      %456 = vst [vmem:[#allocation2 + $0xb4] sm:$0xf] %v408
      %457 = vst [vmem:[#allocation2 + $0xb8] sm:$0xf] %v409
      %458 = vst [vmem:[#allocation2 + $0xbc] sm:$0x1] %v410
      %v459 = vld [vmem:[%s342] sm:$0xf]
      %v460 = vld [vmem:[%s342 + $0x4] sm:$0xf]
      %v461 = vld [vmem:[%s342 + $0x8] sm:$0x1]
      %v462 = vld [vmem:[%s342 + $0xc] sm:$0xf]
      %v463 = vld [vmem:[%s342 + $0x10] sm:$0xf]
      %v464 = vld [vmem:[%s342 + $0x14] sm:$0x1]
      %s465 = scalar_lea.vmem [#allocation2], 192
      %466 = vst [vmem:[%s465] sm:$0xf] %v459
      %467 = vst [vmem:[%s465 + $0x4] sm:$0xf] %v460
      %468 = vst [vmem:[%s465 + $0x8] sm:$0x1] %v461
      %469 = vst [vmem:[%s465 + $0xc] sm:$0xf] %v462
      %470 = vst [vmem:[%s465 + $0x10] sm:$0xf] %v463
      %471 = vst [vmem:[%s465 + $0x14] sm:$0x1] %v464
      %v472 = vld [vmem:[#allocation2] sm:$0xf]
      %v473 = vld [vmem:[#allocation2 + $0x4] sm:$0xf]
      %v474 = vld [vmem:[#allocation2 + $0xc] sm:$0xf]
      %v475 = vld [vmem:[#allocation2 + $0x10] sm:$0xf]
      %v476 = vld [vmem:[#allocation2 + $0x18] sm:$0xf]
      %v477 = vld [vmem:[#allocation2 + $0x1c] sm:$0xf]
      %v478 = vld [vmem:[#allocation2 + $0x24] sm:$0xf]
      %v479 = vld [vmem:[#allocation2 + $0x28] sm:$0xf]
      %v480 = vld [vmem:[#allocation2 + $0x30] sm:$0xf]
      %v481 = vld [vmem:[#allocation2 + $0x34] sm:$0xf]
      %v482 = vld [vmem:[#allocation2 + $0x3c] sm:$0xf]
      %v483 = vld [vmem:[#allocation2 + $0x40] sm:$0xf]
      %v484 = vld [vmem:[#allocation2 + $0x48] sm:$0xf]
      %v485 = vld [vmem:[#allocation2 + $0x4c] sm:$0xf]
      %v486 = vld [vmem:[#allocation2 + $0x54] sm:$0xf]
      %v487 = vld [vmem:[#allocation2 + $0x58] sm:$0xf]
      %v488 = vld [vmem:[#allocation2 + $0x60] sm:$0xf]
      %v489 = vld [vmem:[#allocation2 + $0x64] sm:$0xf]
      %v490 = vld [vmem:[#allocation2 + $0x6c] sm:$0xf]
      %v491 = vld [vmem:[#allocation2 + $0x70] sm:$0xf]
      %v492 = vld [vmem:[#allocation2 + $0x78] sm:$0xf]
      %v493 = vld [vmem:[#allocation2 + $0x7c] sm:$0xf]
      %v494 = vld [vmem:[#allocation2 + $0x84] sm:$0xf]
      %v495 = vld [vmem:[#allocation2 + $0x88] sm:$0xf]
      %v496 = vld [vmem:[#allocation2 + $0x90] sm:$0xf]
      %v497 = vld [vmem:[#allocation2 + $0x94] sm:$0xf]
      %v498 = vld [vmem:[#allocation2 + $0x9c] sm:$0xf]
      %v499 = vld [vmem:[#allocation2 + $0xa0] sm:$0xf]
      %v500 = vld [vmem:[#allocation2 + $0xa8] sm:$0xf]
      %v501 = vld [vmem:[#allocation2 + $0xac] sm:$0xf]
      %v502 = vld [vmem:[#allocation2 + $0xb4] sm:$0xf]
      %v503 = vld [vmem:[#allocation2 + $0xb8] sm:$0xf]
      %v504 = vld [vmem:[%s2] sm:$0xf]
      %v505 = vld [vmem:[%s2 + $0x4] sm:$0xf]
      %v506 = vld [vmem:[%s2 + $0x8] sm:$0xf]
      %v507 = vld [vmem:[%s2 + $0xc] sm:$0xf]
      %v508 = vld [vmem:[%s2 + $0x10] sm:$0xf]
      %v509 = vld [vmem:[%s2 + $0x14] sm:$0xf]
      %v510 = vld [vmem:[%s2 + $0x18] sm:$0xf]
      %v511 = vld [vmem:[%s2 + $0x1c] sm:$0xf]
      %v512 = vld [vmem:[%s2 + $0x20] sm:$0xf]
      %v513 = vld [vmem:[%s2 + $0x24] sm:$0xf]
      %v514 = vld [vmem:[%s2 + $0x28] sm:$0xf]
      %v515 = vld [vmem:[%s2 + $0x2c] sm:$0xf]
      %v516 = vld [vmem:[%s2 + $0x30] sm:$0xf]
      %v517 = vld [vmem:[%s2 + $0x34] sm:$0xf]
      %v518 = vld [vmem:[%s2 + $0x38] sm:$0xf]
      %v519 = vld [vmem:[%s2 + $0x3c] sm:$0xf]
      %v520 = vld [vmem:[#allocation2 + $0x8] sm:$0x1]
      %v521 = vld [vmem:[#allocation2 + $0x14] sm:$0x1]
      %v522 = vld [vmem:[#allocation2 + $0x20] sm:$0x1]
      %v523 = vld [vmem:[#allocation2 + $0x2c] sm:$0x1]
      %v524 = vld [vmem:[#allocation2 + $0x38] sm:$0x1]
      %v525 = vld [vmem:[#allocation2 + $0x44] sm:$0x1]
      %v526 = vld [vmem:[#allocation2 + $0x50] sm:$0x1]
      %v527 = vld [vmem:[#allocation2 + $0x5c] sm:$0x1]
      %v528 = vld [vmem:[#allocation2 + $0x68] sm:$0x1]
      %v529 = vld [vmem:[#allocation2 + $0x74] sm:$0x1]
      %v530 = vld [vmem:[#allocation2 + $0x80] sm:$0x1]
      %v531 = vld [vmem:[#allocation2 + $0x8c] sm:$0x1]
      %v532 = vld [vmem:[#allocation2 + $0x98] sm:$0x1]
      %v533 = vld [vmem:[#allocation2 + $0xa4] sm:$0x1]
      %v534 = vld [vmem:[#allocation2 + $0xb0] sm:$0x1]
      %v535 = vld [vmem:[#allocation2 + $0xbc] sm:$0x1]
      %vm536 = vsmask.f32 3328
      %vm537 = vsmask.f32 7440
      %vm538 = vmor %vm536, %vm537
      %v540 = vshrl.u32 %v472, 16
      %v542 = vrot.slane %v540, 4
      %v543 = vshll.u32 %v472, 16
      %v545 = vrot.slane %v543, 5
      %v546 = vor.u32 %v542, %v545
      %v547 = vrot.slane %v546, 4
      %v549 = vshll.u32 %v473, 16
      %v551 = vrot.slane %v549, 5
      %v552 = vsel %vm538, %v547, %v551
      %v553 = vshrl.u32 %v473, 16
      %v555 = vrot.slane %v553, 4
      %v556 = vor.u32 %v555, %v551
      %v557 = vrot.slane %v556, 4
      %v559 = vshll.u32 %v520, 16
      %v561 = vrot.slane %v559, 5
      %v562 = vsel %vm538, %v557, %v561
      %v564 = vshrl.u32 %v474, 16
      %v566 = vrot.slane %v564, 4
      %v567 = vshll.u32 %v474, 16
      %v569 = vrot.slane %v567, 5
      %v570 = vor.u32 %v566, %v569
      %v571 = vrot.slane %v570, 4
      %v573 = vshll.u32 %v475, 16
      %v575 = vrot.slane %v573, 5
      %v576 = vsel %vm538, %v571, %v575
      %v577 = vshrl.u32 %v475, 16
      %v579 = vrot.slane %v577, 4
      %v580 = vor.u32 %v579, %v575
      %v581 = vrot.slane %v580, 4
      %v583 = vshll.u32 %v521, 16
      %v585 = vrot.slane %v583, 5
      %v586 = vsel %vm538, %v581, %v585
      %v588 = vshrl.u32 %v476, 16
      %v590 = vrot.slane %v588, 4
      %v591 = vshll.u32 %v476, 16
      %v593 = vrot.slane %v591, 5
      %v594 = vor.u32 %v590, %v593
      %v595 = vrot.slane %v594, 4
      %v597 = vshll.u32 %v477, 16
      %v599 = vrot.slane %v597, 5
      %v600 = vsel %vm538, %v595, %v599
      %v601 = vshrl.u32 %v477, 16
      %v603 = vrot.slane %v601, 4
      %v604 = vor.u32 %v603, %v599
      %v605 = vrot.slane %v604, 4
      %v607 = vshll.u32 %v522, 16
      %v609 = vrot.slane %v607, 5
      %v610 = vsel %vm538, %v605, %v609
      %v612 = vshrl.u32 %v478, 16
      %v614 = vrot.slane %v612, 4
      %v615 = vshll.u32 %v478, 16
      %v617 = vrot.slane %v615, 5
      %v618 = vor.u32 %v614, %v617
      %v619 = vrot.slane %v618, 4
      %v621 = vshll.u32 %v479, 16
      %v623 = vrot.slane %v621, 5
      %v624 = vsel %vm538, %v619, %v623
      %v625 = vshrl.u32 %v479, 16
      %v627 = vrot.slane %v625, 4
      %v628 = vor.u32 %v627, %v623
      %v629 = vrot.slane %v628, 4
      %v631 = vshll.u32 %v523, 16
      %v633 = vrot.slane %v631, 5
      %v634 = vsel %vm538, %v629, %v633
      %v636 = vshrl.u32 %v480, 16
      %v638 = vrot.slane %v636, 4
      %v639 = vshll.u32 %v480, 16
      %v641 = vrot.slane %v639, 5
      %v642 = vor.u32 %v638, %v641
      %v643 = vrot.slane %v642, 4
      %v645 = vshll.u32 %v481, 16
      %v647 = vrot.slane %v645, 5
      %v648 = vsel %vm538, %v643, %v647
      %v649 = vshrl.u32 %v481, 16
      %v651 = vrot.slane %v649, 4
      %v652 = vor.u32 %v651, %v647
      %v653 = vrot.slane %v652, 4
      %v655 = vshll.u32 %v524, 16
      %v657 = vrot.slane %v655, 5
      %v658 = vsel %vm538, %v653, %v657
      %v660 = vshrl.u32 %v482, 16
      %v662 = vrot.slane %v660, 4
      %v663 = vshll.u32 %v482, 16
      %v665 = vrot.slane %v663, 5
      %v666 = vor.u32 %v662, %v665
      %v667 = vrot.slane %v666, 4
      %v669 = vshll.u32 %v483, 16
      %v671 = vrot.slane %v669, 5
      %v672 = vsel %vm538, %v667, %v671
      %v673 = vshrl.u32 %v483, 16
      %v675 = vrot.slane %v673, 4
      %v676 = vor.u32 %v675, %v671
      %v677 = vrot.slane %v676, 4
      %v679 = vshll.u32 %v525, 16
      %v681 = vrot.slane %v679, 5
      %v682 = vsel %vm538, %v677, %v681
      %v684 = vshrl.u32 %v484, 16
      %v686 = vrot.slane %v684, 4
      %v687 = vshll.u32 %v484, 16
      %v689 = vrot.slane %v687, 5
      %v690 = vor.u32 %v686, %v689
      %v691 = vrot.slane %v690, 4
      %v693 = vshll.u32 %v485, 16
      %v695 = vrot.slane %v693, 5
      %v696 = vsel %vm538, %v691, %v695
      %v697 = vshrl.u32 %v485, 16
      %v699 = vrot.slane %v697, 4
      %v700 = vor.u32 %v699, %v695
      %v701 = vrot.slane %v700, 4
      %v703 = vshll.u32 %v526, 16
      %v705 = vrot.slane %v703, 5
      %v706 = vsel %vm538, %v701, %v705
      %v708 = vshrl.u32 %v486, 16
      %v710 = vrot.slane %v708, 4
      %v711 = vshll.u32 %v486, 16
      %v713 = vrot.slane %v711, 5
      %v714 = vor.u32 %v710, %v713
      %v715 = vrot.slane %v714, 4
      %v717 = vshll.u32 %v487, 16
      %v719 = vrot.slane %v717, 5
      %v720 = vsel %vm538, %v715, %v719
      %v721 = vshrl.u32 %v487, 16
      %v723 = vrot.slane %v721, 4
      %v724 = vor.u32 %v723, %v719
      %v725 = vrot.slane %v724, 4
      %v727 = vshll.u32 %v527, 16
      %v729 = vrot.slane %v727, 5
      %v730 = vsel %vm538, %v725, %v729
      %v732 = vshrl.u32 %v488, 16
      %v734 = vrot.slane %v732, 4
      %v735 = vshll.u32 %v488, 16
      %v737 = vrot.slane %v735, 5
      %v738 = vor.u32 %v734, %v737
      %v739 = vrot.slane %v738, 4
      %v741 = vshll.u32 %v489, 16
      %v743 = vrot.slane %v741, 5
      %v744 = vsel %vm538, %v739, %v743
      %v745 = vshrl.u32 %v489, 16
      %v747 = vrot.slane %v745, 4
      %v748 = vor.u32 %v747, %v743
      %v749 = vrot.slane %v748, 4
      %v751 = vshll.u32 %v528, 16
      %v753 = vrot.slane %v751, 5
      %v754 = vsel %vm538, %v749, %v753
      %v756 = vshrl.u32 %v490, 16
      %v758 = vrot.slane %v756, 4
      %v759 = vshll.u32 %v490, 16
      %v761 = vrot.slane %v759, 5
      %v762 = vor.u32 %v758, %v761
      %v763 = vrot.slane %v762, 4
      %v765 = vshll.u32 %v491, 16
      %v767 = vrot.slane %v765, 5
      %v768 = vsel %vm538, %v763, %v767
      %v769 = vshrl.u32 %v491, 16
      %v771 = vrot.slane %v769, 4
      %v772 = vor.u32 %v771, %v767
      %v773 = vrot.slane %v772, 4
      %v775 = vshll.u32 %v529, 16
      %v777 = vrot.slane %v775, 5
      %v778 = vsel %vm538, %v773, %v777
      %v780 = vshrl.u32 %v492, 16
      %v782 = vrot.slane %v780, 4
      %v783 = vshll.u32 %v492, 16
      %v785 = vrot.slane %v783, 5
      %v786 = vor.u32 %v782, %v785
      %v787 = vrot.slane %v786, 4
      %v789 = vshll.u32 %v493, 16
      %v791 = vrot.slane %v789, 5
      %v792 = vsel %vm538, %v787, %v791
      %v793 = vshrl.u32 %v493, 16
      %v795 = vrot.slane %v793, 4
      %v796 = vor.u32 %v795, %v791
      %v797 = vrot.slane %v796, 4
      %v799 = vshll.u32 %v530, 16
      %v801 = vrot.slane %v799, 5
      %v802 = vsel %vm538, %v797, %v801
      %v804 = vshrl.u32 %v494, 16
      %v806 = vrot.slane %v804, 4
      %v807 = vshll.u32 %v494, 16
      %v809 = vrot.slane %v807, 5
      %v810 = vor.u32 %v806, %v809
      %v811 = vrot.slane %v810, 4
      %v813 = vshll.u32 %v495, 16
      %v815 = vrot.slane %v813, 5
      %v816 = vsel %vm538, %v811, %v815
      %v817 = vshrl.u32 %v495, 16
      %v819 = vrot.slane %v817, 4
      %v820 = vor.u32 %v819, %v815
      %v821 = vrot.slane %v820, 4
      %v823 = vshll.u32 %v531, 16
      %v825 = vrot.slane %v823, 5
      %v826 = vsel %vm538, %v821, %v825
      %v828 = vshrl.u32 %v496, 16
      %v830 = vrot.slane %v828, 4
      %v831 = vshll.u32 %v496, 16
      %v833 = vrot.slane %v831, 5
      %v834 = vor.u32 %v830, %v833
      %v835 = vrot.slane %v834, 4
      %v837 = vshll.u32 %v497, 16
      %v839 = vrot.slane %v837, 5
      %v840 = vsel %vm538, %v835, %v839
      %v841 = vshrl.u32 %v497, 16
      %v843 = vrot.slane %v841, 4
      %v844 = vor.u32 %v843, %v839
      %v845 = vrot.slane %v844, 4
      %v847 = vshll.u32 %v532, 16
      %v849 = vrot.slane %v847, 5
      %v850 = vsel %vm538, %v845, %v849
      %v852 = vshrl.u32 %v498, 16
      %v854 = vrot.slane %v852, 4
      %v855 = vshll.u32 %v498, 16
      %v857 = vrot.slane %v855, 5
      %v858 = vor.u32 %v854, %v857
      %v859 = vrot.slane %v858, 4
      %v861 = vshll.u32 %v499, 16
      %v863 = vrot.slane %v861, 5
      %v864 = vsel %vm538, %v859, %v863
      %v865 = vshrl.u32 %v499, 16
      %v867 = vrot.slane %v865, 4
      %v868 = vor.u32 %v867, %v863
      %v869 = vrot.slane %v868, 4
      %v871 = vshll.u32 %v533, 16
      %v873 = vrot.slane %v871, 5
      %v874 = vsel %vm538, %v869, %v873
      %v876 = vshrl.u32 %v500, 16
      %v878 = vrot.slane %v876, 4
      %v879 = vshll.u32 %v500, 16
      %v881 = vrot.slane %v879, 5
      %v882 = vor.u32 %v878, %v881
      %v883 = vrot.slane %v882, 4
      %v885 = vshll.u32 %v501, 16
      %v887 = vrot.slane %v885, 5
      %v888 = vsel %vm538, %v883, %v887
      %v889 = vshrl.u32 %v501, 16
      %v891 = vrot.slane %v889, 4
      %v892 = vor.u32 %v891, %v887
      %v893 = vrot.slane %v892, 4
      %v895 = vshll.u32 %v534, 16
      %v897 = vrot.slane %v895, 5
      %v898 = vsel %vm538, %v893, %v897
      %v900 = vshrl.u32 %v502, 16
      %v902 = vrot.slane %v900, 4
      %v903 = vshll.u32 %v502, 16
      %v905 = vrot.slane %v903, 5
      %v906 = vor.u32 %v902, %v905
      %v907 = vrot.slane %v906, 4
      %v909 = vshll.u32 %v503, 16
      %v911 = vrot.slane %v909, 5
      %v912 = vsel %vm538, %v907, %v911
      %v913 = vshrl.u32 %v503, 16
      %v915 = vrot.slane %v913, 4
      %v916 = vor.u32 %v915, %v911
      %v917 = vrot.slane %v916, 4
      %v919 = vshll.u32 %v535, 16
      %v921 = vrot.slane %v919, 5
      %v922 = vsel %vm538, %v917, %v921
      %s923 = scalar_lea.vmem %s2, 64
      %v924 = vld [vmem:[%s923] sm:$0xf]
      %v925 = vld [vmem:[%s923 + $0x4] sm:$0xf]
      %v926 = vld [vmem:[%s923 + $0x8] sm:$0xf]
      %v927 = vld [vmem:[%s923 + $0xc] sm:$0xf]
      %v928 = vld [vmem:[%s923 + $0x10] sm:$0xf]
      %v929 = vld [vmem:[%s923 + $0x14] sm:$0xf]
      %v930 = vld [vmem:[%s923 + $0x18] sm:$0xf]
      %v931 = vld [vmem:[%s923 + $0x1c] sm:$0xf]
      %v932 = vld [vmem:[%s923 + $0x20] sm:$0xf]
      %v933 = vld [vmem:[%s923 + $0x24] sm:$0xf]
      %v934 = vld [vmem:[%s923 + $0x28] sm:$0xf]
      %v935 = vld [vmem:[%s923 + $0x2c] sm:$0xf]
      %v936 = vld [vmem:[%s923 + $0x30] sm:$0xf]
      %v937 = vld [vmem:[%s923 + $0x34] sm:$0xf]
      %v938 = vld [vmem:[%s923 + $0x38] sm:$0xf]
      %v939 = vld [vmem:[%s923 + $0x3c] sm:$0xf]
      %v940 = vunpack.c.l.b16 %v552
      %v941 = vunpack.c.l.b16 %v562
      %v942 = vunpack.c.l.b16 %v576
      %v943 = vunpack.c.l.b16 %v586
      %v944 = vunpack.c.l.b16 %v600
      %v945 = vunpack.c.l.b16 %v610
      %v946 = vunpack.c.l.b16 %v624
      %v947 = vunpack.c.l.b16 %v634
      %v948 = vunpack.c.l.b16 %v648
      %v949 = vunpack.c.l.b16 %v658
      %v950 = vunpack.c.l.b16 %v672
      %v951 = vunpack.c.l.b16 %v682
      %v952 = vunpack.c.l.b16 %v696
      %v953 = vunpack.c.l.b16 %v706
      %v954 = vunpack.c.l.b16 %v720
      %v955 = vunpack.c.l.b16 %v730
      %v956 = vunpack.c.l.b16 %v744
      %v957 = vunpack.c.l.b16 %v754
      %v958 = vunpack.c.l.b16 %v768
      %v959 = vunpack.c.l.b16 %v778
      %v960 = vunpack.c.l.b16 %v792
      %v961 = vunpack.c.l.b16 %v802
      %v962 = vunpack.c.l.b16 %v816
      %v963 = vunpack.c.l.b16 %v826
      %v964 = vunpack.c.l.b16 %v840
      %v965 = vunpack.c.l.b16 %v850
      %v966 = vunpack.c.l.b16 %v864
      %v967 = vunpack.c.l.b16 %v874
      %v968 = vunpack.c.l.b16 %v888
      %v969 = vunpack.c.l.b16 %v898
      %v970 = vunpack.c.l.b16 %v912
      %v971 = vunpack.c.l.b16 %v922
      %v972 = vpack.c.b16 %v941, %v940
      %v973 = vpack.c.b16 %v943, %v942
      %v974 = vpack.c.b16 %v945, %v944
      %v975 = vpack.c.b16 %v947, %v946
      %v976 = vpack.c.b16 %v949, %v948
      %v977 = vpack.c.b16 %v951, %v950
      %v978 = vpack.c.b16 %v953, %v952
      %v979 = vpack.c.b16 %v955, %v954
      %v980 = vpack.c.b16 %v957, %v956
      %v981 = vpack.c.b16 %v959, %v958
      %v982 = vpack.c.b16 %v961, %v960
      %v983 = vpack.c.b16 %v963, %v962
      %v984 = vpack.c.b16 %v965, %v964
      %v985 = vpack.c.b16 %v967, %v966
      %v986 = vpack.c.b16 %v969, %v968
      %v987 = vpack.c.b16 %v971, %v970
      %v1020 = vunpack.c.l.b16 %v924
      %v1021 = vunpack.c.l.b16 %v925
      %v1022 = vunpack.c.l.b16 %v926
      %v1023 = vunpack.c.l.b16 %v927
      %v1024 = vunpack.c.l.b16 %v928
      %v1025 = vunpack.c.l.b16 %v929
      %v1026 = vunpack.c.l.b16 %v930
      %v1027 = vunpack.c.l.b16 %v931
      %v1028 = vunpack.c.l.b16 %v932
      %v1029 = vunpack.c.l.b16 %v933
      %v1030 = vunpack.c.l.b16 %v934
      %v1031 = vunpack.c.l.b16 %v935
      %v1032 = vunpack.c.l.b16 %v936
      %v1033 = vunpack.c.l.b16 %v937
      %v1034 = vunpack.c.l.b16 %v938
      %v1035 = vunpack.c.l.b16 %v939
      %v1036 = vpack.c.b16 %v1021, %v1020
      %v1037 = vpack.c.b16 %v1023, %v1022
      %v1038 = vpack.c.b16 %v1025, %v1024
      %v1039 = vpack.c.b16 %v1027, %v1026
      %v1040 = vpack.c.b16 %v1029, %v1028
      %v1041 = vpack.c.b16 %v1031, %v1030
      %v1042 = vpack.c.b16 %v1033, %v1032
      %v1043 = vpack.c.b16 %v1035, %v1034
      %1052 = vmatpush.bf16.msra.mxu0 %v1043
      %1053 = vmatpush.bf16.msra.mxu0 %v1042
      %1054 = vmatpush.bf16.msra.mxu0 %v1041
      %1055 = vmatpush.bf16.msra.mxu0 %v1040
      %1056 = vmatpush.bf16.msra.mxu0 %v1039
      %1057 = vmatpush.bf16.msra.mxu0 %v1038
      %1058 = vmatpush.bf16.msra.mxu0 %v1037
      %1059 = vmatpush.bf16.msra.mxu0 %v1036
      %1060 = vmatmul.bf16.gmra.mxu0 %v972
      %v1061 = vpop.f32.mrf.mxu0
      %v1062 = vadd.f32 0.0, %v1061
      %v1063 = vpop.f32.mrf.mxu0
      %v1064 = vadd.f32 0.0, %v1063
      %1065 = vmatmul.bf16.gmra.mxu0 %v973
      %v1066 = vpop.f32.mrf.mxu0
      %v1067 = vadd.f32 0.0, %v1066
      %v1068 = vpop.f32.mrf.mxu0
      %v1069 = vadd.f32 0.0, %v1068
      %1070 = vmatmul.bf16.gmra.mxu0 %v974
      %v1071 = vpop.f32.mrf.mxu0
      %v1072 = vadd.f32 0.0, %v1071
      %v1073 = vpop.f32.mrf.mxu0
      %v1074 = vadd.f32 0.0, %v1073
      %1075 = vmatmul.bf16.gmra.mxu0 %v975
      %v1076 = vpop.f32.mrf.mxu0
      %v1077 = vadd.f32 0.0, %v1076
      %v1078 = vpop.f32.mrf.mxu0
      %v1079 = vadd.f32 0.0, %v1078
      %1080 = vmatmul.bf16.gmra.mxu0 %v976
      %v1081 = vpop.f32.mrf.mxu0
      %v1082 = vadd.f32 0.0, %v1081
      %v1083 = vpop.f32.mrf.mxu0
      %v1084 = vadd.f32 0.0, %v1083
      %1085 = vmatmul.bf16.gmra.mxu0 %v977
      %v1086 = vpop.f32.mrf.mxu0
      %v1087 = vadd.f32 0.0, %v1086
      %v1088 = vpop.f32.mrf.mxu0
      %v1089 = vadd.f32 0.0, %v1088
      %1090 = vmatmul.bf16.gmra.mxu0 %v978
      %v1091 = vpop.f32.mrf.mxu0
      %v1092 = vadd.f32 0.0, %v1091
      %v1093 = vpop.f32.mrf.mxu0
      %v1094 = vadd.f32 0.0, %v1093
      %1095 = vmatmul.bf16.gmra.mxu0 %v979
      %v1096 = vpop.f32.mrf.mxu0
      %v1097 = vadd.f32 0.0, %v1096
      %v1098 = vpop.f32.mrf.mxu0
      %v1099 = vadd.f32 0.0, %v1098
      %1100 = vmatmul.bf16.gmra.mxu0 %v980
      %v1101 = vpop.f32.mrf.mxu0
      %v1102 = vadd.f32 0.0, %v1101
      %v1103 = vpop.f32.mrf.mxu0
      %v1104 = vadd.f32 0.0, %v1103
      %1105 = vmatmul.bf16.gmra.mxu0 %v981
      %v1106 = vpop.f32.mrf.mxu0
      %v1107 = vadd.f32 0.0, %v1106
      %v1108 = vpop.f32.mrf.mxu0
      %v1109 = vadd.f32 0.0, %v1108
      %1110 = vmatmul.bf16.gmra.mxu0 %v982
      %v1111 = vpop.f32.mrf.mxu0
      %v1112 = vadd.f32 0.0, %v1111
      %v1113 = vpop.f32.mrf.mxu0
      %v1114 = vadd.f32 0.0, %v1113
      %1115 = vmatmul.bf16.gmra.mxu0 %v983
      %v1116 = vpop.f32.mrf.mxu0
      %v1117 = vadd.f32 0.0, %v1116
      %v1118 = vpop.f32.mrf.mxu0
      %v1119 = vadd.f32 0.0, %v1118
      %1120 = vmatmul.bf16.gmra.mxu0 %v984
      %v1121 = vpop.f32.mrf.mxu0
      %v1122 = vadd.f32 0.0, %v1121
      %v1123 = vpop.f32.mrf.mxu0
      %v1124 = vadd.f32 0.0, %v1123
      %1125 = vmatmul.bf16.gmra.mxu0 %v985
      %v1126 = vpop.f32.mrf.mxu0
      %v1127 = vadd.f32 0.0, %v1126
      %v1128 = vpop.f32.mrf.mxu0
      %v1129 = vadd.f32 0.0, %v1128
      %1130 = vmatmul.bf16.gmra.mxu0 %v986
      %v1131 = vpop.f32.mrf.mxu0
      %v1132 = vadd.f32 0.0, %v1131
      %v1133 = vpop.f32.mrf.mxu0
      %v1134 = vadd.f32 0.0, %v1133
      %1135 = vmatmul.bf16.gmra.mxu0 %v987
      %v1136 = vpop.f32.mrf.mxu0
      %v1137 = vadd.f32 0.0, %v1136
      %v1138 = vpop.f32.mrf.mxu0
      %v1139 = vadd.f32 0.0, %v1138
      %1140 = vdwg.mxu0
      %v1173 = vunpack.c.l.b16 %v472
      %v1174 = vunpack.c.l.b16 %v473
      %v1175 = vunpack.c.l.b16 %v474
      %v1176 = vunpack.c.l.b16 %v475
      %v1177 = vunpack.c.l.b16 %v476
      %v1178 = vunpack.c.l.b16 %v477
      %v1179 = vunpack.c.l.b16 %v478
      %v1180 = vunpack.c.l.b16 %v479
      %v1181 = vunpack.c.l.b16 %v480
      %v1182 = vunpack.c.l.b16 %v481
      %v1183 = vunpack.c.l.b16 %v482
      %v1184 = vunpack.c.l.b16 %v483
      %v1185 = vunpack.c.l.b16 %v484
      %v1186 = vunpack.c.l.b16 %v485
      %v1187 = vunpack.c.l.b16 %v486
      %v1188 = vunpack.c.l.b16 %v487
      %v1189 = vunpack.c.l.b16 %v488
      %v1190 = vunpack.c.l.b16 %v489
      %v1191 = vunpack.c.l.b16 %v490
      %v1192 = vunpack.c.l.b16 %v491
      %v1193 = vunpack.c.l.b16 %v492
      %v1194 = vunpack.c.l.b16 %v493
      %v1195 = vunpack.c.l.b16 %v494
      %v1196 = vunpack.c.l.b16 %v495
      %v1197 = vunpack.c.l.b16 %v496
      %v1198 = vunpack.c.l.b16 %v497
      %v1199 = vunpack.c.l.b16 %v498
      %v1200 = vunpack.c.l.b16 %v499
      %v1201 = vunpack.c.l.b16 %v500
      %v1202 = vunpack.c.l.b16 %v501
      %v1203 = vunpack.c.l.b16 %v502
      %v1204 = vunpack.c.l.b16 %v503
      %v1205 = vpack.c.b16 %v1174, %v1173
      %v1206 = vpack.c.b16 %v1176, %v1175
      %v1207 = vpack.c.b16 %v1178, %v1177
      %v1208 = vpack.c.b16 %v1180, %v1179
      %v1209 = vpack.c.b16 %v1182, %v1181
      %v1210 = vpack.c.b16 %v1184, %v1183
      %v1211 = vpack.c.b16 %v1186, %v1185
      %v1212 = vpack.c.b16 %v1188, %v1187
      %v1213 = vpack.c.b16 %v1190, %v1189
      %v1214 = vpack.c.b16 %v1192, %v1191
      %v1215 = vpack.c.b16 %v1194, %v1193
      %v1216 = vpack.c.b16 %v1196, %v1195
      %v1217 = vpack.c.b16 %v1198, %v1197
      %v1218 = vpack.c.b16 %v1200, %v1199
      %v1219 = vpack.c.b16 %v1202, %v1201
      %v1220 = vpack.c.b16 %v1204, %v1203
      %v1253 = vunpack.c.l.b16 %v504
      %v1254 = vunpack.c.l.b16 %v505
      %v1255 = vunpack.c.l.b16 %v506
      %v1256 = vunpack.c.l.b16 %v507
      %v1257 = vunpack.c.l.b16 %v508
      %v1258 = vunpack.c.l.b16 %v509
      %v1259 = vunpack.c.l.b16 %v510
      %v1260 = vunpack.c.l.b16 %v511
      %v1261 = vunpack.c.l.b16 %v512
      %v1262 = vunpack.c.l.b16 %v513
      %v1263 = vunpack.c.l.b16 %v514
      %v1264 = vunpack.c.l.b16 %v515
      %v1265 = vunpack.c.l.b16 %v516
      %v1266 = vunpack.c.l.b16 %v517
      %v1267 = vunpack.c.l.b16 %v518
      %v1268 = vunpack.c.l.b16 %v519
      %v1269 = vpack.c.b16 %v1254, %v1253
      %v1270 = vpack.c.b16 %v1256, %v1255
      %v1271 = vpack.c.b16 %v1258, %v1257
      %v1272 = vpack.c.b16 %v1260, %v1259
      %v1273 = vpack.c.b16 %v1262, %v1261
      %v1274 = vpack.c.b16 %v1264, %v1263
      %v1275 = vpack.c.b16 %v1266, %v1265
      %v1276 = vpack.c.b16 %v1268, %v1267
      %1285 = vmatpush.bf16.msra.mxu0 %v1276
      %1286 = vmatpush.bf16.msra.mxu0 %v1275
      %1287 = vmatpush.bf16.msra.mxu0 %v1274
      %1288 = vmatpush.bf16.msra.mxu0 %v1273
      %1289 = vmatpush.bf16.msra.mxu0 %v1272
      %1290 = vmatpush.bf16.msra.mxu0 %v1271
      %1291 = vmatpush.bf16.msra.mxu0 %v1270
      %1292 = vmatpush.bf16.msra.mxu0 %v1269
      %1293 = vmatmul.bf16.gmra.mxu0 %v1205
      %v1294 = vpop.f32.mrf.mxu0
      %v1295 = vadd.f32 %v1062, %v1294
      %v1296 = vpop.f32.mrf.mxu0
      %v1297 = vadd.f32 %v1064, %v1296
      %1298 = vmatmul.bf16.gmra.mxu0 %v1206
      %v1299 = vpop.f32.mrf.mxu0
      %v1300 = vadd.f32 %v1067, %v1299
      %v1301 = vpop.f32.mrf.mxu0
      %v1302 = vadd.f32 %v1069, %v1301
      %1303 = vmatmul.bf16.gmra.mxu0 %v1207
      %v1304 = vpop.f32.mrf.mxu0
      %v1305 = vadd.f32 %v1072, %v1304
      %v1306 = vpop.f32.mrf.mxu0
      %v1307 = vadd.f32 %v1074, %v1306
      %1308 = vmatmul.bf16.gmra.mxu0 %v1208
      %v1309 = vpop.f32.mrf.mxu0
      %v1310 = vadd.f32 %v1077, %v1309
      %v1311 = vpop.f32.mrf.mxu0
      %v1312 = vadd.f32 %v1079, %v1311
      %1313 = vmatmul.bf16.gmra.mxu0 %v1209
      %v1314 = vpop.f32.mrf.mxu0
      %v1315 = vadd.f32 %v1082, %v1314
      %v1316 = vpop.f32.mrf.mxu0
      %v1317 = vadd.f32 %v1084, %v1316
      %1318 = vmatmul.bf16.gmra.mxu0 %v1210
      %v1319 = vpop.f32.mrf.mxu0
      %v1320 = vadd.f32 %v1087, %v1319
      %v1321 = vpop.f32.mrf.mxu0
      %v1322 = vadd.f32 %v1089, %v1321
      %1323 = vmatmul.bf16.gmra.mxu0 %v1211
      %v1324 = vpop.f32.mrf.mxu0
      %v1325 = vadd.f32 %v1092, %v1324
      %v1326 = vpop.f32.mrf.mxu0
      %v1327 = vadd.f32 %v1094, %v1326
      %1328 = vmatmul.bf16.gmra.mxu0 %v1212
      %v1329 = vpop.f32.mrf.mxu0
      %v1330 = vadd.f32 %v1097, %v1329
      %v1331 = vpop.f32.mrf.mxu0
      %v1332 = vadd.f32 %v1099, %v1331
      %1333 = vmatmul.bf16.gmra.mxu0 %v1213
      %v1334 = vpop.f32.mrf.mxu0
      %v1335 = vadd.f32 %v1102, %v1334
      %v1336 = vpop.f32.mrf.mxu0
      %v1337 = vadd.f32 %v1104, %v1336
      %1338 = vmatmul.bf16.gmra.mxu0 %v1214
      %v1339 = vpop.f32.mrf.mxu0
      %v1340 = vadd.f32 %v1107, %v1339
      %v1341 = vpop.f32.mrf.mxu0
      %v1342 = vadd.f32 %v1109, %v1341
      %1343 = vmatmul.bf16.gmra.mxu0 %v1215
      %v1344 = vpop.f32.mrf.mxu0
      %v1345 = vadd.f32 %v1112, %v1344
      %v1346 = vpop.f32.mrf.mxu0
      %v1347 = vadd.f32 %v1114, %v1346
      %1348 = vmatmul.bf16.gmra.mxu0 %v1216
      %v1349 = vpop.f32.mrf.mxu0
      %v1350 = vadd.f32 %v1117, %v1349
      %v1351 = vpop.f32.mrf.mxu0
      %v1352 = vadd.f32 %v1119, %v1351
      %1353 = vmatmul.bf16.gmra.mxu0 %v1217
      %v1354 = vpop.f32.mrf.mxu0
      %v1355 = vadd.f32 %v1122, %v1354
      %v1356 = vpop.f32.mrf.mxu0
      %v1357 = vadd.f32 %v1124, %v1356
      %1358 = vmatmul.bf16.gmra.mxu0 %v1218
      %v1359 = vpop.f32.mrf.mxu0
      %v1360 = vadd.f32 %v1127, %v1359
      %v1361 = vpop.f32.mrf.mxu0
      %v1362 = vadd.f32 %v1129, %v1361
      %1363 = vmatmul.bf16.gmra.mxu0 %v1219
      %v1364 = vpop.f32.mrf.mxu0
      %v1365 = vadd.f32 %v1132, %v1364
      %v1366 = vpop.f32.mrf.mxu0
      %v1367 = vadd.f32 %v1134, %v1366
      %1368 = vmatmul.bf16.gmra.mxu0 %v1220
      %v1369 = vpop.f32.mrf.mxu0
      %v1370 = vadd.f32 %v1137, %v1369
      %v1371 = vpop.f32.mrf.mxu0
      %v1372 = vadd.f32 %v1139, %v1371
      %1373 = vdwg.mxu0
      %v1374 = vld [vmem:[#allocation2] sm:$0xe]
      %v1375 = vld [vmem:[#allocation2 + $0xc] sm:$0xe]
      %v1376 = vld [vmem:[#allocation2 + $0x18] sm:$0xe]
      %v1377 = vld [vmem:[#allocation2 + $0x24] sm:$0xe]
      %v1378 = vld [vmem:[#allocation2 + $0x30] sm:$0xe]
      %v1379 = vld [vmem:[#allocation2 + $0x3c] sm:$0xe]
      %v1380 = vld [vmem:[#allocation2 + $0x48] sm:$0xe]
      %v1381 = vld [vmem:[#allocation2 + $0x54] sm:$0xe]
      %v1382 = vld [vmem:[#allocation2 + $0x60] sm:$0xe]
      %v1383 = vld [vmem:[#allocation2 + $0x6c] sm:$0xe]
      %v1384 = vld [vmem:[#allocation2 + $0x78] sm:$0xe]
      %v1385 = vld [vmem:[#allocation2 + $0x84] sm:$0xe]
      %v1386 = vld [vmem:[#allocation2 + $0x90] sm:$0xe]
      %v1387 = vld [vmem:[#allocation2 + $0x9c] sm:$0xe]
      %v1388 = vld [vmem:[#allocation2 + $0xa8] sm:$0xe]
      %v1389 = vld [vmem:[#allocation2 + $0xb4] sm:$0xe]
      %vm1422 = vcmask 1042432
      %vm1423 = vcmask 1046532
      %vm1424 = vmor %vm1422, %vm1423
      %v1425 = vrot.slane %v1374, 5
      %v1426 = vrot.slane %v1425, 4
      %v1427 = vrot.slane %v473, 5
      %v1428 = vsel %vm1424, %v1426, %v1427
      %v1429 = vrot.slane %v1427, 4
      %v1430 = vrot.slane %v520, 5
      %v1431 = vsel %vm1424, %v1429, %v1430
      %v1432 = vrot.slane %v1375, 5
      %v1433 = vrot.slane %v1432, 4
      %v1434 = vrot.slane %v475, 5
      %v1435 = vsel %vm1424, %v1433, %v1434
      %v1436 = vrot.slane %v1434, 4
      %v1437 = vrot.slane %v521, 5
      %v1438 = vsel %vm1424, %v1436, %v1437
      %v1439 = vrot.slane %v1376, 5
      %v1440 = vrot.slane %v1439, 4
      %v1441 = vrot.slane %v477, 5
      %v1442 = vsel %vm1424, %v1440, %v1441
      %v1443 = vrot.slane %v1441, 4
      %v1444 = vrot.slane %v522, 5
      %v1445 = vsel %vm1424, %v1443, %v1444
      %v1446 = vrot.slane %v1377, 5
      %v1447 = vrot.slane %v1446, 4
      %v1448 = vrot.slane %v479, 5
      %v1449 = vsel %vm1424, %v1447, %v1448
      %v1450 = vrot.slane %v1448, 4
      %v1451 = vrot.slane %v523, 5
      %v1452 = vsel %vm1424, %v1450, %v1451
      %v1453 = vrot.slane %v1378, 5
      %v1454 = vrot.slane %v1453, 4
      %v1455 = vrot.slane %v481, 5
      %v1456 = vsel %vm1424, %v1454, %v1455
      %v1457 = vrot.slane %v1455, 4
      %v1458 = vrot.slane %v524, 5
      %v1459 = vsel %vm1424, %v1457, %v1458
      %v1460 = vrot.slane %v1379, 5
      %v1461 = vrot.slane %v1460, 4
      %v1462 = vrot.slane %v483, 5
      %v1463 = vsel %vm1424, %v1461, %v1462
      %v1464 = vrot.slane %v1462, 4
      %v1465 = vrot.slane %v525, 5
      %v1466 = vsel %vm1424, %v1464, %v1465
      %v1467 = vrot.slane %v1380, 5
      %v1468 = vrot.slane %v1467, 4
      %v1469 = vrot.slane %v485, 5
      %v1470 = vsel %vm1424, %v1468, %v1469
      %v1471 = vrot.slane %v1469, 4
      %v1472 = vrot.slane %v526, 5
      %v1473 = vsel %vm1424, %v1471, %v1472
      %v1474 = vrot.slane %v1381, 5
      %v1475 = vrot.slane %v1474, 4
      %v1476 = vrot.slane %v487, 5
      %v1477 = vsel %vm1424, %v1475, %v1476
      %v1478 = vrot.slane %v1476, 4
      %v1479 = vrot.slane %v527, 5
      %v1480 = vsel %vm1424, %v1478, %v1479
      %v1481 = vrot.slane %v1382, 5
      %v1482 = vrot.slane %v1481, 4
      %v1483 = vrot.slane %v489, 5
      %v1484 = vsel %vm1424, %v1482, %v1483
      %v1485 = vrot.slane %v1483, 4
      %v1486 = vrot.slane %v528, 5
      %v1487 = vsel %vm1424, %v1485, %v1486
      %v1488 = vrot.slane %v1383, 5
      %v1489 = vrot.slane %v1488, 4
      %v1490 = vrot.slane %v491, 5
      %v1491 = vsel %vm1424, %v1489, %v1490
      %v1492 = vrot.slane %v1490, 4
      %v1493 = vrot.slane %v529, 5
      %v1494 = vsel %vm1424, %v1492, %v1493
      %v1495 = vrot.slane %v1384, 5
      %v1496 = vrot.slane %v1495, 4
      %v1497 = vrot.slane %v493, 5
      %v1498 = vsel %vm1424, %v1496, %v1497
      %v1499 = vrot.slane %v1497, 4
      %v1500 = vrot.slane %v530, 5
      %v1501 = vsel %vm1424, %v1499, %v1500
      %v1502 = vrot.slane %v1385, 5
      %v1503 = vrot.slane %v1502, 4
      %v1504 = vrot.slane %v495, 5
      %v1505 = vsel %vm1424, %v1503, %v1504
      %v1506 = vrot.slane %v1504, 4
      %v1507 = vrot.slane %v531, 5
      %v1508 = vsel %vm1424, %v1506, %v1507
      %v1509 = vrot.slane %v1386, 5
      %v1510 = vrot.slane %v1509, 4
      %v1511 = vrot.slane %v497, 5
      %v1512 = vsel %vm1424, %v1510, %v1511
      %v1513 = vrot.slane %v1511, 4
      %v1514 = vrot.slane %v532, 5
      %v1515 = vsel %vm1424, %v1513, %v1514
      %v1516 = vrot.slane %v1387, 5
      %v1517 = vrot.slane %v1516, 4
      %v1518 = vrot.slane %v499, 5
      %v1519 = vsel %vm1424, %v1517, %v1518
      %v1520 = vrot.slane %v1518, 4
      %v1521 = vrot.slane %v533, 5
      %v1522 = vsel %vm1424, %v1520, %v1521
      %v1523 = vrot.slane %v1388, 5
      %v1524 = vrot.slane %v1523, 4
      %v1525 = vrot.slane %v501, 5
      %v1526 = vsel %vm1424, %v1524, %v1525
      %v1527 = vrot.slane %v1525, 4
      %v1528 = vrot.slane %v534, 5
      %v1529 = vsel %vm1424, %v1527, %v1528
      %v1530 = vrot.slane %v1389, 5
      %v1531 = vrot.slane %v1530, 4
      %v1532 = vrot.slane %v503, 5
      %v1533 = vsel %vm1424, %v1531, %v1532
      %v1534 = vrot.slane %v1532, 4
      %v1535 = vrot.slane %v535, 5
      %v1536 = vsel %vm1424, %v1534, %v1535
      %s1537 = scalar_lea.vmem %s2, 128
      %v1538 = vld [vmem:[%s1537] sm:$0xf]
      %v1539 = vld [vmem:[%s1537 + $0x4] sm:$0xf]
      %v1540 = vld [vmem:[%s1537 + $0x8] sm:$0xf]
      %v1541 = vld [vmem:[%s1537 + $0xc] sm:$0xf]
      %v1542 = vld [vmem:[%s1537 + $0x10] sm:$0xf]
      %v1543 = vld [vmem:[%s1537 + $0x14] sm:$0xf]
      %v1544 = vld [vmem:[%s1537 + $0x18] sm:$0xf]
      %v1545 = vld [vmem:[%s1537 + $0x1c] sm:$0xf]
      %v1546 = vld [vmem:[%s1537 + $0x20] sm:$0xf]
      %v1547 = vld [vmem:[%s1537 + $0x24] sm:$0xf]
      %v1548 = vld [vmem:[%s1537 + $0x28] sm:$0xf]
      %v1549 = vld [vmem:[%s1537 + $0x2c] sm:$0xf]
      %v1550 = vld [vmem:[%s1537 + $0x30] sm:$0xf]
      %v1551 = vld [vmem:[%s1537 + $0x34] sm:$0xf]
      %v1552 = vld [vmem:[%s1537 + $0x38] sm:$0xf]
      %v1553 = vld [vmem:[%s1537 + $0x3c] sm:$0xf]
      %v1554 = vunpack.c.l.b16 %v1428
      %v1555 = vunpack.c.l.b16 %v1431
      %v1556 = vunpack.c.l.b16 %v1435
      %v1557 = vunpack.c.l.b16 %v1438
      %v1558 = vunpack.c.l.b16 %v1442
      %v1559 = vunpack.c.l.b16 %v1445
      %v1560 = vunpack.c.l.b16 %v1449
      %v1561 = vunpack.c.l.b16 %v1452
      %v1562 = vunpack.c.l.b16 %v1456
      %v1563 = vunpack.c.l.b16 %v1459
      %v1564 = vunpack.c.l.b16 %v1463
      %v1565 = vunpack.c.l.b16 %v1466
      %v1566 = vunpack.c.l.b16 %v1470
      %v1567 = vunpack.c.l.b16 %v1473
      %v1568 = vunpack.c.l.b16 %v1477
      %v1569 = vunpack.c.l.b16 %v1480
      %v1570 = vunpack.c.l.b16 %v1484
      %v1571 = vunpack.c.l.b16 %v1487
      %v1572 = vunpack.c.l.b16 %v1491
      %v1573 = vunpack.c.l.b16 %v1494
      %v1574 = vunpack.c.l.b16 %v1498
      %v1575 = vunpack.c.l.b16 %v1501
      %v1576 = vunpack.c.l.b16 %v1505
      %v1577 = vunpack.c.l.b16 %v1508
      %v1578 = vunpack.c.l.b16 %v1512
      %v1579 = vunpack.c.l.b16 %v1515
      %v1580 = vunpack.c.l.b16 %v1519
      %v1581 = vunpack.c.l.b16 %v1522
      %v1582 = vunpack.c.l.b16 %v1526
      %v1583 = vunpack.c.l.b16 %v1529
      %v1584 = vunpack.c.l.b16 %v1533
      %v1585 = vunpack.c.l.b16 %v1536
      %v1586 = vpack.c.b16 %v1555, %v1554
      %v1587 = vpack.c.b16 %v1557, %v1556
      %v1588 = vpack.c.b16 %v1559, %v1558
      %v1589 = vpack.c.b16 %v1561, %v1560
      %v1590 = vpack.c.b16 %v1563, %v1562
      %v1591 = vpack.c.b16 %v1565, %v1564
      %v1592 = vpack.c.b16 %v1567, %v1566
      %v1593 = vpack.c.b16 %v1569, %v1568
      %v1594 = vpack.c.b16 %v1571, %v1570
      %v1595 = vpack.c.b16 %v1573, %v1572
      %v1596 = vpack.c.b16 %v1575, %v1574
      %v1597 = vpack.c.b16 %v1577, %v1576
      %v1598 = vpack.c.b16 %v1579, %v1578
      %v1599 = vpack.c.b16 %v1581, %v1580
      %v1600 = vpack.c.b16 %v1583, %v1582
      %v1601 = vpack.c.b16 %v1585, %v1584
      %v1634 = vunpack.c.l.b16 %v1538
      %v1635 = vunpack.c.l.b16 %v1539
      %v1636 = vunpack.c.l.b16 %v1540
      %v1637 = vunpack.c.l.b16 %v1541
      %v1638 = vunpack.c.l.b16 %v1542
      %v1639 = vunpack.c.l.b16 %v1543
      %v1640 = vunpack.c.l.b16 %v1544
      %v1641 = vunpack.c.l.b16 %v1545
      %v1642 = vunpack.c.l.b16 %v1546
      %v1643 = vunpack.c.l.b16 %v1547
      %v1644 = vunpack.c.l.b16 %v1548
      %v1645 = vunpack.c.l.b16 %v1549
      %v1646 = vunpack.c.l.b16 %v1550
      %v1647 = vunpack.c.l.b16 %v1551
      %v1648 = vunpack.c.l.b16 %v1552
      %v1649 = vunpack.c.l.b16 %v1553
      %v1650 = vpack.c.b16 %v1635, %v1634
      %v1651 = vpack.c.b16 %v1637, %v1636
      %v1652 = vpack.c.b16 %v1639, %v1638
      %v1653 = vpack.c.b16 %v1641, %v1640
      %v1654 = vpack.c.b16 %v1643, %v1642
      %v1655 = vpack.c.b16 %v1645, %v1644
      %v1656 = vpack.c.b16 %v1647, %v1646
      %v1657 = vpack.c.b16 %v1649, %v1648
      %1666 = vmatpush.bf16.msra.mxu0 %v1657
      %1667 = vmatpush.bf16.msra.mxu0 %v1656
      %1668 = vmatpush.bf16.msra.mxu0 %v1655
      %1669 = vmatpush.bf16.msra.mxu0 %v1654
      %1670 = vmatpush.bf16.msra.mxu0 %v1653
      %1671 = vmatpush.bf16.msra.mxu0 %v1652
      %1672 = vmatpush.bf16.msra.mxu0 %v1651
      %1673 = vmatpush.bf16.msra.mxu0 %v1650
      %1674 = vmatmul.bf16.gmra.mxu0 %v1586
      %v1675 = vpop.f32.mrf.mxu0
      %v1676 = vadd.f32 0.0, %v1675
      %v1677 = vpop.f32.mrf.mxu0
      %v1678 = vadd.f32 0.0, %v1677
      %1679 = vmatmul.bf16.gmra.mxu0 %v1587
      %v1680 = vpop.f32.mrf.mxu0
      %v1681 = vadd.f32 0.0, %v1680
      %v1682 = vpop.f32.mrf.mxu0
      %v1683 = vadd.f32 0.0, %v1682
      %1684 = vmatmul.bf16.gmra.mxu0 %v1588
      %v1685 = vpop.f32.mrf.mxu0
      %v1686 = vadd.f32 0.0, %v1685
      %v1687 = vpop.f32.mrf.mxu0
      %v1688 = vadd.f32 0.0, %v1687
      %1689 = vmatmul.bf16.gmra.mxu0 %v1589
      %v1690 = vpop.f32.mrf.mxu0
      %v1691 = vadd.f32 0.0, %v1690
      %v1692 = vpop.f32.mrf.mxu0
      %v1693 = vadd.f32 0.0, %v1692
      %1694 = vmatmul.bf16.gmra.mxu0 %v1590
      %v1695 = vpop.f32.mrf.mxu0
      %v1696 = vadd.f32 0.0, %v1695
      %v1697 = vpop.f32.mrf.mxu0
      %v1698 = vadd.f32 0.0, %v1697
      %1699 = vmatmul.bf16.gmra.mxu0 %v1591
      %v1700 = vpop.f32.mrf.mxu0
      %v1701 = vadd.f32 0.0, %v1700
      %v1702 = vpop.f32.mrf.mxu0
      %v1703 = vadd.f32 0.0, %v1702
      %1704 = vmatmul.bf16.gmra.mxu0 %v1592
      %v1705 = vpop.f32.mrf.mxu0
      %v1706 = vadd.f32 0.0, %v1705
      %v1707 = vpop.f32.mrf.mxu0
      %v1708 = vadd.f32 0.0, %v1707
      %1709 = vmatmul.bf16.gmra.mxu0 %v1593
      %v1710 = vpop.f32.mrf.mxu0
      %v1711 = vadd.f32 0.0, %v1710
      %v1712 = vpop.f32.mrf.mxu0
      %v1713 = vadd.f32 0.0, %v1712
      %1714 = vmatmul.bf16.gmra.mxu0 %v1594
      %v1715 = vpop.f32.mrf.mxu0
      %v1716 = vadd.f32 0.0, %v1715
      %v1717 = vpop.f32.mrf.mxu0
      %v1718 = vadd.f32 0.0, %v1717
      %1719 = vmatmul.bf16.gmra.mxu0 %v1595
      %v1720 = vpop.f32.mrf.mxu0
      %v1721 = vadd.f32 0.0, %v1720
      %v1722 = vpop.f32.mrf.mxu0
      %v1723 = vadd.f32 0.0, %v1722
      %1724 = vmatmul.bf16.gmra.mxu0 %v1596
      %v1725 = vpop.f32.mrf.mxu0
      %v1726 = vadd.f32 0.0, %v1725
      %v1727 = vpop.f32.mrf.mxu0
      %v1728 = vadd.f32 0.0, %v1727
      %1729 = vmatmul.bf16.gmra.mxu0 %v1597
      %v1730 = vpop.f32.mrf.mxu0
      %v1731 = vadd.f32 0.0, %v1730
      %v1732 = vpop.f32.mrf.mxu0
      %v1733 = vadd.f32 0.0, %v1732
      %1734 = vmatmul.bf16.gmra.mxu0 %v1598
      %v1735 = vpop.f32.mrf.mxu0
      %v1736 = vadd.f32 0.0, %v1735
      %v1737 = vpop.f32.mrf.mxu0
      %v1738 = vadd.f32 0.0, %v1737
      %1739 = vmatmul.bf16.gmra.mxu0 %v1599
      %v1740 = vpop.f32.mrf.mxu0
      %v1741 = vadd.f32 0.0, %v1740
      %v1742 = vpop.f32.mrf.mxu0
      %v1743 = vadd.f32 0.0, %v1742
      %1744 = vmatmul.bf16.gmra.mxu0 %v1600
      %v1745 = vpop.f32.mrf.mxu0
      %v1746 = vadd.f32 0.0, %v1745
      %v1747 = vpop.f32.mrf.mxu0
      %v1748 = vadd.f32 0.0, %v1747
      %1749 = vmatmul.bf16.gmra.mxu0 %v1601
      %v1750 = vpop.f32.mrf.mxu0
      %v1751 = vadd.f32 0.0, %v1750
      %v1752 = vpop.f32.mrf.mxu0
      %v1753 = vadd.f32 0.0, %v1752
      %1754 = vdwg.mxu0
      %v1755 = vadd.f32 %v1295, %v1676
      %v1756 = vadd.f32 %v1297, %v1678
      %v1757 = vadd.f32 %v1300, %v1681
      %v1758 = vadd.f32 %v1302, %v1683
      %v1759 = vadd.f32 %v1305, %v1686
      %v1760 = vadd.f32 %v1307, %v1688
      %v1761 = vadd.f32 %v1310, %v1691
      %v1762 = vadd.f32 %v1312, %v1693
      %v1763 = vadd.f32 %v1315, %v1696
      %v1764 = vadd.f32 %v1317, %v1698
      %v1765 = vadd.f32 %v1320, %v1701
      %v1766 = vadd.f32 %v1322, %v1703
      %v1767 = vadd.f32 %v1325, %v1706
      %v1768 = vadd.f32 %v1327, %v1708
      %v1769 = vadd.f32 %v1330, %v1711
      %v1770 = vadd.f32 %v1332, %v1713
      %v1771 = vadd.f32 %v1335, %v1716
      %v1772 = vadd.f32 %v1337, %v1718
      %v1773 = vadd.f32 %v1340, %v1721
      %v1774 = vadd.f32 %v1342, %v1723
      %v1775 = vadd.f32 %v1345, %v1726
      %v1776 = vadd.f32 %v1347, %v1728
      %v1777 = vadd.f32 %v1350, %v1731
      %v1778 = vadd.f32 %v1352, %v1733
      %v1779 = vadd.f32 %v1355, %v1736
      %v1780 = vadd.f32 %v1357, %v1738
      %v1781 = vadd.f32 %v1360, %v1741
      %v1782 = vadd.f32 %v1362, %v1743
      %v1783 = vadd.f32 %v1365, %v1746
      %v1784 = vadd.f32 %v1367, %v1748
      %v1785 = vadd.f32 %v1370, %v1751
      %v1786 = vadd.f32 %v1372, %v1753
      %s1787 = scalar_lea.vmem [#allocation2], 12
      %v1788 = vld [vmem:[%s1787] sm:$0xf]
      %v1789 = vld [vmem:[%s1787 + $0x4] sm:$0xf]
      %v1790 = vld [vmem:[%s1787 + $0xc] sm:$0xf]
      %v1791 = vld [vmem:[%s1787 + $0x10] sm:$0xf]
      %v1792 = vld [vmem:[%s1787 + $0x18] sm:$0xf]
      %v1793 = vld [vmem:[%s1787 + $0x1c] sm:$0xf]
      %v1794 = vld [vmem:[%s1787 + $0x24] sm:$0xf]
      %v1795 = vld [vmem:[%s1787 + $0x28] sm:$0xf]
      %v1796 = vld [vmem:[%s1787 + $0x30] sm:$0xf]
      %v1797 = vld [vmem:[%s1787 + $0x34] sm:$0xf]
      %v1798 = vld [vmem:[%s1787 + $0x3c] sm:$0xf]
      %v1799 = vld [vmem:[%s1787 + $0x40] sm:$0xf]
      %v1800 = vld [vmem:[%s1787 + $0x48] sm:$0xf]
      %v1801 = vld [vmem:[%s1787 + $0x4c] sm:$0xf]
      %v1802 = vld [vmem:[%s1787 + $0x54] sm:$0xf]
      %v1803 = vld [vmem:[%s1787 + $0x58] sm:$0xf]
      %v1804 = vld [vmem:[%s1787 + $0x60] sm:$0xf]
      %v1805 = vld [vmem:[%s1787 + $0x64] sm:$0xf]
      %v1806 = vld [vmem:[%s1787 + $0x6c] sm:$0xf]
      %v1807 = vld [vmem:[%s1787 + $0x70] sm:$0xf]
      %v1808 = vld [vmem:[%s1787 + $0x78] sm:$0xf]
      %v1809 = vld [vmem:[%s1787 + $0x7c] sm:$0xf]
      %v1810 = vld [vmem:[%s1787 + $0x84] sm:$0xf]
      %v1811 = vld [vmem:[%s1787 + $0x88] sm:$0xf]
      %v1812 = vld [vmem:[%s1787 + $0x90] sm:$0xf]
      %v1813 = vld [vmem:[%s1787 + $0x94] sm:$0xf]
      %v1814 = vld [vmem:[%s1787 + $0x9c] sm:$0xf]
      %v1815 = vld [vmem:[%s1787 + $0xa0] sm:$0xf]
      %v1816 = vld [vmem:[%s1787 + $0xa8] sm:$0xf]
      %v1817 = vld [vmem:[%s1787 + $0xac] sm:$0xf]
      %v1818 = vld [vmem:[%s1787 + $0xb4] sm:$0xf]
      %v1819 = vld [vmem:[%s1787 + $0xb8] sm:$0xf]
      %s1820 = scalar_lea.vmem %s2, 192
      %v1821 = vld [vmem:[%s1820] sm:$0xf]
      %v1822 = vld [vmem:[%s1820 + $0x4] sm:$0xf]
      %v1823 = vld [vmem:[%s1820 + $0x8] sm:$0xf]
      %v1824 = vld [vmem:[%s1820 + $0xc] sm:$0xf]
      %v1825 = vld [vmem:[%s1820 + $0x10] sm:$0xf]
      %v1826 = vld [vmem:[%s1820 + $0x14] sm:$0xf]
      %v1827 = vld [vmem:[%s1820 + $0x18] sm:$0xf]
      %v1828 = vld [vmem:[%s1820 + $0x1c] sm:$0xf]
      %v1829 = vld [vmem:[%s1820 + $0x20] sm:$0xf]
      %v1830 = vld [vmem:[%s1820 + $0x24] sm:$0xf]
      %v1831 = vld [vmem:[%s1820 + $0x28] sm:$0xf]
      %v1832 = vld [vmem:[%s1820 + $0x2c] sm:$0xf]
      %v1833 = vld [vmem:[%s1820 + $0x30] sm:$0xf]
      %v1834 = vld [vmem:[%s1820 + $0x34] sm:$0xf]
      %v1835 = vld [vmem:[%s1820 + $0x38] sm:$0xf]
      %v1836 = vld [vmem:[%s1820 + $0x3c] sm:$0xf]
      %v1869 = vunpack.c.l.b16 %v1788
      %v1870 = vunpack.c.l.b16 %v1789
      %v1871 = vunpack.c.l.b16 %v1790
      %v1872 = vunpack.c.l.b16 %v1791
      %v1873 = vunpack.c.l.b16 %v1792
      %v1874 = vunpack.c.l.b16 %v1793
      %v1875 = vunpack.c.l.b16 %v1794
      %v1876 = vunpack.c.l.b16 %v1795
      %v1877 = vunpack.c.l.b16 %v1796
      %v1878 = vunpack.c.l.b16 %v1797
      %v1879 = vunpack.c.l.b16 %v1798
      %v1880 = vunpack.c.l.b16 %v1799
      %v1881 = vunpack.c.l.b16 %v1800
      %v1882 = vunpack.c.l.b16 %v1801
      %v1883 = vunpack.c.l.b16 %v1802
      %v1884 = vunpack.c.l.b16 %v1803
      %v1885 = vunpack.c.l.b16 %v1804
      %v1886 = vunpack.c.l.b16 %v1805
      %v1887 = vunpack.c.l.b16 %v1806
      %v1888 = vunpack.c.l.b16 %v1807
      %v1889 = vunpack.c.l.b16 %v1808
      %v1890 = vunpack.c.l.b16 %v1809
      %v1891 = vunpack.c.l.b16 %v1810
      %v1892 = vunpack.c.l.b16 %v1811
      %v1893 = vunpack.c.l.b16 %v1812
      %v1894 = vunpack.c.l.b16 %v1813
      %v1895 = vunpack.c.l.b16 %v1814
      %v1896 = vunpack.c.l.b16 %v1815
      %v1897 = vunpack.c.l.b16 %v1816
      %v1898 = vunpack.c.l.b16 %v1817
      %v1899 = vunpack.c.l.b16 %v1818
      %v1900 = vunpack.c.l.b16 %v1819
      %v1901 = vpack.c.b16 %v1870, %v1869
      %v1902 = vpack.c.b16 %v1872, %v1871
      %v1903 = vpack.c.b16 %v1874, %v1873
      %v1904 = vpack.c.b16 %v1876, %v1875
      %v1905 = vpack.c.b16 %v1878, %v1877
      %v1906 = vpack.c.b16 %v1880, %v1879
      %v1907 = vpack.c.b16 %v1882, %v1881
      %v1908 = vpack.c.b16 %v1884, %v1883
      %v1909 = vpack.c.b16 %v1886, %v1885
      %v1910 = vpack.c.b16 %v1888, %v1887
      %v1911 = vpack.c.b16 %v1890, %v1889
      %v1912 = vpack.c.b16 %v1892, %v1891
      %v1913 = vpack.c.b16 %v1894, %v1893
      %v1914 = vpack.c.b16 %v1896, %v1895
      %v1915 = vpack.c.b16 %v1898, %v1897
      %v1916 = vpack.c.b16 %v1900, %v1899
      %v1949 = vunpack.c.l.b16 %v1821
      %v1950 = vunpack.c.l.b16 %v1822
      %v1951 = vunpack.c.l.b16 %v1823
      %v1952 = vunpack.c.l.b16 %v1824
      %v1953 = vunpack.c.l.b16 %v1825
      %v1954 = vunpack.c.l.b16 %v1826
      %v1955 = vunpack.c.l.b16 %v1827
      %v1956 = vunpack.c.l.b16 %v1828
      %v1957 = vunpack.c.l.b16 %v1829
      %v1958 = vunpack.c.l.b16 %v1830
      %v1959 = vunpack.c.l.b16 %v1831
      %v1960 = vunpack.c.l.b16 %v1832
      %v1961 = vunpack.c.l.b16 %v1833
      %v1962 = vunpack.c.l.b16 %v1834
      %v1963 = vunpack.c.l.b16 %v1835
      %v1964 = vunpack.c.l.b16 %v1836
      %v1965 = vpack.c.b16 %v1950, %v1949
      %v1966 = vpack.c.b16 %v1952, %v1951
      %v1967 = vpack.c.b16 %v1954, %v1953
      %v1968 = vpack.c.b16 %v1956, %v1955
      %v1969 = vpack.c.b16 %v1958, %v1957
      %v1970 = vpack.c.b16 %v1960, %v1959
      %v1971 = vpack.c.b16 %v1962, %v1961
      %v1972 = vpack.c.b16 %v1964, %v1963
      %1981 = vmatpush.bf16.msra.mxu0 %v1972
      %1982 = vmatpush.bf16.msra.mxu0 %v1971
      %1983 = vmatpush.bf16.msra.mxu0 %v1970
      %1984 = vmatpush.bf16.msra.mxu0 %v1969
      %1985 = vmatpush.bf16.msra.mxu0 %v1968
      %1986 = vmatpush.bf16.msra.mxu0 %v1967
      %1987 = vmatpush.bf16.msra.mxu0 %v1966
      %1988 = vmatpush.bf16.msra.mxu0 %v1965
      %1989 = vmatmul.bf16.gmra.mxu0 %v1901
      %v1990 = vpop.f32.mrf.mxu0
      %v1991 = vadd.f32 0.0, %v1990
      %v1992 = vpop.f32.mrf.mxu0
      %v1993 = vadd.f32 0.0, %v1992
      %1994 = vmatmul.bf16.gmra.mxu0 %v1902
      %v1995 = vpop.f32.mrf.mxu0
      %v1996 = vadd.f32 0.0, %v1995
      %v1997 = vpop.f32.mrf.mxu0
      %v1998 = vadd.f32 0.0, %v1997
      %1999 = vmatmul.bf16.gmra.mxu0 %v1903
      %v2000 = vpop.f32.mrf.mxu0
      %v2001 = vadd.f32 0.0, %v2000
      %v2002 = vpop.f32.mrf.mxu0
      %v2003 = vadd.f32 0.0, %v2002
      %2004 = vmatmul.bf16.gmra.mxu0 %v1904
      %v2005 = vpop.f32.mrf.mxu0
      %v2006 = vadd.f32 0.0, %v2005
      %v2007 = vpop.f32.mrf.mxu0
      %v2008 = vadd.f32 0.0, %v2007
      %2009 = vmatmul.bf16.gmra.mxu0 %v1905
      %v2010 = vpop.f32.mrf.mxu0
      %v2011 = vadd.f32 0.0, %v2010
      %v2012 = vpop.f32.mrf.mxu0
      %v2013 = vadd.f32 0.0, %v2012
      %2014 = vmatmul.bf16.gmra.mxu0 %v1906
      %v2015 = vpop.f32.mrf.mxu0
      %v2016 = vadd.f32 0.0, %v2015
      %v2017 = vpop.f32.mrf.mxu0
      %v2018 = vadd.f32 0.0, %v2017
      %2019 = vmatmul.bf16.gmra.mxu0 %v1907
      %v2020 = vpop.f32.mrf.mxu0
      %v2021 = vadd.f32 0.0, %v2020
      %v2022 = vpop.f32.mrf.mxu0
      %v2023 = vadd.f32 0.0, %v2022
      %2024 = vmatmul.bf16.gmra.mxu0 %v1908
      %v2025 = vpop.f32.mrf.mxu0
      %v2026 = vadd.f32 0.0, %v2025
      %v2027 = vpop.f32.mrf.mxu0
      %v2028 = vadd.f32 0.0, %v2027
      %2029 = vmatmul.bf16.gmra.mxu0 %v1909
      %v2030 = vpop.f32.mrf.mxu0
      %v2031 = vadd.f32 0.0, %v2030
      %v2032 = vpop.f32.mrf.mxu0
      %v2033 = vadd.f32 0.0, %v2032
      %2034 = vmatmul.bf16.gmra.mxu0 %v1910
      %v2035 = vpop.f32.mrf.mxu0
      %v2036 = vadd.f32 0.0, %v2035
      %v2037 = vpop.f32.mrf.mxu0
      %v2038 = vadd.f32 0.0, %v2037
      %2039 = vmatmul.bf16.gmra.mxu0 %v1911
      %v2040 = vpop.f32.mrf.mxu0
      %v2041 = vadd.f32 0.0, %v2040
      %v2042 = vpop.f32.mrf.mxu0
      %v2043 = vadd.f32 0.0, %v2042
      %2044 = vmatmul.bf16.gmra.mxu0 %v1912
      %v2045 = vpop.f32.mrf.mxu0
      %v2046 = vadd.f32 0.0, %v2045
      %v2047 = vpop.f32.mrf.mxu0
      %v2048 = vadd.f32 0.0, %v2047
      %2049 = vmatmul.bf16.gmra.mxu0 %v1913
      %v2050 = vpop.f32.mrf.mxu0
      %v2051 = vadd.f32 0.0, %v2050
      %v2052 = vpop.f32.mrf.mxu0
      %v2053 = vadd.f32 0.0, %v2052
      %2054 = vmatmul.bf16.gmra.mxu0 %v1914
      %v2055 = vpop.f32.mrf.mxu0
      %v2056 = vadd.f32 0.0, %v2055
      %v2057 = vpop.f32.mrf.mxu0
      %v2058 = vadd.f32 0.0, %v2057
      %2059 = vmatmul.bf16.gmra.mxu0 %v1915
      %v2060 = vpop.f32.mrf.mxu0
      %v2061 = vadd.f32 0.0, %v2060
      %v2062 = vpop.f32.mrf.mxu0
      %v2063 = vadd.f32 0.0, %v2062
      %2064 = vmatmul.bf16.gmra.mxu0 %v1916
      %v2065 = vpop.f32.mrf.mxu0
      %v2066 = vadd.f32 0.0, %v2065
      %v2067 = vpop.f32.mrf.mxu0
      %v2068 = vadd.f32 0.0, %v2067
      %2069 = vdwg.mxu0
      %v2070 = vadd.f32 %v1755, %v1991
      %v2071 = vadd.f32 %v1756, %v1993
      %v2072 = vadd.f32 %v1757, %v1996
      %v2073 = vadd.f32 %v1758, %v1998
      %v2074 = vadd.f32 %v1759, %v2001
      %v2075 = vadd.f32 %v1760, %v2003
      %v2076 = vadd.f32 %v1761, %v2006
      %v2077 = vadd.f32 %v1762, %v2008
      %v2078 = vadd.f32 %v1763, %v2011
      %v2079 = vadd.f32 %v1764, %v2013
      %v2080 = vadd.f32 %v1765, %v2016
      %v2081 = vadd.f32 %v1766, %v2018
      %v2082 = vadd.f32 %v1767, %v2021
      %v2083 = vadd.f32 %v1768, %v2023
      %v2084 = vadd.f32 %v1769, %v2026
      %v2085 = vadd.f32 %v1770, %v2028
      %v2086 = vadd.f32 %v1771, %v2031
      %v2087 = vadd.f32 %v1772, %v2033
      %v2088 = vadd.f32 %v1773, %v2036
      %v2089 = vadd.f32 %v1774, %v2038
      %v2090 = vadd.f32 %v1775, %v2041
      %v2091 = vadd.f32 %v1776, %v2043
      %v2092 = vadd.f32 %v1777, %v2046
      %v2093 = vadd.f32 %v1778, %v2048
      %v2094 = vadd.f32 %v1779, %v2051
      %v2095 = vadd.f32 %v1780, %v2053
      %v2096 = vadd.f32 %v1781, %v2056
      %v2097 = vadd.f32 %v1782, %v2058
      %v2098 = vadd.f32 %v1783, %v2061
      %v2099 = vadd.f32 %v1784, %v2063
      %v2100 = vadd.f32 %v1785, %v2066
      %v2101 = vadd.f32 %v1786, %v2068
      %v2102 = vld [vmem:[%s1787] sm:$0xf]
      %v2103 = vld [vmem:[%s1787 + $0x4] sm:$0xf]
      %v2104 = vld [vmem:[%s1787 + $0x8] sm:$0x1]
      %v2105 = vld [vmem:[%s1787 + $0xc] sm:$0xf]
      %v2106 = vld [vmem:[%s1787 + $0x10] sm:$0xf]
      %v2107 = vld [vmem:[%s1787 + $0x14] sm:$0x1]
      %v2108 = vld [vmem:[%s1787 + $0x18] sm:$0xf]
      %v2109 = vld [vmem:[%s1787 + $0x1c] sm:$0xf]
      %v2110 = vld [vmem:[%s1787 + $0x20] sm:$0x1]
      %v2111 = vld [vmem:[%s1787 + $0x24] sm:$0xf]
      %v2112 = vld [vmem:[%s1787 + $0x28] sm:$0xf]
      %v2113 = vld [vmem:[%s1787 + $0x2c] sm:$0x1]
      %v2114 = vld [vmem:[%s1787 + $0x30] sm:$0xf]
      %v2115 = vld [vmem:[%s1787 + $0x34] sm:$0xf]
      %v2116 = vld [vmem:[%s1787 + $0x38] sm:$0x1]
      %v2117 = vld [vmem:[%s1787 + $0x3c] sm:$0xf]
      %v2118 = vld [vmem:[%s1787 + $0x40] sm:$0xf]
      %v2119 = vld [vmem:[%s1787 + $0x44] sm:$0x1]
      %v2120 = vld [vmem:[%s1787 + $0x48] sm:$0xf]
      %v2121 = vld [vmem:[%s1787 + $0x4c] sm:$0xf]
      %v2122 = vld [vmem:[%s1787 + $0x50] sm:$0x1]
      %v2123 = vld [vmem:[%s1787 + $0x54] sm:$0xf]
      %v2124 = vld [vmem:[%s1787 + $0x58] sm:$0xf]
      %v2125 = vld [vmem:[%s1787 + $0x5c] sm:$0x1]
      %v2126 = vld [vmem:[%s1787 + $0x60] sm:$0xf]
      %v2127 = vld [vmem:[%s1787 + $0x64] sm:$0xf]
      %v2128 = vld [vmem:[%s1787 + $0x68] sm:$0x1]
      %v2129 = vld [vmem:[%s1787 + $0x6c] sm:$0xf]
      %v2130 = vld [vmem:[%s1787 + $0x70] sm:$0xf]
      %v2131 = vld [vmem:[%s1787 + $0x74] sm:$0x1]
      %v2132 = vld [vmem:[%s1787 + $0x78] sm:$0xf]
      %v2133 = vld [vmem:[%s1787 + $0x7c] sm:$0xf]
      %v2134 = vld [vmem:[%s1787 + $0x80] sm:$0x1]
      %v2135 = vld [vmem:[%s1787 + $0x84] sm:$0xf]
      %v2136 = vld [vmem:[%s1787 + $0x88] sm:$0xf]
      %v2137 = vld [vmem:[%s1787 + $0x8c] sm:$0x1]
      %v2138 = vld [vmem:[%s1787 + $0x90] sm:$0xf]
      %v2139 = vld [vmem:[%s1787 + $0x94] sm:$0xf]
      %v2140 = vld [vmem:[%s1787 + $0x98] sm:$0x1]
      %v2141 = vld [vmem:[%s1787 + $0x9c] sm:$0xf]
      %v2142 = vld [vmem:[%s1787 + $0xa0] sm:$0xf]
      %v2143 = vld [vmem:[%s1787 + $0xa4] sm:$0x1]
      %v2144 = vld [vmem:[%s1787 + $0xa8] sm:$0xf]
      %v2145 = vld [vmem:[%s1787 + $0xac] sm:$0xf]
      %v2146 = vld [vmem:[%s1787 + $0xb0] sm:$0x1]
      %v2147 = vld [vmem:[%s1787 + $0xb4] sm:$0xf]
      %v2148 = vld [vmem:[%s1787 + $0xb8] sm:$0xf]
      %v2149 = vld [vmem:[%s1787 + $0xbc] sm:$0x1]
      %v2151 = vshrl.u32 %v2102, 16
      %v2153 = vrot.slane %v2151, 4
      %v2154 = vshll.u32 %v2102, 16
      %v2156 = vrot.slane %v2154, 5
      %v2157 = vor.u32 %v2153, %v2156
      %v2158 = vrot.slane %v2157, 4
      %v2160 = vshll.u32 %v2103, 16
      %v2162 = vrot.slane %v2160, 5
      %v2163 = vsel %vm538, %v2158, %v2162
      %v2164 = vshrl.u32 %v2103, 16
      %v2166 = vrot.slane %v2164, 4
      %v2167 = vor.u32 %v2166, %v2162
      %v2168 = vrot.slane %v2167, 4
      %v2170 = vshll.u32 %v2104, 16
      %v2172 = vrot.slane %v2170, 5
      %v2173 = vsel %vm538, %v2168, %v2172
      %v2175 = vshrl.u32 %v2105, 16
      %v2177 = vrot.slane %v2175, 4
      %v2178 = vshll.u32 %v2105, 16
      %v2180 = vrot.slane %v2178, 5
      %v2181 = vor.u32 %v2177, %v2180
      %v2182 = vrot.slane %v2181, 4
      %v2184 = vshll.u32 %v2106, 16
      %v2186 = vrot.slane %v2184, 5
      %v2187 = vsel %vm538, %v2182, %v2186
      %v2188 = vshrl.u32 %v2106, 16
      %v2190 = vrot.slane %v2188, 4
      %v2191 = vor.u32 %v2190, %v2186
      %v2192 = vrot.slane %v2191, 4
      %v2194 = vshll.u32 %v2107, 16
      %v2196 = vrot.slane %v2194, 5
      %v2197 = vsel %vm538, %v2192, %v2196
      %v2199 = vshrl.u32 %v2108, 16
      %v2201 = vrot.slane %v2199, 4
      %v2202 = vshll.u32 %v2108, 16
      %v2204 = vrot.slane %v2202, 5
      %v2205 = vor.u32 %v2201, %v2204
      %v2206 = vrot.slane %v2205, 4
      %v2208 = vshll.u32 %v2109, 16
      %v2210 = vrot.slane %v2208, 5
      %v2211 = vsel %vm538, %v2206, %v2210
      %v2212 = vshrl.u32 %v2109, 16
      %v2214 = vrot.slane %v2212, 4
      %v2215 = vor.u32 %v2214, %v2210
      %v2216 = vrot.slane %v2215, 4
      %v2218 = vshll.u32 %v2110, 16
      %v2220 = vrot.slane %v2218, 5
      %v2221 = vsel %vm538, %v2216, %v2220
      %v2223 = vshrl.u32 %v2111, 16
      %v2225 = vrot.slane %v2223, 4
      %v2226 = vshll.u32 %v2111, 16
      %v2228 = vrot.slane %v2226, 5
      %v2229 = vor.u32 %v2225, %v2228
      %v2230 = vrot.slane %v2229, 4
      %v2232 = vshll.u32 %v2112, 16
      %v2234 = vrot.slane %v2232, 5
      %v2235 = vsel %vm538, %v2230, %v2234
      %v2236 = vshrl.u32 %v2112, 16
      %v2238 = vrot.slane %v2236, 4
      %v2239 = vor.u32 %v2238, %v2234
      %v2240 = vrot.slane %v2239, 4
      %v2242 = vshll.u32 %v2113, 16
      %v2244 = vrot.slane %v2242, 5
      %v2245 = vsel %vm538, %v2240, %v2244
      %v2247 = vshrl.u32 %v2114, 16
      %v2249 = vrot.slane %v2247, 4
      %v2250 = vshll.u32 %v2114, 16
      %v2252 = vrot.slane %v2250, 5
      %v2253 = vor.u32 %v2249, %v2252
      %v2254 = vrot.slane %v2253, 4
      %v2256 = vshll.u32 %v2115, 16
      %v2258 = vrot.slane %v2256, 5
      %v2259 = vsel %vm538, %v2254, %v2258
      %v2260 = vshrl.u32 %v2115, 16
      %v2262 = vrot.slane %v2260, 4
      %v2263 = vor.u32 %v2262, %v2258
      %v2264 = vrot.slane %v2263, 4
      %v2266 = vshll.u32 %v2116, 16
      %v2268 = vrot.slane %v2266, 5
      %v2269 = vsel %vm538, %v2264, %v2268
      %v2271 = vshrl.u32 %v2117, 16
      %v2273 = vrot.slane %v2271, 4
      %v2274 = vshll.u32 %v2117, 16
      %v2276 = vrot.slane %v2274, 5
      %v2277 = vor.u32 %v2273, %v2276
      %v2278 = vrot.slane %v2277, 4
      %v2280 = vshll.u32 %v2118, 16
      %v2282 = vrot.slane %v2280, 5
      %v2283 = vsel %vm538, %v2278, %v2282
      %v2284 = vshrl.u32 %v2118, 16
      %v2286 = vrot.slane %v2284, 4
      %v2287 = vor.u32 %v2286, %v2282
      %v2288 = vrot.slane %v2287, 4
      %v2290 = vshll.u32 %v2119, 16
      %v2292 = vrot.slane %v2290, 5
      %v2293 = vsel %vm538, %v2288, %v2292
      %v2295 = vshrl.u32 %v2120, 16
      %v2297 = vrot.slane %v2295, 4
      %v2298 = vshll.u32 %v2120, 16
      %v2300 = vrot.slane %v2298, 5
      %v2301 = vor.u32 %v2297, %v2300
      %v2302 = vrot.slane %v2301, 4
      %v2304 = vshll.u32 %v2121, 16
      %v2306 = vrot.slane %v2304, 5
      %v2307 = vsel %vm538, %v2302, %v2306
      %v2308 = vshrl.u32 %v2121, 16
      %v2310 = vrot.slane %v2308, 4
      %v2311 = vor.u32 %v2310, %v2306
      %v2312 = vrot.slane %v2311, 4
      %v2314 = vshll.u32 %v2122, 16
      %v2316 = vrot.slane %v2314, 5
      %v2317 = vsel %vm538, %v2312, %v2316
      %v2319 = vshrl.u32 %v2123, 16
      %v2321 = vrot.slane %v2319, 4
      %v2322 = vshll.u32 %v2123, 16
      %v2324 = vrot.slane %v2322, 5
      %v2325 = vor.u32 %v2321, %v2324
      %v2326 = vrot.slane %v2325, 4
      %v2328 = vshll.u32 %v2124, 16
      %v2330 = vrot.slane %v2328, 5
      %v2331 = vsel %vm538, %v2326, %v2330
      %v2332 = vshrl.u32 %v2124, 16
      %v2334 = vrot.slane %v2332, 4
      %v2335 = vor.u32 %v2334, %v2330
      %v2336 = vrot.slane %v2335, 4
      %v2338 = vshll.u32 %v2125, 16
      %v2340 = vrot.slane %v2338, 5
      %v2341 = vsel %vm538, %v2336, %v2340
      %v2343 = vshrl.u32 %v2126, 16
      %v2345 = vrot.slane %v2343, 4
      %v2346 = vshll.u32 %v2126, 16
      %v2348 = vrot.slane %v2346, 5
      %v2349 = vor.u32 %v2345, %v2348
      %v2350 = vrot.slane %v2349, 4
      %v2352 = vshll.u32 %v2127, 16
      %v2354 = vrot.slane %v2352, 5
      %v2355 = vsel %vm538, %v2350, %v2354
      %v2356 = vshrl.u32 %v2127, 16
      %v2358 = vrot.slane %v2356, 4
      %v2359 = vor.u32 %v2358, %v2354
      %v2360 = vrot.slane %v2359, 4
      %v2362 = vshll.u32 %v2128, 16
      %v2364 = vrot.slane %v2362, 5
      %v2365 = vsel %vm538, %v2360, %v2364
      %v2367 = vshrl.u32 %v2129, 16
      %v2369 = vrot.slane %v2367, 4
      %v2370 = vshll.u32 %v2129, 16
      %v2372 = vrot.slane %v2370, 5
      %v2373 = vor.u32 %v2369, %v2372
      %v2374 = vrot.slane %v2373, 4
      %v2376 = vshll.u32 %v2130, 16
      %v2378 = vrot.slane %v2376, 5
      %v2379 = vsel %vm538, %v2374, %v2378
      %v2380 = vshrl.u32 %v2130, 16
      %v2382 = vrot.slane %v2380, 4
      %v2383 = vor.u32 %v2382, %v2378
      %v2384 = vrot.slane %v2383, 4
      %v2386 = vshll.u32 %v2131, 16
      %v2388 = vrot.slane %v2386, 5
      %v2389 = vsel %vm538, %v2384, %v2388
      %v2391 = vshrl.u32 %v2132, 16
      %v2393 = vrot.slane %v2391, 4
      %v2394 = vshll.u32 %v2132, 16
      %v2396 = vrot.slane %v2394, 5
      %v2397 = vor.u32 %v2393, %v2396
      %v2398 = vrot.slane %v2397, 4
      %v2400 = vshll.u32 %v2133, 16
      %v2402 = vrot.slane %v2400, 5
      %v2403 = vsel %vm538, %v2398, %v2402
      %v2404 = vshrl.u32 %v2133, 16
      %v2406 = vrot.slane %v2404, 4
      %v2407 = vor.u32 %v2406, %v2402
      %v2408 = vrot.slane %v2407, 4
      %v2410 = vshll.u32 %v2134, 16
      %v2412 = vrot.slane %v2410, 5
      %v2413 = vsel %vm538, %v2408, %v2412
      %v2415 = vshrl.u32 %v2135, 16
      %v2417 = vrot.slane %v2415, 4
      %v2418 = vshll.u32 %v2135, 16
      %v2420 = vrot.slane %v2418, 5
      %v2421 = vor.u32 %v2417, %v2420
      %v2422 = vrot.slane %v2421, 4
      %v2424 = vshll.u32 %v2136, 16
      %v2426 = vrot.slane %v2424, 5
      %v2427 = vsel %vm538, %v2422, %v2426
      %v2428 = vshrl.u32 %v2136, 16
      %v2430 = vrot.slane %v2428, 4
      %v2431 = vor.u32 %v2430, %v2426
      %v2432 = vrot.slane %v2431, 4
      %v2434 = vshll.u32 %v2137, 16
      %v2436 = vrot.slane %v2434, 5
      %v2437 = vsel %vm538, %v2432, %v2436
      %v2439 = vshrl.u32 %v2138, 16
      %v2441 = vrot.slane %v2439, 4
      %v2442 = vshll.u32 %v2138, 16
      %v2444 = vrot.slane %v2442, 5
      %v2445 = vor.u32 %v2441, %v2444
      %v2446 = vrot.slane %v2445, 4
      %v2448 = vshll.u32 %v2139, 16
      %v2450 = vrot.slane %v2448, 5
      %v2451 = vsel %vm538, %v2446, %v2450
      %v2452 = vshrl.u32 %v2139, 16
      %v2454 = vrot.slane %v2452, 4
      %v2455 = vor.u32 %v2454, %v2450
      %v2456 = vrot.slane %v2455, 4
      %v2458 = vshll.u32 %v2140, 16
      %v2460 = vrot.slane %v2458, 5
      %v2461 = vsel %vm538, %v2456, %v2460
      %v2463 = vshrl.u32 %v2141, 16
      %v2465 = vrot.slane %v2463, 4
      %v2466 = vshll.u32 %v2141, 16
      %v2468 = vrot.slane %v2466, 5
      %v2469 = vor.u32 %v2465, %v2468
      %v2470 = vrot.slane %v2469, 4
      %v2472 = vshll.u32 %v2142, 16
      %v2474 = vrot.slane %v2472, 5
      %v2475 = vsel %vm538, %v2470, %v2474
      %v2476 = vshrl.u32 %v2142, 16
      %v2478 = vrot.slane %v2476, 4
      %v2479 = vor.u32 %v2478, %v2474
      %v2480 = vrot.slane %v2479, 4
      %v2482 = vshll.u32 %v2143, 16
      %v2484 = vrot.slane %v2482, 5
      %v2485 = vsel %vm538, %v2480, %v2484
      %v2487 = vshrl.u32 %v2144, 16
      %v2489 = vrot.slane %v2487, 4
      %v2490 = vshll.u32 %v2144, 16
      %v2492 = vrot.slane %v2490, 5
      %v2493 = vor.u32 %v2489, %v2492
      %v2494 = vrot.slane %v2493, 4
      %v2496 = vshll.u32 %v2145, 16
      %v2498 = vrot.slane %v2496, 5
      %v2499 = vsel %vm538, %v2494, %v2498
      %v2500 = vshrl.u32 %v2145, 16
      %v2502 = vrot.slane %v2500, 4
      %v2503 = vor.u32 %v2502, %v2498
      %v2504 = vrot.slane %v2503, 4
      %v2506 = vshll.u32 %v2146, 16
      %v2508 = vrot.slane %v2506, 5
      %v2509 = vsel %vm538, %v2504, %v2508
      %v2511 = vshrl.u32 %v2147, 16
      %v2513 = vrot.slane %v2511, 4
      %v2514 = vshll.u32 %v2147, 16
      %v2516 = vrot.slane %v2514, 5
      %v2517 = vor.u32 %v2513, %v2516
      %v2518 = vrot.slane %v2517, 4
      %v2520 = vshll.u32 %v2148, 16
      %v2522 = vrot.slane %v2520, 5
      %v2523 = vsel %vm538, %v2518, %v2522
      %v2524 = vshrl.u32 %v2148, 16
      %v2526 = vrot.slane %v2524, 4
      %v2527 = vor.u32 %v2526, %v2522
      %v2528 = vrot.slane %v2527, 4
      %v2530 = vshll.u32 %v2149, 16
      %v2532 = vrot.slane %v2530, 5
      %v2533 = vsel %vm538, %v2528, %v2532
      %s2534 = scalar_lea.vmem %s2, 256
      %v2535 = vld [vmem:[%s2534] sm:$0xf]
      %v2536 = vld [vmem:[%s2534 + $0x4] sm:$0xf]
      %v2537 = vld [vmem:[%s2534 + $0x8] sm:$0xf]
      %v2538 = vld [vmem:[%s2534 + $0xc] sm:$0xf]
      %v2539 = vld [vmem:[%s2534 + $0x10] sm:$0xf]
      %v2540 = vld [vmem:[%s2534 + $0x14] sm:$0xf]
      %v2541 = vld [vmem:[%s2534 + $0x18] sm:$0xf]
      %v2542 = vld [vmem:[%s2534 + $0x1c] sm:$0xf]
      %v2543 = vld [vmem:[%s2534 + $0x20] sm:$0xf]
      %v2544 = vld [vmem:[%s2534 + $0x24] sm:$0xf]
      %v2545 = vld [vmem:[%s2534 + $0x28] sm:$0xf]
      %v2546 = vld [vmem:[%s2534 + $0x2c] sm:$0xf]
      %v2547 = vld [vmem:[%s2534 + $0x30] sm:$0xf]
      %v2548 = vld [vmem:[%s2534 + $0x34] sm:$0xf]
      %v2549 = vld [vmem:[%s2534 + $0x38] sm:$0xf]
      %v2550 = vld [vmem:[%s2534 + $0x3c] sm:$0xf]
      %v2551 = vunpack.c.l.b16 %v2163
      %v2552 = vunpack.c.l.b16 %v2173
      %v2553 = vunpack.c.l.b16 %v2187
      %v2554 = vunpack.c.l.b16 %v2197
      %v2555 = vunpack.c.l.b16 %v2211
      %v2556 = vunpack.c.l.b16 %v2221
      %v2557 = vunpack.c.l.b16 %v2235
      %v2558 = vunpack.c.l.b16 %v2245
      %v2559 = vunpack.c.l.b16 %v2259
      %v2560 = vunpack.c.l.b16 %v2269
      %v2561 = vunpack.c.l.b16 %v2283
      %v2562 = vunpack.c.l.b16 %v2293
      %v2563 = vunpack.c.l.b16 %v2307
      %v2564 = vunpack.c.l.b16 %v2317
      %v2565 = vunpack.c.l.b16 %v2331
      %v2566 = vunpack.c.l.b16 %v2341
      %v2567 = vunpack.c.l.b16 %v2355
      %v2568 = vunpack.c.l.b16 %v2365
      %v2569 = vunpack.c.l.b16 %v2379
      %v2570 = vunpack.c.l.b16 %v2389
      %v2571 = vunpack.c.l.b16 %v2403
      %v2572 = vunpack.c.l.b16 %v2413
      %v2573 = vunpack.c.l.b16 %v2427
      %v2574 = vunpack.c.l.b16 %v2437
      %v2575 = vunpack.c.l.b16 %v2451
      %v2576 = vunpack.c.l.b16 %v2461
      %v2577 = vunpack.c.l.b16 %v2475
      %v2578 = vunpack.c.l.b16 %v2485
      %v2579 = vunpack.c.l.b16 %v2499
      %v2580 = vunpack.c.l.b16 %v2509
      %v2581 = vunpack.c.l.b16 %v2523
      %v2582 = vunpack.c.l.b16 %v2533
      %v2583 = vpack.c.b16 %v2552, %v2551
      %v2584 = vpack.c.b16 %v2554, %v2553
      %v2585 = vpack.c.b16 %v2556, %v2555
      %v2586 = vpack.c.b16 %v2558, %v2557
      %v2587 = vpack.c.b16 %v2560, %v2559
      %v2588 = vpack.c.b16 %v2562, %v2561
      %v2589 = vpack.c.b16 %v2564, %v2563
      %v2590 = vpack.c.b16 %v2566, %v2565
      %v2591 = vpack.c.b16 %v2568, %v2567
      %v2592 = vpack.c.b16 %v2570, %v2569
      %v2593 = vpack.c.b16 %v2572, %v2571
      %v2594 = vpack.c.b16 %v2574, %v2573
      %v2595 = vpack.c.b16 %v2576, %v2575
      %v2596 = vpack.c.b16 %v2578, %v2577
      %v2597 = vpack.c.b16 %v2580, %v2579
      %v2598 = vpack.c.b16 %v2582, %v2581
      %v2631 = vunpack.c.l.b16 %v2535
      %v2632 = vunpack.c.l.b16 %v2536
      %v2633 = vunpack.c.l.b16 %v2537
      %v2634 = vunpack.c.l.b16 %v2538
      %v2635 = vunpack.c.l.b16 %v2539
      %v2636 = vunpack.c.l.b16 %v2540
      %v2637 = vunpack.c.l.b16 %v2541
      %v2638 = vunpack.c.l.b16 %v2542
      %v2639 = vunpack.c.l.b16 %v2543
      %v2640 = vunpack.c.l.b16 %v2544
      %v2641 = vunpack.c.l.b16 %v2545
      %v2642 = vunpack.c.l.b16 %v2546
      %v2643 = vunpack.c.l.b16 %v2547
      %v2644 = vunpack.c.l.b16 %v2548
      %v2645 = vunpack.c.l.b16 %v2549
      %v2646 = vunpack.c.l.b16 %v2550
      %v2647 = vpack.c.b16 %v2632, %v2631
      %v2648 = vpack.c.b16 %v2634, %v2633
      %v2649 = vpack.c.b16 %v2636, %v2635
      %v2650 = vpack.c.b16 %v2638, %v2637
      %v2651 = vpack.c.b16 %v2640, %v2639
      %v2652 = vpack.c.b16 %v2642, %v2641
      %v2653 = vpack.c.b16 %v2644, %v2643
      %v2654 = vpack.c.b16 %v2646, %v2645
      %2663 = vmatpush.bf16.msra.mxu0 %v2654
      %2664 = vmatpush.bf16.msra.mxu0 %v2653
      %2665 = vmatpush.bf16.msra.mxu0 %v2652
      %2666 = vmatpush.bf16.msra.mxu0 %v2651
      %2667 = vmatpush.bf16.msra.mxu0 %v2650
      %2668 = vmatpush.bf16.msra.mxu0 %v2649
      %2669 = vmatpush.bf16.msra.mxu0 %v2648
      %2670 = vmatpush.bf16.msra.mxu0 %v2647
      %2671 = vmatmul.bf16.gmra.mxu0 %v2583
      %v2672 = vpop.f32.mrf.mxu0
      %v2673 = vadd.f32 0.0, %v2672
      %v2674 = vpop.f32.mrf.mxu0
      %v2675 = vadd.f32 0.0, %v2674
      %2676 = vmatmul.bf16.gmra.mxu0 %v2584
      %v2677 = vpop.f32.mrf.mxu0
      %v2678 = vadd.f32 0.0, %v2677
      %v2679 = vpop.f32.mrf.mxu0
      %v2680 = vadd.f32 0.0, %v2679
      %2681 = vmatmul.bf16.gmra.mxu0 %v2585
      %v2682 = vpop.f32.mrf.mxu0
      %v2683 = vadd.f32 0.0, %v2682
      %v2684 = vpop.f32.mrf.mxu0
      %v2685 = vadd.f32 0.0, %v2684
      %2686 = vmatmul.bf16.gmra.mxu0 %v2586
      %v2687 = vpop.f32.mrf.mxu0
      %v2688 = vadd.f32 0.0, %v2687
      %v2689 = vpop.f32.mrf.mxu0
      %v2690 = vadd.f32 0.0, %v2689
      %2691 = vmatmul.bf16.gmra.mxu0 %v2587
      %v2692 = vpop.f32.mrf.mxu0
      %v2693 = vadd.f32 0.0, %v2692
      %v2694 = vpop.f32.mrf.mxu0
      %v2695 = vadd.f32 0.0, %v2694
      %2696 = vmatmul.bf16.gmra.mxu0 %v2588
      %v2697 = vpop.f32.mrf.mxu0
      %v2698 = vadd.f32 0.0, %v2697
      %v2699 = vpop.f32.mrf.mxu0
      %v2700 = vadd.f32 0.0, %v2699
      %2701 = vmatmul.bf16.gmra.mxu0 %v2589
      %v2702 = vpop.f32.mrf.mxu0
      %v2703 = vadd.f32 0.0, %v2702
      %v2704 = vpop.f32.mrf.mxu0
      %v2705 = vadd.f32 0.0, %v2704
      %2706 = vmatmul.bf16.gmra.mxu0 %v2590
      %v2707 = vpop.f32.mrf.mxu0
      %v2708 = vadd.f32 0.0, %v2707
      %v2709 = vpop.f32.mrf.mxu0
      %v2710 = vadd.f32 0.0, %v2709
      %2711 = vmatmul.bf16.gmra.mxu0 %v2591
      %v2712 = vpop.f32.mrf.mxu0
      %v2713 = vadd.f32 0.0, %v2712
      %v2714 = vpop.f32.mrf.mxu0
      %v2715 = vadd.f32 0.0, %v2714
      %2716 = vmatmul.bf16.gmra.mxu0 %v2592
      %v2717 = vpop.f32.mrf.mxu0
      %v2718 = vadd.f32 0.0, %v2717
      %v2719 = vpop.f32.mrf.mxu0
      %v2720 = vadd.f32 0.0, %v2719
      %2721 = vmatmul.bf16.gmra.mxu0 %v2593
      %v2722 = vpop.f32.mrf.mxu0
      %v2723 = vadd.f32 0.0, %v2722
      %v2724 = vpop.f32.mrf.mxu0
      %v2725 = vadd.f32 0.0, %v2724
      %2726 = vmatmul.bf16.gmra.mxu0 %v2594
      %v2727 = vpop.f32.mrf.mxu0
      %v2728 = vadd.f32 0.0, %v2727
      %v2729 = vpop.f32.mrf.mxu0
      %v2730 = vadd.f32 0.0, %v2729
      %2731 = vmatmul.bf16.gmra.mxu0 %v2595
      %v2732 = vpop.f32.mrf.mxu0
      %v2733 = vadd.f32 0.0, %v2732
      %v2734 = vpop.f32.mrf.mxu0
      %v2735 = vadd.f32 0.0, %v2734
      %2736 = vmatmul.bf16.gmra.mxu0 %v2596
      %v2737 = vpop.f32.mrf.mxu0
      %v2738 = vadd.f32 0.0, %v2737
      %v2739 = vpop.f32.mrf.mxu0
      %v2740 = vadd.f32 0.0, %v2739
      %2741 = vmatmul.bf16.gmra.mxu0 %v2597
      %v2742 = vpop.f32.mrf.mxu0
      %v2743 = vadd.f32 0.0, %v2742
      %v2744 = vpop.f32.mrf.mxu0
      %v2745 = vadd.f32 0.0, %v2744
      %2746 = vmatmul.bf16.gmra.mxu0 %v2598
      %v2747 = vpop.f32.mrf.mxu0
      %v2748 = vadd.f32 0.0, %v2747
      %v2749 = vpop.f32.mrf.mxu0
      %v2750 = vadd.f32 0.0, %v2749
      %2751 = vdwg.mxu0
      %v2752 = vadd.f32 %v2070, %v2673
      %v2753 = vadd.f32 %v2071, %v2675
      %v2754 = vadd.f32 %v2072, %v2678
      %v2755 = vadd.f32 %v2073, %v2680
      %v2756 = vadd.f32 %v2074, %v2683
      %v2757 = vadd.f32 %v2075, %v2685
      %v2758 = vadd.f32 %v2076, %v2688
      %v2759 = vadd.f32 %v2077, %v2690
      %v2760 = vadd.f32 %v2078, %v2693
      %v2761 = vadd.f32 %v2079, %v2695
      %v2762 = vadd.f32 %v2080, %v2698
      %v2763 = vadd.f32 %v2081, %v2700
      %v2764 = vadd.f32 %v2082, %v2703
      %v2765 = vadd.f32 %v2083, %v2705
      %v2766 = vadd.f32 %v2084, %v2708
      %v2767 = vadd.f32 %v2085, %v2710
      %v2768 = vadd.f32 %v2086, %v2713
      %v2769 = vadd.f32 %v2087, %v2715
      %v2770 = vadd.f32 %v2088, %v2718
      %v2771 = vadd.f32 %v2089, %v2720
      %v2772 = vadd.f32 %v2090, %v2723
      %v2773 = vadd.f32 %v2091, %v2725
      %v2774 = vadd.f32 %v2092, %v2728
      %v2775 = vadd.f32 %v2093, %v2730
      %v2776 = vadd.f32 %v2094, %v2733
      %v2777 = vadd.f32 %v2095, %v2735
      %v2778 = vadd.f32 %v2096, %v2738
      %v2779 = vadd.f32 %v2097, %v2740
      %v2780 = vadd.f32 %v2098, %v2743
      %v2781 = vadd.f32 %v2099, %v2745
      %v2782 = vadd.f32 %v2100, %v2748
      %v2783 = vadd.f32 %v2101, %v2750
      %v2784 = vld [vmem:[%s1787] sm:$0xe]
      %v2785 = vld [vmem:[%s1787 + $0xc] sm:$0xe]
      %v2786 = vld [vmem:[%s1787 + $0x18] sm:$0xe]
      %v2787 = vld [vmem:[%s1787 + $0x24] sm:$0xe]
      %v2788 = vld [vmem:[%s1787 + $0x30] sm:$0xe]
      %v2789 = vld [vmem:[%s1787 + $0x3c] sm:$0xe]
      %v2790 = vld [vmem:[%s1787 + $0x48] sm:$0xe]
      %v2791 = vld [vmem:[%s1787 + $0x54] sm:$0xe]
      %v2792 = vld [vmem:[%s1787 + $0x60] sm:$0xe]
      %v2793 = vld [vmem:[%s1787 + $0x6c] sm:$0xe]
      %v2794 = vld [vmem:[%s1787 + $0x78] sm:$0xe]
      %v2795 = vld [vmem:[%s1787 + $0x84] sm:$0xe]
      %v2796 = vld [vmem:[%s1787 + $0x90] sm:$0xe]
      %v2797 = vld [vmem:[%s1787 + $0x9c] sm:$0xe]
      %v2798 = vld [vmem:[%s1787 + $0xa8] sm:$0xe]
      %v2799 = vld [vmem:[%s1787 + $0xb4] sm:$0xe]
      %v2848 = vrot.slane %v2784, 5
      %v2849 = vrot.slane %v2848, 4
      %v2850 = vrot.slane %v2103, 5
      %v2851 = vsel %vm1424, %v2849, %v2850
      %v2852 = vrot.slane %v2850, 4
      %v2853 = vrot.slane %v2104, 5
      %v2854 = vsel %vm1424, %v2852, %v2853
      %v2855 = vrot.slane %v2785, 5
      %v2856 = vrot.slane %v2855, 4
      %v2857 = vrot.slane %v2106, 5
      %v2858 = vsel %vm1424, %v2856, %v2857
      %v2859 = vrot.slane %v2857, 4
      %v2860 = vrot.slane %v2107, 5
      %v2861 = vsel %vm1424, %v2859, %v2860
      %v2862 = vrot.slane %v2786, 5
      %v2863 = vrot.slane %v2862, 4
      %v2864 = vrot.slane %v2109, 5
      %v2865 = vsel %vm1424, %v2863, %v2864
      %v2866 = vrot.slane %v2864, 4
      %v2867 = vrot.slane %v2110, 5
      %v2868 = vsel %vm1424, %v2866, %v2867
      %v2869 = vrot.slane %v2787, 5
      %v2870 = vrot.slane %v2869, 4
      %v2871 = vrot.slane %v2112, 5
      %v2872 = vsel %vm1424, %v2870, %v2871
      %v2873 = vrot.slane %v2871, 4
      %v2874 = vrot.slane %v2113, 5
      %v2875 = vsel %vm1424, %v2873, %v2874
      %v2876 = vrot.slane %v2788, 5
      %v2877 = vrot.slane %v2876, 4
      %v2878 = vrot.slane %v2115, 5
      %v2879 = vsel %vm1424, %v2877, %v2878
      %v2880 = vrot.slane %v2878, 4
      %v2881 = vrot.slane %v2116, 5
      %v2882 = vsel %vm1424, %v2880, %v2881
      %v2883 = vrot.slane %v2789, 5
      %v2884 = vrot.slane %v2883, 4
      %v2885 = vrot.slane %v2118, 5
      %v2886 = vsel %vm1424, %v2884, %v2885
      %v2887 = vrot.slane %v2885, 4
      %v2888 = vrot.slane %v2119, 5
      %v2889 = vsel %vm1424, %v2887, %v2888
      %v2890 = vrot.slane %v2790, 5
      %v2891 = vrot.slane %v2890, 4
      %v2892 = vrot.slane %v2121, 5
      %v2893 = vsel %vm1424, %v2891, %v2892
      %v2894 = vrot.slane %v2892, 4
      %v2895 = vrot.slane %v2122, 5
      %v2896 = vsel %vm1424, %v2894, %v2895
      %v2897 = vrot.slane %v2791, 5
      %v2898 = vrot.slane %v2897, 4
      %v2899 = vrot.slane %v2124, 5
      %v2900 = vsel %vm1424, %v2898, %v2899
      %v2901 = vrot.slane %v2899, 4
      %v2902 = vrot.slane %v2125, 5
      %v2903 = vsel %vm1424, %v2901, %v2902
      %v2904 = vrot.slane %v2792, 5
      %v2905 = vrot.slane %v2904, 4
      %v2906 = vrot.slane %v2127, 5
      %v2907 = vsel %vm1424, %v2905, %v2906
      %v2908 = vrot.slane %v2906, 4
      %v2909 = vrot.slane %v2128, 5
      %v2910 = vsel %vm1424, %v2908, %v2909
      %v2911 = vrot.slane %v2793, 5
      %v2912 = vrot.slane %v2911, 4
      %v2913 = vrot.slane %v2130, 5
      %v2914 = vsel %vm1424, %v2912, %v2913
      %v2915 = vrot.slane %v2913, 4
      %v2916 = vrot.slane %v2131, 5
      %v2917 = vsel %vm1424, %v2915, %v2916
      %v2918 = vrot.slane %v2794, 5
      %v2919 = vrot.slane %v2918, 4
      %v2920 = vrot.slane %v2133, 5
      %v2921 = vsel %vm1424, %v2919, %v2920
      %v2922 = vrot.slane %v2920, 4
      %v2923 = vrot.slane %v2134, 5
      %v2924 = vsel %vm1424, %v2922, %v2923
      %v2925 = vrot.slane %v2795, 5
      %v2926 = vrot.slane %v2925, 4
      %v2927 = vrot.slane %v2136, 5
      %v2928 = vsel %vm1424, %v2926, %v2927
      %v2929 = vrot.slane %v2927, 4
      %v2930 = vrot.slane %v2137, 5
      %v2931 = vsel %vm1424, %v2929, %v2930
      %v2932 = vrot.slane %v2796, 5
      %v2933 = vrot.slane %v2932, 4
      %v2934 = vrot.slane %v2139, 5
      %v2935 = vsel %vm1424, %v2933, %v2934
      %v2936 = vrot.slane %v2934, 4
      %v2937 = vrot.slane %v2140, 5
      %v2938 = vsel %vm1424, %v2936, %v2937
      %v2939 = vrot.slane %v2797, 5
      %v2940 = vrot.slane %v2939, 4
      %v2941 = vrot.slane %v2142, 5
      %v2942 = vsel %vm1424, %v2940, %v2941
      %v2943 = vrot.slane %v2941, 4
      %v2944 = vrot.slane %v2143, 5
      %v2945 = vsel %vm1424, %v2943, %v2944
      %v2946 = vrot.slane %v2798, 5
      %v2947 = vrot.slane %v2946, 4
      %v2948 = vrot.slane %v2145, 5
      %v2949 = vsel %vm1424, %v2947, %v2948
      %v2950 = vrot.slane %v2948, 4
      %v2951 = vrot.slane %v2146, 5
      %v2952 = vsel %vm1424, %v2950, %v2951
      %v2953 = vrot.slane %v2799, 5
      %v2954 = vrot.slane %v2953, 4
      %v2955 = vrot.slane %v2148, 5
      %v2956 = vsel %vm1424, %v2954, %v2955
      %v2957 = vrot.slane %v2955, 4
      %v2958 = vrot.slane %v2149, 5
      %v2959 = vsel %vm1424, %v2957, %v2958
      %s2960 = scalar_lea.vmem %s2, 320
      %v2961 = vld [vmem:[%s2960] sm:$0xf]
      %v2962 = vld [vmem:[%s2960 + $0x4] sm:$0xf]
      %v2963 = vld [vmem:[%s2960 + $0x8] sm:$0xf]
      %v2964 = vld [vmem:[%s2960 + $0xc] sm:$0xf]
      %v2965 = vld [vmem:[%s2960 + $0x10] sm:$0xf]
      %v2966 = vld [vmem:[%s2960 + $0x14] sm:$0xf]
      %v2967 = vld [vmem:[%s2960 + $0x18] sm:$0xf]
      %v2968 = vld [vmem:[%s2960 + $0x1c] sm:$0xf]
      %v2969 = vld [vmem:[%s2960 + $0x20] sm:$0xf]
      %v2970 = vld [vmem:[%s2960 + $0x24] sm:$0xf]
      %v2971 = vld [vmem:[%s2960 + $0x28] sm:$0xf]
      %v2972 = vld [vmem:[%s2960 + $0x2c] sm:$0xf]
      %v2973 = vld [vmem:[%s2960 + $0x30] sm:$0xf]
      %v2974 = vld [vmem:[%s2960 + $0x34] sm:$0xf]
      %v2975 = vld [vmem:[%s2960 + $0x38] sm:$0xf]
      %v2976 = vld [vmem:[%s2960 + $0x3c] sm:$0xf]
      %v2977 = vunpack.c.l.b16 %v2851
      %v2978 = vunpack.c.l.b16 %v2854
      %v2979 = vunpack.c.l.b16 %v2858
      %v2980 = vunpack.c.l.b16 %v2861
      %v2981 = vunpack.c.l.b16 %v2865
      %v2982 = vunpack.c.l.b16 %v2868
      %v2983 = vunpack.c.l.b16 %v2872
      %v2984 = vunpack.c.l.b16 %v2875
      %v2985 = vunpack.c.l.b16 %v2879
      %v2986 = vunpack.c.l.b16 %v2882
      %v2987 = vunpack.c.l.b16 %v2886
      %v2988 = vunpack.c.l.b16 %v2889
      %v2989 = vunpack.c.l.b16 %v2893
      %v2990 = vunpack.c.l.b16 %v2896
      %v2991 = vunpack.c.l.b16 %v2900
      %v2992 = vunpack.c.l.b16 %v2903
      %v2993 = vunpack.c.l.b16 %v2907
      %v2994 = vunpack.c.l.b16 %v2910
      %v2995 = vunpack.c.l.b16 %v2914
      %v2996 = vunpack.c.l.b16 %v2917
      %v2997 = vunpack.c.l.b16 %v2921
      %v2998 = vunpack.c.l.b16 %v2924
      %v2999 = vunpack.c.l.b16 %v2928
      %v3000 = vunpack.c.l.b16 %v2931
      %v3001 = vunpack.c.l.b16 %v2935
      %v3002 = vunpack.c.l.b16 %v2938
      %v3003 = vunpack.c.l.b16 %v2942
      %v3004 = vunpack.c.l.b16 %v2945
      %v3005 = vunpack.c.l.b16 %v2949
      %v3006 = vunpack.c.l.b16 %v2952
      %v3007 = vunpack.c.l.b16 %v2956
      %v3008 = vunpack.c.l.b16 %v2959
      %v3009 = vpack.c.b16 %v2978, %v2977
      %v3010 = vpack.c.b16 %v2980, %v2979
      %v3011 = vpack.c.b16 %v2982, %v2981
      %v3012 = vpack.c.b16 %v2984, %v2983
      %v3013 = vpack.c.b16 %v2986, %v2985
      %v3014 = vpack.c.b16 %v2988, %v2987
      %v3015 = vpack.c.b16 %v2990, %v2989
      %v3016 = vpack.c.b16 %v2992, %v2991
      %v3017 = vpack.c.b16 %v2994, %v2993
      %v3018 = vpack.c.b16 %v2996, %v2995
      %v3019 = vpack.c.b16 %v2998, %v2997
      %v3020 = vpack.c.b16 %v3000, %v2999
      %v3021 = vpack.c.b16 %v3002, %v3001
      %v3022 = vpack.c.b16 %v3004, %v3003
      %v3023 = vpack.c.b16 %v3006, %v3005
      %v3024 = vpack.c.b16 %v3008, %v3007
      %v3057 = vunpack.c.l.b16 %v2961
      %v3058 = vunpack.c.l.b16 %v2962
      %v3059 = vunpack.c.l.b16 %v2963
      %v3060 = vunpack.c.l.b16 %v2964
      %v3061 = vunpack.c.l.b16 %v2965
      %v3062 = vunpack.c.l.b16 %v2966
      %v3063 = vunpack.c.l.b16 %v2967
      %v3064 = vunpack.c.l.b16 %v2968
      %v3065 = vunpack.c.l.b16 %v2969
      %v3066 = vunpack.c.l.b16 %v2970
      %v3067 = vunpack.c.l.b16 %v2971
      %v3068 = vunpack.c.l.b16 %v2972
      %v3069 = vunpack.c.l.b16 %v2973
      %v3070 = vunpack.c.l.b16 %v2974
      %v3071 = vunpack.c.l.b16 %v2975
      %v3072 = vunpack.c.l.b16 %v2976
      %v3073 = vpack.c.b16 %v3058, %v3057
      %v3074 = vpack.c.b16 %v3060, %v3059
      %v3075 = vpack.c.b16 %v3062, %v3061
      %v3076 = vpack.c.b16 %v3064, %v3063
      %v3077 = vpack.c.b16 %v3066, %v3065
      %v3078 = vpack.c.b16 %v3068, %v3067
      %v3079 = vpack.c.b16 %v3070, %v3069
      %v3080 = vpack.c.b16 %v3072, %v3071
      %3089 = vmatpush.bf16.msra.mxu0 %v3080
      %3090 = vmatpush.bf16.msra.mxu0 %v3079
      %3091 = vmatpush.bf16.msra.mxu0 %v3078
      %3092 = vmatpush.bf16.msra.mxu0 %v3077
      %3093 = vmatpush.bf16.msra.mxu0 %v3076
      %3094 = vmatpush.bf16.msra.mxu0 %v3075
      %3095 = vmatpush.bf16.msra.mxu0 %v3074
      %3096 = vmatpush.bf16.msra.mxu0 %v3073
      %3097 = vmatmul.bf16.gmra.mxu0 %v3009
      %v3098 = vpop.f32.mrf.mxu0
      %v3099 = vadd.f32 0.0, %v3098
      %v3100 = vpop.f32.mrf.mxu0
      %v3101 = vadd.f32 0.0, %v3100
      %3102 = vmatmul.bf16.gmra.mxu0 %v3010
      %v3103 = vpop.f32.mrf.mxu0
      %v3104 = vadd.f32 0.0, %v3103
      %v3105 = vpop.f32.mrf.mxu0
      %v3106 = vadd.f32 0.0, %v3105
      %3107 = vmatmul.bf16.gmra.mxu0 %v3011
      %v3108 = vpop.f32.mrf.mxu0
      %v3109 = vadd.f32 0.0, %v3108
      %v3110 = vpop.f32.mrf.mxu0
      %v3111 = vadd.f32 0.0, %v3110
      %3112 = vmatmul.bf16.gmra.mxu0 %v3012
      %v3113 = vpop.f32.mrf.mxu0
      %v3114 = vadd.f32 0.0, %v3113
      %v3115 = vpop.f32.mrf.mxu0
      %v3116 = vadd.f32 0.0, %v3115
      %3117 = vmatmul.bf16.gmra.mxu0 %v3013
      %v3118 = vpop.f32.mrf.mxu0
      %v3119 = vadd.f32 0.0, %v3118
      %v3120 = vpop.f32.mrf.mxu0
      %v3121 = vadd.f32 0.0, %v3120
      %3122 = vmatmul.bf16.gmra.mxu0 %v3014
      %v3123 = vpop.f32.mrf.mxu0
      %v3124 = vadd.f32 0.0, %v3123
      %v3125 = vpop.f32.mrf.mxu0
      %v3126 = vadd.f32 0.0, %v3125
      %3127 = vmatmul.bf16.gmra.mxu0 %v3015
      %v3128 = vpop.f32.mrf.mxu0
      %v3129 = vadd.f32 0.0, %v3128
      %v3130 = vpop.f32.mrf.mxu0
      %v3131 = vadd.f32 0.0, %v3130
      %3132 = vmatmul.bf16.gmra.mxu0 %v3016
      %v3133 = vpop.f32.mrf.mxu0
      %v3134 = vadd.f32 0.0, %v3133
      %v3135 = vpop.f32.mrf.mxu0
      %v3136 = vadd.f32 0.0, %v3135
      %3137 = vmatmul.bf16.gmra.mxu0 %v3017
      %v3138 = vpop.f32.mrf.mxu0
      %v3139 = vadd.f32 0.0, %v3138
      %v3140 = vpop.f32.mrf.mxu0
      %v3141 = vadd.f32 0.0, %v3140
      %3142 = vmatmul.bf16.gmra.mxu0 %v3018
      %v3143 = vpop.f32.mrf.mxu0
      %v3144 = vadd.f32 0.0, %v3143
      %v3145 = vpop.f32.mrf.mxu0
      %v3146 = vadd.f32 0.0, %v3145
      %3147 = vmatmul.bf16.gmra.mxu0 %v3019
      %v3148 = vpop.f32.mrf.mxu0
      %v3149 = vadd.f32 0.0, %v3148
      %v3150 = vpop.f32.mrf.mxu0
      %v3151 = vadd.f32 0.0, %v3150
      %3152 = vmatmul.bf16.gmra.mxu0 %v3020
      %v3153 = vpop.f32.mrf.mxu0
      %v3154 = vadd.f32 0.0, %v3153
      %v3155 = vpop.f32.mrf.mxu0
      %v3156 = vadd.f32 0.0, %v3155
      %3157 = vmatmul.bf16.gmra.mxu0 %v3021
      %v3158 = vpop.f32.mrf.mxu0
      %v3159 = vadd.f32 0.0, %v3158
      %v3160 = vpop.f32.mrf.mxu0
      %v3161 = vadd.f32 0.0, %v3160
      %3162 = vmatmul.bf16.gmra.mxu0 %v3022
      %v3163 = vpop.f32.mrf.mxu0
      %v3164 = vadd.f32 0.0, %v3163
      %v3165 = vpop.f32.mrf.mxu0
      %v3166 = vadd.f32 0.0, %v3165
      %3167 = vmatmul.bf16.gmra.mxu0 %v3023
      %v3168 = vpop.f32.mrf.mxu0
      %v3169 = vadd.f32 0.0, %v3168
      %v3170 = vpop.f32.mrf.mxu0
      %v3171 = vadd.f32 0.0, %v3170
      %3172 = vmatmul.bf16.gmra.mxu0 %v3024
      %v3173 = vpop.f32.mrf.mxu0
      %v3174 = vadd.f32 0.0, %v3173
      %v3175 = vpop.f32.mrf.mxu0
      %v3176 = vadd.f32 0.0, %v3175
      %3177 = vdwg.mxu0
      %v3178 = vadd.f32 %v2752, %v3099
      %v3179 = vadd.f32 %v2753, %v3101
      %v3180 = vadd.f32 %v2754, %v3104
      %v3181 = vadd.f32 %v2755, %v3106
      %v3182 = vadd.f32 %v2756, %v3109
      %v3183 = vadd.f32 %v2757, %v3111
      %v3184 = vadd.f32 %v2758, %v3114
      %v3185 = vadd.f32 %v2759, %v3116
      %v3186 = vadd.f32 %v2760, %v3119
      %v3187 = vadd.f32 %v2761, %v3121
      %v3188 = vadd.f32 %v2762, %v3124
      %v3189 = vadd.f32 %v2763, %v3126
      %v3190 = vadd.f32 %v2764, %v3129
      %v3191 = vadd.f32 %v2765, %v3131
      %v3192 = vadd.f32 %v2766, %v3134
      %v3193 = vadd.f32 %v2767, %v3136
      %v3194 = vadd.f32 %v2768, %v3139
      %v3195 = vadd.f32 %v2769, %v3141
      %v3196 = vadd.f32 %v2770, %v3144
      %v3197 = vadd.f32 %v2771, %v3146
      %v3198 = vadd.f32 %v2772, %v3149
      %v3199 = vadd.f32 %v2773, %v3151
      %v3200 = vadd.f32 %v2774, %v3154
      %v3201 = vadd.f32 %v2775, %v3156
      %v3202 = vadd.f32 %v2776, %v3159
      %v3203 = vadd.f32 %v2777, %v3161
      %v3204 = vadd.f32 %v2778, %v3164
      %v3205 = vadd.f32 %v2779, %v3166
      %v3206 = vadd.f32 %v2780, %v3169
      %v3207 = vadd.f32 %v2781, %v3171
      %v3208 = vadd.f32 %v2782, %v3174
      %v3209 = vadd.f32 %v2783, %v3176
      %s3210 = scalar_lea.vmem [#allocation2], 24
      %v3211 = vld [vmem:[%s3210] sm:$0xf]
      %v3212 = vld [vmem:[%s3210 + $0x4] sm:$0xf]
      %v3213 = vld [vmem:[%s3210 + $0xc] sm:$0xf]
      %v3214 = vld [vmem:[%s3210 + $0x10] sm:$0xf]
      %v3215 = vld [vmem:[%s3210 + $0x18] sm:$0xf]
      %v3216 = vld [vmem:[%s3210 + $0x1c] sm:$0xf]
      %v3217 = vld [vmem:[%s3210 + $0x24] sm:$0xf]
      %v3218 = vld [vmem:[%s3210 + $0x28] sm:$0xf]
      %v3219 = vld [vmem:[%s3210 + $0x30] sm:$0xf]
      %v3220 = vld [vmem:[%s3210 + $0x34] sm:$0xf]
      %v3221 = vld [vmem:[%s3210 + $0x3c] sm:$0xf]
      %v3222 = vld [vmem:[%s3210 + $0x40] sm:$0xf]
      %v3223 = vld [vmem:[%s3210 + $0x48] sm:$0xf]
      %v3224 = vld [vmem:[%s3210 + $0x4c] sm:$0xf]
      %v3225 = vld [vmem:[%s3210 + $0x54] sm:$0xf]
      %v3226 = vld [vmem:[%s3210 + $0x58] sm:$0xf]
      %v3227 = vld [vmem:[%s3210 + $0x60] sm:$0xf]
      %v3228 = vld [vmem:[%s3210 + $0x64] sm:$0xf]
      %v3229 = vld [vmem:[%s3210 + $0x6c] sm:$0xf]
      %v3230 = vld [vmem:[%s3210 + $0x70] sm:$0xf]
      %v3231 = vld [vmem:[%s3210 + $0x78] sm:$0xf]
      %v3232 = vld [vmem:[%s3210 + $0x7c] sm:$0xf]
      %v3233 = vld [vmem:[%s3210 + $0x84] sm:$0xf]
      %v3234 = vld [vmem:[%s3210 + $0x88] sm:$0xf]
      %v3235 = vld [vmem:[%s3210 + $0x90] sm:$0xf]
      %v3236 = vld [vmem:[%s3210 + $0x94] sm:$0xf]
      %v3237 = vld [vmem:[%s3210 + $0x9c] sm:$0xf]
      %v3238 = vld [vmem:[%s3210 + $0xa0] sm:$0xf]
      %v3239 = vld [vmem:[%s3210 + $0xa8] sm:$0xf]
      %v3240 = vld [vmem:[%s3210 + $0xac] sm:$0xf]
      %v3241 = vld [vmem:[%s3210 + $0xb4] sm:$0xf]
      %v3242 = vld [vmem:[%s3210 + $0xb8] sm:$0xf]
      %s3243 = scalar_lea.vmem %s2, 384
      %v3244 = vld [vmem:[%s3243] sm:$0xf]
      %v3245 = vld [vmem:[%s3243 + $0x4] sm:$0xf]
      %v3246 = vld [vmem:[%s3243 + $0x8] sm:$0xf]
      %v3247 = vld [vmem:[%s3243 + $0xc] sm:$0xf]
      %v3248 = vld [vmem:[%s3243 + $0x10] sm:$0xf]
      %v3249 = vld [vmem:[%s3243 + $0x14] sm:$0xf]
      %v3250 = vld [vmem:[%s3243 + $0x18] sm:$0xf]
      %v3251 = vld [vmem:[%s3243 + $0x1c] sm:$0xf]
      %v3252 = vld [vmem:[%s3243 + $0x20] sm:$0xf]
      %v3253 = vld [vmem:[%s3243 + $0x24] sm:$0xf]
      %v3254 = vld [vmem:[%s3243 + $0x28] sm:$0xf]
      %v3255 = vld [vmem:[%s3243 + $0x2c] sm:$0xf]
      %v3256 = vld [vmem:[%s3243 + $0x30] sm:$0xf]
      %v3257 = vld [vmem:[%s3243 + $0x34] sm:$0xf]
      %v3258 = vld [vmem:[%s3243 + $0x38] sm:$0xf]
      %v3259 = vld [vmem:[%s3243 + $0x3c] sm:$0xf]
      %v3292 = vunpack.c.l.b16 %v3211
      %v3293 = vunpack.c.l.b16 %v3212
      %v3294 = vunpack.c.l.b16 %v3213
      %v3295 = vunpack.c.l.b16 %v3214
      %v3296 = vunpack.c.l.b16 %v3215
      %v3297 = vunpack.c.l.b16 %v3216
      %v3298 = vunpack.c.l.b16 %v3217
      %v3299 = vunpack.c.l.b16 %v3218
      %v3300 = vunpack.c.l.b16 %v3219
      %v3301 = vunpack.c.l.b16 %v3220
      %v3302 = vunpack.c.l.b16 %v3221
      %v3303 = vunpack.c.l.b16 %v3222
      %v3304 = vunpack.c.l.b16 %v3223
      %v3305 = vunpack.c.l.b16 %v3224
      %v3306 = vunpack.c.l.b16 %v3225
      %v3307 = vunpack.c.l.b16 %v3226
      %v3308 = vunpack.c.l.b16 %v3227
      %v3309 = vunpack.c.l.b16 %v3228
      %v3310 = vunpack.c.l.b16 %v3229
      %v3311 = vunpack.c.l.b16 %v3230
      %v3312 = vunpack.c.l.b16 %v3231
      %v3313 = vunpack.c.l.b16 %v3232
      %v3314 = vunpack.c.l.b16 %v3233
      %v3315 = vunpack.c.l.b16 %v3234
      %v3316 = vunpack.c.l.b16 %v3235
      %v3317 = vunpack.c.l.b16 %v3236
      %v3318 = vunpack.c.l.b16 %v3237
      %v3319 = vunpack.c.l.b16 %v3238
      %v3320 = vunpack.c.l.b16 %v3239
      %v3321 = vunpack.c.l.b16 %v3240
      %v3322 = vunpack.c.l.b16 %v3241
      %v3323 = vunpack.c.l.b16 %v3242
      %v3324 = vpack.c.b16 %v3293, %v3292
      %v3325 = vpack.c.b16 %v3295, %v3294
      %v3326 = vpack.c.b16 %v3297, %v3296
      %v3327 = vpack.c.b16 %v3299, %v3298
      %v3328 = vpack.c.b16 %v3301, %v3300
      %v3329 = vpack.c.b16 %v3303, %v3302
      %v3330 = vpack.c.b16 %v3305, %v3304
      %v3331 = vpack.c.b16 %v3307, %v3306
      %v3332 = vpack.c.b16 %v3309, %v3308
      %v3333 = vpack.c.b16 %v3311, %v3310
      %v3334 = vpack.c.b16 %v3313, %v3312
      %v3335 = vpack.c.b16 %v3315, %v3314
      %v3336 = vpack.c.b16 %v3317, %v3316
      %v3337 = vpack.c.b16 %v3319, %v3318
      %v3338 = vpack.c.b16 %v3321, %v3320
      %v3339 = vpack.c.b16 %v3323, %v3322
      %v3372 = vunpack.c.l.b16 %v3244
      %v3373 = vunpack.c.l.b16 %v3245
      %v3374 = vunpack.c.l.b16 %v3246
      %v3375 = vunpack.c.l.b16 %v3247
      %v3376 = vunpack.c.l.b16 %v3248
      %v3377 = vunpack.c.l.b16 %v3249
      %v3378 = vunpack.c.l.b16 %v3250
      %v3379 = vunpack.c.l.b16 %v3251
      %v3380 = vunpack.c.l.b16 %v3252
      %v3381 = vunpack.c.l.b16 %v3253
      %v3382 = vunpack.c.l.b16 %v3254
      %v3383 = vunpack.c.l.b16 %v3255
      %v3384 = vunpack.c.l.b16 %v3256
      %v3385 = vunpack.c.l.b16 %v3257
      %v3386 = vunpack.c.l.b16 %v3258
      %v3387 = vunpack.c.l.b16 %v3259
      %v3388 = vpack.c.b16 %v3373, %v3372
      %v3389 = vpack.c.b16 %v3375, %v3374
      %v3390 = vpack.c.b16 %v3377, %v3376
      %v3391 = vpack.c.b16 %v3379, %v3378
      %v3392 = vpack.c.b16 %v3381, %v3380
      %v3393 = vpack.c.b16 %v3383, %v3382
      %v3394 = vpack.c.b16 %v3385, %v3384
      %v3395 = vpack.c.b16 %v3387, %v3386
      %3404 = vmatpush.bf16.msra.mxu0 %v3395
      %3405 = vmatpush.bf16.msra.mxu0 %v3394
      %3406 = vmatpush.bf16.msra.mxu0 %v3393
      %3407 = vmatpush.bf16.msra.mxu0 %v3392
      %3408 = vmatpush.bf16.msra.mxu0 %v3391
      %3409 = vmatpush.bf16.msra.mxu0 %v3390
      %3410 = vmatpush.bf16.msra.mxu0 %v3389
      %3411 = vmatpush.bf16.msra.mxu0 %v3388
      %3412 = vmatmul.bf16.gmra.mxu0 %v3324
      %v3413 = vpop.f32.mrf.mxu0
      %v3414 = vadd.f32 0.0, %v3413
      %v3415 = vpop.f32.mrf.mxu0
      %v3416 = vadd.f32 0.0, %v3415
      %3417 = vmatmul.bf16.gmra.mxu0 %v3325
      %v3418 = vpop.f32.mrf.mxu0
      %v3419 = vadd.f32 0.0, %v3418
      %v3420 = vpop.f32.mrf.mxu0
      %v3421 = vadd.f32 0.0, %v3420
      %3422 = vmatmul.bf16.gmra.mxu0 %v3326
      %v3423 = vpop.f32.mrf.mxu0
      %v3424 = vadd.f32 0.0, %v3423
      %v3425 = vpop.f32.mrf.mxu0
      %v3426 = vadd.f32 0.0, %v3425
      %3427 = vmatmul.bf16.gmra.mxu0 %v3327
      %v3428 = vpop.f32.mrf.mxu0
      %v3429 = vadd.f32 0.0, %v3428
      %v3430 = vpop.f32.mrf.mxu0
      %v3431 = vadd.f32 0.0, %v3430
      %3432 = vmatmul.bf16.gmra.mxu0 %v3328
      %v3433 = vpop.f32.mrf.mxu0
      %v3434 = vadd.f32 0.0, %v3433
      %v3435 = vpop.f32.mrf.mxu0
      %v3436 = vadd.f32 0.0, %v3435
      %3437 = vmatmul.bf16.gmra.mxu0 %v3329
      %v3438 = vpop.f32.mrf.mxu0
      %v3439 = vadd.f32 0.0, %v3438
      %v3440 = vpop.f32.mrf.mxu0
      %v3441 = vadd.f32 0.0, %v3440
      %3442 = vmatmul.bf16.gmra.mxu0 %v3330
      %v3443 = vpop.f32.mrf.mxu0
      %v3444 = vadd.f32 0.0, %v3443
      %v3445 = vpop.f32.mrf.mxu0
      %v3446 = vadd.f32 0.0, %v3445
      %3447 = vmatmul.bf16.gmra.mxu0 %v3331
      %v3448 = vpop.f32.mrf.mxu0
      %v3449 = vadd.f32 0.0, %v3448
      %v3450 = vpop.f32.mrf.mxu0
      %v3451 = vadd.f32 0.0, %v3450
      %3452 = vmatmul.bf16.gmra.mxu0 %v3332
      %v3453 = vpop.f32.mrf.mxu0
      %v3454 = vadd.f32 0.0, %v3453
      %v3455 = vpop.f32.mrf.mxu0
      %v3456 = vadd.f32 0.0, %v3455
      %3457 = vmatmul.bf16.gmra.mxu0 %v3333
      %v3458 = vpop.f32.mrf.mxu0
      %v3459 = vadd.f32 0.0, %v3458
      %v3460 = vpop.f32.mrf.mxu0
      %v3461 = vadd.f32 0.0, %v3460
      %3462 = vmatmul.bf16.gmra.mxu0 %v3334
      %v3463 = vpop.f32.mrf.mxu0
      %v3464 = vadd.f32 0.0, %v3463
      %v3465 = vpop.f32.mrf.mxu0
      %v3466 = vadd.f32 0.0, %v3465
      %3467 = vmatmul.bf16.gmra.mxu0 %v3335
      %v3468 = vpop.f32.mrf.mxu0
      %v3469 = vadd.f32 0.0, %v3468
      %v3470 = vpop.f32.mrf.mxu0
      %v3471 = vadd.f32 0.0, %v3470
      %3472 = vmatmul.bf16.gmra.mxu0 %v3336
      %v3473 = vpop.f32.mrf.mxu0
      %v3474 = vadd.f32 0.0, %v3473
      %v3475 = vpop.f32.mrf.mxu0
      %v3476 = vadd.f32 0.0, %v3475
      %3477 = vmatmul.bf16.gmra.mxu0 %v3337
      %v3478 = vpop.f32.mrf.mxu0
      %v3479 = vadd.f32 0.0, %v3478
      %v3480 = vpop.f32.mrf.mxu0
      %v3481 = vadd.f32 0.0, %v3480
      %3482 = vmatmul.bf16.gmra.mxu0 %v3338
      %v3483 = vpop.f32.mrf.mxu0
      %v3484 = vadd.f32 0.0, %v3483
      %v3485 = vpop.f32.mrf.mxu0
      %v3486 = vadd.f32 0.0, %v3485
      %3487 = vmatmul.bf16.gmra.mxu0 %v3339
      %v3488 = vpop.f32.mrf.mxu0
      %v3489 = vadd.f32 0.0, %v3488
      %v3490 = vpop.f32.mrf.mxu0
      %v3491 = vadd.f32 0.0, %v3490
      %3492 = vdwg.mxu0
      %v3493 = vadd.f32 %v3178, %v3414
      %v3494 = vadd.f32 %v3179, %v3416
      %v3495 = vadd.f32 %v3180, %v3419
      %v3496 = vadd.f32 %v3181, %v3421
      %v3497 = vadd.f32 %v3182, %v3424
      %v3498 = vadd.f32 %v3183, %v3426
      %v3499 = vadd.f32 %v3184, %v3429
      %v3500 = vadd.f32 %v3185, %v3431
      %v3501 = vadd.f32 %v3186, %v3434
      %v3502 = vadd.f32 %v3187, %v3436
      %v3503 = vadd.f32 %v3188, %v3439
      %v3504 = vadd.f32 %v3189, %v3441
      %v3505 = vadd.f32 %v3190, %v3444
      %v3506 = vadd.f32 %v3191, %v3446
      %v3507 = vadd.f32 %v3192, %v3449
      %v3508 = vadd.f32 %v3193, %v3451
      %v3509 = vadd.f32 %v3194, %v3454
      %v3510 = vadd.f32 %v3195, %v3456
      %v3511 = vadd.f32 %v3196, %v3459
      %v3512 = vadd.f32 %v3197, %v3461
      %v3513 = vadd.f32 %v3198, %v3464
      %v3514 = vadd.f32 %v3199, %v3466
      %v3515 = vadd.f32 %v3200, %v3469
      %v3516 = vadd.f32 %v3201, %v3471
      %v3517 = vadd.f32 %v3202, %v3474
      %v3518 = vadd.f32 %v3203, %v3476
      %v3519 = vadd.f32 %v3204, %v3479
      %v3520 = vadd.f32 %v3205, %v3481
      %v3521 = vadd.f32 %v3206, %v3484
      %v3522 = vadd.f32 %v3207, %v3486
      %v3523 = vadd.f32 %v3208, %v3489
      %v3524 = vadd.f32 %v3209, %v3491
      %v3525 = vld [vmem:[%s3210] sm:$0xf]
      %v3526 = vld [vmem:[%s3210 + $0x4] sm:$0xf]
      %v3527 = vld [vmem:[%s3210 + $0x8] sm:$0x1]
      %v3528 = vld [vmem:[%s3210 + $0xc] sm:$0xf]
      %v3529 = vld [vmem:[%s3210 + $0x10] sm:$0xf]
      %v3530 = vld [vmem:[%s3210 + $0x14] sm:$0x1]
      %v3531 = vld [vmem:[%s3210 + $0x18] sm:$0xf]
      %v3532 = vld [vmem:[%s3210 + $0x1c] sm:$0xf]
      %v3533 = vld [vmem:[%s3210 + $0x20] sm:$0x1]
      %v3534 = vld [vmem:[%s3210 + $0x24] sm:$0xf]
      %v3535 = vld [vmem:[%s3210 + $0x28] sm:$0xf]
      %v3536 = vld [vmem:[%s3210 + $0x2c] sm:$0x1]
      %v3537 = vld [vmem:[%s3210 + $0x30] sm:$0xf]
      %v3538 = vld [vmem:[%s3210 + $0x34] sm:$0xf]
      %v3539 = vld [vmem:[%s3210 + $0x38] sm:$0x1]
      %v3540 = vld [vmem:[%s3210 + $0x3c] sm:$0xf]
      %v3541 = vld [vmem:[%s3210 + $0x40] sm:$0xf]
      %v3542 = vld [vmem:[%s3210 + $0x44] sm:$0x1]
      %v3543 = vld [vmem:[%s3210 + $0x48] sm:$0xf]
      %v3544 = vld [vmem:[%s3210 + $0x4c] sm:$0xf]
      %v3545 = vld [vmem:[%s3210 + $0x50] sm:$0x1]
      %v3546 = vld [vmem:[%s3210 + $0x54] sm:$0xf]
      %v3547 = vld [vmem:[%s3210 + $0x58] sm:$0xf]
      %v3548 = vld [vmem:[%s3210 + $0x5c] sm:$0x1]
      %v3549 = vld [vmem:[%s3210 + $0x60] sm:$0xf]
      %v3550 = vld [vmem:[%s3210 + $0x64] sm:$0xf]
      %v3551 = vld [vmem:[%s3210 + $0x68] sm:$0x1]
      %v3552 = vld [vmem:[%s3210 + $0x6c] sm:$0xf]
      %v3553 = vld [vmem:[%s3210 + $0x70] sm:$0xf]
      %v3554 = vld [vmem:[%s3210 + $0x74] sm:$0x1]
      %v3555 = vld [vmem:[%s3210 + $0x78] sm:$0xf]
      %v3556 = vld [vmem:[%s3210 + $0x7c] sm:$0xf]
      %v3557 = vld [vmem:[%s3210 + $0x80] sm:$0x1]
      %v3558 = vld [vmem:[%s3210 + $0x84] sm:$0xf]
      %v3559 = vld [vmem:[%s3210 + $0x88] sm:$0xf]
      %v3560 = vld [vmem:[%s3210 + $0x8c] sm:$0x1]
      %v3561 = vld [vmem:[%s3210 + $0x90] sm:$0xf]
      %v3562 = vld [vmem:[%s3210 + $0x94] sm:$0xf]
      %v3563 = vld [vmem:[%s3210 + $0x98] sm:$0x1]
      %v3564 = vld [vmem:[%s3210 + $0x9c] sm:$0xf]
      %v3565 = vld [vmem:[%s3210 + $0xa0] sm:$0xf]
      %v3566 = vld [vmem:[%s3210 + $0xa4] sm:$0x1]
      %v3567 = vld [vmem:[%s3210 + $0xa8] sm:$0xf]
      %v3568 = vld [vmem:[%s3210 + $0xac] sm:$0xf]
      %v3569 = vld [vmem:[%s3210 + $0xb0] sm:$0x1]
      %v3570 = vld [vmem:[%s3210 + $0xb4] sm:$0xf]
      %v3571 = vld [vmem:[%s3210 + $0xb8] sm:$0xf]
      %v3572 = vld [vmem:[%s3210 + $0xbc] sm:$0x1]
      %v3574 = vshrl.u32 %v3525, 16
      %v3576 = vrot.slane %v3574, 4
      %v3577 = vshll.u32 %v3525, 16
      %v3579 = vrot.slane %v3577, 5
      %v3580 = vor.u32 %v3576, %v3579
      %v3581 = vrot.slane %v3580, 4
      %v3583 = vshll.u32 %v3526, 16
      %v3585 = vrot.slane %v3583, 5
      %v3586 = vsel %vm538, %v3581, %v3585
      %v3587 = vshrl.u32 %v3526, 16
      %v3589 = vrot.slane %v3587, 4
      %v3590 = vor.u32 %v3589, %v3585
      %v3591 = vrot.slane %v3590, 4
      %v3593 = vshll.u32 %v3527, 16
      %v3595 = vrot.slane %v3593, 5
      %v3596 = vsel %vm538, %v3591, %v3595
      %v3598 = vshrl.u32 %v3528, 16
      %v3600 = vrot.slane %v3598, 4
      %v3601 = vshll.u32 %v3528, 16
      %v3603 = vrot.slane %v3601, 5
      %v3604 = vor.u32 %v3600, %v3603
      %v3605 = vrot.slane %v3604, 4
      %v3607 = vshll.u32 %v3529, 16
      %v3609 = vrot.slane %v3607, 5
      %v3610 = vsel %vm538, %v3605, %v3609
      %v3611 = vshrl.u32 %v3529, 16
      %v3613 = vrot.slane %v3611, 4
      %v3614 = vor.u32 %v3613, %v3609
      %v3615 = vrot.slane %v3614, 4
      %v3617 = vshll.u32 %v3530, 16
      %v3619 = vrot.slane %v3617, 5
      %v3620 = vsel %vm538, %v3615, %v3619
      %v3622 = vshrl.u32 %v3531, 16
      %v3624 = vrot.slane %v3622, 4
      %v3625 = vshll.u32 %v3531, 16
      %v3627 = vrot.slane %v3625, 5
      %v3628 = vor.u32 %v3624, %v3627
      %v3629 = vrot.slane %v3628, 4
      %v3631 = vshll.u32 %v3532, 16
      %v3633 = vrot.slane %v3631, 5
      %v3634 = vsel %vm538, %v3629, %v3633
      %v3635 = vshrl.u32 %v3532, 16
      %v3637 = vrot.slane %v3635, 4
      %v3638 = vor.u32 %v3637, %v3633
      %v3639 = vrot.slane %v3638, 4
      %v3641 = vshll.u32 %v3533, 16
      %v3643 = vrot.slane %v3641, 5
      %v3644 = vsel %vm538, %v3639, %v3643
      %v3646 = vshrl.u32 %v3534, 16
      %v3648 = vrot.slane %v3646, 4
      %v3649 = vshll.u32 %v3534, 16
      %v3651 = vrot.slane %v3649, 5
      %v3652 = vor.u32 %v3648, %v3651
      %v3653 = vrot.slane %v3652, 4
      %v3655 = vshll.u32 %v3535, 16
      %v3657 = vrot.slane %v3655, 5
      %v3658 = vsel %vm538, %v3653, %v3657
      %v3659 = vshrl.u32 %v3535, 16
      %v3661 = vrot.slane %v3659, 4
      %v3662 = vor.u32 %v3661, %v3657
      %v3663 = vrot.slane %v3662, 4
      %v3665 = vshll.u32 %v3536, 16
      %v3667 = vrot.slane %v3665, 5
      %v3668 = vsel %vm538, %v3663, %v3667
      %v3670 = vshrl.u32 %v3537, 16
      %v3672 = vrot.slane %v3670, 4
      %v3673 = vshll.u32 %v3537, 16
      %v3675 = vrot.slane %v3673, 5
      %v3676 = vor.u32 %v3672, %v3675
      %v3677 = vrot.slane %v3676, 4
      %v3679 = vshll.u32 %v3538, 16
      %v3681 = vrot.slane %v3679, 5
      %v3682 = vsel %vm538, %v3677, %v3681
      %v3683 = vshrl.u32 %v3538, 16
      %v3685 = vrot.slane %v3683, 4
      %v3686 = vor.u32 %v3685, %v3681
      %v3687 = vrot.slane %v3686, 4
      %v3689 = vshll.u32 %v3539, 16
      %v3691 = vrot.slane %v3689, 5
      %v3692 = vsel %vm538, %v3687, %v3691
      %v3694 = vshrl.u32 %v3540, 16
      %v3696 = vrot.slane %v3694, 4
      %v3697 = vshll.u32 %v3540, 16
      %v3699 = vrot.slane %v3697, 5
      %v3700 = vor.u32 %v3696, %v3699
      %v3701 = vrot.slane %v3700, 4
      %v3703 = vshll.u32 %v3541, 16
      %v3705 = vrot.slane %v3703, 5
      %v3706 = vsel %vm538, %v3701, %v3705
      %v3707 = vshrl.u32 %v3541, 16
      %v3709 = vrot.slane %v3707, 4
      %v3710 = vor.u32 %v3709, %v3705
      %v3711 = vrot.slane %v3710, 4
      %v3713 = vshll.u32 %v3542, 16
      %v3715 = vrot.slane %v3713, 5
      %v3716 = vsel %vm538, %v3711, %v3715
      %v3718 = vshrl.u32 %v3543, 16
      %v3720 = vrot.slane %v3718, 4
      %v3721 = vshll.u32 %v3543, 16
      %v3723 = vrot.slane %v3721, 5
      %v3724 = vor.u32 %v3720, %v3723
      %v3725 = vrot.slane %v3724, 4
      %v3727 = vshll.u32 %v3544, 16
      %v3729 = vrot.slane %v3727, 5
      %v3730 = vsel %vm538, %v3725, %v3729
      %v3731 = vshrl.u32 %v3544, 16
      %v3733 = vrot.slane %v3731, 4
      %v3734 = vor.u32 %v3733, %v3729
      %v3735 = vrot.slane %v3734, 4
      %v3737 = vshll.u32 %v3545, 16
      %v3739 = vrot.slane %v3737, 5
      %v3740 = vsel %vm538, %v3735, %v3739
      %v3742 = vshrl.u32 %v3546, 16
      %v3744 = vrot.slane %v3742, 4
      %v3745 = vshll.u32 %v3546, 16
      %v3747 = vrot.slane %v3745, 5
      %v3748 = vor.u32 %v3744, %v3747
      %v3749 = vrot.slane %v3748, 4
      %v3751 = vshll.u32 %v3547, 16
      %v3753 = vrot.slane %v3751, 5
      %v3754 = vsel %vm538, %v3749, %v3753
      %v3755 = vshrl.u32 %v3547, 16
      %v3757 = vrot.slane %v3755, 4
      %v3758 = vor.u32 %v3757, %v3753
      %v3759 = vrot.slane %v3758, 4
      %v3761 = vshll.u32 %v3548, 16
      %v3763 = vrot.slane %v3761, 5
      %v3764 = vsel %vm538, %v3759, %v3763
      %v3766 = vshrl.u32 %v3549, 16
      %v3768 = vrot.slane %v3766, 4
      %v3769 = vshll.u32 %v3549, 16
      %v3771 = vrot.slane %v3769, 5
      %v3772 = vor.u32 %v3768, %v3771
      %v3773 = vrot.slane %v3772, 4
      %v3775 = vshll.u32 %v3550, 16
      %v3777 = vrot.slane %v3775, 5
      %v3778 = vsel %vm538, %v3773, %v3777
      %v3779 = vshrl.u32 %v3550, 16
      %v3781 = vrot.slane %v3779, 4
      %v3782 = vor.u32 %v3781, %v3777
      %v3783 = vrot.slane %v3782, 4
      %v3785 = vshll.u32 %v3551, 16
      %v3787 = vrot.slane %v3785, 5
      %v3788 = vsel %vm538, %v3783, %v3787
      %v3790 = vshrl.u32 %v3552, 16
      %v3792 = vrot.slane %v3790, 4
      %v3793 = vshll.u32 %v3552, 16
      %v3795 = vrot.slane %v3793, 5
      %v3796 = vor.u32 %v3792, %v3795
      %v3797 = vrot.slane %v3796, 4
      %v3799 = vshll.u32 %v3553, 16
      %v3801 = vrot.slane %v3799, 5
      %v3802 = vsel %vm538, %v3797, %v3801
      %v3803 = vshrl.u32 %v3553, 16
      %v3805 = vrot.slane %v3803, 4
      %v3806 = vor.u32 %v3805, %v3801
      %v3807 = vrot.slane %v3806, 4
      %v3809 = vshll.u32 %v3554, 16
      %v3811 = vrot.slane %v3809, 5
      %v3812 = vsel %vm538, %v3807, %v3811
      %v3814 = vshrl.u32 %v3555, 16
      %v3816 = vrot.slane %v3814, 4
      %v3817 = vshll.u32 %v3555, 16
      %v3819 = vrot.slane %v3817, 5
      %v3820 = vor.u32 %v3816, %v3819
      %v3821 = vrot.slane %v3820, 4
      %v3823 = vshll.u32 %v3556, 16
      %v3825 = vrot.slane %v3823, 5
      %v3826 = vsel %vm538, %v3821, %v3825
      %v3827 = vshrl.u32 %v3556, 16
      %v3829 = vrot.slane %v3827, 4
      %v3830 = vor.u32 %v3829, %v3825
      %v3831 = vrot.slane %v3830, 4
      %v3833 = vshll.u32 %v3557, 16
      %v3835 = vrot.slane %v3833, 5
      %v3836 = vsel %vm538, %v3831, %v3835
      %v3838 = vshrl.u32 %v3558, 16
      %v3840 = vrot.slane %v3838, 4
      %v3841 = vshll.u32 %v3558, 16
      %v3843 = vrot.slane %v3841, 5
      %v3844 = vor.u32 %v3840, %v3843
      %v3845 = vrot.slane %v3844, 4
      %v3847 = vshll.u32 %v3559, 16
      %v3849 = vrot.slane %v3847, 5
      %v3850 = vsel %vm538, %v3845, %v3849
      %v3851 = vshrl.u32 %v3559, 16
      %v3853 = vrot.slane %v3851, 4
      %v3854 = vor.u32 %v3853, %v3849
      %v3855 = vrot.slane %v3854, 4
      %v3857 = vshll.u32 %v3560, 16
      %v3859 = vrot.slane %v3857, 5
      %v3860 = vsel %vm538, %v3855, %v3859
      %v3862 = vshrl.u32 %v3561, 16
      %v3864 = vrot.slane %v3862, 4
      %v3865 = vshll.u32 %v3561, 16
      %v3867 = vrot.slane %v3865, 5
      %v3868 = vor.u32 %v3864, %v3867
      %v3869 = vrot.slane %v3868, 4
      %v3871 = vshll.u32 %v3562, 16
      %v3873 = vrot.slane %v3871, 5
      %v3874 = vsel %vm538, %v3869, %v3873
      %v3875 = vshrl.u32 %v3562, 16
      %v3877 = vrot.slane %v3875, 4
      %v3878 = vor.u32 %v3877, %v3873
      %v3879 = vrot.slane %v3878, 4
      %v3881 = vshll.u32 %v3563, 16
      %v3883 = vrot.slane %v3881, 5
      %v3884 = vsel %vm538, %v3879, %v3883
      %v3886 = vshrl.u32 %v3564, 16
      %v3888 = vrot.slane %v3886, 4
      %v3889 = vshll.u32 %v3564, 16
      %v3891 = vrot.slane %v3889, 5
      %v3892 = vor.u32 %v3888, %v3891
      %v3893 = vrot.slane %v3892, 4
      %v3895 = vshll.u32 %v3565, 16
      %v3897 = vrot.slane %v3895, 5
      %v3898 = vsel %vm538, %v3893, %v3897
      %v3899 = vshrl.u32 %v3565, 16
      %v3901 = vrot.slane %v3899, 4
      %v3902 = vor.u32 %v3901, %v3897
      %v3903 = vrot.slane %v3902, 4
      %v3905 = vshll.u32 %v3566, 16
      %v3907 = vrot.slane %v3905, 5
      %v3908 = vsel %vm538, %v3903, %v3907
      %v3910 = vshrl.u32 %v3567, 16
      %v3912 = vrot.slane %v3910, 4
      %v3913 = vshll.u32 %v3567, 16
      %v3915 = vrot.slane %v3913, 5
      %v3916 = vor.u32 %v3912, %v3915
      %v3917 = vrot.slane %v3916, 4
      %v3919 = vshll.u32 %v3568, 16
      %v3921 = vrot.slane %v3919, 5
      %v3922 = vsel %vm538, %v3917, %v3921
      %v3923 = vshrl.u32 %v3568, 16
      %v3925 = vrot.slane %v3923, 4
      %v3926 = vor.u32 %v3925, %v3921
      %v3927 = vrot.slane %v3926, 4
      %v3929 = vshll.u32 %v3569, 16
      %v3931 = vrot.slane %v3929, 5
      %v3932 = vsel %vm538, %v3927, %v3931
      %v3934 = vshrl.u32 %v3570, 16
      %v3936 = vrot.slane %v3934, 4
      %v3937 = vshll.u32 %v3570, 16
      %v3939 = vrot.slane %v3937, 5
      %v3940 = vor.u32 %v3936, %v3939
      %v3941 = vrot.slane %v3940, 4
      %v3943 = vshll.u32 %v3571, 16
      %v3945 = vrot.slane %v3943, 5
      %v3946 = vsel %vm538, %v3941, %v3945
      %v3947 = vshrl.u32 %v3571, 16
      %v3949 = vrot.slane %v3947, 4
      %v3950 = vor.u32 %v3949, %v3945
      %v3951 = vrot.slane %v3950, 4
      %v3953 = vshll.u32 %v3572, 16
      %v3955 = vrot.slane %v3953, 5
      %v3956 = vsel %vm538, %v3951, %v3955
      %s3957 = scalar_lea.vmem %s2, 448
      %v3958 = vld [vmem:[%s3957] sm:$0xf]
      %v3959 = vld [vmem:[%s3957 + $0x4] sm:$0xf]
      %v3960 = vld [vmem:[%s3957 + $0x8] sm:$0xf]
      %v3961 = vld [vmem:[%s3957 + $0xc] sm:$0xf]
      %v3962 = vld [vmem:[%s3957 + $0x10] sm:$0xf]
      %v3963 = vld [vmem:[%s3957 + $0x14] sm:$0xf]
      %v3964 = vld [vmem:[%s3957 + $0x18] sm:$0xf]
      %v3965 = vld [vmem:[%s3957 + $0x1c] sm:$0xf]
      %v3966 = vld [vmem:[%s3957 + $0x20] sm:$0xf]
      %v3967 = vld [vmem:[%s3957 + $0x24] sm:$0xf]
      %v3968 = vld [vmem:[%s3957 + $0x28] sm:$0xf]
      %v3969 = vld [vmem:[%s3957 + $0x2c] sm:$0xf]
      %v3970 = vld [vmem:[%s3957 + $0x30] sm:$0xf]
      %v3971 = vld [vmem:[%s3957 + $0x34] sm:$0xf]
      %v3972 = vld [vmem:[%s3957 + $0x38] sm:$0xf]
      %v3973 = vld [vmem:[%s3957 + $0x3c] sm:$0xf]
      %v3974 = vunpack.c.l.b16 %v3586
      %v3975 = vunpack.c.l.b16 %v3596
      %v3976 = vunpack.c.l.b16 %v3610
      %v3977 = vunpack.c.l.b16 %v3620
      %v3978 = vunpack.c.l.b16 %v3634
      %v3979 = vunpack.c.l.b16 %v3644
      %v3980 = vunpack.c.l.b16 %v3658
      %v3981 = vunpack.c.l.b16 %v3668
      %v3982 = vunpack.c.l.b16 %v3682
      %v3983 = vunpack.c.l.b16 %v3692
      %v3984 = vunpack.c.l.b16 %v3706
      %v3985 = vunpack.c.l.b16 %v3716
      %v3986 = vunpack.c.l.b16 %v3730
      %v3987 = vunpack.c.l.b16 %v3740
      %v3988 = vunpack.c.l.b16 %v3754
      %v3989 = vunpack.c.l.b16 %v3764
      %v3990 = vunpack.c.l.b16 %v3778
      %v3991 = vunpack.c.l.b16 %v3788
      %v3992 = vunpack.c.l.b16 %v3802
      %v3993 = vunpack.c.l.b16 %v3812
      %v3994 = vunpack.c.l.b16 %v3826
      %v3995 = vunpack.c.l.b16 %v3836
      %v3996 = vunpack.c.l.b16 %v3850
      %v3997 = vunpack.c.l.b16 %v3860
      %v3998 = vunpack.c.l.b16 %v3874
      %v3999 = vunpack.c.l.b16 %v3884
      %v4000 = vunpack.c.l.b16 %v3898
      %v4001 = vunpack.c.l.b16 %v3908
      %v4002 = vunpack.c.l.b16 %v3922
      %v4003 = vunpack.c.l.b16 %v3932
      %v4004 = vunpack.c.l.b16 %v3946
      %v4005 = vunpack.c.l.b16 %v3956
      %v4006 = vpack.c.b16 %v3975, %v3974
      %v4007 = vpack.c.b16 %v3977, %v3976
      %v4008 = vpack.c.b16 %v3979, %v3978
      %v4009 = vpack.c.b16 %v3981, %v3980
      %v4010 = vpack.c.b16 %v3983, %v3982
      %v4011 = vpack.c.b16 %v3985, %v3984
      %v4012 = vpack.c.b16 %v3987, %v3986
      %v4013 = vpack.c.b16 %v3989, %v3988
      %v4014 = vpack.c.b16 %v3991, %v3990
      %v4015 = vpack.c.b16 %v3993, %v3992
      %v4016 = vpack.c.b16 %v3995, %v3994
      %v4017 = vpack.c.b16 %v3997, %v3996
      %v4018 = vpack.c.b16 %v3999, %v3998
      %v4019 = vpack.c.b16 %v4001, %v4000
      %v4020 = vpack.c.b16 %v4003, %v4002
      %v4021 = vpack.c.b16 %v4005, %v4004
      %v4054 = vunpack.c.l.b16 %v3958
      %v4055 = vunpack.c.l.b16 %v3959
      %v4056 = vunpack.c.l.b16 %v3960
      %v4057 = vunpack.c.l.b16 %v3961
      %v4058 = vunpack.c.l.b16 %v3962
      %v4059 = vunpack.c.l.b16 %v3963
      %v4060 = vunpack.c.l.b16 %v3964
      %v4061 = vunpack.c.l.b16 %v3965
      %v4062 = vunpack.c.l.b16 %v3966
      %v4063 = vunpack.c.l.b16 %v3967
      %v4064 = vunpack.c.l.b16 %v3968
      %v4065 = vunpack.c.l.b16 %v3969
      %v4066 = vunpack.c.l.b16 %v3970
      %v4067 = vunpack.c.l.b16 %v3971
      %v4068 = vunpack.c.l.b16 %v3972
      %v4069 = vunpack.c.l.b16 %v3973
      %v4070 = vpack.c.b16 %v4055, %v4054
      %v4071 = vpack.c.b16 %v4057, %v4056
      %v4072 = vpack.c.b16 %v4059, %v4058
      %v4073 = vpack.c.b16 %v4061, %v4060
      %v4074 = vpack.c.b16 %v4063, %v4062
      %v4075 = vpack.c.b16 %v4065, %v4064
      %v4076 = vpack.c.b16 %v4067, %v4066
      %v4077 = vpack.c.b16 %v4069, %v4068
      %4086 = vmatpush.bf16.msra.mxu0 %v4077
      %4087 = vmatpush.bf16.msra.mxu0 %v4076
      %4088 = vmatpush.bf16.msra.mxu0 %v4075
      %4089 = vmatpush.bf16.msra.mxu0 %v4074
      %4090 = vmatpush.bf16.msra.mxu0 %v4073
      %4091 = vmatpush.bf16.msra.mxu0 %v4072
      %4092 = vmatpush.bf16.msra.mxu0 %v4071
      %4093 = vmatpush.bf16.msra.mxu0 %v4070
      %4094 = vmatmul.bf16.gmra.mxu0 %v4006
      %v4095 = vpop.f32.mrf.mxu0
      %v4096 = vadd.f32 0.0, %v4095
      %v4097 = vpop.f32.mrf.mxu0
      %v4098 = vadd.f32 0.0, %v4097
      %4099 = vmatmul.bf16.gmra.mxu0 %v4007
      %v4100 = vpop.f32.mrf.mxu0
      %v4101 = vadd.f32 0.0, %v4100
      %v4102 = vpop.f32.mrf.mxu0
      %v4103 = vadd.f32 0.0, %v4102
      %4104 = vmatmul.bf16.gmra.mxu0 %v4008
      %v4105 = vpop.f32.mrf.mxu0
      %v4106 = vadd.f32 0.0, %v4105
      %v4107 = vpop.f32.mrf.mxu0
      %v4108 = vadd.f32 0.0, %v4107
      %4109 = vmatmul.bf16.gmra.mxu0 %v4009
      %v4110 = vpop.f32.mrf.mxu0
      %v4111 = vadd.f32 0.0, %v4110
      %v4112 = vpop.f32.mrf.mxu0
      %v4113 = vadd.f32 0.0, %v4112
      %4114 = vmatmul.bf16.gmra.mxu0 %v4010
      %v4115 = vpop.f32.mrf.mxu0
      %v4116 = vadd.f32 0.0, %v4115
      %v4117 = vpop.f32.mrf.mxu0
      %v4118 = vadd.f32 0.0, %v4117
      %4119 = vmatmul.bf16.gmra.mxu0 %v4011
      %v4120 = vpop.f32.mrf.mxu0
      %v4121 = vadd.f32 0.0, %v4120
      %v4122 = vpop.f32.mrf.mxu0
      %v4123 = vadd.f32 0.0, %v4122
      %4124 = vmatmul.bf16.gmra.mxu0 %v4012
      %v4125 = vpop.f32.mrf.mxu0
      %v4126 = vadd.f32 0.0, %v4125
      %v4127 = vpop.f32.mrf.mxu0
      %v4128 = vadd.f32 0.0, %v4127
      %4129 = vmatmul.bf16.gmra.mxu0 %v4013
      %v4130 = vpop.f32.mrf.mxu0
      %v4131 = vadd.f32 0.0, %v4130
      %v4132 = vpop.f32.mrf.mxu0
      %v4133 = vadd.f32 0.0, %v4132
      %4134 = vmatmul.bf16.gmra.mxu0 %v4014
      %v4135 = vpop.f32.mrf.mxu0
      %v4136 = vadd.f32 0.0, %v4135
      %v4137 = vpop.f32.mrf.mxu0
      %v4138 = vadd.f32 0.0, %v4137
      %4139 = vmatmul.bf16.gmra.mxu0 %v4015
      %v4140 = vpop.f32.mrf.mxu0
      %v4141 = vadd.f32 0.0, %v4140
      %v4142 = vpop.f32.mrf.mxu0
      %v4143 = vadd.f32 0.0, %v4142
      %4144 = vmatmul.bf16.gmra.mxu0 %v4016
      %v4145 = vpop.f32.mrf.mxu0
      %v4146 = vadd.f32 0.0, %v4145
      %v4147 = vpop.f32.mrf.mxu0
      %v4148 = vadd.f32 0.0, %v4147
      %4149 = vmatmul.bf16.gmra.mxu0 %v4017
      %v4150 = vpop.f32.mrf.mxu0
      %v4151 = vadd.f32 0.0, %v4150
      %v4152 = vpop.f32.mrf.mxu0
      %v4153 = vadd.f32 0.0, %v4152
      %4154 = vmatmul.bf16.gmra.mxu0 %v4018
      %v4155 = vpop.f32.mrf.mxu0
      %v4156 = vadd.f32 0.0, %v4155
      %v4157 = vpop.f32.mrf.mxu0
      %v4158 = vadd.f32 0.0, %v4157
      %4159 = vmatmul.bf16.gmra.mxu0 %v4019
      %v4160 = vpop.f32.mrf.mxu0
      %v4161 = vadd.f32 0.0, %v4160
      %v4162 = vpop.f32.mrf.mxu0
      %v4163 = vadd.f32 0.0, %v4162
      %4164 = vmatmul.bf16.gmra.mxu0 %v4020
      %v4165 = vpop.f32.mrf.mxu0
      %v4166 = vadd.f32 0.0, %v4165
      %v4167 = vpop.f32.mrf.mxu0
      %v4168 = vadd.f32 0.0, %v4167
      %4169 = vmatmul.bf16.gmra.mxu0 %v4021
      %v4170 = vpop.f32.mrf.mxu0
      %v4171 = vadd.f32 0.0, %v4170
      %v4172 = vpop.f32.mrf.mxu0
      %v4173 = vadd.f32 0.0, %v4172
      %4174 = vdwg.mxu0
      %v4175 = vadd.f32 %v3493, %v4096
      %v4176 = vadd.f32 %v3494, %v4098
      %v4177 = vadd.f32 %v3495, %v4101
      %v4178 = vadd.f32 %v3496, %v4103
      %v4179 = vadd.f32 %v3497, %v4106
      %v4180 = vadd.f32 %v3498, %v4108
      %v4181 = vadd.f32 %v3499, %v4111
      %v4182 = vadd.f32 %v3500, %v4113
      %v4183 = vadd.f32 %v3501, %v4116
      %v4184 = vadd.f32 %v3502, %v4118
      %v4185 = vadd.f32 %v3503, %v4121
      %v4186 = vadd.f32 %v3504, %v4123
      %v4187 = vadd.f32 %v3505, %v4126
      %v4188 = vadd.f32 %v3506, %v4128
      %v4189 = vadd.f32 %v3507, %v4131
      %v4190 = vadd.f32 %v3508, %v4133
      %v4191 = vadd.f32 %v3509, %v4136
      %v4192 = vadd.f32 %v3510, %v4138
      %v4193 = vadd.f32 %v3511, %v4141
      %v4194 = vadd.f32 %v3512, %v4143
      %v4195 = vadd.f32 %v3513, %v4146
      %v4196 = vadd.f32 %v3514, %v4148
      %v4197 = vadd.f32 %v3515, %v4151
      %v4198 = vadd.f32 %v3516, %v4153
      %v4199 = vadd.f32 %v3517, %v4156
      %v4200 = vadd.f32 %v3518, %v4158
      %v4201 = vadd.f32 %v3519, %v4161
      %v4202 = vadd.f32 %v3520, %v4163
      %v4203 = vadd.f32 %v3521, %v4166
      %v4204 = vadd.f32 %v3522, %v4168
      %v4205 = vadd.f32 %v3523, %v4171
      %v4206 = vadd.f32 %v3524, %v4173
      %v4207 = vld [vmem:[%s3210] sm:$0xe]
      %v4208 = vld [vmem:[%s3210 + $0xc] sm:$0xe]
      %v4209 = vld [vmem:[%s3210 + $0x18] sm:$0xe]
      %v4210 = vld [vmem:[%s3210 + $0x24] sm:$0xe]
      %v4211 = vld [vmem:[%s3210 + $0x30] sm:$0xe]
      %v4212 = vld [vmem:[%s3210 + $0x3c] sm:$0xe]
      %v4213 = vld [vmem:[%s3210 + $0x48] sm:$0xe]
      %v4214 = vld [vmem:[%s3210 + $0x54] sm:$0xe]
      %v4215 = vld [vmem:[%s3210 + $0x60] sm:$0xe]
      %v4216 = vld [vmem:[%s3210 + $0x6c] sm:$0xe]
      %v4217 = vld [vmem:[%s3210 + $0x78] sm:$0xe]
      %v4218 = vld [vmem:[%s3210 + $0x84] sm:$0xe]
      %v4219 = vld [vmem:[%s3210 + $0x90] sm:$0xe]
      %v4220 = vld [vmem:[%s3210 + $0x9c] sm:$0xe]
      %v4221 = vld [vmem:[%s3210 + $0xa8] sm:$0xe]
      %v4222 = vld [vmem:[%s3210 + $0xb4] sm:$0xe]
      %v4271 = vrot.slane %v4207, 5
      %v4272 = vrot.slane %v4271, 4
      %v4273 = vrot.slane %v3526, 5
      %v4274 = vsel %vm1424, %v4272, %v4273
      %v4275 = vrot.slane %v4273, 4
      %v4276 = vrot.slane %v3527, 5
      %v4277 = vsel %vm1424, %v4275, %v4276
      %v4278 = vrot.slane %v4208, 5
      %v4279 = vrot.slane %v4278, 4
      %v4280 = vrot.slane %v3529, 5
      %v4281 = vsel %vm1424, %v4279, %v4280
      %v4282 = vrot.slane %v4280, 4
      %v4283 = vrot.slane %v3530, 5
      %v4284 = vsel %vm1424, %v4282, %v4283
      %v4285 = vrot.slane %v4209, 5
      %v4286 = vrot.slane %v4285, 4
      %v4287 = vrot.slane %v3532, 5
      %v4288 = vsel %vm1424, %v4286, %v4287
      %v4289 = vrot.slane %v4287, 4
      %v4290 = vrot.slane %v3533, 5
      %v4291 = vsel %vm1424, %v4289, %v4290
      %v4292 = vrot.slane %v4210, 5
      %v4293 = vrot.slane %v4292, 4
      %v4294 = vrot.slane %v3535, 5
      %v4295 = vsel %vm1424, %v4293, %v4294
      %v4296 = vrot.slane %v4294, 4
      %v4297 = vrot.slane %v3536, 5
      %v4298 = vsel %vm1424, %v4296, %v4297
      %v4299 = vrot.slane %v4211, 5
      %v4300 = vrot.slane %v4299, 4
      %v4301 = vrot.slane %v3538, 5
      %v4302 = vsel %vm1424, %v4300, %v4301
      %v4303 = vrot.slane %v4301, 4
      %v4304 = vrot.slane %v3539, 5
      %v4305 = vsel %vm1424, %v4303, %v4304
      %v4306 = vrot.slane %v4212, 5
      %v4307 = vrot.slane %v4306, 4
      %v4308 = vrot.slane %v3541, 5
      %v4309 = vsel %vm1424, %v4307, %v4308
      %v4310 = vrot.slane %v4308, 4
      %v4311 = vrot.slane %v3542, 5
      %v4312 = vsel %vm1424, %v4310, %v4311
      %v4313 = vrot.slane %v4213, 5
      %v4314 = vrot.slane %v4313, 4
      %v4315 = vrot.slane %v3544, 5
      %v4316 = vsel %vm1424, %v4314, %v4315
      %v4317 = vrot.slane %v4315, 4
      %v4318 = vrot.slane %v3545, 5
      %v4319 = vsel %vm1424, %v4317, %v4318
      %v4320 = vrot.slane %v4214, 5
      %v4321 = vrot.slane %v4320, 4
      %v4322 = vrot.slane %v3547, 5
      %v4323 = vsel %vm1424, %v4321, %v4322
      %v4324 = vrot.slane %v4322, 4
      %v4325 = vrot.slane %v3548, 5
      %v4326 = vsel %vm1424, %v4324, %v4325
      %v4327 = vrot.slane %v4215, 5
      %v4328 = vrot.slane %v4327, 4
      %v4329 = vrot.slane %v3550, 5
      %v4330 = vsel %vm1424, %v4328, %v4329
      %v4331 = vrot.slane %v4329, 4
      %v4332 = vrot.slane %v3551, 5
      %v4333 = vsel %vm1424, %v4331, %v4332
      %v4334 = vrot.slane %v4216, 5
      %v4335 = vrot.slane %v4334, 4
      %v4336 = vrot.slane %v3553, 5
      %v4337 = vsel %vm1424, %v4335, %v4336
      %v4338 = vrot.slane %v4336, 4
      %v4339 = vrot.slane %v3554, 5
      %v4340 = vsel %vm1424, %v4338, %v4339
      %v4341 = vrot.slane %v4217, 5
      %v4342 = vrot.slane %v4341, 4
      %v4343 = vrot.slane %v3556, 5
      %v4344 = vsel %vm1424, %v4342, %v4343
      %v4345 = vrot.slane %v4343, 4
      %v4346 = vrot.slane %v3557, 5
      %v4347 = vsel %vm1424, %v4345, %v4346
      %v4348 = vrot.slane %v4218, 5
      %v4349 = vrot.slane %v4348, 4
      %v4350 = vrot.slane %v3559, 5
      %v4351 = vsel %vm1424, %v4349, %v4350
      %v4352 = vrot.slane %v4350, 4
      %v4353 = vrot.slane %v3560, 5
      %v4354 = vsel %vm1424, %v4352, %v4353
      %v4355 = vrot.slane %v4219, 5
      %v4356 = vrot.slane %v4355, 4
      %v4357 = vrot.slane %v3562, 5
      %v4358 = vsel %vm1424, %v4356, %v4357
      %v4359 = vrot.slane %v4357, 4
      %v4360 = vrot.slane %v3563, 5
      %v4361 = vsel %vm1424, %v4359, %v4360
      %v4362 = vrot.slane %v4220, 5
      %v4363 = vrot.slane %v4362, 4
      %v4364 = vrot.slane %v3565, 5
      %v4365 = vsel %vm1424, %v4363, %v4364
      %v4366 = vrot.slane %v4364, 4
      %v4367 = vrot.slane %v3566, 5
      %v4368 = vsel %vm1424, %v4366, %v4367
      %v4369 = vrot.slane %v4221, 5
      %v4370 = vrot.slane %v4369, 4
      %v4371 = vrot.slane %v3568, 5
      %v4372 = vsel %vm1424, %v4370, %v4371
      %v4373 = vrot.slane %v4371, 4
      %v4374 = vrot.slane %v3569, 5
      %v4375 = vsel %vm1424, %v4373, %v4374
      %v4376 = vrot.slane %v4222, 5
      %v4377 = vrot.slane %v4376, 4
      %v4378 = vrot.slane %v3571, 5
      %v4379 = vsel %vm1424, %v4377, %v4378
      %v4380 = vrot.slane %v4378, 4
      %v4381 = vrot.slane %v3572, 5
      %v4382 = vsel %vm1424, %v4380, %v4381
      %s4383 = scalar_lea.vmem %s2, 512
      %v4384 = vld [vmem:[%s4383] sm:$0xf]
      %v4385 = vld [vmem:[%s4383 + $0x4] sm:$0xf]
      %v4386 = vld [vmem:[%s4383 + $0x8] sm:$0xf]
      %v4387 = vld [vmem:[%s4383 + $0xc] sm:$0xf]
      %v4388 = vld [vmem:[%s4383 + $0x10] sm:$0xf]
      %v4389 = vld [vmem:[%s4383 + $0x14] sm:$0xf]
      %v4390 = vld [vmem:[%s4383 + $0x18] sm:$0xf]
      %v4391 = vld [vmem:[%s4383 + $0x1c] sm:$0xf]
      %v4392 = vld [vmem:[%s4383 + $0x20] sm:$0xf]
      %v4393 = vld [vmem:[%s4383 + $0x24] sm:$0xf]
      %v4394 = vld [vmem:[%s4383 + $0x28] sm:$0xf]
      %v4395 = vld [vmem:[%s4383 + $0x2c] sm:$0xf]
      %v4396 = vld [vmem:[%s4383 + $0x30] sm:$0xf]
      %v4397 = vld [vmem:[%s4383 + $0x34] sm:$0xf]
      %v4398 = vld [vmem:[%s4383 + $0x38] sm:$0xf]
      %v4399 = vld [vmem:[%s4383 + $0x3c] sm:$0xf]
      %v4400 = vunpack.c.l.b16 %v4274
      %v4401 = vunpack.c.l.b16 %v4277
      %v4402 = vunpack.c.l.b16 %v4281
      %v4403 = vunpack.c.l.b16 %v4284
      %v4404 = vunpack.c.l.b16 %v4288
      %v4405 = vunpack.c.l.b16 %v4291
      %v4406 = vunpack.c.l.b16 %v4295
      %v4407 = vunpack.c.l.b16 %v4298
      %v4408 = vunpack.c.l.b16 %v4302
      %v4409 = vunpack.c.l.b16 %v4305
      %v4410 = vunpack.c.l.b16 %v4309
      %v4411 = vunpack.c.l.b16 %v4312
      %v4412 = vunpack.c.l.b16 %v4316
      %v4413 = vunpack.c.l.b16 %v4319
      %v4414 = vunpack.c.l.b16 %v4323
      %v4415 = vunpack.c.l.b16 %v4326
      %v4416 = vunpack.c.l.b16 %v4330
      %v4417 = vunpack.c.l.b16 %v4333
      %v4418 = vunpack.c.l.b16 %v4337
      %v4419 = vunpack.c.l.b16 %v4340
      %v4420 = vunpack.c.l.b16 %v4344
      %v4421 = vunpack.c.l.b16 %v4347
      %v4422 = vunpack.c.l.b16 %v4351
      %v4423 = vunpack.c.l.b16 %v4354
      %v4424 = vunpack.c.l.b16 %v4358
      %v4425 = vunpack.c.l.b16 %v4361
      %v4426 = vunpack.c.l.b16 %v4365
      %v4427 = vunpack.c.l.b16 %v4368
      %v4428 = vunpack.c.l.b16 %v4372
      %v4429 = vunpack.c.l.b16 %v4375
      %v4430 = vunpack.c.l.b16 %v4379
      %v4431 = vunpack.c.l.b16 %v4382
      %v4432 = vpack.c.b16 %v4401, %v4400
      %v4433 = vpack.c.b16 %v4403, %v4402
      %v4434 = vpack.c.b16 %v4405, %v4404
      %v4435 = vpack.c.b16 %v4407, %v4406
      %v4436 = vpack.c.b16 %v4409, %v4408
      %v4437 = vpack.c.b16 %v4411, %v4410
      %v4438 = vpack.c.b16 %v4413, %v4412
      %v4439 = vpack.c.b16 %v4415, %v4414
      %v4440 = vpack.c.b16 %v4417, %v4416
      %v4441 = vpack.c.b16 %v4419, %v4418
      %v4442 = vpack.c.b16 %v4421, %v4420
      %v4443 = vpack.c.b16 %v4423, %v4422
      %v4444 = vpack.c.b16 %v4425, %v4424
      %v4445 = vpack.c.b16 %v4427, %v4426
      %v4446 = vpack.c.b16 %v4429, %v4428
      %v4447 = vpack.c.b16 %v4431, %v4430
      %v4480 = vunpack.c.l.b16 %v4384
      %v4481 = vunpack.c.l.b16 %v4385
      %v4482 = vunpack.c.l.b16 %v4386
      %v4483 = vunpack.c.l.b16 %v4387
      %v4484 = vunpack.c.l.b16 %v4388
      %v4485 = vunpack.c.l.b16 %v4389
      %v4486 = vunpack.c.l.b16 %v4390
      %v4487 = vunpack.c.l.b16 %v4391
      %v4488 = vunpack.c.l.b16 %v4392
      %v4489 = vunpack.c.l.b16 %v4393
      %v4490 = vunpack.c.l.b16 %v4394
      %v4491 = vunpack.c.l.b16 %v4395
      %v4492 = vunpack.c.l.b16 %v4396
      %v4493 = vunpack.c.l.b16 %v4397
      %v4494 = vunpack.c.l.b16 %v4398
      %v4495 = vunpack.c.l.b16 %v4399
      %v4496 = vpack.c.b16 %v4481, %v4480
      %v4497 = vpack.c.b16 %v4483, %v4482
      %v4498 = vpack.c.b16 %v4485, %v4484
      %v4499 = vpack.c.b16 %v4487, %v4486
      %v4500 = vpack.c.b16 %v4489, %v4488
      %v4501 = vpack.c.b16 %v4491, %v4490
      %v4502 = vpack.c.b16 %v4493, %v4492
      %v4503 = vpack.c.b16 %v4495, %v4494
      %4512 = vmatpush.bf16.msra.mxu0 %v4503
      %4513 = vmatpush.bf16.msra.mxu0 %v4502
      %4514 = vmatpush.bf16.msra.mxu0 %v4501
      %4515 = vmatpush.bf16.msra.mxu0 %v4500
      %4516 = vmatpush.bf16.msra.mxu0 %v4499
      %4517 = vmatpush.bf16.msra.mxu0 %v4498
      %4518 = vmatpush.bf16.msra.mxu0 %v4497
      %4519 = vmatpush.bf16.msra.mxu0 %v4496
      %4520 = vmatmul.bf16.gmra.mxu0 %v4432
      %v4521 = vpop.f32.mrf.mxu0
      %v4522 = vadd.f32 0.0, %v4521
      %v4523 = vpop.f32.mrf.mxu0
      %v4524 = vadd.f32 0.0, %v4523
      %4525 = vmatmul.bf16.gmra.mxu0 %v4433
      %v4526 = vpop.f32.mrf.mxu0
      %v4527 = vadd.f32 0.0, %v4526
      %v4528 = vpop.f32.mrf.mxu0
      %v4529 = vadd.f32 0.0, %v4528
      %4530 = vmatmul.bf16.gmra.mxu0 %v4434
      %v4531 = vpop.f32.mrf.mxu0
      %v4532 = vadd.f32 0.0, %v4531
      %v4533 = vpop.f32.mrf.mxu0
      %v4534 = vadd.f32 0.0, %v4533
      %4535 = vmatmul.bf16.gmra.mxu0 %v4435
      %v4536 = vpop.f32.mrf.mxu0
      %v4537 = vadd.f32 0.0, %v4536
      %v4538 = vpop.f32.mrf.mxu0
      %v4539 = vadd.f32 0.0, %v4538
      %4540 = vmatmul.bf16.gmra.mxu0 %v4436
      %v4541 = vpop.f32.mrf.mxu0
      %v4542 = vadd.f32 0.0, %v4541
      %v4543 = vpop.f32.mrf.mxu0
      %v4544 = vadd.f32 0.0, %v4543
      %4545 = vmatmul.bf16.gmra.mxu0 %v4437
      %v4546 = vpop.f32.mrf.mxu0
      %v4547 = vadd.f32 0.0, %v4546
      %v4548 = vpop.f32.mrf.mxu0
      %v4549 = vadd.f32 0.0, %v4548
      %4550 = vmatmul.bf16.gmra.mxu0 %v4438
      %v4551 = vpop.f32.mrf.mxu0
      %v4552 = vadd.f32 0.0, %v4551
      %v4553 = vpop.f32.mrf.mxu0
      %v4554 = vadd.f32 0.0, %v4553
      %4555 = vmatmul.bf16.gmra.mxu0 %v4439
      %v4556 = vpop.f32.mrf.mxu0
      %v4557 = vadd.f32 0.0, %v4556
      %v4558 = vpop.f32.mrf.mxu0
      %v4559 = vadd.f32 0.0, %v4558
      %4560 = vmatmul.bf16.gmra.mxu0 %v4440
      %v4561 = vpop.f32.mrf.mxu0
      %v4562 = vadd.f32 0.0, %v4561
      %v4563 = vpop.f32.mrf.mxu0
      %v4564 = vadd.f32 0.0, %v4563
      %4565 = vmatmul.bf16.gmra.mxu0 %v4441
      %v4566 = vpop.f32.mrf.mxu0
      %v4567 = vadd.f32 0.0, %v4566
      %v4568 = vpop.f32.mrf.mxu0
      %v4569 = vadd.f32 0.0, %v4568
      %4570 = vmatmul.bf16.gmra.mxu0 %v4442
      %v4571 = vpop.f32.mrf.mxu0
      %v4572 = vadd.f32 0.0, %v4571
      %v4573 = vpop.f32.mrf.mxu0
      %v4574 = vadd.f32 0.0, %v4573
      %4575 = vmatmul.bf16.gmra.mxu0 %v4443
      %v4576 = vpop.f32.mrf.mxu0
      %v4577 = vadd.f32 0.0, %v4576
      %v4578 = vpop.f32.mrf.mxu0
      %v4579 = vadd.f32 0.0, %v4578
      %4580 = vmatmul.bf16.gmra.mxu0 %v4444
      %v4581 = vpop.f32.mrf.mxu0
      %v4582 = vadd.f32 0.0, %v4581
      %v4583 = vpop.f32.mrf.mxu0
      %v4584 = vadd.f32 0.0, %v4583
      %4585 = vmatmul.bf16.gmra.mxu0 %v4445
      %v4586 = vpop.f32.mrf.mxu0
      %v4587 = vadd.f32 0.0, %v4586
      %v4588 = vpop.f32.mrf.mxu0
      %v4589 = vadd.f32 0.0, %v4588
      %4590 = vmatmul.bf16.gmra.mxu0 %v4446
      %v4591 = vpop.f32.mrf.mxu0
      %v4592 = vadd.f32 0.0, %v4591
      %v4593 = vpop.f32.mrf.mxu0
      %v4594 = vadd.f32 0.0, %v4593
      %4595 = vmatmul.bf16.gmra.mxu0 %v4447
      %v4596 = vpop.f32.mrf.mxu0
      %v4597 = vadd.f32 0.0, %v4596
      %v4598 = vpop.f32.mrf.mxu0
      %v4599 = vadd.f32 0.0, %v4598
      %4600 = vdwg.mxu0
      %v4601 = vadd.f32 %v4175, %v4522
      %v4602 = vadd.f32 %v4176, %v4524
      %v4603 = vadd.f32 %v4177, %v4527
      %v4604 = vadd.f32 %v4178, %v4529
      %v4605 = vadd.f32 %v4179, %v4532
      %v4606 = vadd.f32 %v4180, %v4534
      %v4607 = vadd.f32 %v4181, %v4537
      %v4608 = vadd.f32 %v4182, %v4539
      %v4609 = vadd.f32 %v4183, %v4542
      %v4610 = vadd.f32 %v4184, %v4544
      %v4611 = vadd.f32 %v4185, %v4547
      %v4612 = vadd.f32 %v4186, %v4549
      %v4613 = vadd.f32 %v4187, %v4552
      %v4614 = vadd.f32 %v4188, %v4554
      %v4615 = vadd.f32 %v4189, %v4557
      %v4616 = vadd.f32 %v4190, %v4559
      %v4617 = vadd.f32 %v4191, %v4562
      %v4618 = vadd.f32 %v4192, %v4564
      %v4619 = vadd.f32 %v4193, %v4567
      %v4620 = vadd.f32 %v4194, %v4569
      %v4621 = vadd.f32 %v4195, %v4572
      %v4622 = vadd.f32 %v4196, %v4574
      %v4623 = vadd.f32 %v4197, %v4577
      %v4624 = vadd.f32 %v4198, %v4579
      %v4625 = vadd.f32 %v4199, %v4582
      %v4626 = vadd.f32 %v4200, %v4584
      %v4627 = vadd.f32 %v4201, %v4587
      %v4628 = vadd.f32 %v4202, %v4589
      %v4629 = vadd.f32 %v4203, %v4592
      %v4630 = vadd.f32 %v4204, %v4594
      %v4631 = vadd.f32 %v4205, %v4597
      %v4632 = vadd.f32 %v4206, %v4599
      %v4633 = vld [vmem:[%s3] sm:$0x1]
      %v4635 = vperm.slane %v4633, 0
      %v4637 = vadd.f32 %v4601, %v4635
      %v4638 = vadd.f32 %v4602, %v4635
      %v4639 = vadd.f32 %v4603, %v4635
      %v4640 = vadd.f32 %v4604, %v4635
      %v4641 = vadd.f32 %v4605, %v4635
      %v4642 = vadd.f32 %v4606, %v4635
      %v4643 = vadd.f32 %v4607, %v4635
      %v4644 = vadd.f32 %v4608, %v4635
      %v4645 = vadd.f32 %v4609, %v4635
      %v4646 = vadd.f32 %v4610, %v4635
      %v4647 = vadd.f32 %v4611, %v4635
      %v4648 = vadd.f32 %v4612, %v4635
      %v4649 = vadd.f32 %v4613, %v4635
      %v4650 = vadd.f32 %v4614, %v4635
      %v4651 = vadd.f32 %v4615, %v4635
      %v4652 = vadd.f32 %v4616, %v4635
      %v4653 = vadd.f32 %v4617, %v4635
      %v4654 = vadd.f32 %v4618, %v4635
      %v4655 = vadd.f32 %v4619, %v4635
      %v4656 = vadd.f32 %v4620, %v4635
      %v4657 = vadd.f32 %v4621, %v4635
      %v4658 = vadd.f32 %v4622, %v4635
      %v4659 = vadd.f32 %v4623, %v4635
      %v4660 = vadd.f32 %v4624, %v4635
      %v4661 = vadd.f32 %v4625, %v4635
      %v4662 = vadd.f32 %v4626, %v4635
      %v4663 = vadd.f32 %v4627, %v4635
      %v4664 = vadd.f32 %v4628, %v4635
      %v4665 = vadd.f32 %v4629, %v4635
      %v4666 = vadd.f32 %v4630, %v4635
      %v4667 = vadd.f32 %v4631, %v4635
      %v4668 = vadd.f32 %v4632, %v4635
      %4669 = vst [vmem:[%s355] sm:$0xff] %v4637
      %4670 = vst [vmem:[%s355 + $0x8] sm:$0xff] %v4638
      %4671 = vst [vmem:[%s355 + $0x10] sm:$0xff] %v4639
      %4672 = vst [vmem:[%s355 + $0x18] sm:$0xff] %v4640
      %4673 = vst [vmem:[%s355 + $0x20] sm:$0xff] %v4641
      %4674 = vst [vmem:[%s355 + $0x28] sm:$0xff] %v4642
      %4675 = vst [vmem:[%s355 + $0x30] sm:$0xff] %v4643
      %4676 = vst [vmem:[%s355 + $0x38] sm:$0xff] %v4644
      %4677 = vst [vmem:[%s355 + $0x40] sm:$0xff] %v4645
      %4678 = vst [vmem:[%s355 + $0x48] sm:$0xff] %v4646
      %4679 = vst [vmem:[%s355 + $0x50] sm:$0xff] %v4647
      %4680 = vst [vmem:[%s355 + $0x58] sm:$0xff] %v4648
      %4681 = vst [vmem:[%s355 + $0x60] sm:$0xff] %v4649
      %4682 = vst [vmem:[%s355 + $0x68] sm:$0xff] %v4650
      %4683 = vst [vmem:[%s355 + $0x70] sm:$0xff] %v4651
      %4684 = vst [vmem:[%s355 + $0x78] sm:$0xff] %v4652
      %4685 = vst [vmem:[%s355 + $0x80] sm:$0xff] %v4653
      %4686 = vst [vmem:[%s355 + $0x88] sm:$0xff] %v4654
      %4687 = vst [vmem:[%s355 + $0x90] sm:$0xff] %v4655
      %4688 = vst [vmem:[%s355 + $0x98] sm:$0xff] %v4656
      %4689 = vst [vmem:[%s355 + $0xa0] sm:$0xff] %v4657
      %4690 = vst [vmem:[%s355 + $0xa8] sm:$0xff] %v4658
      %4691 = vst [vmem:[%s355 + $0xb0] sm:$0xff] %v4659
      %4692 = vst [vmem:[%s355 + $0xb8] sm:$0xff] %v4660
      %4693 = vst [vmem:[%s355 + $0xc0] sm:$0xff] %v4661
      %4694 = vst [vmem:[%s355 + $0xc8] sm:$0xff] %v4662
      %4695 = vst [vmem:[%s355 + $0xd0] sm:$0xff] %v4663
      %4696 = vst [vmem:[%s355 + $0xd8] sm:$0xff] %v4664
      %4697 = vst [vmem:[%s355 + $0xe0] sm:$0xff] %v4665
      %4698 = vst [vmem:[%s355 + $0xe8] sm:$0xff] %v4666
      %4699 = vst [vmem:[%s355 + $0xf0] sm:$0xff] %v4667
      %4700 = vst [vmem:[%s355 + $0xf8] sm:$0xff] %v4668
      %v4701 = vadd.f32 %v4637, %v4638
      %v4702 = vadd.f32 %v4701, %v4639
      %v4703 = vadd.f32 %v4702, %v4640
      %v4704 = vadd.f32 %v4703, %v4641
      %v4705 = vadd.f32 %v4704, %v4642
      %v4706 = vadd.f32 %v4705, %v4643
      %v4707 = vadd.f32 %v4706, %v4644
      %v4708 = vadd.f32 %v4707, %v4645
      %v4709 = vadd.f32 %v4708, %v4646
      %v4710 = vadd.f32 %v4709, %v4647
      %v4711 = vadd.f32 %v4710, %v4648
      %v4712 = vadd.f32 %v4711, %v4649
      %v4713 = vadd.f32 %v4712, %v4650
      %v4714 = vadd.f32 %v4713, %v4651
      %v4715 = vadd.f32 %v4714, %v4652
      %v4716 = vadd.f32 %v4715, %v4653
      %v4717 = vadd.f32 %v4716, %v4654
      %v4718 = vadd.f32 %v4717, %v4655
      %v4719 = vadd.f32 %v4718, %v4656
      %v4720 = vadd.f32 %v4719, %v4657
      %v4721 = vadd.f32 %v4720, %v4658
      %v4722 = vadd.f32 %v4721, %v4659
      %v4723 = vadd.f32 %v4722, %v4660
      %v4724 = vadd.f32 %v4723, %v4661
      %v4725 = vadd.f32 %v4724, %v4662
      %v4726 = vadd.f32 %v4725, %v4663
      %v4727 = vadd.f32 %v4726, %v4664
      %v4728 = vadd.f32 %v4727, %v4665
      %v4729 = vadd.f32 %v4728, %v4666
      %v4730 = vadd.f32 %v4729, %v4667
      %v4731 = vadd.f32 %v4730, %v4668
      %v4732 = vrot.slane %v4731, 4
      %v4733 = vadd.f32 %v4731, %v4732
      %v4734 = vrot.slane %v4733, 2
      %v4735 = vadd.f32 %v4733, %v4734
      %v4736 = vrot.slane %v4735, 1
      %v4737 = vadd.f32 %v4735, %v4736
      %v4738 = vmul.f32 %v4637, %v4637
      %v4739 = vmul.f32 %v4638, %v4638
      %v4740 = vmul.f32 %v4639, %v4639
      %v4741 = vmul.f32 %v4640, %v4640
      %v4742 = vmul.f32 %v4641, %v4641
      %v4743 = vmul.f32 %v4642, %v4642
      %v4744 = vmul.f32 %v4643, %v4643
      %v4745 = vmul.f32 %v4644, %v4644
      %v4746 = vmul.f32 %v4645, %v4645
      %v4747 = vmul.f32 %v4646, %v4646
      %v4748 = vmul.f32 %v4647, %v4647
      %v4749 = vmul.f32 %v4648, %v4648
      %v4750 = vmul.f32 %v4649, %v4649
      %v4751 = vmul.f32 %v4650, %v4650
      %v4752 = vmul.f32 %v4651, %v4651
      %v4753 = vmul.f32 %v4652, %v4652
      %v4754 = vmul.f32 %v4653, %v4653
      %v4755 = vmul.f32 %v4654, %v4654
      %v4756 = vmul.f32 %v4655, %v4655
      %v4757 = vmul.f32 %v4656, %v4656
      %v4758 = vmul.f32 %v4657, %v4657
      %v4759 = vmul.f32 %v4658, %v4658
      %v4760 = vmul.f32 %v4659, %v4659
      %v4761 = vmul.f32 %v4660, %v4660
      %v4762 = vmul.f32 %v4661, %v4661
      %v4763 = vmul.f32 %v4662, %v4662
      %v4764 = vmul.f32 %v4663, %v4663
      %v4765 = vmul.f32 %v4664, %v4664
      %v4766 = vmul.f32 %v4665, %v4665
      %v4767 = vmul.f32 %v4666, %v4666
      %v4768 = vmul.f32 %v4667, %v4667
      %v4769 = vmul.f32 %v4668, %v4668
      %v4770 = vadd.f32 %v4738, %v4739
      %v4771 = vadd.f32 %v4770, %v4740
      %v4772 = vadd.f32 %v4771, %v4741
      %v4773 = vadd.f32 %v4772, %v4742
      %v4774 = vadd.f32 %v4773, %v4743
      %v4775 = vadd.f32 %v4774, %v4744
      %v4776 = vadd.f32 %v4775, %v4745
      %v4777 = vadd.f32 %v4776, %v4746
      %v4778 = vadd.f32 %v4777, %v4747
      %v4779 = vadd.f32 %v4778, %v4748
      %v4780 = vadd.f32 %v4779, %v4749
      %v4781 = vadd.f32 %v4780, %v4750
      %v4782 = vadd.f32 %v4781, %v4751
      %v4783 = vadd.f32 %v4782, %v4752
      %v4784 = vadd.f32 %v4783, %v4753
      %v4785 = vadd.f32 %v4784, %v4754
      %v4786 = vadd.f32 %v4785, %v4755
      %v4787 = vadd.f32 %v4786, %v4756
      %v4788 = vadd.f32 %v4787, %v4757
      %v4789 = vadd.f32 %v4788, %v4758
      %v4790 = vadd.f32 %v4789, %v4759
      %v4791 = vadd.f32 %v4790, %v4760
      %v4792 = vadd.f32 %v4791, %v4761
      %v4793 = vadd.f32 %v4792, %v4762
      %v4794 = vadd.f32 %v4793, %v4763
      %v4795 = vadd.f32 %v4794, %v4764
      %v4796 = vadd.f32 %v4795, %v4765
      %v4797 = vadd.f32 %v4796, %v4766
      %v4798 = vadd.f32 %v4797, %v4767
      %v4799 = vadd.f32 %v4798, %v4768
      %v4800 = vadd.f32 %v4799, %v4769
      %v4801 = vrot.slane %v4800, 4
      %v4802 = vadd.f32 %v4800, %v4801
      %v4803 = vrot.slane %v4802, 2
      %v4804 = vadd.f32 %v4802, %v4803
      %v4805 = vrot.slane %v4804, 1
      %v4806 = vadd.f32 %v4804, %v4805
      %vm4807 = vcmask 1040384
      %v4808 = vsel %vm4807, %v4737, %v4806
      %4809 = vst [vmem:[%s361] sm:$0x3] %v4808
      %s4810 = smul.u32 16, %s22
      %p4811 = scmp.lt.s32.totalorder %s21, 1
      %s4812 = scalar_select %p4811, %s21, 1
      %p4813 = scmp.lt.s32.totalorder %s4810, 15
      %s4814 = scalar_select %p4813, %s4810, 15
      %s4815 = smul.addr %s4814, 2
      %s4816 = smul.addr %s4812, 32
      %s4817 = sadd.s32 %s4815, %s4816
      %s4818 = smul.addr %s4817, 8
      %s4819 = scalar_lea.vmem %s4, %s4818
      %s4820 = sadd.s32 %s21, %s22
      %p4821 = scmp.lt.s32.totalorder %s4820, 1
      %s4822 = scalar_select %p4821, %s4820, 1
      %s4823 = smul.addr %s4822, 2
      %s4824 = scalar_lea.vmem %s5, %s4823
      // Predicated region
      $region37: #{upconvd_forward.8} parent=35 // pred_check
        %p4825 = pneg %p151
      $region38: #{upconvd_forward.8} parent=35 // pred_check_branch
        %4827 = sbr.rel (%p4825) target = $region40
      $region39: #{upconvd_forward.8} parent=35 // pred_region
        %s4828 = smul.u32 16, %s22
      $region40: #{upconvd_forward.8} parent=35 // pred_fallthru
        _
      // Predicated region
      $region41: #{upconvd_forward.8} parent=35 // pred_check
        %p4829 = pneg %p179
      $region42: #{upconvd_forward.8} parent=35 // pred_check_branch
        %4831 = sbr.rel (%p4829) target = $region44
      $region43: #{upconvd_forward.8} parent=35 // pred_region
        %s4832 = sadd.s32 %s21, %s22
      $region44: #{upconvd_forward.8} parent=35 // pred_fallthru
        _
    $region36: #{upconvd_forward.8} parent=5 // pred_fallthru
      _
    %p4833 = scmp.le.s32.totalorder 2, %s12
    // Predicated region
    $region45: #{upconvd_forward.8} parent=5 // pred_check
      %p4834 = pneg %p4833
    $region46: #{upconvd_forward.8} parent=5 // pred_check_branch
      %4836 = sbr.rel (%p4834) target = $region48
    $region47: #{upconvd_forward.8} parent=5 // pred_region
      %s4837 = ssub.s32 %s12, 2
      // Predicated region
      $region49: #{upconvd_forward.8} parent=47 // pred_check
        %p4838 = pneg %p157
      $region50: #{upconvd_forward.8} parent=47 // pred_check_branch
        %4840 = sbr.rel (%p4838) target = $region52
      $region51: #{upconvd_forward.8} parent=47 // pred_region
        %s4841 = smul.u32 16, %s24
        %p4842 = scmp.lt.s32.totalorder %s23, 1
        %s4843 = scalar_select %p4842, %s23, 1
        %p4844 = scmp.lt.s32.totalorder %s4841, 15
        %s4845 = scalar_select %p4844, %s4841, 15
        %s4846 = smul.addr %s4845, 2
        %s4847 = smul.addr %s4843, 32
        %s4848 = sadd.s32 %s4846, %s4847
        %s4849 = smul.addr %s4848, 8
        %s4850 = scalar_lea.vmem %s4, %s4849
      $region52: #{upconvd_forward.8} parent=47 // pred_fallthru
        _
      // Predicated region
      $region53: #{upconvd_forward.8} parent=47 // pred_check
        %p4851 = pneg %p185
      $region54: #{upconvd_forward.8} parent=47 // pred_check_branch
        %4853 = sbr.rel (%p4851) target = $region56
      $region55: #{upconvd_forward.8} parent=47 // pred_region
        %s4854 = sadd.s32 %s23, %s24
        %p4855 = scmp.lt.s32.totalorder %s4854, 1
        %s4856 = scalar_select %p4855, %s4854, 1
        %s4857 = smul.addr %s4856, 2
        %s4858 = scalar_lea.vmem %s5, %s4857
      $region56: #{upconvd_forward.8} parent=47 // pred_fallthru
        _
    $region48: #{upconvd_forward.8} parent=5 // pred_fallthru
      _
  $region6: #{upconvd_forward.8} parent=0 // loop_footer
    %s16 = sadd.s32 1, %s12
  $region7: #{upconvd_forward.8} parent=0 // loop_footer_branch
    %11 = sbr.rel target = $region3
  $region8: #{upconvd_forward.8} parent=0 // loop_exit
    _

</llo_original>
